<compile_context>
chip_gen: v5e
topology: v5e:2x2
jax: 0.10.0
libtpu: 0.0.40
codegen_flags: <defaults>
</compile_context>

<pallas_src>
from functools import partial

import jax
import jax.numpy as jnp
from jax import lax
from jax.experimental import pallas as pl
from jax.experimental.pallas import tpu as pltpu


LANE = 128                       # channel padding target (TPU lane width)
_EPS = 1e-5                      # InstanceNorm3d default eps
_VMEM_LIMIT = 64 * 1024 * 1024   # explicit scoped-VMEM cap
_TILE_BUDGET = 12 * 1024 * 1024  # per-step working-set budget used to pick the D tile


def _round_up(x, m):
    return (x + m - 1) // m * m


def _pick_tile_d(D, H, W, cin_p, cout_p, itemsize):
    """Largest divisor of D whose per-step working set fits the VMEM budget,
    preferring >=2 D-tiles so the grid has enough steps to pipeline the output
    writeback and be split across TensorCores."""
    def est(t):
        x_slab = (t + 2) * (H + 2) * (W + 2) * cin_p * itemsize   # halo'd input slab
        acc = t * H * W * cout_p * 4                              # f32 accumulator
        patch = t * H * W * 3 * cin_p * 4                         # folded-tap patch temp
        out2 = 2 * t * H * W * cout_p * itemsize                  # double-buffered output
        return x_slab + acc + patch + out2

    divs = [t for t in range(1, D + 1) if D % t == 0 and est(t) <= _TILE_BUDGET]
    if not divs:
        return 1
    multi = [t for t in divs if t < D and t >= 4]
    return max(multi) if multi else max(divs)


def _fold_params(w, b, cin_p, cout_p):
    """Zero-pad channels to lane multiples and fold the kw taps into the contraction:
    (3,3,3,Cin,Cout) -> (3,3,3*Cin_p,Cout_p), bias -> (1, Cout_p)."""
    cin, cout = w.shape[3], w.shape[4]
    wp = jnp.pad(w, ((0, 0), (0, 0), (0, 0), (0, cin_p - cin), (0, cout_p - cout)))
    wf = wp.reshape(3, 3, 3 * cin_p, cout_p)
    bp = jnp.pad(b, (0, cout_p - cout)).reshape(1, cout_p)
    return wf, bp


def _conv3d_kernel(x_hbm, w_ref, b_ref, *rest, tile_d, apply_in):
    """One (batch, D-tile) grid step of a 3x3x3 'same' conv.

    x_hbm : (N, D+2, H+2, W+2, Cp)     HBM-resident, spatially pre-padded input
    w_ref : (3, 3, 3*Cp, Coutp)        kw taps folded into the contraction dim
    b_ref : (1, Coutp)
    y_ref : (1, tile_d, H, W, Coutp)   conv + bias (+ ReLU if not apply_in)
    stats_ref (apply_in only): (1, 1, 8, Coutp), rows 0/1 = per-channel sum / sum-sq
    """
    if apply_in:
        y_ref, stats_ref, x_vmem, acc_ref, sem = rest
    else:
        y_ref, x_vmem, acc_ref, sem = rest
        stats_ref = None

    n = pl.program_id(0)
    i = pl.program_id(1)
    d0 = pl.multiple_of(i * tile_d, tile_d)

    _, _, H, W, coutp = y_ref.shape
    cp = x_vmem.shape[-1]

    # Manual DMA of the halo'd D-slab for this tile (overlapping windows are not
    # expressible with a Blocked BlockSpec).
    copy = pltpu.make_async_copy(x_hbm.at[n, pl.ds(d0, tile_d + 2)], x_vmem, sem)
    copy.start()
    copy.wait()

    # 9 (kd, kh) taps; the 3 kw taps are folded into the contraction (K = 3*Cp),
    # accumulating into an explicit f32 VMEM scratch.
    for kd in range(3):
        for kh in range(3):
            sl = x_vmem[kd:kd + tile_d, kh:kh + H, :, :]          # (tile_d, H, W+2, Cp)
            patch = jnp.concatenate(
                [sl[:, :, 0:W, :], sl[:, :, 1:W + 1, :], sl[:, :, 2:W + 2, :]],
                axis=-1,
            ).reshape(tile_d * H * W, 3 * cp)
            contrib = jnp.dot(patch, w_ref[kd, kh],
                              preferred_element_type=jnp.float32)
            if kd == 0 and kh == 0:
                acc_ref[...] = contrib
            else:
                acc_ref[...] += contrib

    acc = acc_ref[...] + b_ref[...].astype(jnp.float32)          # (R, Coutp)

    if apply_in:
        # Pre-activation output + per-tile partial stats; normalize+ReLU is a 2nd pass.
        y_ref[...] = acc.reshape(y_ref.shape).astype(y_ref.dtype)
        s1 = jnp.sum(acc, axis=0, keepdims=True)
        s2 = jnp.sum(acc * acc, axis=0, keepdims=True)
        fill = jnp.zeros((6, coutp), jnp.float32)
        stats_ref[...] = jnp.concatenate([s1, s2, fill], axis=0).reshape(stats_ref.shape)
    else:
        y_ref[...] = jnp.maximum(acc, 0.0).reshape(y_ref.shape).astype(y_ref.dtype)


def _norm_relu_kernel(y_ref, scale_ref, shift_ref, o_ref):
    c = scale_ref.shape[-1]
    s = scale_ref[...].reshape(1, 1, 1, 1, c)
    t = shift_ref[...].reshape(1, 1, 1, 1, c)
    y = y_ref[...].astype(jnp.float32)
    o_ref[...] = jnp.maximum(y * s + t, 0.0).astype(o_ref.dtype)


def conv3d_block(x, w_folded, b, *, apply_in, eps=_EPS):
    """3x3x3 same-conv + bias (+ InstanceNorm) + ReLU on channel-padded NDHWC input.

    x        : (N, D, H, W, Cp)      Cp a multiple of 128
    w_folded : (3, 3, 3*Cp, Coutp)   Coutp a multiple of 128
    b        : (1, Coutp)
    returns  : (N, D, H, W, Coutp)
    """
    N, D, H, W, cp = x.shape
    coutp = w_folded.shape[-1]
    itemsize = jnp.dtype(x.dtype).itemsize
    tile_d = _pick_tile_d(D, H, W, cp, coutp, itemsize)
    n_d = D // tile_d

    # Single spatial halo pad (channels are already lane-padded by the caller).
    x_pad = jnp.pad(x, ((0, 0), (1, 1), (1, 1), (1, 1), (0, 0)))

    out_shape = [jax.ShapeDtypeStruct((N, D, H, W, coutp), x.dtype)]
    out_specs = [pl.BlockSpec((1, tile_d, H, W, coutp), lambda n, i: (n, i, 0, 0, 0))]
    if apply_in:
        out_shape.append(jax.ShapeDtypeStruct((N, n_d, 8, coutp), jnp.float32))
        out_specs.append(pl.BlockSpec((1, 1, 8, coutp), lambda n, i: (n, i, 0, 0)))

    kernel = partial(_conv3d_kernel, tile_d=tile_d, apply_in=apply_in)
    res = pl.pallas_call(
        kernel,
        out_shape=tuple(out_shape),
        grid=(N, n_d),
        in_specs=[
            pl.BlockSpec(memory_space=pl.ANY),                         # x stays in HBM
            pl.BlockSpec((3, 3, 3 * cp, coutp), lambda n, i: (0, 0, 0, 0)),
            pl.BlockSpec((1, coutp), lambda n, i: (0, 0)),
        ],
        out_specs=tuple(out_specs),
        scratch_shapes=[
            pltpu.VMEM((tile_d + 2, H + 2, W + 2, cp), x.dtype),       # halo'd input slab
            pltpu.VMEM((tile_d * H * W, coutp), jnp.float32),          # f32 accumulator
            pltpu.SemaphoreType.DMA,
        ],
        compiler_params=pltpu.CompilerParams(
            dimension_semantics=("parallel", "parallel"),
            vmem_limit_bytes=_VMEM_LIMIT,
        ),
    )(x_pad, w_folded, b)

    if not apply_in:
        return res[0]

    # Two-pass InstanceNorm3d (affine=False): reduce per-tile partial sums (tiny),
    # then normalize + ReLU with a lane-dense elementwise kernel.
    y, stats = res
    cnt = float(D * H * W)
    s1 = jnp.sum(stats[:, :, 0, :], axis=1)                            # (N, Coutp)
    s2 = jnp.sum(stats[:, :, 1, :], axis=1)
    mean = s1 / cnt
    var = jnp.maximum(s2 / cnt - mean * mean, 0.0)
    scale = lax.rsqrt(var + eps)
    shift = -mean * scale

    return pl.pallas_call(
        _norm_relu_kernel,
        out_shape=jax.ShapeDtypeStruct(y.shape, y.dtype),
        grid=(N, n_d),
        in_specs=[
            pl.BlockSpec((1, tile_d, H, W, coutp), lambda n, i: (n, i, 0, 0, 0)),
            pl.BlockSpec((1, 1, coutp), lambda n, i: (n, 0, 0)),
            pl.BlockSpec((1, 1, coutp), lambda n, i: (n, 0, 0)),
        ],
        out_specs=pl.BlockSpec((1, tile_d, H, W, coutp), lambda n, i: (n, i, 0, 0, 0)),
        compiler_params=pltpu.CompilerParams(
            dimension_semantics=("parallel", "parallel"),
            vmem_limit_bytes=_VMEM_LIMIT,
        ),
    )(y, scale.reshape(N, 1, coutp), shift.reshape(N, 1, coutp))


class DoubleConvPallas:
    """JAX/Pallas equivalent of the PyTorch DoubleConv module (forward only)."""

    def __init__(self, in_channels, out_channels, batch_normal=False, key=None):
        channels = out_channels // 2
        if in_channels > out_channels:
            channels = in_channels // 2
        self.in_channels = in_channels
        self.mid_channels = channels
        self.out_channels = out_channels
        self.batch_normal = batch_normal

        if key is None:
            key = jax.random.PRNGKey(0)
        k1, k2, k3, k4 = jax.random.split(key, 4)

        def init_conv(kw, kb, cin, cout):
            # Deterministic kaiming-uniform-like init (fan_in = cin * 27).
            fan_in = cin * 27
            bound = 1.0 / jnp.sqrt(fan_in)
            # weight stored as (kD,kH,kW,Cin,Cout) (DHWIO)
            w = jax.random.uniform(kw, (3, 3, 3, cin, cout), jnp.float32, -bound, bound)
            b = jax.random.uniform(kb, (cout,), jnp.float32, -bound, bound)
            return w, b

        # Unpadded parameters (also used by the pure-JAX reference).
        self.w1, self.b1 = init_conv(k1, k2, in_channels, channels)
        self.w2, self.b2 = init_conv(k3, k4, channels, out_channels)

        # Lane-padded, kw-folded parameters for the Pallas kernels.
        self.cin_p = _round_up(in_channels, LANE)
        self.mid_p = _round_up(channels, LANE)
        self.out_p = _round_up(out_channels, LANE)
        self.w1f, self.b1p = _fold_params(self.w1, self.b1, self.cin_p, self.mid_p)
        self.w2f, self.b2p = _fold_params(self.w2, self.b2, self.mid_p, self.out_p)

    def __call__(self, x_ncdhw):
        # NCDHW -> NDHWC once; channels lane-padded once; stays padded across both convs.
        x = jnp.transpose(x_ncdhw, (0, 2, 3, 4, 1))
        x = jnp.pad(x, ((0, 0),) * 4 + ((0, self.cin_p - self.in_channels),))
        x = conv3d_block(x, self.w1f, self.b1p, apply_in=self.batch_normal)
        x = conv3d_block(x, self.w2f, self.b2p, apply_in=self.batch_normal)
        x = x[..., : self.out_channels]
        return jnp.transpose(x, (0, 4, 1, 2, 3))


def _reference_forward(x_ncdhw, module):
    """Pure-JAX reference (lax conv) for correctness checking."""
    def conv(x, w, b):
        y = lax.conv_general_dilated(
            x, w, window_strides=(1, 1, 1), padding=((1, 1), (1, 1), (1, 1)),
            dimension_numbers=("NDHWC", "DHWIO", "NDHWC"),
        )
        y = y + b[None, None, None, None, :]
        if module.batch_normal:
            mean = jnp.mean(y, axis=(1, 2, 3), keepdims=True)
            var = jnp.mean((y - mean) ** 2, axis=(1, 2, 3), keepdims=True)
            y = (y - mean) * lax.rsqrt(var + _EPS)
        return jnp.maximum(y, 0.0)

    x = jnp.transpose(x_ncdhw, (0, 2, 3, 4, 1))
    x = conv(x, module.w1, module.b1)
    x = conv(x, module.w2, module.b2)
    return jnp.transpose(x, (0, 4, 1, 2, 3))


if __name__ == "__main__":
    key = jax.random.PRNGKey(0)
    kx, kp0, kp1 = jax.random.split(key, 3)

    N, Cin, Cout = 2, 4, 8
    D = H = W = 8
    x = jax.random.normal(kx, (N, Cin, D, H, W), jnp.float32)   # PyTorch NCDHW input

    # Plain DoubleConv path (conv + ReLU, twice).
    m0 = DoubleConvPallas(Cin, Cout, batch_normal=False, key=kp0)
    out0 = jax.block_until_ready(jax.jit(m0.__call__)(x))
    ref0 = _reference_forward(x, m0)
    assert out0.shape == (N, Cout, D, H, W), out0.shape
    assert jnp.allclose(out0, ref0, atol=1e-3, rtol=1e-3), float(jnp.max(jnp.abs(out0 - ref0)))

    # With InstanceNorm3d between each conv and its ReLU (two-pass IN path).
    m1 = DoubleConvPallas(Cin, Cout, batch_normal=True, key=kp1)
    out1 = jax.block_until_ready(jax.jit(m1.__call__)(x))
    ref1 = _reference_forward(x, m1)
    assert out1.shape == (N, Cout, D, H, W), out1.shape
    assert jnp.allclose(out1, ref1, atol=1e-3, rtol=1e-3), float(jnp.max(jnp.abs(out1 - ref1)))

    print("KERNEL_OK")
</pallas_src>

<mosaic_0001>
module attributes {stable_mosaic.version = 11 : i64} {
  func.func @_conv3d_kernel(%arg0: i32, %arg1: i32, %arg2: memref<2x10x10x10x128xf32, #tpu.memory_space<any>>, %arg3: memref<3x3x384x128xf32, #tpu.memory_space<vmem>>, %arg4: memref<1x128xf32, #tpu.memory_space<vmem>>, %arg5: memref<1x4x8x8x128xf32, #tpu.memory_space<vmem>>, %arg6: memref<6x10x10x128xf32, #tpu.memory_space<vmem>>, %arg7: memref<256x128xf32, #tpu.memory_space<vmem>>, %arg8: memref<!tpu.dma_semaphore, #tpu.memory_space<semaphore_mem>>) attributes {dimension_semantics = [#tpu.dimension_semantics<parallel>, #tpu.dimension_semantics<parallel>], iteration_bounds = array<i64: 2, 2>, scalar_prefetch = 0 : i64, scratch_operands = 3 : i64, tpu.core_type = #tpu.core_type<tc>, window_params = [{}, {pipeline_mode = #tpu.pipeline_mode<synchronous>, transform_indices = @transform_1, window_bounds = array<i64: 3, 3, 384, 128>}, {pipeline_mode = #tpu.pipeline_mode<synchronous>, transform_indices = @transform_2, window_bounds = array<i64: 1, 128>}, {transform_indices = @transform_3, window_bounds = array<i64: 1, 4, 8, 8, 128>}]} {
    %c4_i32 = arith.constant 4 : i32
    %0 = arith.muli %arg1, %c4_i32 : i32
    %1 = tpu.assume_multiple %0, 4 : i32
    %c0_i32 = arith.constant 0 : i32
    %c0_i32_0 = arith.constant 0 : i32
    %c0_i32_1 = arith.constant 0 : i32
    %2 = tpu.memref_slice %arg2[%arg0, %1, %c0_i32, %c0_i32_0, %c0_i32_1] : memref<2x10x10x10x128xf32, #tpu.memory_space<any>> -> memref<1x6x10x10x128xf32, #tpu.memory_space<any>>
    %3 = tpu.memref_squeeze %2 : memref<1x6x10x10x128xf32, #tpu.memory_space<any>> -> memref<6x10x10x128xf32, #tpu.memory_space<any>>
    tpu.enqueue_dma source(%3 : memref<6x10x10x128xf32, #tpu.memory_space<any>>) target(%arg6 : memref<6x10x10x128xf32, #tpu.memory_space<vmem>>) target_semaphore(%arg8 : memref<!tpu.dma_semaphore, #tpu.memory_space<semaphore_mem>>)
    %c0_i32_2 = arith.constant 0 : i32
    %c0_i32_3 = arith.constant 0 : i32
    %c0_i32_4 = arith.constant 0 : i32
    %4 = tpu.memref_slice %arg2[%arg0, %1, %c0_i32_2, %c0_i32_3, %c0_i32_4] : memref<2x10x10x10x128xf32, #tpu.memory_space<any>> -> memref<1x6x10x10x128xf32, #tpu.memory_space<any>>
    %5 = tpu.memref_squeeze %4 : memref<1x6x10x10x128xf32, #tpu.memory_space<any>> -> memref<6x10x10x128xf32, #tpu.memory_space<any>>
    tpu.wait_dma2 semaphore(%arg8 : memref<!tpu.dma_semaphore, #tpu.memory_space<semaphore_mem>>) src(%5 : memref<6x10x10x128xf32, #tpu.memory_space<any>>) dst(%arg6 : memref<6x10x10x128xf32, #tpu.memory_space<vmem>>)
    %c0 = arith.constant 0 : index
    %c0_5 = arith.constant 0 : index
    %c0_6 = arith.constant 0 : index
    %c0_7 = arith.constant 0 : index
    %6 = vector.load %arg6[%c0, %c0_5, %c0_6, %c0_7] : memref<6x10x10x128xf32, #tpu.memory_space<vmem>>, vector<4x8x10x128xf32>
    %7 = vector.extract_strided_slice %6 {offsets = [0, 0, 0, 0], sizes = [4, 8, 8, 128], strides = [1, 1, 1, 1]} : vector<4x8x10x128xf32> to vector<4x8x8x128xf32>
    %8 = vector.extract_strided_slice %6 {offsets = [0, 0, 1, 0], sizes = [4, 8, 8, 128], strides = [1, 1, 1, 1]} : vector<4x8x10x128xf32> to vector<4x8x8x128xf32>
    %9 = vector.extract_strided_slice %6 {offsets = [0, 0, 2, 0], sizes = [4, 8, 8, 128], strides = [1, 1, 1, 1]} : vector<4x8x10x128xf32> to vector<4x8x8x128xf32>
    %10 = tpu.concatenate %7, %8, %9 in 3 : vector<4x8x8x128xf32>, vector<4x8x8x128xf32>, vector<4x8x8x128xf32> -> vector<4x8x8x384xf32>
    %11 = vector.shape_cast %10 : vector<4x8x8x384xf32> to vector<256x384xf32>
    %c0_8 = arith.constant 0 : index
    %c0_9 = arith.constant 0 : index
    %c0_10 = arith.constant 0 : index
    %c0_11 = arith.constant 0 : index
    %12 = vector.load %arg3[%c0_8, %c0_9, %c0_10, %c0_11] : memref<3x3x384x128xf32, #tpu.memory_space<vmem>>, vector<1x1x384x128xf32>
    %13 = vector.shape_cast %12 : vector<1x1x384x128xf32> to vector<384x128xf32>
    %cst = arith.constant dense<0.000000e+00> : vector<256x128xf32>
    %14 = tpu.matmul %11, %13, %cst {dimension_numbers = #tpu.dot_dimension_numbers<[1], [0], [0], [1], [0, 0, 1, 1], [], []>} : vector<256x384xf32>, vector<384x128xf32>, vector<256x128xf32> -> vector<256x128xf32>
    %c0_12 = arith.constant 0 : index
    %c0_13 = arith.constant 0 : index
    %15 = vector.load %arg7[%c0_12, %c0_13] : memref<256x128xf32, #tpu.memory_space<vmem>>, vector<256x128xf32>
    tpu.vector_store %arg7[%c0_12, %c0_13], %14 {strides = array<i32>} : memref<256x128xf32, #tpu.memory_space<vmem>>, vector<256x128xf32>,
    %c0_14 = arith.constant 0 : index
    %c1 = arith.constant 1 : index
    %c0_15 = arith.constant 0 : index
    %c0_16 = arith.constant 0 : index
    %16 = vector.load %arg6[%c0_14, %c1, %c0_15, %c0_16] : memref<6x10x10x128xf32, #tpu.memory_space<vmem>>, vector<4x8x10x128xf32>
    %17 = vector.extract_strided_slice %16 {offsets = [0, 0, 0, 0], sizes = [4, 8, 8, 128], strides = [1, 1, 1, 1]} : vector<4x8x10x128xf32> to vector<4x8x8x128xf32>
    %18 = vector.extract_strided_slice %16 {offsets = [0, 0, 1, 0], sizes = [4, 8, 8, 128], strides = [1, 1, 1, 1]} : vector<4x8x10x128xf32> to vector<4x8x8x128xf32>
    %19 = vector.extract_strided_slice %16 {offsets = [0, 0, 2, 0], sizes = [4, 8, 8, 128], strides = [1, 1, 1, 1]} : vector<4x8x10x128xf32> to vector<4x8x8x128xf32>
    %20 = tpu.concatenate %17, %18, %19 in 3 : vector<4x8x8x128xf32>, vector<4x8x8x128xf32>, vector<4x8x8x128xf32> -> vector<4x8x8x384xf32>
    %21 = vector.shape_cast %20 : vector<4x8x8x384xf32> to vector<256x384xf32>
    %c0_17 = arith.constant 0 : index
    %c1_18 = arith.constant 1 : index
    %c0_19 = arith.constant 0 : index
    %c0_20 = arith.constant 0 : index
    %22 = vector.load %arg3[%c0_17, %c1_18, %c0_19, %c0_20] : memref<3x3x384x128xf32, #tpu.memory_space<vmem>>, vector<1x1x384x128xf32>
    %23 = vector.shape_cast %22 : vector<1x1x384x128xf32> to vector<384x128xf32>
    %cst_21 = arith.constant dense<0.000000e+00> : vector<256x128xf32>
    %24 = tpu.matmul %21, %23, %cst_21 {dimension_numbers = #tpu.dot_dimension_numbers<[1], [0], [0], [1], [0, 0, 1, 1], [], []>} : vector<256x384xf32>, vector<384x128xf32>, vector<256x128xf32> -> vector<256x128xf32>
    %c0_22 = arith.constant 0 : index
    %c0_23 = arith.constant 0 : index
    %25 = vector.load %arg7[%c0_22, %c0_23] : memref<256x128xf32, #tpu.memory_space<vmem>>, vector<256x128xf32>
    %26 = arith.addf %25, %24 : vector<256x128xf32>
    %c0_24 = arith.constant 0 : index
    %c0_25 = arith.constant 0 : index
    %27 = vector.load %arg7[%c0_24, %c0_25] : memref<256x128xf32, #tpu.memory_space<vmem>>, vector<256x128xf32>
    tpu.vector_store %arg7[%c0_24, %c0_25], %26 {strides = array<i32>} : memref<256x128xf32, #tpu.memory_space<vmem>>, vector<256x128xf32>,
    %c0_26 = arith.constant 0 : index
    %c2 = arith.constant 2 : index
    %c0_27 = arith.constant 0 : index
    %c0_28 = arith.constant 0 : index
    %28 = vector.load %arg6[%c0_26, %c2, %c0_27, %c0_28] : memref<6x10x10x128xf32, #tpu.memory_space<vmem>>, vector<4x8x10x128xf32>
    %29 = vector.extract_strided_slice %28 {offsets = [0, 0, 0, 0], sizes = [4, 8, 8, 128], strides = [1, 1, 1, 1]} : vector<4x8x10x128xf32> to vector<4x8x8x128xf32>
    %30 = vector.extract_strided_slice %28 {offsets = [0, 0, 1, 0], sizes = [4, 8, 8, 128], strides = [1, 1, 1, 1]} : vector<4x8x10x128xf32> to vector<4x8x8x128xf32>
    %31 = vector.extract_strided_slice %28 {offsets = [0, 0, 2, 0], sizes = [4, 8, 8, 128], strides = [1, 1, 1, 1]} : vector<4x8x10x128xf32> to vector<4x8x8x128xf32>
    %32 = tpu.concatenate %29, %30, %31 in 3 : vector<4x8x8x128xf32>, vector<4x8x8x128xf32>, vector<4x8x8x128xf32> -> vector<4x8x8x384xf32>
    %33 = vector.shape_cast %32 : vector<4x8x8x384xf32> to vector<256x384xf32>
    %c0_29 = arith.constant 0 : index
    %c2_30 = arith.constant 2 : index
    %c0_31 = arith.constant 0 : index
    %c0_32 = arith.constant 0 : index
    %34 = vector.load %arg3[%c0_29, %c2_30, %c0_31, %c0_32] : memref<3x3x384x128xf32, #tpu.memory_space<vmem>>, vector<1x1x384x128xf32>
    %35 = vector.shape_cast %34 : vector<1x1x384x128xf32> to vector<384x128xf32>
    %cst_33 = arith.constant dense<0.000000e+00> : vector<256x128xf32>
    %36 = tpu.matmul %33, %35, %cst_33 {dimension_numbers = #tpu.dot_dimension_numbers<[1], [0], [0], [1], [0, 0, 1, 1], [], []>} : vector<256x384xf32>, vector<384x128xf32>, vector<256x128xf32> -> vector<256x128xf32>
    %c0_34 = arith.constant 0 : index
    %c0_35 = arith.constant 0 : index
    %37 = vector.load %arg7[%c0_34, %c0_35] : memref<256x128xf32, #tpu.memory_space<vmem>>, vector<256x128xf32>
    %38 = arith.addf %37, %36 : vector<256x128xf32>
    %c0_36 = arith.constant 0 : index
    %c0_37 = arith.constant 0 : index
    %39 = vector.load %arg7[%c0_36, %c0_37] : memref<256x128xf32, #tpu.memory_space<vmem>>, vector<256x128xf32>
    tpu.vector_store %arg7[%c0_36, %c0_37], %38 {strides = array<i32>} : memref<256x128xf32, #tpu.memory_space<vmem>>, vector<256x128xf32>,
    %c1_38 = arith.constant 1 : index
    %c0_39 = arith.constant 0 : index
    %c0_40 = arith.constant 0 : index
    %c0_41 = arith.constant 0 : index
    %40 = vector.load %arg6[%c1_38, %c0_39, %c0_40, %c0_41] : memref<6x10x10x128xf32, #tpu.memory_space<vmem>>, vector<4x8x10x128xf32>
    %41 = vector.extract_strided_slice %40 {offsets = [0, 0, 0, 0], sizes = [4, 8, 8, 128], strides = [1, 1, 1, 1]} : vector<4x8x10x128xf32> to vector<4x8x8x128xf32>
    %42 = vector.extract_strided_slice %40 {offsets = [0, 0, 1, 0], sizes = [4, 8, 8, 128], strides = [1, 1, 1, 1]} : vector<4x8x10x128xf32> to vector<4x8x8x128xf32>
    %43 = vector.extract_strided_slice %40 {offsets = [0, 0, 2, 0], sizes = [4, 8, 8, 128], strides = [1, 1, 1, 1]} : vector<4x8x10x128xf32> to vector<4x8x8x128xf32>
    %44 = tpu.concatenate %41, %42, %43 in 3 : vector<4x8x8x128xf32>, vector<4x8x8x128xf32>, vector<4x8x8x128xf32> -> vector<4x8x8x384xf32>
    %45 = vector.shape_cast %44 : vector<4x8x8x384xf32> to vector<256x384xf32>
    %c1_42 = arith.constant 1 : index
    %c0_43 = arith.constant 0 : index
    %c0_44 = arith.constant 0 : index
    %c0_45 = arith.constant 0 : index
    %46 = vector.load %arg3[%c1_42, %c0_43, %c0_44, %c0_45] : memref<3x3x384x128xf32, #tpu.memory_space<vmem>>, vector<1x1x384x128xf32>
    %47 = vector.shape_cast %46 : vector<1x1x384x128xf32> to vector<384x128xf32>
    %cst_46 = arith.constant dense<0.000000e+00> : vector<256x128xf32>
    %48 = tpu.matmul %45, %47, %cst_46 {dimension_numbers = #tpu.dot_dimension_numbers<[1], [0], [0], [1], [0, 0, 1, 1], [], []>} : vector<256x384xf32>, vector<384x128xf32>, vector<256x128xf32> -> vector<256x128xf32>
    %c0_47 = arith.constant 0 : index
    %c0_48 = arith.constant 0 : index
    %49 = vector.load %arg7[%c0_47, %c0_48] : memref<256x128xf32, #tpu.memory_space<vmem>>, vector<256x128xf32>
    %50 = arith.addf %49, %48 : vector<256x128xf32>
    %c0_49 = arith.constant 0 : index
    %c0_50 = arith.constant 0 : index
    %51 = vector.load %arg7[%c0_49, %c0_50] : memref<256x128xf32, #tpu.memory_space<vmem>>, vector<256x128xf32>
    tpu.vector_store %arg7[%c0_49, %c0_50], %50 {strides = array<i32>} : memref<256x128xf32, #tpu.memory_space<vmem>>, vector<256x128xf32>,
    %c1_51 = arith.constant 1 : index
    %c1_52 = arith.constant 1 : index
    %c0_53 = arith.constant 0 : index
    %c0_54 = arith.constant 0 : index
    %52 = vector.load %arg6[%c1_51, %c1_52, %c0_53, %c0_54] : memref<6x10x10x128xf32, #tpu.memory_space<vmem>>, vector<4x8x10x128xf32>
    %53 = vector.extract_strided_slice %52 {offsets = [0, 0, 0, 0], sizes = [4, 8, 8, 128], strides = [1, 1, 1, 1]} : vector<4x8x10x128xf32> to vector<4x8x8x128xf32>
    %54 = vector.extract_strided_slice %52 {offsets = [0, 0, 1, 0], sizes = [4, 8, 8, 128], strides = [1, 1, 1, 1]} : vector<4x8x10x128xf32> to vector<4x8x8x128xf32>
    %55 = vector.extract_strided_slice %52 {offsets = [0, 0, 2, 0], sizes = [4, 8, 8, 128], strides = [1, 1, 1, 1]} : vector<4x8x10x128xf32> to vector<4x8x8x128xf32>
    %56 = tpu.concatenate %53, %54, %55 in 3 : vector<4x8x8x128xf32>, vector<4x8x8x128xf32>, vector<4x8x8x128xf32> -> vector<4x8x8x384xf32>
    %57 = vector.shape_cast %56 : vector<4x8x8x384xf32> to vector<256x384xf32>
    %c1_55 = arith.constant 1 : index
    %c1_56 = arith.constant 1 : index
    %c0_57 = arith.constant 0 : index
    %c0_58 = arith.constant 0 : index
    %58 = vector.load %arg3[%c1_55, %c1_56, %c0_57, %c0_58] : memref<3x3x384x128xf32, #tpu.memory_space<vmem>>, vector<1x1x384x128xf32>
    %59 = vector.shape_cast %58 : vector<1x1x384x128xf32> to vector<384x128xf32>
    %cst_59 = arith.constant dense<0.000000e+00> : vector<256x128xf32>
    %60 = tpu.matmul %57, %59, %cst_59 {dimension_numbers = #tpu.dot_dimension_numbers<[1], [0], [0], [1], [0, 0, 1, 1], [], []>} : vector<256x384xf32>, vector<384x128xf32>, vector<256x128xf32> -> vector<256x128xf32>
    %c0_60 = arith.constant 0 : index
    %c0_61 = arith.constant 0 : index
    %61 = vector.load %arg7[%c0_60, %c0_61] : memref<256x128xf32, #tpu.memory_space<vmem>>, vector<256x128xf32>
    %62 = arith.addf %61, %60 : vector<256x128xf32>
    %c0_62 = arith.constant 0 : index
    %c0_63 = arith.constant 0 : index
    %63 = vector.load %arg7[%c0_62, %c0_63] : memref<256x128xf32, #tpu.memory_space<vmem>>, vector<256x128xf32>
    tpu.vector_store %arg7[%c0_62, %c0_63], %62 {strides = array<i32>} : memref<256x128xf32, #tpu.memory_space<vmem>>, vector<256x128xf32>,
    %c1_64 = arith.constant 1 : index
    %c2_65 = arith.constant 2 : index
    %c0_66 = arith.constant 0 : index
    %c0_67 = arith.constant 0 : index
    %64 = vector.load %arg6[%c1_64, %c2_65, %c0_66, %c0_67] : memref<6x10x10x128xf32, #tpu.memory_space<vmem>>, vector<4x8x10x128xf32>
    %65 = vector.extract_strided_slice %64 {offsets = [0, 0, 0, 0], sizes = [4, 8, 8, 128], strides = [1, 1, 1, 1]} : vector<4x8x10x128xf32> to vector<4x8x8x128xf32>
    %66 = vector.extract_strided_slice %64 {offsets = [0, 0, 1, 0], sizes = [4, 8, 8, 128], strides = [1, 1, 1, 1]} : vector<4x8x10x128xf32> to vector<4x8x8x128xf32>
    %67 = vector.extract_strided_slice %64 {offsets = [0, 0, 2, 0], sizes = [4, 8, 8, 128], strides = [1, 1, 1, 1]} : vector<4x8x10x128xf32> to vector<4x8x8x128xf32>
    %68 = tpu.concatenate %65, %66, %67 in 3 : vector<4x8x8x128xf32>, vector<4x8x8x128xf32>, vector<4x8x8x128xf32> -> vector<4x8x8x384xf32>
    %69 = vector.shape_cast %68 : vector<4x8x8x384xf32> to vector<256x384xf32>
    %c1_68 = arith.constant 1 : index
    %c2_69 = arith.constant 2 : index
    %c0_70 = arith.constant 0 : index
    %c0_71 = arith.constant 0 : index
    %70 = vector.load %arg3[%c1_68, %c2_69, %c0_70, %c0_71] : memref<3x3x384x128xf32, #tpu.memory_space<vmem>>, vector<1x1x384x128xf32>
    %71 = vector.shape_cast %70 : vector<1x1x384x128xf32> to vector<384x128xf32>
    %cst_72 = arith.constant dense<0.000000e+00> : vector<256x128xf32>
    %72 = tpu.matmul %69, %71, %cst_72 {dimension_numbers = #tpu.dot_dimension_numbers<[1], [0], [0], [1], [0, 0, 1, 1], [], []>} : vector<256x384xf32>, vector<384x128xf32>, vector<256x128xf32> -> vector<256x128xf32>
    %c0_73 = arith.constant 0 : index
    %c0_74 = arith.constant 0 : index
    %73 = vector.load %arg7[%c0_73, %c0_74] : memref<256x128xf32, #tpu.memory_space<vmem>>, vector<256x128xf32>
    %74 = arith.addf %73, %72 : vector<256x128xf32>
    %c0_75 = arith.constant 0 : index
    %c0_76 = arith.constant 0 : index
    %75 = vector.load %arg7[%c0_75, %c0_76] : memref<256x128xf32, #tpu.memory_space<vmem>>, vector<256x128xf32>
    tpu.vector_store %arg7[%c0_75, %c0_76], %74 {strides = array<i32>} : memref<256x128xf32, #tpu.memory_space<vmem>>, vector<256x128xf32>,
    %c2_77 = arith.constant 2 : index
    %c0_78 = arith.constant 0 : index
    %c0_79 = arith.constant 0 : index
    %c0_80 = arith.constant 0 : index
    %76 = vector.load %arg6[%c2_77, %c0_78, %c0_79, %c0_80] : memref<6x10x10x128xf32, #tpu.memory_space<vmem>>, vector<4x8x10x128xf32>
    %77 = vector.extract_strided_slice %76 {offsets = [0, 0, 0, 0], sizes = [4, 8, 8, 128], strides = [1, 1, 1, 1]} : vector<4x8x10x128xf32> to vector<4x8x8x128xf32>
    %78 = vector.extract_strided_slice %76 {offsets = [0, 0, 1, 0], sizes = [4, 8, 8, 128], strides = [1, 1, 1, 1]} : vector<4x8x10x128xf32> to vector<4x8x8x128xf32>
    %79 = vector.extract_strided_slice %76 {offsets = [0, 0, 2, 0], sizes = [4, 8, 8, 128], strides = [1, 1, 1, 1]} : vector<4x8x10x128xf32> to vector<4x8x8x128xf32>
    %80 = tpu.concatenate %77, %78, %79 in 3 : vector<4x8x8x128xf32>, vector<4x8x8x128xf32>, vector<4x8x8x128xf32> -> vector<4x8x8x384xf32>
    %81 = vector.shape_cast %80 : vector<4x8x8x384xf32> to vector<256x384xf32>
    %c2_81 = arith.constant 2 : index
    %c0_82 = arith.constant 0 : index
    %c0_83 = arith.constant 0 : index
    %c0_84 = arith.constant 0 : index
    %82 = vector.load %arg3[%c2_81, %c0_82, %c0_83, %c0_84] : memref<3x3x384x128xf32, #tpu.memory_space<vmem>>, vector<1x1x384x128xf32>
    %83 = vector.shape_cast %82 : vector<1x1x384x128xf32> to vector<384x128xf32>
    %cst_85 = arith.constant dense<0.000000e+00> : vector<256x128xf32>
    %84 = tpu.matmul %81, %83, %cst_85 {dimension_numbers = #tpu.dot_dimension_numbers<[1], [0], [0], [1], [0, 0, 1, 1], [], []>} : vector<256x384xf32>, vector<384x128xf32>, vector<256x128xf32> -> vector<256x128xf32>
    %c0_86 = arith.constant 0 : index
    %c0_87 = arith.constant 0 : index
    %85 = vector.load %arg7[%c0_86, %c0_87] : memref<256x128xf32, #tpu.memory_space<vmem>>, vector<256x128xf32>
    %86 = arith.addf %85, %84 : vector<256x128xf32>
    %c0_88 = arith.constant 0 : index
    %c0_89 = arith.constant 0 : index
    %87 = vector.load %arg7[%c0_88, %c0_89] : memref<256x128xf32, #tpu.memory_space<vmem>>, vector<256x128xf32>
    tpu.vector_store %arg7[%c0_88, %c0_89], %86 {strides = array<i32>} : memref<256x128xf32, #tpu.memory_space<vmem>>, vector<256x128xf32>,
    %c2_90 = arith.constant 2 : index
    %c1_91 = arith.constant 1 : index
    %c0_92 = arith.constant 0 : index
    %c0_93 = arith.constant 0 : index
    %88 = vector.load %arg6[%c2_90, %c1_91, %c0_92, %c0_93] : memref<6x10x10x128xf32, #tpu.memory_space<vmem>>, vector<4x8x10x128xf32>
    %89 = vector.extract_strided_slice %88 {offsets = [0, 0, 0, 0], sizes = [4, 8, 8, 128], strides = [1, 1, 1, 1]} : vector<4x8x10x128xf32> to vector<4x8x8x128xf32>
    %90 = vector.extract_strided_slice %88 {offsets = [0, 0, 1, 0], sizes = [4, 8, 8, 128], strides = [1, 1, 1, 1]} : vector<4x8x10x128xf32> to vector<4x8x8x128xf32>
    %91 = vector.extract_strided_slice %88 {offsets = [0, 0, 2, 0], sizes = [4, 8, 8, 128], strides = [1, 1, 1, 1]} : vector<4x8x10x128xf32> to vector<4x8x8x128xf32>
    %92 = tpu.concatenate %89, %90, %91 in 3 : vector<4x8x8x128xf32>, vector<4x8x8x128xf32>, vector<4x8x8x128xf32> -> vector<4x8x8x384xf32>
    %93 = vector.shape_cast %92 : vector<4x8x8x384xf32> to vector<256x384xf32>
    %c2_94 = arith.constant 2 : index
    %c1_95 = arith.constant 1 : index
    %c0_96 = arith.constant 0 : index
    %c0_97 = arith.constant 0 : index
    %94 = vector.load %arg3[%c2_94, %c1_95, %c0_96, %c0_97] : memref<3x3x384x128xf32, #tpu.memory_space<vmem>>, vector<1x1x384x128xf32>
    %95 = vector.shape_cast %94 : vector<1x1x384x128xf32> to vector<384x128xf32>
    %cst_98 = arith.constant dense<0.000000e+00> : vector<256x128xf32>
    %96 = tpu.matmul %93, %95, %cst_98 {dimension_numbers = #tpu.dot_dimension_numbers<[1], [0], [0], [1], [0, 0, 1, 1], [], []>} : vector<256x384xf32>, vector<384x128xf32>, vector<256x128xf32> -> vector<256x128xf32>
    %c0_99 = arith.constant 0 : index
    %c0_100 = arith.constant 0 : index
    %97 = vector.load %arg7[%c0_99, %c0_100] : memref<256x128xf32, #tpu.memory_space<vmem>>, vector<256x128xf32>
    %98 = arith.addf %97, %96 : vector<256x128xf32>
    %c0_101 = arith.constant 0 : index
    %c0_102 = arith.constant 0 : index
    %99 = vector.load %arg7[%c0_101, %c0_102] : memref<256x128xf32, #tpu.memory_space<vmem>>, vector<256x128xf32>
    tpu.vector_store %arg7[%c0_101, %c0_102], %98 {strides = array<i32>} : memref<256x128xf32, #tpu.memory_space<vmem>>, vector<256x128xf32>,
    %c2_103 = arith.constant 2 : index
    %c2_104 = arith.constant 2 : index
    %c0_105 = arith.constant 0 : index
    %c0_106 = arith.constant 0 : index
    %100 = vector.load %arg6[%c2_103, %c2_104, %c0_105, %c0_106] : memref<6x10x10x128xf32, #tpu.memory_space<vmem>>, vector<4x8x10x128xf32>
    %101 = vector.extract_strided_slice %100 {offsets = [0, 0, 0, 0], sizes = [4, 8, 8, 128], strides = [1, 1, 1, 1]} : vector<4x8x10x128xf32> to vector<4x8x8x128xf32>
    %102 = vector.extract_strided_slice %100 {offsets = [0, 0, 1, 0], sizes = [4, 8, 8, 128], strides = [1, 1, 1, 1]} : vector<4x8x10x128xf32> to vector<4x8x8x128xf32>
    %103 = vector.extract_strided_slice %100 {offsets = [0, 0, 2, 0], sizes = [4, 8, 8, 128], strides = [1, 1, 1, 1]} : vector<4x8x10x128xf32> to vector<4x8x8x128xf32>
    %104 = tpu.concatenate %101, %102, %103 in 3 : vector<4x8x8x128xf32>, vector<4x8x8x128xf32>, vector<4x8x8x128xf32> -> vector<4x8x8x384xf32>
    %105 = vector.shape_cast %104 : vector<4x8x8x384xf32> to vector<256x384xf32>
    %c2_107 = arith.constant 2 : index
    %c2_108 = arith.constant 2 : index
    %c0_109 = arith.constant 0 : index
    %c0_110 = arith.constant 0 : index
    %106 = vector.load %arg3[%c2_107, %c2_108, %c0_109, %c0_110] : memref<3x3x384x128xf32, #tpu.memory_space<vmem>>, vector<1x1x384x128xf32>
    %107 = vector.shape_cast %106 : vector<1x1x384x128xf32> to vector<384x128xf32>
    %cst_111 = arith.constant dense<0.000000e+00> : vector<256x128xf32>
    %108 = tpu.matmul %105, %107, %cst_111 {dimension_numbers = #tpu.dot_dimension_numbers<[1], [0], [0], [1], [0, 0, 1, 1], [], []>} : vector<256x384xf32>, vector<384x128xf32>, vector<256x128xf32> -> vector<256x128xf32>
    %c0_112 = arith.constant 0 : index
    %c0_113 = arith.constant 0 : index
    %109 = vector.load %arg7[%c0_112, %c0_113] : memref<256x128xf32, #tpu.memory_space<vmem>>, vector<256x128xf32>
    %110 = arith.addf %109, %108 : vector<256x128xf32>
    %c0_114 = arith.constant 0 : index
    %c0_115 = arith.constant 0 : index
    %111 = vector.load %arg7[%c0_114, %c0_115] : memref<256x128xf32, #tpu.memory_space<vmem>>, vector<256x128xf32>
    tpu.vector_store %arg7[%c0_114, %c0_115], %110 {strides = array<i32>} : memref<256x128xf32, #tpu.memory_space<vmem>>, vector<256x128xf32>,
    %c0_116 = arith.constant 0 : index
    %c0_117 = arith.constant 0 : index
    %112 = vector.load %arg7[%c0_116, %c0_117] : memref<256x128xf32, #tpu.memory_space<vmem>>, vector<256x128xf32>
    %c0_118 = arith.constant 0 : index
    %c0_119 = arith.constant 0 : index
    %113 = vector.load %arg4[%c0_118, %c0_119] : memref<1x128xf32, #tpu.memory_space<vmem>>, vector<1x128xf32>
    %114 = vector.broadcast %113 : vector<1x128xf32> to vector<256x128xf32>
    %115 = arith.addf %112, %114 : vector<256x128xf32>
    %cst_120 = arith.constant 0.000000e+00 : f32
    %116 = vector.broadcast %cst_120 : f32 to vector<256x128xf32>
    %117 = arith.maximumf %115, %116 : vector<256x128xf32>
    %118 = vector.shape_cast %117 : vector<256x128xf32> to vector<1x4x8x8x128xf32>
    %c0_121 = arith.constant 0 : index
    %c0_122 = arith.constant 0 : index
    %c0_123 = arith.constant 0 : index
    %c0_124 = arith.constant 0 : index
    %c0_125 = arith.constant 0 : index
    %119 = vector.load %arg5[%c0_121, %c0_122, %c0_123, %c0_124, %c0_125] : memref<1x4x8x8x128xf32, #tpu.memory_space<vmem>>, vector<1x4x8x8x128xf32>
    tpu.vector_store %arg5[%c0_121, %c0_122, %c0_123, %c0_124, %c0_125], %118 {strides = array<i32>} : memref<1x4x8x8x128xf32, #tpu.memory_space<vmem>>, vector<1x4x8x8x128xf32>,
    return
  }
  func.func @transform_1(%arg0: i32, %arg1: i32) -> (i32, i32, i32, i32) {
    %c0_i32 = arith.constant 0 : i32
    %c0_i32_0 = arith.constant 0 : i32
    %c0_i32_1 = arith.constant 0 : i32
    %c0_i32_2 = arith.constant 0 : i32
    %c0_i32_3 = arith.constant 0 : i32
    return %c0_i32, %c0_i32_0, %c0_i32_1, %c0_i32_2 : i32, i32, i32, i32
  }
  func.func @transform_2(%arg0: i32, %arg1: i32) -> (i32, i32) {
    %c0_i32 = arith.constant 0 : i32
    %c0_i32_0 = arith.constant 0 : i32
    %c0_i32_1 = arith.constant 0 : i32
    return %c0_i32, %c0_i32_0 : i32, i32
  }
  func.func @transform_3(%arg0: i32, %arg1: i32) -> (i32, i32, i32, i32, i32) {
    %c0_i32 = arith.constant 0 : i32
    %c0_i32_0 = arith.constant 0 : i32
    %c0_i32_1 = arith.constant 0 : i32
    %c0_i32_2 = arith.constant 0 : i32
    return %arg0, %arg1, %c0_i32, %c0_i32_0, %c0_i32_1 : i32, i32, i32, i32, i32
  }
}

</mosaic_0001>

<llo_original>
// kernel: a_call__.2
$region0: #{a_call__.2}
  #allocation0 [shape = 'u32[]', space=smem, size = 0x4, offset = 0x4, fixed_abs, tag = 'smem constant byte address 0x4 - core index']
  #allocation1 [shape = 'u32[72,128]{1,0:T(1,128)}', space=vmem, size = 0x9000, scoped, tag = 'internal scratch']
  #allocation2 [shape = 'f32[6,10,10,128]{3,2,1,0:T(8,128)}', space=vmem, size = 0x78000, scoped, tag = 'scratch operand']
  #allocation3 [shape = 'f32[256,128]{1,0:T(8,128)}', space=vmem, size = 0x20000, scoped, tag = 'scratch operand']
  #allocation4 [shape = 's32[1]{0}', space=sflag, size = 0x4, scoped, tag = 'scratch operand']
  #allocation5 [shape = 's32[]', space=sflag, size = 0x4, offset = 0, fixed_abs, tag = 'sflag constant byte address 0x0 - dummy sync flag']
  %s0 = inlined_call_operand.vmem [shape: f32[2,10,10,10,128], index: 0, kind: input, shape index: {}]
  %s1 = inlined_call_operand.vmem [shape: f32[3,3,384,128], index: 1, kind: input, shape index: {}]
  %s2 = inlined_call_operand.vmem [shape: f32[1,128], index: 2, kind: input, shape index: {}]
  %s3 = inlined_call_operand.vmem [shape: f32[2,8,8,8,128], index: 3, kind: output, shape index: {}]
  %s4 = sld [smem:[#allocation0]]
  $region63: #{a_call__.2} parent=0
    _
  %s6 = ssub.s32 1, %s4
  %s7 = scalar_select 0, %s6, %s4
  loop: start=0, step=1, limit=6
  $region2: #{a_call__.2} parent=0 // loop_pre_header
    _
  $region3: #{a_call__.2} parent=0 // loop_header
    %s9 = sphi 0, %s13
    %p10 = scmp.ge.s32.totalorder %s9, 6
    %s16 = sphi 0, %s28
    %s17 = sphi 0, %s24
    %s18 = sphi 0, %s16
    %s19 = sphi 0, %s17
    %s20 = sphi 0, %s18
    %s21 = sphi 0, %s19
    %s29 = sphi 0, %s29
    %s31 = sphi 0, %s29
    %s32 = sphi 0, %s31
    %s46 = sphi 0, %s32
    %s50 = sphi 0, %s50
    %s52 = sphi 0, %s50
    %s53 = sphi 0, %s52
    %s67 = sphi 0, %s53
    %s75 = sphi 0, %s77
    %s78 = sphi 0, %s75
    %s79 = sphi 0, %s78
    %s95 = sphi 0, %s79
  $region4: #{a_call__.2} parent=0 // loop_header_branch
    %12 = sbr.rel (%p10) target = $region8
  $region5: #{a_call__.2} parent=0 // loop_body
    %s14 = ssub.s32 %s9, 1
    %s15 = ssub.s32 %s9, 2
    %s22 = sadd.s32 1, %s17
    %p23 = scmp.ge.s32.totalorder %s22, 2
    %s24 = scalar_select %p23, 0, %s22
    %s25 = sadd.s32 1, %s16
    %s26 = scalar_select %p23, %s25, %s16
    %p27 = scmp.ge.s32.totalorder %s26, 2
    %s28 = scalar_select %p27, 0, %s26
    %s30 = sadd.s32 %s29, 1
    %p33 = scmp.eq.s32.totalorder %s9, 3
    %p34 = scmp.ne.s32.totalorder %s29, %s31
    %p35 = scmp.eq.s32.totalorder %s9, 0
    %p36 = por %p34, %p35
    %p37 = scmp.ne.s32.totalorder %s29, %s31
    %p38 = scmp.eq.s32.totalorder %s14, 3
    %p39 = por %p37, %p38
    %p40 = scmp.ne.s32.totalorder %s31, %s32
    %p41 = scmp.eq.s32.totalorder %s14, 0
    %p42 = por %p40, %p41
    %p43 = scmp.ne.s32.totalorder %s31, %s32
    %p44 = scmp.eq.s32.totalorder %s15, 3
    %p45 = por %p43, %p44
    %p47 = scmp.ne.s32.totalorder %s32, %s46
    %p48 = scmp.eq.s32.totalorder %s15, 0
    %p49 = por %p47, %p48
    %s51 = sadd.s32 %s50, 1
    %p54 = scmp.eq.s32.totalorder %s9, 3
    %p55 = scmp.ne.s32.totalorder %s50, %s52
    %p56 = scmp.eq.s32.totalorder %s9, 0
    %p57 = por %p55, %p56
    %p58 = scmp.ne.s32.totalorder %s50, %s52
    %p59 = scmp.eq.s32.totalorder %s14, 3
    %p60 = por %p58, %p59
    %p61 = scmp.ne.s32.totalorder %s52, %s53
    %p62 = scmp.eq.s32.totalorder %s14, 0
    %p63 = por %p61, %p62
    %p64 = scmp.ne.s32.totalorder %s52, %s53
    %p65 = scmp.eq.s32.totalorder %s15, 3
    %p66 = por %p64, %p65
    %p68 = scmp.ne.s32.totalorder %s53, %s67
    %p69 = scmp.eq.s32.totalorder %s15, 0
    %p70 = por %p68, %p69
    %s71 = ssub.s32 %s16, %s28
    %s72 = ssub.s32 %s17, %s24
    %s73 = sor.u32 %s71, %s72
    %p74 = scmp.eq.s32.totalorder %s73, 0
    %s76 = sadd.s32 %s75, 1
    %s77 = scalar_select %p74, %s75, %s76
    %p80 = pneg %p74
    %p81 = scmp.eq.s32.totalorder %s9, 3
    %p82 = por %p80, %p81
    %p83 = scmp.ne.s32.totalorder %s75, %s78
    %p84 = scmp.eq.s32.totalorder %s9, 0
    %p85 = por %p83, %p84
    %p86 = scmp.ne.s32.totalorder %s75, %s78
    %p87 = scmp.eq.s32.totalorder %s14, 3
    %p88 = por %p86, %p87
    %p89 = scmp.ne.s32.totalorder %s78, %s79
    %p90 = scmp.eq.s32.totalorder %s14, 0
    %p91 = por %p89, %p90
    %p92 = scmp.ne.s32.totalorder %s78, %s79
    %p93 = scmp.eq.s32.totalorder %s15, 3
    %p94 = por %p92, %p93
    %p96 = scmp.ne.s32.totalorder %s79, %s95
    %p97 = scmp.eq.s32.totalorder %s15, 0
    %p98 = por %p96, %p97
    %p99 = scmp.le.s32.totalorder 1, %s9
    %p100 = scmp.lt.s32.totalorder %s9, 5
    %p101 = pnand %p99, %p100
    %p102 = pneg %p101
    // Predicated region
    $region9: #{a_call__.2} parent=5 // pred_check
      _
    $region10: #{a_call__.2} parent=5 // pred_check_branch
      %104 = sbr.rel (%p101) target = $region12
    $region11: #{a_call__.2} parent=5 // pred_region
      %s105 = ssub.s32 %s9, 1
      // Predicated region
      $region13: #{a_call__.2} parent=11 // pred_check
        %p106 = pneg %p42
      $region14: #{a_call__.2} parent=11 // pred_check_branch
        %108 = sbr.rel (%p106) target = $region16
      $region15: #{a_call__.2} parent=11 // pred_region
        _
      $region16: #{a_call__.2} parent=11 // pred_fallthru
        _
      // Predicated region
      $region17: #{a_call__.2} parent=11 // pred_check
        %p109 = pneg %p63
      $region18: #{a_call__.2} parent=11 // pred_check_branch
        %111 = sbr.rel (%p109) target = $region20
      $region19: #{a_call__.2} parent=11 // pred_region
        _
      $region20: #{a_call__.2} parent=11 // pred_fallthru
        _
    $region12: #{a_call__.2} parent=5 // pred_fallthru
      _
    %p112 = scmp.lt.s32.totalorder %s9, 4
    // Predicated region
    $region21: #{a_call__.2} parent=5 // pred_check
      %p113 = pneg %p112
    $region22: #{a_call__.2} parent=5 // pred_check_branch
      %115 = sbr.rel (%p113) target = $region24
    $region23: #{a_call__.2} parent=5 // pred_region
      _
    $region24: #{a_call__.2} parent=5 // pred_fallthru
      _
    %p116 = scmp.le.s32.totalorder 1, %s9
    %p117 = scmp.lt.s32.totalorder %s9, 5
    %p118 = pnand %p116, %p117
    %p119 = pneg %p118
    // Predicated region
    $region25: #{a_call__.2} parent=5 // pred_check
      _
    $region26: #{a_call__.2} parent=5 // pred_check_branch
      %121 = sbr.rel (%p118) target = $region28
    $region27: #{a_call__.2} parent=5 // pred_region
      %s122 = ssub.s32 %s9, 1
      %p123 = pneg %p42
      %p124 = pneg %p39
      %p125 = pneg %p63
      %p126 = pneg %p60
      %p127 = pneg %p91
      %p128 = pneg %p88
      %s129 = smul.u32 4, %s19
      %p130 = scmp.lt.s32.totalorder %s18, 1
      %s131 = scalar_select %p130, %s18, 1
      %p132 = scmp.lt.s32.totalorder %s129, 7
      %s133 = scalar_select %p132, %s129, 7
      %s134 = smul.addr %s133, 8
      %s135 = smul.addr %s131, 64
      %s136 = sadd.s32 %s134, %s135
      %s137 = smul.addr %s136, 8
      %s138 = scalar_lea.vmem %s3, %s137
      %s139 = smul.u32 4, %s19
      %p140 = scmp.lt.s32.totalorder %s18, 1
      %s141 = scalar_select %p140, %s18, 1
      %p142 = scmp.lt.s32.totalorder %s139, 7
      %s143 = scalar_select %p142, %s139, 7
      %s144 = smul.addr %s143, 8
      %s145 = smul.addr %s141, 64
      %s146 = sadd.s32 %s144, %s145
      %s147 = smul.addr %s146, 8
      %s148 = scalar_lea.vmem %s3, %s147
      %s149 = smul.u32 4, %s19
      %s150 = smul.u32 %s19, 4
      %s151 = smul.u32 %s150, 160
      %s152 = smul.u32 %s18, 1600
      %s153 = sadd.s32 %s151, %s152
      %s154 = scalar_lea.vmem %s0, %s153
      // Predicated region
      $region29: #{a_call__.2} parent=27 // pred_check
        _
      $region30: #{a_call__.2} parent=27 // pred_check_branch
        %156 = sbr.rel (0) target = $region32
      $region31: #{a_call__.2} parent=27 // pred_region
        %s157 = scalar_lea.vmem %s154, 8
        %s158 = scalar_lea.vmem [#allocation2], 8
        loop: start=0, step=1, limit=1
        $region33: #{a_call__.2} parent=31 // loop_pre_header
          _
        $region34: #{a_call__.2} parent=31 // loop_header
          %s160 = sphi 0, %s164
          %p161 = scmp.ge.s32.totalorder %s160, 1
          %s165 = sphi %s154, %s154
          %s166 = sphi [#allocation2], [#allocation2]
        $region35: #{a_call__.2} parent=31 // loop_header_branch
          %163 = sbr.rel (%p161) target = $region39
        $region36: #{a_call__.2} parent=31 // loop_body
          %v167 = vld [vmem:[%s165] sm:$0xff]
          %168 = vst [vmem:[%s166] sm:$0xff] %v167
          %v169 = vld [vmem:[%s165 + $0x10] sm:$0xff]
          %170 = vst [vmem:[%s166 + $0x10] sm:$0xff] %v169
          %v171 = vld [vmem:[%s165 + $0x20] sm:$0xff]
          %172 = vst [vmem:[%s166 + $0x20] sm:$0xff] %v171
          %v173 = vld [vmem:[%s165 + $0x30] sm:$0xff]
          %174 = vst [vmem:[%s166 + $0x30] sm:$0xff] %v173
          %v175 = vld [vmem:[%s165 + $0x40] sm:$0xff]
          %176 = vst [vmem:[%s166 + $0x40] sm:$0xff] %v175
          %v177 = vld [vmem:[%s165 + $0x50] sm:$0xff]
          %178 = vst [vmem:[%s166 + $0x50] sm:$0xff] %v177
          %v179 = vld [vmem:[%s165 + $0x60] sm:$0xff]
          %180 = vst [vmem:[%s166 + $0x60] sm:$0xff] %v179
          %v181 = vld [vmem:[%s165 + $0x70] sm:$0xff]
          %182 = vst [vmem:[%s166 + $0x70] sm:$0xff] %v181
          %v183 = vld [vmem:[%s165 + $0x80] sm:$0xff]
          %184 = vst [vmem:[%s166 + $0x80] sm:$0xff] %v183
          %v185 = vld [vmem:[%s165 + $0x90] sm:$0xff]
          %186 = vst [vmem:[%s166 + $0x90] sm:$0xff] %v185
          %v187 = vld [vmem:[%s165 + $0xa0] sm:$0xff]
          %188 = vst [vmem:[%s166 + $0xa0] sm:$0xff] %v187
          %v189 = vld [vmem:[%s165 + $0xb0] sm:$0xff]
          %190 = vst [vmem:[%s166 + $0xb0] sm:$0xff] %v189
          %v191 = vld [vmem:[%s165 + $0xc0] sm:$0xff]
          %192 = vst [vmem:[%s166 + $0xc0] sm:$0xff] %v191
          %v193 = vld [vmem:[%s165 + $0xd0] sm:$0xff]
          %194 = vst [vmem:[%s166 + $0xd0] sm:$0xff] %v193
          %v195 = vld [vmem:[%s165 + $0xe0] sm:$0xff]
          %196 = vst [vmem:[%s166 + $0xe0] sm:$0xff] %v195
          %v197 = vld [vmem:[%s165 + $0xf0] sm:$0xff]
          %198 = vst [vmem:[%s166 + $0xf0] sm:$0xff] %v197
          %v199 = vld [vmem:[%s165 + $0x100] sm:$0xff]
          %200 = vst [vmem:[%s166 + $0x100] sm:$0xff] %v199
          %v201 = vld [vmem:[%s165 + $0x110] sm:$0xff]
          %202 = vst [vmem:[%s166 + $0x110] sm:$0xff] %v201
          %v203 = vld [vmem:[%s165 + $0x120] sm:$0xff]
          %204 = vst [vmem:[%s166 + $0x120] sm:$0xff] %v203
          %v205 = vld [vmem:[%s165 + $0x130] sm:$0xff]
          %206 = vst [vmem:[%s166 + $0x130] sm:$0xff] %v205
          %v207 = vld [vmem:[%s165 + $0x140] sm:$0xff]
          %208 = vst [vmem:[%s166 + $0x140] sm:$0xff] %v207
          %v209 = vld [vmem:[%s165 + $0x150] sm:$0xff]
          %210 = vst [vmem:[%s166 + $0x150] sm:$0xff] %v209
          %v211 = vld [vmem:[%s165 + $0x160] sm:$0xff]
          %212 = vst [vmem:[%s166 + $0x160] sm:$0xff] %v211
          %v213 = vld [vmem:[%s165 + $0x170] sm:$0xff]
          %214 = vst [vmem:[%s166 + $0x170] sm:$0xff] %v213
          %v215 = vld [vmem:[%s165 + $0x180] sm:$0xff]
          %216 = vst [vmem:[%s166 + $0x180] sm:$0xff] %v215
          %v217 = vld [vmem:[%s165 + $0x190] sm:$0xff]
          %218 = vst [vmem:[%s166 + $0x190] sm:$0xff] %v217
          %v219 = vld [vmem:[%s165 + $0x1a0] sm:$0xff]
          %220 = vst [vmem:[%s166 + $0x1a0] sm:$0xff] %v219
          %v221 = vld [vmem:[%s165 + $0x1b0] sm:$0xff]
          %222 = vst [vmem:[%s166 + $0x1b0] sm:$0xff] %v221
          %v223 = vld [vmem:[%s165 + $0x1c0] sm:$0xff]
          %224 = vst [vmem:[%s166 + $0x1c0] sm:$0xff] %v223
          %v225 = vld [vmem:[%s165 + $0x1d0] sm:$0xff]
          %226 = vst [vmem:[%s166 + $0x1d0] sm:$0xff] %v225
          %v227 = vld [vmem:[%s165 + $0x1e0] sm:$0xff]
          %228 = vst [vmem:[%s166 + $0x1e0] sm:$0xff] %v227
          %v229 = vld [vmem:[%s165 + $0x1f0] sm:$0xff]
          %230 = vst [vmem:[%s166 + $0x1f0] sm:$0xff] %v229
          %v231 = vld [vmem:[%s165 + $0x200] sm:$0xff]
          %232 = vst [vmem:[%s166 + $0x200] sm:$0xff] %v231
          %v233 = vld [vmem:[%s165 + $0x210] sm:$0xff]
          %234 = vst [vmem:[%s166 + $0x210] sm:$0xff] %v233
          %v235 = vld [vmem:[%s165 + $0x220] sm:$0xff]
          %236 = vst [vmem:[%s166 + $0x220] sm:$0xff] %v235
          %v237 = vld [vmem:[%s165 + $0x230] sm:$0xff]
          %238 = vst [vmem:[%s166 + $0x230] sm:$0xff] %v237
          %v239 = vld [vmem:[%s165 + $0x240] sm:$0xff]
          %240 = vst [vmem:[%s166 + $0x240] sm:$0xff] %v239
          %v241 = vld [vmem:[%s165 + $0x250] sm:$0xff]
          %242 = vst [vmem:[%s166 + $0x250] sm:$0xff] %v241
          %v243 = vld [vmem:[%s165 + $0x260] sm:$0xff]
          %244 = vst [vmem:[%s166 + $0x260] sm:$0xff] %v243
          %v245 = vld [vmem:[%s165 + $0x270] sm:$0xff]
          %246 = vst [vmem:[%s166 + $0x270] sm:$0xff] %v245
          %v247 = vld [vmem:[%s165 + $0x280] sm:$0xff]
          %248 = vst [vmem:[%s166 + $0x280] sm:$0xff] %v247
          %v249 = vld [vmem:[%s165 + $0x290] sm:$0xff]
          %250 = vst [vmem:[%s166 + $0x290] sm:$0xff] %v249
          %v251 = vld [vmem:[%s165 + $0x2a0] sm:$0xff]
          %252 = vst [vmem:[%s166 + $0x2a0] sm:$0xff] %v251
          %v253 = vld [vmem:[%s165 + $0x2b0] sm:$0xff]
          %254 = vst [vmem:[%s166 + $0x2b0] sm:$0xff] %v253
          %v255 = vld [vmem:[%s165 + $0x2c0] sm:$0xff]
          %256 = vst [vmem:[%s166 + $0x2c0] sm:$0xff] %v255
          %v257 = vld [vmem:[%s165 + $0x2d0] sm:$0xff]
          %258 = vst [vmem:[%s166 + $0x2d0] sm:$0xff] %v257
          %v259 = vld [vmem:[%s165 + $0x2e0] sm:$0xff]
          %260 = vst [vmem:[%s166 + $0x2e0] sm:$0xff] %v259
          %v261 = vld [vmem:[%s165 + $0x2f0] sm:$0xff]
          %262 = vst [vmem:[%s166 + $0x2f0] sm:$0xff] %v261
          %v263 = vld [vmem:[%s165 + $0x300] sm:$0xff]
          %264 = vst [vmem:[%s166 + $0x300] sm:$0xff] %v263
          %v265 = vld [vmem:[%s165 + $0x310] sm:$0xff]
          %266 = vst [vmem:[%s166 + $0x310] sm:$0xff] %v265
          %v267 = vld [vmem:[%s165 + $0x320] sm:$0xff]
          %268 = vst [vmem:[%s166 + $0x320] sm:$0xff] %v267
          %v269 = vld [vmem:[%s165 + $0x330] sm:$0xff]
          %270 = vst [vmem:[%s166 + $0x330] sm:$0xff] %v269
          %v271 = vld [vmem:[%s165 + $0x340] sm:$0xff]
          %272 = vst [vmem:[%s166 + $0x340] sm:$0xff] %v271
          %v273 = vld [vmem:[%s165 + $0x350] sm:$0xff]
          %274 = vst [vmem:[%s166 + $0x350] sm:$0xff] %v273
          %v275 = vld [vmem:[%s165 + $0x360] sm:$0xff]
          %276 = vst [vmem:[%s166 + $0x360] sm:$0xff] %v275
          %v277 = vld [vmem:[%s165 + $0x370] sm:$0xff]
          %278 = vst [vmem:[%s166 + $0x370] sm:$0xff] %v277
          %v279 = vld [vmem:[%s165 + $0x380] sm:$0xff]
          %280 = vst [vmem:[%s166 + $0x380] sm:$0xff] %v279
          %v281 = vld [vmem:[%s165 + $0x390] sm:$0xff]
          %282 = vst [vmem:[%s166 + $0x390] sm:$0xff] %v281
          %v283 = vld [vmem:[%s165 + $0x3a0] sm:$0xff]
          %284 = vst [vmem:[%s166 + $0x3a0] sm:$0xff] %v283
          %v285 = vld [vmem:[%s165 + $0x3b0] sm:$0xff]
          %286 = vst [vmem:[%s166 + $0x3b0] sm:$0xff] %v285
        $region37: #{a_call__.2} parent=31 // loop_footer
          %s164 = sadd.s32 1, %s160
        $region38: #{a_call__.2} parent=31 // loop_footer_branch
          %159 = sbr.rel target = $region34
        $region39: #{a_call__.2} parent=31 // loop_exit
          _
        %s288 = ssub.s32 4, 1
        loop: start=0, step=1, limit=1
        $region40: #{a_call__.2} parent=31 // loop_pre_header
          _
        $region41: #{a_call__.2} parent=31 // loop_header
          %s290 = sphi 0, %s294
          %p291 = scmp.ge.s32.totalorder %s290, 1
          %s295 = sphi %s157, %s157
          %s296 = sphi %s158, %s158
        $region42: #{a_call__.2} parent=31 // loop_header_branch
          %293 = sbr.rel (%p291) target = $region46
        $region43: #{a_call__.2} parent=31 // loop_body
          %v297 = vld [vmem:[%s295] sm:%s288]
          %298 = vst [vmem:[%s296] sm:%s288] %v297
          %v299 = vld [vmem:[%s295 + $0x10] sm:%s288]
          %300 = vst [vmem:[%s296 + $0x10] sm:%s288] %v299
          %v301 = vld [vmem:[%s295 + $0x20] sm:%s288]
          %302 = vst [vmem:[%s296 + $0x20] sm:%s288] %v301
          %v303 = vld [vmem:[%s295 + $0x30] sm:%s288]
          %304 = vst [vmem:[%s296 + $0x30] sm:%s288] %v303
          %v305 = vld [vmem:[%s295 + $0x40] sm:%s288]
          %306 = vst [vmem:[%s296 + $0x40] sm:%s288] %v305
          %v307 = vld [vmem:[%s295 + $0x50] sm:%s288]
          %308 = vst [vmem:[%s296 + $0x50] sm:%s288] %v307
          %v309 = vld [vmem:[%s295 + $0x60] sm:%s288]
          %310 = vst [vmem:[%s296 + $0x60] sm:%s288] %v309
          %v311 = vld [vmem:[%s295 + $0x70] sm:%s288]
          %312 = vst [vmem:[%s296 + $0x70] sm:%s288] %v311
          %v313 = vld [vmem:[%s295 + $0x80] sm:%s288]
          %314 = vst [vmem:[%s296 + $0x80] sm:%s288] %v313
          %v315 = vld [vmem:[%s295 + $0x90] sm:%s288]
          %316 = vst [vmem:[%s296 + $0x90] sm:%s288] %v315
          %v317 = vld [vmem:[%s295 + $0xa0] sm:%s288]
          %318 = vst [vmem:[%s296 + $0xa0] sm:%s288] %v317
          %v319 = vld [vmem:[%s295 + $0xb0] sm:%s288]
          %320 = vst [vmem:[%s296 + $0xb0] sm:%s288] %v319
          %v321 = vld [vmem:[%s295 + $0xc0] sm:%s288]
          %322 = vst [vmem:[%s296 + $0xc0] sm:%s288] %v321
          %v323 = vld [vmem:[%s295 + $0xd0] sm:%s288]
          %324 = vst [vmem:[%s296 + $0xd0] sm:%s288] %v323
          %v325 = vld [vmem:[%s295 + $0xe0] sm:%s288]
          %326 = vst [vmem:[%s296 + $0xe0] sm:%s288] %v325
          %v327 = vld [vmem:[%s295 + $0xf0] sm:%s288]
          %328 = vst [vmem:[%s296 + $0xf0] sm:%s288] %v327
          %v329 = vld [vmem:[%s295 + $0x100] sm:%s288]
          %330 = vst [vmem:[%s296 + $0x100] sm:%s288] %v329
          %v331 = vld [vmem:[%s295 + $0x110] sm:%s288]
          %332 = vst [vmem:[%s296 + $0x110] sm:%s288] %v331
          %v333 = vld [vmem:[%s295 + $0x120] sm:%s288]
          %334 = vst [vmem:[%s296 + $0x120] sm:%s288] %v333
          %v335 = vld [vmem:[%s295 + $0x130] sm:%s288]
          %336 = vst [vmem:[%s296 + $0x130] sm:%s288] %v335
          %v337 = vld [vmem:[%s295 + $0x140] sm:%s288]
          %338 = vst [vmem:[%s296 + $0x140] sm:%s288] %v337
          %v339 = vld [vmem:[%s295 + $0x150] sm:%s288]
          %340 = vst [vmem:[%s296 + $0x150] sm:%s288] %v339
          %v341 = vld [vmem:[%s295 + $0x160] sm:%s288]
          %342 = vst [vmem:[%s296 + $0x160] sm:%s288] %v341
          %v343 = vld [vmem:[%s295 + $0x170] sm:%s288]
          %344 = vst [vmem:[%s296 + $0x170] sm:%s288] %v343
          %v345 = vld [vmem:[%s295 + $0x180] sm:%s288]
          %346 = vst [vmem:[%s296 + $0x180] sm:%s288] %v345
          %v347 = vld [vmem:[%s295 + $0x190] sm:%s288]
          %348 = vst [vmem:[%s296 + $0x190] sm:%s288] %v347
          %v349 = vld [vmem:[%s295 + $0x1a0] sm:%s288]
          %350 = vst [vmem:[%s296 + $0x1a0] sm:%s288] %v349
          %v351 = vld [vmem:[%s295 + $0x1b0] sm:%s288]
          %352 = vst [vmem:[%s296 + $0x1b0] sm:%s288] %v351
          %v353 = vld [vmem:[%s295 + $0x1c0] sm:%s288]
          %354 = vst [vmem:[%s296 + $0x1c0] sm:%s288] %v353
          %v355 = vld [vmem:[%s295 + $0x1d0] sm:%s288]
          %356 = vst [vmem:[%s296 + $0x1d0] sm:%s288] %v355
          %v357 = vld [vmem:[%s295 + $0x1e0] sm:%s288]
          %358 = vst [vmem:[%s296 + $0x1e0] sm:%s288] %v357
          %v359 = vld [vmem:[%s295 + $0x1f0] sm:%s288]
          %360 = vst [vmem:[%s296 + $0x1f0] sm:%s288] %v359
          %v361 = vld [vmem:[%s295 + $0x200] sm:%s288]
          %362 = vst [vmem:[%s296 + $0x200] sm:%s288] %v361
          %v363 = vld [vmem:[%s295 + $0x210] sm:%s288]
          %364 = vst [vmem:[%s296 + $0x210] sm:%s288] %v363
          %v365 = vld [vmem:[%s295 + $0x220] sm:%s288]
          %366 = vst [vmem:[%s296 + $0x220] sm:%s288] %v365
          %v367 = vld [vmem:[%s295 + $0x230] sm:%s288]
          %368 = vst [vmem:[%s296 + $0x230] sm:%s288] %v367
          %v369 = vld [vmem:[%s295 + $0x240] sm:%s288]
          %370 = vst [vmem:[%s296 + $0x240] sm:%s288] %v369
          %v371 = vld [vmem:[%s295 + $0x250] sm:%s288]
          %372 = vst [vmem:[%s296 + $0x250] sm:%s288] %v371
          %v373 = vld [vmem:[%s295 + $0x260] sm:%s288]
          %374 = vst [vmem:[%s296 + $0x260] sm:%s288] %v373
          %v375 = vld [vmem:[%s295 + $0x270] sm:%s288]
          %376 = vst [vmem:[%s296 + $0x270] sm:%s288] %v375
          %v377 = vld [vmem:[%s295 + $0x280] sm:%s288]
          %378 = vst [vmem:[%s296 + $0x280] sm:%s288] %v377
          %v379 = vld [vmem:[%s295 + $0x290] sm:%s288]
          %380 = vst [vmem:[%s296 + $0x290] sm:%s288] %v379
          %v381 = vld [vmem:[%s295 + $0x2a0] sm:%s288]
          %382 = vst [vmem:[%s296 + $0x2a0] sm:%s288] %v381
          %v383 = vld [vmem:[%s295 + $0x2b0] sm:%s288]
          %384 = vst [vmem:[%s296 + $0x2b0] sm:%s288] %v383
          %v385 = vld [vmem:[%s295 + $0x2c0] sm:%s288]
          %386 = vst [vmem:[%s296 + $0x2c0] sm:%s288] %v385
          %v387 = vld [vmem:[%s295 + $0x2d0] sm:%s288]
          %388 = vst [vmem:[%s296 + $0x2d0] sm:%s288] %v387
          %v389 = vld [vmem:[%s295 + $0x2e0] sm:%s288]
          %390 = vst [vmem:[%s296 + $0x2e0] sm:%s288] %v389
          %v391 = vld [vmem:[%s295 + $0x2f0] sm:%s288]
          %392 = vst [vmem:[%s296 + $0x2f0] sm:%s288] %v391
          %v393 = vld [vmem:[%s295 + $0x300] sm:%s288]
          %394 = vst [vmem:[%s296 + $0x300] sm:%s288] %v393
          %v395 = vld [vmem:[%s295 + $0x310] sm:%s288]
          %396 = vst [vmem:[%s296 + $0x310] sm:%s288] %v395
          %v397 = vld [vmem:[%s295 + $0x320] sm:%s288]
          %398 = vst [vmem:[%s296 + $0x320] sm:%s288] %v397
          %v399 = vld [vmem:[%s295 + $0x330] sm:%s288]
          %400 = vst [vmem:[%s296 + $0x330] sm:%s288] %v399
          %v401 = vld [vmem:[%s295 + $0x340] sm:%s288]
          %402 = vst [vmem:[%s296 + $0x340] sm:%s288] %v401
          %v403 = vld [vmem:[%s295 + $0x350] sm:%s288]
          %404 = vst [vmem:[%s296 + $0x350] sm:%s288] %v403
          %v405 = vld [vmem:[%s295 + $0x360] sm:%s288]
          %406 = vst [vmem:[%s296 + $0x360] sm:%s288] %v405
          %v407 = vld [vmem:[%s295 + $0x370] sm:%s288]
          %408 = vst [vmem:[%s296 + $0x370] sm:%s288] %v407
          %v409 = vld [vmem:[%s295 + $0x380] sm:%s288]
          %410 = vst [vmem:[%s296 + $0x380] sm:%s288] %v409
          %v411 = vld [vmem:[%s295 + $0x390] sm:%s288]
          %412 = vst [vmem:[%s296 + $0x390] sm:%s288] %v411
          %v413 = vld [vmem:[%s295 + $0x3a0] sm:%s288]
          %414 = vst [vmem:[%s296 + $0x3a0] sm:%s288] %v413
          %v415 = vld [vmem:[%s295 + $0x3b0] sm:%s288]
          %416 = vst [vmem:[%s296 + $0x3b0] sm:%s288] %v415
        $region44: #{a_call__.2} parent=31 // loop_footer
          %s294 = sadd.s32 1, %s290
        $region45: #{a_call__.2} parent=31 // loop_footer_branch
          %289 = sbr.rel target = $region41
        $region46: #{a_call__.2} parent=31 // loop_exit
          _
      $region32: #{a_call__.2} parent=27 // pred_fallthru
        _
      // Predicated region
      $region47: #{a_call__.2} parent=27 // pred_check
        _
      $region48: #{a_call__.2} parent=27 // pred_check_branch
        %419 = sbr.rel (0) target = $region50
      $region49: #{a_call__.2} parent=27 // pred_region
        %420 = vsyncadd [#allocation4], 9600
      $region50: #{a_call__.2} parent=27 // pred_fallthru
        _
      %s421 = smul.u32 6, 10
      %s422 = smul.u32 %s421, 10
      %s423 = smul.u32 %s422, 1
      %s424 = sshll.u32 %s423, 4
      %425 = dma.done [#allocation4], %s424
      %v426 = vld [vmem:[#allocation2] sm:$0xff]
      %v427 = vld [vmem:[#allocation2 + $0x8] sm:$0x3]
      %v428 = vld [vmem:[#allocation2 + $0x10] sm:$0xff]
      %v429 = vld [vmem:[#allocation2 + $0x18] sm:$0x3]
      %v430 = vld [vmem:[#allocation2 + $0x20] sm:$0xff]
      %v431 = vld [vmem:[#allocation2 + $0x28] sm:$0x3]
      %v432 = vld [vmem:[#allocation2 + $0x30] sm:$0xff]
      %v433 = vld [vmem:[#allocation2 + $0x38] sm:$0x3]
      %v434 = vld [vmem:[#allocation2 + $0x40] sm:$0xff]
      %v435 = vld [vmem:[#allocation2 + $0x48] sm:$0x3]
      %v436 = vld [vmem:[#allocation2 + $0x50] sm:$0xff]
      %v437 = vld [vmem:[#allocation2 + $0x58] sm:$0x3]
      %v438 = vld [vmem:[#allocation2 + $0x60] sm:$0xff]
      %v439 = vld [vmem:[#allocation2 + $0x68] sm:$0x3]
      %v440 = vld [vmem:[#allocation2 + $0x70] sm:$0xff]
      %v441 = vld [vmem:[#allocation2 + $0x78] sm:$0x3]
      %v442 = vld [vmem:[#allocation2 + $0xa0] sm:$0xff]
      %v443 = vld [vmem:[#allocation2 + $0xa8] sm:$0x3]
      %v444 = vld [vmem:[#allocation2 + $0xb0] sm:$0xff]
      %v445 = vld [vmem:[#allocation2 + $0xb8] sm:$0x3]
      %v446 = vld [vmem:[#allocation2 + $0xc0] sm:$0xff]
      %v447 = vld [vmem:[#allocation2 + $0xc8] sm:$0x3]
      %v448 = vld [vmem:[#allocation2 + $0xd0] sm:$0xff]
      %v449 = vld [vmem:[#allocation2 + $0xd8] sm:$0x3]
      %v450 = vld [vmem:[#allocation2 + $0xe0] sm:$0xff]
      %v451 = vld [vmem:[#allocation2 + $0xe8] sm:$0x3]
      %v452 = vld [vmem:[#allocation2 + $0xf0] sm:$0xff]
      %v453 = vld [vmem:[#allocation2 + $0xf8] sm:$0x3]
      %v454 = vld [vmem:[#allocation2 + $0x100] sm:$0xff]
      %v455 = vld [vmem:[#allocation2 + $0x108] sm:$0x3]
      %v456 = vld [vmem:[#allocation2 + $0x110] sm:$0xff]
      %v457 = vld [vmem:[#allocation2 + $0x118] sm:$0x3]
      %v458 = vld [vmem:[#allocation2 + $0x140] sm:$0xff]
      %v459 = vld [vmem:[#allocation2 + $0x148] sm:$0x3]
      %v460 = vld [vmem:[#allocation2 + $0x150] sm:$0xff]
      %v461 = vld [vmem:[#allocation2 + $0x158] sm:$0x3]
      %v462 = vld [vmem:[#allocation2 + $0x160] sm:$0xff]
      %v463 = vld [vmem:[#allocation2 + $0x168] sm:$0x3]
      %v464 = vld [vmem:[#allocation2 + $0x170] sm:$0xff]
      %v465 = vld [vmem:[#allocation2 + $0x178] sm:$0x3]
      %v466 = vld [vmem:[#allocation2 + $0x180] sm:$0xff]
      %v467 = vld [vmem:[#allocation2 + $0x188] sm:$0x3]
      %v468 = vld [vmem:[#allocation2 + $0x190] sm:$0xff]
      %v469 = vld [vmem:[#allocation2 + $0x198] sm:$0x3]
      %v470 = vld [vmem:[#allocation2 + $0x1a0] sm:$0xff]
      %v471 = vld [vmem:[#allocation2 + $0x1a8] sm:$0x3]
      %v472 = vld [vmem:[#allocation2 + $0x1b0] sm:$0xff]
      %v473 = vld [vmem:[#allocation2 + $0x1b8] sm:$0x3]
      %v474 = vld [vmem:[#allocation2 + $0x1e0] sm:$0xff]
      %v475 = vld [vmem:[#allocation2 + $0x1e8] sm:$0x3]
      %v476 = vld [vmem:[#allocation2 + $0x1f0] sm:$0xff]
      %v477 = vld [vmem:[#allocation2 + $0x1f8] sm:$0x3]
      %v478 = vld [vmem:[#allocation2 + $0x200] sm:$0xff]
      %v479 = vld [vmem:[#allocation2 + $0x208] sm:$0x3]
      %v480 = vld [vmem:[#allocation2 + $0x210] sm:$0xff]
      %v481 = vld [vmem:[#allocation2 + $0x218] sm:$0x3]
      %v482 = vld [vmem:[#allocation2 + $0x220] sm:$0xff]
      %v483 = vld [vmem:[#allocation2 + $0x228] sm:$0x3]
      %v484 = vld [vmem:[#allocation2 + $0x230] sm:$0xff]
      %v485 = vld [vmem:[#allocation2 + $0x238] sm:$0x3]
      %v486 = vld [vmem:[#allocation2 + $0x240] sm:$0xff]
      %v487 = vld [vmem:[#allocation2 + $0x248] sm:$0x3]
      %v488 = vld [vmem:[#allocation2 + $0x250] sm:$0xff]
      %v489 = vld [vmem:[#allocation2 + $0x258] sm:$0x3]
      %vm554 = vcmask 1046528
      %v555 = vrot.slane %v426, 1
      %v556 = vrot.slane %v427, 1
      %v557 = vsel %vm554, %v555, %v556
      %v558 = vrot.slane %v428, 1
      %v559 = vrot.slane %v429, 1
      %v560 = vsel %vm554, %v558, %v559
      %v561 = vrot.slane %v430, 1
      %v562 = vrot.slane %v431, 1
      %v563 = vsel %vm554, %v561, %v562
      %v564 = vrot.slane %v432, 1
      %v565 = vrot.slane %v433, 1
      %v566 = vsel %vm554, %v564, %v565
      %v567 = vrot.slane %v434, 1
      %v568 = vrot.slane %v435, 1
      %v569 = vsel %vm554, %v567, %v568
      %v570 = vrot.slane %v436, 1
      %v571 = vrot.slane %v437, 1
      %v572 = vsel %vm554, %v570, %v571
      %v573 = vrot.slane %v438, 1
      %v574 = vrot.slane %v439, 1
      %v575 = vsel %vm554, %v573, %v574
      %v576 = vrot.slane %v440, 1
      %v577 = vrot.slane %v441, 1
      %v578 = vsel %vm554, %v576, %v577
      %v579 = vrot.slane %v442, 1
      %v580 = vrot.slane %v443, 1
      %v581 = vsel %vm554, %v579, %v580
      %v582 = vrot.slane %v444, 1
      %v583 = vrot.slane %v445, 1
      %v584 = vsel %vm554, %v582, %v583
      %v585 = vrot.slane %v446, 1
      %v586 = vrot.slane %v447, 1
      %v587 = vsel %vm554, %v585, %v586
      %v588 = vrot.slane %v448, 1
      %v589 = vrot.slane %v449, 1
      %v590 = vsel %vm554, %v588, %v589
      %v591 = vrot.slane %v450, 1
      %v592 = vrot.slane %v451, 1
      %v593 = vsel %vm554, %v591, %v592
      %v594 = vrot.slane %v452, 1
      %v595 = vrot.slane %v453, 1
      %v596 = vsel %vm554, %v594, %v595
      %v597 = vrot.slane %v454, 1
      %v598 = vrot.slane %v455, 1
      %v599 = vsel %vm554, %v597, %v598
      %v600 = vrot.slane %v456, 1
      %v601 = vrot.slane %v457, 1
      %v602 = vsel %vm554, %v600, %v601
      %v603 = vrot.slane %v458, 1
      %v604 = vrot.slane %v459, 1
      %v605 = vsel %vm554, %v603, %v604
      %v606 = vrot.slane %v460, 1
      %v607 = vrot.slane %v461, 1
      %v608 = vsel %vm554, %v606, %v607
      %v609 = vrot.slane %v462, 1
      %v610 = vrot.slane %v463, 1
      %v611 = vsel %vm554, %v609, %v610
      %v612 = vrot.slane %v464, 1
      %v613 = vrot.slane %v465, 1
      %v614 = vsel %vm554, %v612, %v613
      %v615 = vrot.slane %v466, 1
      %v616 = vrot.slane %v467, 1
      %v617 = vsel %vm554, %v615, %v616
      %v618 = vrot.slane %v468, 1
      %v619 = vrot.slane %v469, 1
      %v620 = vsel %vm554, %v618, %v619
      %v621 = vrot.slane %v470, 1
      %v622 = vrot.slane %v471, 1
      %v623 = vsel %vm554, %v621, %v622
      %v624 = vrot.slane %v472, 1
      %v625 = vrot.slane %v473, 1
      %v626 = vsel %vm554, %v624, %v625
      %v627 = vrot.slane %v474, 1
      %v628 = vrot.slane %v475, 1
      %v629 = vsel %vm554, %v627, %v628
      %v630 = vrot.slane %v476, 1
      %v631 = vrot.slane %v477, 1
      %v632 = vsel %vm554, %v630, %v631
      %v633 = vrot.slane %v478, 1
      %v634 = vrot.slane %v479, 1
      %v635 = vsel %vm554, %v633, %v634
      %v636 = vrot.slane %v480, 1
      %v637 = vrot.slane %v481, 1
      %v638 = vsel %vm554, %v636, %v637
      %v639 = vrot.slane %v482, 1
      %v640 = vrot.slane %v483, 1
      %v641 = vsel %vm554, %v639, %v640
      %v642 = vrot.slane %v484, 1
      %v643 = vrot.slane %v485, 1
      %v644 = vsel %vm554, %v642, %v643
      %v645 = vrot.slane %v486, 1
      %v646 = vrot.slane %v487, 1
      %v647 = vsel %vm554, %v645, %v646
      %v648 = vrot.slane %v488, 1
      %v649 = vrot.slane %v489, 1
      %v650 = vsel %vm554, %v648, %v649
      %vm683 = vcmask 1045504
      %v684 = vrot.slane %v426, 2
      %v685 = vrot.slane %v427, 2
      %v686 = vsel %vm683, %v684, %v685
      %v687 = vrot.slane %v428, 2
      %v688 = vrot.slane %v429, 2
      %v689 = vsel %vm683, %v687, %v688
      %v690 = vrot.slane %v430, 2
      %v691 = vrot.slane %v431, 2
      %v692 = vsel %vm683, %v690, %v691
      %v693 = vrot.slane %v432, 2
      %v694 = vrot.slane %v433, 2
      %v695 = vsel %vm683, %v693, %v694
      %v696 = vrot.slane %v434, 2
      %v697 = vrot.slane %v435, 2
      %v698 = vsel %vm683, %v696, %v697
      %v699 = vrot.slane %v436, 2
      %v700 = vrot.slane %v437, 2
      %v701 = vsel %vm683, %v699, %v700
      %v702 = vrot.slane %v438, 2
      %v703 = vrot.slane %v439, 2
      %v704 = vsel %vm683, %v702, %v703
      %v705 = vrot.slane %v440, 2
      %v706 = vrot.slane %v441, 2
      %v707 = vsel %vm683, %v705, %v706
      %v708 = vrot.slane %v442, 2
      %v709 = vrot.slane %v443, 2
      %v710 = vsel %vm683, %v708, %v709
      %v711 = vrot.slane %v444, 2
      %v712 = vrot.slane %v445, 2
      %v713 = vsel %vm683, %v711, %v712
      %v714 = vrot.slane %v446, 2
      %v715 = vrot.slane %v447, 2
      %v716 = vsel %vm683, %v714, %v715
      %v717 = vrot.slane %v448, 2
      %v718 = vrot.slane %v449, 2
      %v719 = vsel %vm683, %v717, %v718
      %v720 = vrot.slane %v450, 2
      %v721 = vrot.slane %v451, 2
      %v722 = vsel %vm683, %v720, %v721
      %v723 = vrot.slane %v452, 2
      %v724 = vrot.slane %v453, 2
      %v725 = vsel %vm683, %v723, %v724
      %v726 = vrot.slane %v454, 2
      %v727 = vrot.slane %v455, 2
      %v728 = vsel %vm683, %v726, %v727
      %v729 = vrot.slane %v456, 2
      %v730 = vrot.slane %v457, 2
      %v731 = vsel %vm683, %v729, %v730
      %v732 = vrot.slane %v458, 2
      %v733 = vrot.slane %v459, 2
      %v734 = vsel %vm683, %v732, %v733
      %v735 = vrot.slane %v460, 2
      %v736 = vrot.slane %v461, 2
      %v737 = vsel %vm683, %v735, %v736
      %v738 = vrot.slane %v462, 2
      %v739 = vrot.slane %v463, 2
      %v740 = vsel %vm683, %v738, %v739
      %v741 = vrot.slane %v464, 2
      %v742 = vrot.slane %v465, 2
      %v743 = vsel %vm683, %v741, %v742
      %v744 = vrot.slane %v466, 2
      %v745 = vrot.slane %v467, 2
      %v746 = vsel %vm683, %v744, %v745
      %v747 = vrot.slane %v468, 2
      %v748 = vrot.slane %v469, 2
      %v749 = vsel %vm683, %v747, %v748
      %v750 = vrot.slane %v470, 2
      %v751 = vrot.slane %v471, 2
      %v752 = vsel %vm683, %v750, %v751
      %v753 = vrot.slane %v472, 2
      %v754 = vrot.slane %v473, 2
      %v755 = vsel %vm683, %v753, %v754
      %v756 = vrot.slane %v474, 2
      %v757 = vrot.slane %v475, 2
      %v758 = vsel %vm683, %v756, %v757
      %v759 = vrot.slane %v476, 2
      %v760 = vrot.slane %v477, 2
      %v761 = vsel %vm683, %v759, %v760
      %v762 = vrot.slane %v478, 2
      %v763 = vrot.slane %v479, 2
      %v764 = vsel %vm683, %v762, %v763
      %v765 = vrot.slane %v480, 2
      %v766 = vrot.slane %v481, 2
      %v767 = vsel %vm683, %v765, %v766
      %v768 = vrot.slane %v482, 2
      %v769 = vrot.slane %v483, 2
      %v770 = vsel %vm683, %v768, %v769
      %v771 = vrot.slane %v484, 2
      %v772 = vrot.slane %v485, 2
      %v773 = vsel %vm683, %v771, %v772
      %v774 = vrot.slane %v486, 2
      %v775 = vrot.slane %v487, 2
      %v776 = vsel %vm683, %v774, %v775
      %v777 = vrot.slane %v488, 2
      %v778 = vrot.slane %v489, 2
      %v779 = vsel %vm683, %v777, %v778
      %v812 = vld [vmem:[%s1] sm:$0xff]
      %v813 = vld [vmem:[%s1 + $0x8] sm:$0xff]
      %v814 = vld [vmem:[%s1 + $0x10] sm:$0xff]
      %v815 = vld [vmem:[%s1 + $0x18] sm:$0xff]
      %v816 = vld [vmem:[%s1 + $0x20] sm:$0xff]
      %v817 = vld [vmem:[%s1 + $0x28] sm:$0xff]
      %v818 = vld [vmem:[%s1 + $0x30] sm:$0xff]
      %v819 = vld [vmem:[%s1 + $0x38] sm:$0xff]
      %v820 = vld [vmem:[%s1 + $0x40] sm:$0xff]
      %v821 = vld [vmem:[%s1 + $0x48] sm:$0xff]
      %v822 = vld [vmem:[%s1 + $0x50] sm:$0xff]
      %v823 = vld [vmem:[%s1 + $0x58] sm:$0xff]
      %v824 = vld [vmem:[%s1 + $0x60] sm:$0xff]
      %v825 = vld [vmem:[%s1 + $0x68] sm:$0xff]
      %v826 = vld [vmem:[%s1 + $0x70] sm:$0xff]
      %v827 = vld [vmem:[%s1 + $0x78] sm:$0xff]
      %v828 = vld [vmem:[%s1 + $0x80] sm:$0xff]
      %v829 = vld [vmem:[%s1 + $0x88] sm:$0xff]
      %v830 = vld [vmem:[%s1 + $0x90] sm:$0xff]
      %v831 = vld [vmem:[%s1 + $0x98] sm:$0xff]
      %v832 = vld [vmem:[%s1 + $0xa0] sm:$0xff]
      %v833 = vld [vmem:[%s1 + $0xa8] sm:$0xff]
      %v834 = vld [vmem:[%s1 + $0xb0] sm:$0xff]
      %v835 = vld [vmem:[%s1 + $0xb8] sm:$0xff]
      %v836 = vld [vmem:[%s1 + $0xc0] sm:$0xff]
      %v837 = vld [vmem:[%s1 + $0xc8] sm:$0xff]
      %v838 = vld [vmem:[%s1 + $0xd0] sm:$0xff]
      %v839 = vld [vmem:[%s1 + $0xd8] sm:$0xff]
      %v840 = vld [vmem:[%s1 + $0xe0] sm:$0xff]
      %v841 = vld [vmem:[%s1 + $0xe8] sm:$0xff]
      %v842 = vld [vmem:[%s1 + $0xf0] sm:$0xff]
      %v843 = vld [vmem:[%s1 + $0xf8] sm:$0xff]
      %v844 = vld [vmem:[%s1 + $0x100] sm:$0xff]
      %v845 = vld [vmem:[%s1 + $0x108] sm:$0xff]
      %v846 = vld [vmem:[%s1 + $0x110] sm:$0xff]
      %v847 = vld [vmem:[%s1 + $0x118] sm:$0xff]
      %v848 = vld [vmem:[%s1 + $0x120] sm:$0xff]
      %v849 = vld [vmem:[%s1 + $0x128] sm:$0xff]
      %v850 = vld [vmem:[%s1 + $0x130] sm:$0xff]
      %v851 = vld [vmem:[%s1 + $0x138] sm:$0xff]
      %v852 = vld [vmem:[%s1 + $0x140] sm:$0xff]
      %v853 = vld [vmem:[%s1 + $0x148] sm:$0xff]
      %v854 = vld [vmem:[%s1 + $0x150] sm:$0xff]
      %v855 = vld [vmem:[%s1 + $0x158] sm:$0xff]
      %v856 = vld [vmem:[%s1 + $0x160] sm:$0xff]
      %v857 = vld [vmem:[%s1 + $0x168] sm:$0xff]
      %v858 = vld [vmem:[%s1 + $0x170] sm:$0xff]
      %v859 = vld [vmem:[%s1 + $0x178] sm:$0xff]
      %860 = vmatpush.msra.mxu0 %v827
      %861 = vmatpush.msra.mxu0 %v826
      %862 = vmatpush.msra.mxu0 %v825
      %863 = vmatpush.msra.mxu0 %v824
      %864 = vmatpush.msra.mxu0 %v823
      %865 = vmatpush.msra.mxu0 %v822
      %866 = vmatpush.msra.mxu0 %v821
      %867 = vmatpush.msra.mxu0 %v820
      %868 = vmatpush.msra.mxu0 %v819
      %869 = vmatpush.msra.mxu0 %v818
      %870 = vmatpush.msra.mxu0 %v817
      %871 = vmatpush.msra.mxu0 %v816
      %872 = vmatpush.msra.mxu0 %v815
      %873 = vmatpush.msra.mxu0 %v814
      %874 = vmatpush.msra.mxu0 %v813
      %875 = vmatpush.msra.mxu0 %v812
      %876 = vmatmul.f32.gmra.mxu0 %v426
      %v877 = vpop.f32.mrf.mxu0
      %v878 = vadd.f32 0.0, %v877
      %879 = vmatmul.f32.gmra.mxu0 %v428
      %v880 = vpop.f32.mrf.mxu0
      %v881 = vadd.f32 0.0, %v880
      %882 = vmatmul.f32.gmra.mxu0 %v430
      %v883 = vpop.f32.mrf.mxu0
      %v884 = vadd.f32 0.0, %v883
      %885 = vmatmul.f32.gmra.mxu0 %v432
      %v886 = vpop.f32.mrf.mxu0
      %v887 = vadd.f32 0.0, %v886
      %888 = vmatmul.f32.gmra.mxu0 %v434
      %v889 = vpop.f32.mrf.mxu0
      %v890 = vadd.f32 0.0, %v889
      %891 = vmatmul.f32.gmra.mxu0 %v436
      %v892 = vpop.f32.mrf.mxu0
      %v893 = vadd.f32 0.0, %v892
      %894 = vmatmul.f32.gmra.mxu0 %v438
      %v895 = vpop.f32.mrf.mxu0
      %v896 = vadd.f32 0.0, %v895
      %897 = vmatmul.f32.gmra.mxu0 %v440
      %v898 = vpop.f32.mrf.mxu0
      %v899 = vadd.f32 0.0, %v898
      %900 = vmatmul.f32.gmra.mxu0 %v442
      %v901 = vpop.f32.mrf.mxu0
      %v902 = vadd.f32 0.0, %v901
      %903 = vmatmul.f32.gmra.mxu0 %v444
      %v904 = vpop.f32.mrf.mxu0
      %v905 = vadd.f32 0.0, %v904
      %906 = vmatmul.f32.gmra.mxu0 %v446
      %v907 = vpop.f32.mrf.mxu0
      %v908 = vadd.f32 0.0, %v907
      %909 = vmatmul.f32.gmra.mxu0 %v448
      %v910 = vpop.f32.mrf.mxu0
      %v911 = vadd.f32 0.0, %v910
      %912 = vmatmul.f32.gmra.mxu0 %v450
      %v913 = vpop.f32.mrf.mxu0
      %v914 = vadd.f32 0.0, %v913
      %915 = vmatmul.f32.gmra.mxu0 %v452
      %v916 = vpop.f32.mrf.mxu0
      %v917 = vadd.f32 0.0, %v916
      %918 = vmatmul.f32.gmra.mxu0 %v454
      %v919 = vpop.f32.mrf.mxu0
      %v920 = vadd.f32 0.0, %v919
      %921 = vmatmul.f32.gmra.mxu0 %v456
      %v922 = vpop.f32.mrf.mxu0
      %v923 = vadd.f32 0.0, %v922
      %924 = vmatmul.f32.gmra.mxu0 %v458
      %v925 = vpop.f32.mrf.mxu0
      %v926 = vadd.f32 0.0, %v925
      %927 = vmatmul.f32.gmra.mxu0 %v460
      %v928 = vpop.f32.mrf.mxu0
      %v929 = vadd.f32 0.0, %v928
      %930 = vmatmul.f32.gmra.mxu0 %v462
      %v931 = vpop.f32.mrf.mxu0
      %v932 = vadd.f32 0.0, %v931
      %933 = vmatmul.f32.gmra.mxu0 %v464
      %v934 = vpop.f32.mrf.mxu0
      %v935 = vadd.f32 0.0, %v934
      %936 = vmatmul.f32.gmra.mxu0 %v466
      %v937 = vpop.f32.mrf.mxu0
      %v938 = vadd.f32 0.0, %v937
      %939 = vmatmul.f32.gmra.mxu0 %v468
      %v940 = vpop.f32.mrf.mxu0
      %v941 = vadd.f32 0.0, %v940
      %942 = vmatmul.f32.gmra.mxu0 %v470
      %v943 = vpop.f32.mrf.mxu0
      %v944 = vadd.f32 0.0, %v943
      %945 = vmatmul.f32.gmra.mxu0 %v472
      %v946 = vpop.f32.mrf.mxu0
      %v947 = vadd.f32 0.0, %v946
      %948 = vmatmul.f32.gmra.mxu0 %v474
      %v949 = vpop.f32.mrf.mxu0
      %v950 = vadd.f32 0.0, %v949
      %951 = vmatmul.f32.gmra.mxu0 %v476
      %v952 = vpop.f32.mrf.mxu0
      %v953 = vadd.f32 0.0, %v952
      %954 = vmatmul.f32.gmra.mxu0 %v478
      %v955 = vpop.f32.mrf.mxu0
      %v956 = vadd.f32 0.0, %v955
      %957 = vmatmul.f32.gmra.mxu0 %v480
      %v958 = vpop.f32.mrf.mxu0
      %v959 = vadd.f32 0.0, %v958
      %960 = vmatmul.f32.gmra.mxu0 %v482
      %v961 = vpop.f32.mrf.mxu0
      %v962 = vadd.f32 0.0, %v961
      %963 = vmatmul.f32.gmra.mxu0 %v484
      %v964 = vpop.f32.mrf.mxu0
      %v965 = vadd.f32 0.0, %v964
      %966 = vmatmul.f32.gmra.mxu0 %v486
      %v967 = vpop.f32.mrf.mxu0
      %v968 = vadd.f32 0.0, %v967
      %969 = vmatmul.f32.gmra.mxu0 %v488
      %v970 = vpop.f32.mrf.mxu0
      %v971 = vadd.f32 0.0, %v970
      %972 = vdwg.mxu0
      %973 = vmatpush.msra.mxu0 %v843
      %974 = vmatpush.msra.mxu0 %v842
      %975 = vmatpush.msra.mxu0 %v841
      %976 = vmatpush.msra.mxu0 %v840
      %977 = vmatpush.msra.mxu0 %v839
      %978 = vmatpush.msra.mxu0 %v838
      %979 = vmatpush.msra.mxu0 %v837
      %980 = vmatpush.msra.mxu0 %v836
      %981 = vmatpush.msra.mxu0 %v835
      %982 = vmatpush.msra.mxu0 %v834
      %983 = vmatpush.msra.mxu0 %v833
      %984 = vmatpush.msra.mxu0 %v832
      %985 = vmatpush.msra.mxu0 %v831
      %986 = vmatpush.msra.mxu0 %v830
      %987 = vmatpush.msra.mxu0 %v829
      %988 = vmatpush.msra.mxu0 %v828
      %989 = vmatmul.f32.gmra.mxu0 %v557
      %v990 = vpop.f32.mrf.mxu0
      %v991 = vadd.f32 %v878, %v990
      %992 = vmatmul.f32.gmra.mxu0 %v560
      %v993 = vpop.f32.mrf.mxu0
      %v994 = vadd.f32 %v881, %v993
      %995 = vmatmul.f32.gmra.mxu0 %v563
      %v996 = vpop.f32.mrf.mxu0
      %v997 = vadd.f32 %v884, %v996
      %998 = vmatmul.f32.gmra.mxu0 %v566
      %v999 = vpop.f32.mrf.mxu0
      %v1000 = vadd.f32 %v887, %v999
      %1001 = vmatmul.f32.gmra.mxu0 %v569
      %v1002 = vpop.f32.mrf.mxu0
      %v1003 = vadd.f32 %v890, %v1002
      %1004 = vmatmul.f32.gmra.mxu0 %v572
      %v1005 = vpop.f32.mrf.mxu0
      %v1006 = vadd.f32 %v893, %v1005
      %1007 = vmatmul.f32.gmra.mxu0 %v575
      %v1008 = vpop.f32.mrf.mxu0
      %v1009 = vadd.f32 %v896, %v1008
      %1010 = vmatmul.f32.gmra.mxu0 %v578
      %v1011 = vpop.f32.mrf.mxu0
      %v1012 = vadd.f32 %v899, %v1011
      %1013 = vmatmul.f32.gmra.mxu0 %v581
      %v1014 = vpop.f32.mrf.mxu0
      %v1015 = vadd.f32 %v902, %v1014
      %1016 = vmatmul.f32.gmra.mxu0 %v584
      %v1017 = vpop.f32.mrf.mxu0
      %v1018 = vadd.f32 %v905, %v1017
      %1019 = vmatmul.f32.gmra.mxu0 %v587
      %v1020 = vpop.f32.mrf.mxu0
      %v1021 = vadd.f32 %v908, %v1020
      %1022 = vmatmul.f32.gmra.mxu0 %v590
      %v1023 = vpop.f32.mrf.mxu0
      %v1024 = vadd.f32 %v911, %v1023
      %1025 = vmatmul.f32.gmra.mxu0 %v593
      %v1026 = vpop.f32.mrf.mxu0
      %v1027 = vadd.f32 %v914, %v1026
      %1028 = vmatmul.f32.gmra.mxu0 %v596
      %v1029 = vpop.f32.mrf.mxu0
      %v1030 = vadd.f32 %v917, %v1029
      %1031 = vmatmul.f32.gmra.mxu0 %v599
      %v1032 = vpop.f32.mrf.mxu0
      %v1033 = vadd.f32 %v920, %v1032
      %1034 = vmatmul.f32.gmra.mxu0 %v602
      %v1035 = vpop.f32.mrf.mxu0
      %v1036 = vadd.f32 %v923, %v1035
      %1037 = vmatmul.f32.gmra.mxu0 %v605
      %v1038 = vpop.f32.mrf.mxu0
      %v1039 = vadd.f32 %v926, %v1038
      %1040 = vmatmul.f32.gmra.mxu0 %v608
      %v1041 = vpop.f32.mrf.mxu0
      %v1042 = vadd.f32 %v929, %v1041
      %1043 = vmatmul.f32.gmra.mxu0 %v611
      %v1044 = vpop.f32.mrf.mxu0
      %v1045 = vadd.f32 %v932, %v1044
      %1046 = vmatmul.f32.gmra.mxu0 %v614
      %v1047 = vpop.f32.mrf.mxu0
      %v1048 = vadd.f32 %v935, %v1047
      %1049 = vmatmul.f32.gmra.mxu0 %v617
      %v1050 = vpop.f32.mrf.mxu0
      %v1051 = vadd.f32 %v938, %v1050
      %1052 = vmatmul.f32.gmra.mxu0 %v620
      %v1053 = vpop.f32.mrf.mxu0
      %v1054 = vadd.f32 %v941, %v1053
      %1055 = vmatmul.f32.gmra.mxu0 %v623
      %v1056 = vpop.f32.mrf.mxu0
      %v1057 = vadd.f32 %v944, %v1056
      %1058 = vmatmul.f32.gmra.mxu0 %v626
      %v1059 = vpop.f32.mrf.mxu0
      %v1060 = vadd.f32 %v947, %v1059
      %1061 = vmatmul.f32.gmra.mxu0 %v629
      %v1062 = vpop.f32.mrf.mxu0
      %v1063 = vadd.f32 %v950, %v1062
      %1064 = vmatmul.f32.gmra.mxu0 %v632
      %v1065 = vpop.f32.mrf.mxu0
      %v1066 = vadd.f32 %v953, %v1065
      %1067 = vmatmul.f32.gmra.mxu0 %v635
      %v1068 = vpop.f32.mrf.mxu0
      %v1069 = vadd.f32 %v956, %v1068
      %1070 = vmatmul.f32.gmra.mxu0 %v638
      %v1071 = vpop.f32.mrf.mxu0
      %v1072 = vadd.f32 %v959, %v1071
      %1073 = vmatmul.f32.gmra.mxu0 %v641
      %v1074 = vpop.f32.mrf.mxu0
      %v1075 = vadd.f32 %v962, %v1074
      %1076 = vmatmul.f32.gmra.mxu0 %v644
      %v1077 = vpop.f32.mrf.mxu0
      %v1078 = vadd.f32 %v965, %v1077
      %1079 = vmatmul.f32.gmra.mxu0 %v647
      %v1080 = vpop.f32.mrf.mxu0
      %v1081 = vadd.f32 %v968, %v1080
      %1082 = vmatmul.f32.gmra.mxu0 %v650
      %v1083 = vpop.f32.mrf.mxu0
      %v1084 = vadd.f32 %v971, %v1083
      %1085 = vdwg.mxu0
      %1086 = vmatpush.msra.mxu0 %v859
      %1087 = vmatpush.msra.mxu0 %v858
      %1088 = vmatpush.msra.mxu0 %v857
      %1089 = vmatpush.msra.mxu0 %v856
      %1090 = vmatpush.msra.mxu0 %v855
      %1091 = vmatpush.msra.mxu0 %v854
      %1092 = vmatpush.msra.mxu0 %v853
      %1093 = vmatpush.msra.mxu0 %v852
      %1094 = vmatpush.msra.mxu0 %v851
      %1095 = vmatpush.msra.mxu0 %v850
      %1096 = vmatpush.msra.mxu0 %v849
      %1097 = vmatpush.msra.mxu0 %v848
      %1098 = vmatpush.msra.mxu0 %v847
      %1099 = vmatpush.msra.mxu0 %v846
      %1100 = vmatpush.msra.mxu0 %v845
      %1101 = vmatpush.msra.mxu0 %v844
      %1102 = vmatmul.f32.gmra.mxu0 %v686
      %v1103 = vpop.f32.mrf.mxu0
      %v1104 = vadd.f32 %v991, %v1103
      %1105 = vmatmul.f32.gmra.mxu0 %v689
      %v1106 = vpop.f32.mrf.mxu0
      %v1107 = vadd.f32 %v994, %v1106
      %1108 = vmatmul.f32.gmra.mxu0 %v692
      %v1109 = vpop.f32.mrf.mxu0
      %v1110 = vadd.f32 %v997, %v1109
      %1111 = vmatmul.f32.gmra.mxu0 %v695
      %v1112 = vpop.f32.mrf.mxu0
      %v1113 = vadd.f32 %v1000, %v1112
      %1114 = vmatmul.f32.gmra.mxu0 %v698
      %v1115 = vpop.f32.mrf.mxu0
      %v1116 = vadd.f32 %v1003, %v1115
      %1117 = vmatmul.f32.gmra.mxu0 %v701
      %v1118 = vpop.f32.mrf.mxu0
      %v1119 = vadd.f32 %v1006, %v1118
      %1120 = vmatmul.f32.gmra.mxu0 %v704
      %v1121 = vpop.f32.mrf.mxu0
      %v1122 = vadd.f32 %v1009, %v1121
      %1123 = vmatmul.f32.gmra.mxu0 %v707
      %v1124 = vpop.f32.mrf.mxu0
      %v1125 = vadd.f32 %v1012, %v1124
      %1126 = vmatmul.f32.gmra.mxu0 %v710
      %v1127 = vpop.f32.mrf.mxu0
      %v1128 = vadd.f32 %v1015, %v1127
      %1129 = vmatmul.f32.gmra.mxu0 %v713
      %v1130 = vpop.f32.mrf.mxu0
      %v1131 = vadd.f32 %v1018, %v1130
      %1132 = vmatmul.f32.gmra.mxu0 %v716
      %v1133 = vpop.f32.mrf.mxu0
      %v1134 = vadd.f32 %v1021, %v1133
      %1135 = vmatmul.f32.gmra.mxu0 %v719
      %v1136 = vpop.f32.mrf.mxu0
      %v1137 = vadd.f32 %v1024, %v1136
      %1138 = vmatmul.f32.gmra.mxu0 %v722
      %v1139 = vpop.f32.mrf.mxu0
      %v1140 = vadd.f32 %v1027, %v1139
      %1141 = vmatmul.f32.gmra.mxu0 %v725
      %v1142 = vpop.f32.mrf.mxu0
      %v1143 = vadd.f32 %v1030, %v1142
      %1144 = vmatmul.f32.gmra.mxu0 %v728
      %v1145 = vpop.f32.mrf.mxu0
      %v1146 = vadd.f32 %v1033, %v1145
      %1147 = vmatmul.f32.gmra.mxu0 %v731
      %v1148 = vpop.f32.mrf.mxu0
      %v1149 = vadd.f32 %v1036, %v1148
      %1150 = vmatmul.f32.gmra.mxu0 %v734
      %v1151 = vpop.f32.mrf.mxu0
      %v1152 = vadd.f32 %v1039, %v1151
      %1153 = vmatmul.f32.gmra.mxu0 %v737
      %v1154 = vpop.f32.mrf.mxu0
      %v1155 = vadd.f32 %v1042, %v1154
      %1156 = vmatmul.f32.gmra.mxu0 %v740
      %v1157 = vpop.f32.mrf.mxu0
      %v1158 = vadd.f32 %v1045, %v1157
      %1159 = vmatmul.f32.gmra.mxu0 %v743
      %v1160 = vpop.f32.mrf.mxu0
      %v1161 = vadd.f32 %v1048, %v1160
      %1162 = vmatmul.f32.gmra.mxu0 %v746
      %v1163 = vpop.f32.mrf.mxu0
      %v1164 = vadd.f32 %v1051, %v1163
      %1165 = vmatmul.f32.gmra.mxu0 %v749
      %v1166 = vpop.f32.mrf.mxu0
      %v1167 = vadd.f32 %v1054, %v1166
      %1168 = vmatmul.f32.gmra.mxu0 %v752
      %v1169 = vpop.f32.mrf.mxu0
      %v1170 = vadd.f32 %v1057, %v1169
      %1171 = vmatmul.f32.gmra.mxu0 %v755
      %v1172 = vpop.f32.mrf.mxu0
      %v1173 = vadd.f32 %v1060, %v1172
      %1174 = vmatmul.f32.gmra.mxu0 %v758
      %v1175 = vpop.f32.mrf.mxu0
      %v1176 = vadd.f32 %v1063, %v1175
      %1177 = vmatmul.f32.gmra.mxu0 %v761
      %v1178 = vpop.f32.mrf.mxu0
      %v1179 = vadd.f32 %v1066, %v1178
      %1180 = vmatmul.f32.gmra.mxu0 %v764
      %v1181 = vpop.f32.mrf.mxu0
      %v1182 = vadd.f32 %v1069, %v1181
      %1183 = vmatmul.f32.gmra.mxu0 %v767
      %v1184 = vpop.f32.mrf.mxu0
      %v1185 = vadd.f32 %v1072, %v1184
      %1186 = vmatmul.f32.gmra.mxu0 %v770
      %v1187 = vpop.f32.mrf.mxu0
      %v1188 = vadd.f32 %v1075, %v1187
      %1189 = vmatmul.f32.gmra.mxu0 %v773
      %v1190 = vpop.f32.mrf.mxu0
      %v1191 = vadd.f32 %v1078, %v1190
      %1192 = vmatmul.f32.gmra.mxu0 %v776
      %v1193 = vpop.f32.mrf.mxu0
      %v1194 = vadd.f32 %v1081, %v1193
      %1195 = vmatmul.f32.gmra.mxu0 %v779
      %v1196 = vpop.f32.mrf.mxu0
      %v1197 = vadd.f32 %v1084, %v1196
      %1198 = vdwg.mxu0
      %1199 = vst [vmem:[#allocation3] sm:$0xff] %v1104
      %1200 = vst [vmem:[#allocation3 + $0x8] sm:$0xff] %v1107
      %1201 = vst [vmem:[#allocation3 + $0x10] sm:$0xff] %v1110
      %1202 = vst [vmem:[#allocation3 + $0x18] sm:$0xff] %v1113
      %1203 = vst [vmem:[#allocation3 + $0x20] sm:$0xff] %v1116
      %1204 = vst [vmem:[#allocation3 + $0x28] sm:$0xff] %v1119
      %1205 = vst [vmem:[#allocation3 + $0x30] sm:$0xff] %v1122
      %1206 = vst [vmem:[#allocation3 + $0x38] sm:$0xff] %v1125
      %1207 = vst [vmem:[#allocation3 + $0x40] sm:$0xff] %v1128
      %1208 = vst [vmem:[#allocation3 + $0x48] sm:$0xff] %v1131
      %1209 = vst [vmem:[#allocation3 + $0x50] sm:$0xff] %v1134
      %1210 = vst [vmem:[#allocation3 + $0x58] sm:$0xff] %v1137
      %1211 = vst [vmem:[#allocation3 + $0x60] sm:$0xff] %v1140
      %1212 = vst [vmem:[#allocation3 + $0x68] sm:$0xff] %v1143
      %1213 = vst [vmem:[#allocation3 + $0x70] sm:$0xff] %v1146
      %1214 = vst [vmem:[#allocation3 + $0x78] sm:$0xff] %v1149
      %1215 = vst [vmem:[#allocation3 + $0x80] sm:$0xff] %v1152
      %1216 = vst [vmem:[#allocation3 + $0x88] sm:$0xff] %v1155
      %1217 = vst [vmem:[#allocation3 + $0x90] sm:$0xff] %v1158
      %1218 = vst [vmem:[#allocation3 + $0x98] sm:$0xff] %v1161
      %1219 = vst [vmem:[#allocation3 + $0xa0] sm:$0xff] %v1164
      %1220 = vst [vmem:[#allocation3 + $0xa8] sm:$0xff] %v1167
      %1221 = vst [vmem:[#allocation3 + $0xb0] sm:$0xff] %v1170
      %1222 = vst [vmem:[#allocation3 + $0xb8] sm:$0xff] %v1173
      %1223 = vst [vmem:[#allocation3 + $0xc0] sm:$0xff] %v1176
      %1224 = vst [vmem:[#allocation3 + $0xc8] sm:$0xff] %v1179
      %1225 = vst [vmem:[#allocation3 + $0xd0] sm:$0xff] %v1182
      %1226 = vst [vmem:[#allocation3 + $0xd8] sm:$0xff] %v1185
      %1227 = vst [vmem:[#allocation3 + $0xe0] sm:$0xff] %v1188
      %1228 = vst [vmem:[#allocation3 + $0xe8] sm:$0xff] %v1191
      %1229 = vst [vmem:[#allocation3 + $0xf0] sm:$0xff] %v1194
      %1230 = vst [vmem:[#allocation3 + $0xf8] sm:$0xff] %v1197
      %s1231 = scalar_lea.vmem [#allocation2], 16
      %v1232 = vld [vmem:[%s1231] sm:$0xff]
      %v1233 = vld [vmem:[%s1231 + $0x8] sm:$0x3]
      %v1234 = vld [vmem:[%s1231 + $0x10] sm:$0xff]
      %v1235 = vld [vmem:[%s1231 + $0x18] sm:$0x3]
      %v1236 = vld [vmem:[%s1231 + $0x20] sm:$0xff]
      %v1237 = vld [vmem:[%s1231 + $0x28] sm:$0x3]
      %v1238 = vld [vmem:[%s1231 + $0x30] sm:$0xff]
      %v1239 = vld [vmem:[%s1231 + $0x38] sm:$0x3]
      %v1240 = vld [vmem:[%s1231 + $0x40] sm:$0xff]
      %v1241 = vld [vmem:[%s1231 + $0x48] sm:$0x3]
      %v1242 = vld [vmem:[%s1231 + $0x50] sm:$0xff]
      %v1243 = vld [vmem:[%s1231 + $0x58] sm:$0x3]
      %v1244 = vld [vmem:[%s1231 + $0x60] sm:$0xff]
      %v1245 = vld [vmem:[%s1231 + $0x68] sm:$0x3]
      %v1246 = vld [vmem:[%s1231 + $0x70] sm:$0xff]
      %v1247 = vld [vmem:[%s1231 + $0x78] sm:$0x3]
      %v1248 = vld [vmem:[%s1231 + $0xa0] sm:$0xff]
      %v1249 = vld [vmem:[%s1231 + $0xa8] sm:$0x3]
      %v1250 = vld [vmem:[%s1231 + $0xb0] sm:$0xff]
      %v1251 = vld [vmem:[%s1231 + $0xb8] sm:$0x3]
      %v1252 = vld [vmem:[%s1231 + $0xc0] sm:$0xff]
      %v1253 = vld [vmem:[%s1231 + $0xc8] sm:$0x3]
      %v1254 = vld [vmem:[%s1231 + $0xd0] sm:$0xff]
      %v1255 = vld [vmem:[%s1231 + $0xd8] sm:$0x3]
      %v1256 = vld [vmem:[%s1231 + $0xe0] sm:$0xff]
      %v1257 = vld [vmem:[%s1231 + $0xe8] sm:$0x3]
      %v1258 = vld [vmem:[%s1231 + $0xf0] sm:$0xff]
      %v1259 = vld [vmem:[%s1231 + $0xf8] sm:$0x3]
      %v1260 = vld [vmem:[%s1231 + $0x100] sm:$0xff]
      %v1261 = vld [vmem:[%s1231 + $0x108] sm:$0x3]
      %v1262 = vld [vmem:[%s1231 + $0x110] sm:$0xff]
      %v1263 = vld [vmem:[%s1231 + $0x118] sm:$0x3]
      %v1264 = vld [vmem:[%s1231 + $0x140] sm:$0xff]
      %v1265 = vld [vmem:[%s1231 + $0x148] sm:$0x3]
      %v1266 = vld [vmem:[%s1231 + $0x150] sm:$0xff]
      %v1267 = vld [vmem:[%s1231 + $0x158] sm:$0x3]
      %v1268 = vld [vmem:[%s1231 + $0x160] sm:$0xff]
      %v1269 = vld [vmem:[%s1231 + $0x168] sm:$0x3]
      %v1270 = vld [vmem:[%s1231 + $0x170] sm:$0xff]
      %v1271 = vld [vmem:[%s1231 + $0x178] sm:$0x3]
      %v1272 = vld [vmem:[%s1231 + $0x180] sm:$0xff]
      %v1273 = vld [vmem:[%s1231 + $0x188] sm:$0x3]
      %v1274 = vld [vmem:[%s1231 + $0x190] sm:$0xff]
      %v1275 = vld [vmem:[%s1231 + $0x198] sm:$0x3]
      %v1276 = vld [vmem:[%s1231 + $0x1a0] sm:$0xff]
      %v1277 = vld [vmem:[%s1231 + $0x1a8] sm:$0x3]
      %v1278 = vld [vmem:[%s1231 + $0x1b0] sm:$0xff]
      %v1279 = vld [vmem:[%s1231 + $0x1b8] sm:$0x3]
      %v1280 = vld [vmem:[%s1231 + $0x1e0] sm:$0xff]
      %v1281 = vld [vmem:[%s1231 + $0x1e8] sm:$0x3]
      %v1282 = vld [vmem:[%s1231 + $0x1f0] sm:$0xff]
      %v1283 = vld [vmem:[%s1231 + $0x1f8] sm:$0x3]
      %v1284 = vld [vmem:[%s1231 + $0x200] sm:$0xff]
      %v1285 = vld [vmem:[%s1231 + $0x208] sm:$0x3]
      %v1286 = vld [vmem:[%s1231 + $0x210] sm:$0xff]
      %v1287 = vld [vmem:[%s1231 + $0x218] sm:$0x3]
      %v1288 = vld [vmem:[%s1231 + $0x220] sm:$0xff]
      %v1289 = vld [vmem:[%s1231 + $0x228] sm:$0x3]
      %v1290 = vld [vmem:[%s1231 + $0x230] sm:$0xff]
      %v1291 = vld [vmem:[%s1231 + $0x238] sm:$0x3]
      %v1292 = vld [vmem:[%s1231 + $0x240] sm:$0xff]
      %v1293 = vld [vmem:[%s1231 + $0x248] sm:$0x3]
      %v1294 = vld [vmem:[%s1231 + $0x250] sm:$0xff]
      %v1295 = vld [vmem:[%s1231 + $0x258] sm:$0x3]
      %v1360 = vrot.slane %v1232, 1
      %v1361 = vrot.slane %v1233, 1
      %v1362 = vsel %vm554, %v1360, %v1361
      %v1363 = vrot.slane %v1234, 1
      %v1364 = vrot.slane %v1235, 1
      %v1365 = vsel %vm554, %v1363, %v1364
      %v1366 = vrot.slane %v1236, 1
      %v1367 = vrot.slane %v1237, 1
      %v1368 = vsel %vm554, %v1366, %v1367
      %v1369 = vrot.slane %v1238, 1
      %v1370 = vrot.slane %v1239, 1
      %v1371 = vsel %vm554, %v1369, %v1370
      %v1372 = vrot.slane %v1240, 1
      %v1373 = vrot.slane %v1241, 1
      %v1374 = vsel %vm554, %v1372, %v1373
      %v1375 = vrot.slane %v1242, 1
      %v1376 = vrot.slane %v1243, 1
      %v1377 = vsel %vm554, %v1375, %v1376
      %v1378 = vrot.slane %v1244, 1
      %v1379 = vrot.slane %v1245, 1
      %v1380 = vsel %vm554, %v1378, %v1379
      %v1381 = vrot.slane %v1246, 1
      %v1382 = vrot.slane %v1247, 1
      %v1383 = vsel %vm554, %v1381, %v1382
      %v1384 = vrot.slane %v1248, 1
      %v1385 = vrot.slane %v1249, 1
      %v1386 = vsel %vm554, %v1384, %v1385
      %v1387 = vrot.slane %v1250, 1
      %v1388 = vrot.slane %v1251, 1
      %v1389 = vsel %vm554, %v1387, %v1388
      %v1390 = vrot.slane %v1252, 1
      %v1391 = vrot.slane %v1253, 1
      %v1392 = vsel %vm554, %v1390, %v1391
      %v1393 = vrot.slane %v1254, 1
      %v1394 = vrot.slane %v1255, 1
      %v1395 = vsel %vm554, %v1393, %v1394
      %v1396 = vrot.slane %v1256, 1
      %v1397 = vrot.slane %v1257, 1
      %v1398 = vsel %vm554, %v1396, %v1397
      %v1399 = vrot.slane %v1258, 1
      %v1400 = vrot.slane %v1259, 1
      %v1401 = vsel %vm554, %v1399, %v1400
      %v1402 = vrot.slane %v1260, 1
      %v1403 = vrot.slane %v1261, 1
      %v1404 = vsel %vm554, %v1402, %v1403
      %v1405 = vrot.slane %v1262, 1
      %v1406 = vrot.slane %v1263, 1
      %v1407 = vsel %vm554, %v1405, %v1406
      %v1408 = vrot.slane %v1264, 1
      %v1409 = vrot.slane %v1265, 1
      %v1410 = vsel %vm554, %v1408, %v1409
      %v1411 = vrot.slane %v1266, 1
      %v1412 = vrot.slane %v1267, 1
      %v1413 = vsel %vm554, %v1411, %v1412
      %v1414 = vrot.slane %v1268, 1
      %v1415 = vrot.slane %v1269, 1
      %v1416 = vsel %vm554, %v1414, %v1415
      %v1417 = vrot.slane %v1270, 1
      %v1418 = vrot.slane %v1271, 1
      %v1419 = vsel %vm554, %v1417, %v1418
      %v1420 = vrot.slane %v1272, 1
      %v1421 = vrot.slane %v1273, 1
      %v1422 = vsel %vm554, %v1420, %v1421
      %v1423 = vrot.slane %v1274, 1
      %v1424 = vrot.slane %v1275, 1
      %v1425 = vsel %vm554, %v1423, %v1424
      %v1426 = vrot.slane %v1276, 1
      %v1427 = vrot.slane %v1277, 1
      %v1428 = vsel %vm554, %v1426, %v1427
      %v1429 = vrot.slane %v1278, 1
      %v1430 = vrot.slane %v1279, 1
      %v1431 = vsel %vm554, %v1429, %v1430
      %v1432 = vrot.slane %v1280, 1
      %v1433 = vrot.slane %v1281, 1
      %v1434 = vsel %vm554, %v1432, %v1433
      %v1435 = vrot.slane %v1282, 1
      %v1436 = vrot.slane %v1283, 1
      %v1437 = vsel %vm554, %v1435, %v1436
      %v1438 = vrot.slane %v1284, 1
      %v1439 = vrot.slane %v1285, 1
      %v1440 = vsel %vm554, %v1438, %v1439
      %v1441 = vrot.slane %v1286, 1
      %v1442 = vrot.slane %v1287, 1
      %v1443 = vsel %vm554, %v1441, %v1442
      %v1444 = vrot.slane %v1288, 1
      %v1445 = vrot.slane %v1289, 1
      %v1446 = vsel %vm554, %v1444, %v1445
      %v1447 = vrot.slane %v1290, 1
      %v1448 = vrot.slane %v1291, 1
      %v1449 = vsel %vm554, %v1447, %v1448
      %v1450 = vrot.slane %v1292, 1
      %v1451 = vrot.slane %v1293, 1
      %v1452 = vsel %vm554, %v1450, %v1451
      %v1453 = vrot.slane %v1294, 1
      %v1454 = vrot.slane %v1295, 1
      %v1455 = vsel %vm554, %v1453, %v1454
      %v1488 = vrot.slane %v1232, 2
      %v1489 = vrot.slane %v1233, 2
      %v1490 = vsel %vm683, %v1488, %v1489
      %v1491 = vrot.slane %v1234, 2
      %v1492 = vrot.slane %v1235, 2
      %v1493 = vsel %vm683, %v1491, %v1492
      %v1494 = vrot.slane %v1236, 2
      %v1495 = vrot.slane %v1237, 2
      %v1496 = vsel %vm683, %v1494, %v1495
      %v1497 = vrot.slane %v1238, 2
      %v1498 = vrot.slane %v1239, 2
      %v1499 = vsel %vm683, %v1497, %v1498
      %v1500 = vrot.slane %v1240, 2
      %v1501 = vrot.slane %v1241, 2
      %v1502 = vsel %vm683, %v1500, %v1501
      %v1503 = vrot.slane %v1242, 2
      %v1504 = vrot.slane %v1243, 2
      %v1505 = vsel %vm683, %v1503, %v1504
      %v1506 = vrot.slane %v1244, 2
      %v1507 = vrot.slane %v1245, 2
      %v1508 = vsel %vm683, %v1506, %v1507
      %v1509 = vrot.slane %v1246, 2
      %v1510 = vrot.slane %v1247, 2
      %v1511 = vsel %vm683, %v1509, %v1510
      %v1512 = vrot.slane %v1248, 2
      %v1513 = vrot.slane %v1249, 2
      %v1514 = vsel %vm683, %v1512, %v1513
      %v1515 = vrot.slane %v1250, 2
      %v1516 = vrot.slane %v1251, 2
      %v1517 = vsel %vm683, %v1515, %v1516
      %v1518 = vrot.slane %v1252, 2
      %v1519 = vrot.slane %v1253, 2
      %v1520 = vsel %vm683, %v1518, %v1519
      %v1521 = vrot.slane %v1254, 2
      %v1522 = vrot.slane %v1255, 2
      %v1523 = vsel %vm683, %v1521, %v1522
      %v1524 = vrot.slane %v1256, 2
      %v1525 = vrot.slane %v1257, 2
      %v1526 = vsel %vm683, %v1524, %v1525
      %v1527 = vrot.slane %v1258, 2
      %v1528 = vrot.slane %v1259, 2
      %v1529 = vsel %vm683, %v1527, %v1528
      %v1530 = vrot.slane %v1260, 2
      %v1531 = vrot.slane %v1261, 2
      %v1532 = vsel %vm683, %v1530, %v1531
      %v1533 = vrot.slane %v1262, 2
      %v1534 = vrot.slane %v1263, 2
      %v1535 = vsel %vm683, %v1533, %v1534
      %v1536 = vrot.slane %v1264, 2
      %v1537 = vrot.slane %v1265, 2
      %v1538 = vsel %vm683, %v1536, %v1537
      %v1539 = vrot.slane %v1266, 2
      %v1540 = vrot.slane %v1267, 2
      %v1541 = vsel %vm683, %v1539, %v1540
      %v1542 = vrot.slane %v1268, 2
      %v1543 = vrot.slane %v1269, 2
      %v1544 = vsel %vm683, %v1542, %v1543
      %v1545 = vrot.slane %v1270, 2
      %v1546 = vrot.slane %v1271, 2
      %v1547 = vsel %vm683, %v1545, %v1546
      %v1548 = vrot.slane %v1272, 2
      %v1549 = vrot.slane %v1273, 2
      %v1550 = vsel %vm683, %v1548, %v1549
      %v1551 = vrot.slane %v1274, 2
      %v1552 = vrot.slane %v1275, 2
      %v1553 = vsel %vm683, %v1551, %v1552
      %v1554 = vrot.slane %v1276, 2
      %v1555 = vrot.slane %v1277, 2
      %v1556 = vsel %vm683, %v1554, %v1555
      %v1557 = vrot.slane %v1278, 2
      %v1558 = vrot.slane %v1279, 2
      %v1559 = vsel %vm683, %v1557, %v1558
      %v1560 = vrot.slane %v1280, 2
      %v1561 = vrot.slane %v1281, 2
      %v1562 = vsel %vm683, %v1560, %v1561
      %v1563 = vrot.slane %v1282, 2
      %v1564 = vrot.slane %v1283, 2
      %v1565 = vsel %vm683, %v1563, %v1564
      %v1566 = vrot.slane %v1284, 2
      %v1567 = vrot.slane %v1285, 2
      %v1568 = vsel %vm683, %v1566, %v1567
      %v1569 = vrot.slane %v1286, 2
      %v1570 = vrot.slane %v1287, 2
      %v1571 = vsel %vm683, %v1569, %v1570
      %v1572 = vrot.slane %v1288, 2
      %v1573 = vrot.slane %v1289, 2
      %v1574 = vsel %vm683, %v1572, %v1573
      %v1575 = vrot.slane %v1290, 2
      %v1576 = vrot.slane %v1291, 2
      %v1577 = vsel %vm683, %v1575, %v1576
      %v1578 = vrot.slane %v1292, 2
      %v1579 = vrot.slane %v1293, 2
      %v1580 = vsel %vm683, %v1578, %v1579
      %v1581 = vrot.slane %v1294, 2
      %v1582 = vrot.slane %v1295, 2
      %v1583 = vsel %vm683, %v1581, %v1582
      %s1616 = scalar_lea.vmem %s1, 384
      %v1617 = vld [vmem:[%s1616] sm:$0xff]
      %v1618 = vld [vmem:[%s1616 + $0x8] sm:$0xff]
      %v1619 = vld [vmem:[%s1616 + $0x10] sm:$0xff]
      %v1620 = vld [vmem:[%s1616 + $0x18] sm:$0xff]
      %v1621 = vld [vmem:[%s1616 + $0x20] sm:$0xff]
      %v1622 = vld [vmem:[%s1616 + $0x28] sm:$0xff]
      %v1623 = vld [vmem:[%s1616 + $0x30] sm:$0xff]
      %v1624 = vld [vmem:[%s1616 + $0x38] sm:$0xff]
      %v1625 = vld [vmem:[%s1616 + $0x40] sm:$0xff]
      %v1626 = vld [vmem:[%s1616 + $0x48] sm:$0xff]
      %v1627 = vld [vmem:[%s1616 + $0x50] sm:$0xff]
      %v1628 = vld [vmem:[%s1616 + $0x58] sm:$0xff]
      %v1629 = vld [vmem:[%s1616 + $0x60] sm:$0xff]
      %v1630 = vld [vmem:[%s1616 + $0x68] sm:$0xff]
      %v1631 = vld [vmem:[%s1616 + $0x70] sm:$0xff]
      %v1632 = vld [vmem:[%s1616 + $0x78] sm:$0xff]
      %v1633 = vld [vmem:[%s1616 + $0x80] sm:$0xff]
      %v1634 = vld [vmem:[%s1616 + $0x88] sm:$0xff]
      %v1635 = vld [vmem:[%s1616 + $0x90] sm:$0xff]
      %v1636 = vld [vmem:[%s1616 + $0x98] sm:$0xff]
      %v1637 = vld [vmem:[%s1616 + $0xa0] sm:$0xff]
      %v1638 = vld [vmem:[%s1616 + $0xa8] sm:$0xff]
      %v1639 = vld [vmem:[%s1616 + $0xb0] sm:$0xff]
      %v1640 = vld [vmem:[%s1616 + $0xb8] sm:$0xff]
      %v1641 = vld [vmem:[%s1616 + $0xc0] sm:$0xff]
      %v1642 = vld [vmem:[%s1616 + $0xc8] sm:$0xff]
      %v1643 = vld [vmem:[%s1616 + $0xd0] sm:$0xff]
      %v1644 = vld [vmem:[%s1616 + $0xd8] sm:$0xff]
      %v1645 = vld [vmem:[%s1616 + $0xe0] sm:$0xff]
      %v1646 = vld [vmem:[%s1616 + $0xe8] sm:$0xff]
      %v1647 = vld [vmem:[%s1616 + $0xf0] sm:$0xff]
      %v1648 = vld [vmem:[%s1616 + $0xf8] sm:$0xff]
      %v1649 = vld [vmem:[%s1616 + $0x100] sm:$0xff]
      %v1650 = vld [vmem:[%s1616 + $0x108] sm:$0xff]
      %v1651 = vld [vmem:[%s1616 + $0x110] sm:$0xff]
      %v1652 = vld [vmem:[%s1616 + $0x118] sm:$0xff]
      %v1653 = vld [vmem:[%s1616 + $0x120] sm:$0xff]
      %v1654 = vld [vmem:[%s1616 + $0x128] sm:$0xff]
      %v1655 = vld [vmem:[%s1616 + $0x130] sm:$0xff]
      %v1656 = vld [vmem:[%s1616 + $0x138] sm:$0xff]
      %v1657 = vld [vmem:[%s1616 + $0x140] sm:$0xff]
      %v1658 = vld [vmem:[%s1616 + $0x148] sm:$0xff]
      %v1659 = vld [vmem:[%s1616 + $0x150] sm:$0xff]
      %v1660 = vld [vmem:[%s1616 + $0x158] sm:$0xff]
      %v1661 = vld [vmem:[%s1616 + $0x160] sm:$0xff]
      %v1662 = vld [vmem:[%s1616 + $0x168] sm:$0xff]
      %v1663 = vld [vmem:[%s1616 + $0x170] sm:$0xff]
      %v1664 = vld [vmem:[%s1616 + $0x178] sm:$0xff]
      %1665 = vmatpush.msra.mxu0 %v1632
      %1666 = vmatpush.msra.mxu0 %v1631
      %1667 = vmatpush.msra.mxu0 %v1630
      %1668 = vmatpush.msra.mxu0 %v1629
      %1669 = vmatpush.msra.mxu0 %v1628
      %1670 = vmatpush.msra.mxu0 %v1627
      %1671 = vmatpush.msra.mxu0 %v1626
      %1672 = vmatpush.msra.mxu0 %v1625
      %1673 = vmatpush.msra.mxu0 %v1624
      %1674 = vmatpush.msra.mxu0 %v1623
      %1675 = vmatpush.msra.mxu0 %v1622
      %1676 = vmatpush.msra.mxu0 %v1621
      %1677 = vmatpush.msra.mxu0 %v1620
      %1678 = vmatpush.msra.mxu0 %v1619
      %1679 = vmatpush.msra.mxu0 %v1618
      %1680 = vmatpush.msra.mxu0 %v1617
      %1681 = vmatmul.f32.gmra.mxu0 %v1232
      %v1682 = vpop.f32.mrf.mxu0
      %v1683 = vadd.f32 0.0, %v1682
      %1684 = vmatmul.f32.gmra.mxu0 %v1234
      %v1685 = vpop.f32.mrf.mxu0
      %v1686 = vadd.f32 0.0, %v1685
      %1687 = vmatmul.f32.gmra.mxu0 %v1236
      %v1688 = vpop.f32.mrf.mxu0
      %v1689 = vadd.f32 0.0, %v1688
      %1690 = vmatmul.f32.gmra.mxu0 %v1238
      %v1691 = vpop.f32.mrf.mxu0
      %v1692 = vadd.f32 0.0, %v1691
      %1693 = vmatmul.f32.gmra.mxu0 %v1240
      %v1694 = vpop.f32.mrf.mxu0
      %v1695 = vadd.f32 0.0, %v1694
      %1696 = vmatmul.f32.gmra.mxu0 %v1242
      %v1697 = vpop.f32.mrf.mxu0
      %v1698 = vadd.f32 0.0, %v1697
      %1699 = vmatmul.f32.gmra.mxu0 %v1244
      %v1700 = vpop.f32.mrf.mxu0
      %v1701 = vadd.f32 0.0, %v1700
      %1702 = vmatmul.f32.gmra.mxu0 %v1246
      %v1703 = vpop.f32.mrf.mxu0
      %v1704 = vadd.f32 0.0, %v1703
      %1705 = vmatmul.f32.gmra.mxu0 %v1248
      %v1706 = vpop.f32.mrf.mxu0
      %v1707 = vadd.f32 0.0, %v1706
      %1708 = vmatmul.f32.gmra.mxu0 %v1250
      %v1709 = vpop.f32.mrf.mxu0
      %v1710 = vadd.f32 0.0, %v1709
      %1711 = vmatmul.f32.gmra.mxu0 %v1252
      %v1712 = vpop.f32.mrf.mxu0
      %v1713 = vadd.f32 0.0, %v1712
      %1714 = vmatmul.f32.gmra.mxu0 %v1254
      %v1715 = vpop.f32.mrf.mxu0
      %v1716 = vadd.f32 0.0, %v1715
      %1717 = vmatmul.f32.gmra.mxu0 %v1256
      %v1718 = vpop.f32.mrf.mxu0
      %v1719 = vadd.f32 0.0, %v1718
      %1720 = vmatmul.f32.gmra.mxu0 %v1258
      %v1721 = vpop.f32.mrf.mxu0
      %v1722 = vadd.f32 0.0, %v1721
      %1723 = vmatmul.f32.gmra.mxu0 %v1260
      %v1724 = vpop.f32.mrf.mxu0
      %v1725 = vadd.f32 0.0, %v1724
      %1726 = vmatmul.f32.gmra.mxu0 %v1262
      %v1727 = vpop.f32.mrf.mxu0
      %v1728 = vadd.f32 0.0, %v1727
      %1729 = vmatmul.f32.gmra.mxu0 %v1264
      %v1730 = vpop.f32.mrf.mxu0
      %v1731 = vadd.f32 0.0, %v1730
      %1732 = vmatmul.f32.gmra.mxu0 %v1266
      %v1733 = vpop.f32.mrf.mxu0
      %v1734 = vadd.f32 0.0, %v1733
      %1735 = vmatmul.f32.gmra.mxu0 %v1268
      %v1736 = vpop.f32.mrf.mxu0
      %v1737 = vadd.f32 0.0, %v1736
      %1738 = vmatmul.f32.gmra.mxu0 %v1270
      %v1739 = vpop.f32.mrf.mxu0
      %v1740 = vadd.f32 0.0, %v1739
      %1741 = vmatmul.f32.gmra.mxu0 %v1272
      %v1742 = vpop.f32.mrf.mxu0
      %v1743 = vadd.f32 0.0, %v1742
      %1744 = vmatmul.f32.gmra.mxu0 %v1274
      %v1745 = vpop.f32.mrf.mxu0
      %v1746 = vadd.f32 0.0, %v1745
      %1747 = vmatmul.f32.gmra.mxu0 %v1276
      %v1748 = vpop.f32.mrf.mxu0
      %v1749 = vadd.f32 0.0, %v1748
      %1750 = vmatmul.f32.gmra.mxu0 %v1278
      %v1751 = vpop.f32.mrf.mxu0
      %v1752 = vadd.f32 0.0, %v1751
      %1753 = vmatmul.f32.gmra.mxu0 %v1280
      %v1754 = vpop.f32.mrf.mxu0
      %v1755 = vadd.f32 0.0, %v1754
      %1756 = vmatmul.f32.gmra.mxu0 %v1282
      %v1757 = vpop.f32.mrf.mxu0
      %v1758 = vadd.f32 0.0, %v1757
      %1759 = vmatmul.f32.gmra.mxu0 %v1284
      %v1760 = vpop.f32.mrf.mxu0
      %v1761 = vadd.f32 0.0, %v1760
      %1762 = vmatmul.f32.gmra.mxu0 %v1286
      %v1763 = vpop.f32.mrf.mxu0
      %v1764 = vadd.f32 0.0, %v1763
      %1765 = vmatmul.f32.gmra.mxu0 %v1288
      %v1766 = vpop.f32.mrf.mxu0
      %v1767 = vadd.f32 0.0, %v1766
      %1768 = vmatmul.f32.gmra.mxu0 %v1290
      %v1769 = vpop.f32.mrf.mxu0
      %v1770 = vadd.f32 0.0, %v1769
      %1771 = vmatmul.f32.gmra.mxu0 %v1292
      %v1772 = vpop.f32.mrf.mxu0
      %v1773 = vadd.f32 0.0, %v1772
      %1774 = vmatmul.f32.gmra.mxu0 %v1294
      %v1775 = vpop.f32.mrf.mxu0
      %v1776 = vadd.f32 0.0, %v1775
      %1777 = vdwg.mxu0
      %1778 = vmatpush.msra.mxu0 %v1648
      %1779 = vmatpush.msra.mxu0 %v1647
      %1780 = vmatpush.msra.mxu0 %v1646
      %1781 = vmatpush.msra.mxu0 %v1645
      %1782 = vmatpush.msra.mxu0 %v1644
      %1783 = vmatpush.msra.mxu0 %v1643
      %1784 = vmatpush.msra.mxu0 %v1642
      %1785 = vmatpush.msra.mxu0 %v1641
      %1786 = vmatpush.msra.mxu0 %v1640
      %1787 = vmatpush.msra.mxu0 %v1639
      %1788 = vmatpush.msra.mxu0 %v1638
      %1789 = vmatpush.msra.mxu0 %v1637
      %1790 = vmatpush.msra.mxu0 %v1636
      %1791 = vmatpush.msra.mxu0 %v1635
      %1792 = vmatpush.msra.mxu0 %v1634
      %1793 = vmatpush.msra.mxu0 %v1633
      %1794 = vmatmul.f32.gmra.mxu0 %v1362
      %v1795 = vpop.f32.mrf.mxu0
      %v1796 = vadd.f32 %v1683, %v1795
      %1797 = vmatmul.f32.gmra.mxu0 %v1365
      %v1798 = vpop.f32.mrf.mxu0
      %v1799 = vadd.f32 %v1686, %v1798
      %1800 = vmatmul.f32.gmra.mxu0 %v1368
      %v1801 = vpop.f32.mrf.mxu0
      %v1802 = vadd.f32 %v1689, %v1801
      %1803 = vmatmul.f32.gmra.mxu0 %v1371
      %v1804 = vpop.f32.mrf.mxu0
      %v1805 = vadd.f32 %v1692, %v1804
      %1806 = vmatmul.f32.gmra.mxu0 %v1374
      %v1807 = vpop.f32.mrf.mxu0
      %v1808 = vadd.f32 %v1695, %v1807
      %1809 = vmatmul.f32.gmra.mxu0 %v1377
      %v1810 = vpop.f32.mrf.mxu0
      %v1811 = vadd.f32 %v1698, %v1810
      %1812 = vmatmul.f32.gmra.mxu0 %v1380
      %v1813 = vpop.f32.mrf.mxu0
      %v1814 = vadd.f32 %v1701, %v1813
      %1815 = vmatmul.f32.gmra.mxu0 %v1383
      %v1816 = vpop.f32.mrf.mxu0
      %v1817 = vadd.f32 %v1704, %v1816
      %1818 = vmatmul.f32.gmra.mxu0 %v1386
      %v1819 = vpop.f32.mrf.mxu0
      %v1820 = vadd.f32 %v1707, %v1819
      %1821 = vmatmul.f32.gmra.mxu0 %v1389
      %v1822 = vpop.f32.mrf.mxu0
      %v1823 = vadd.f32 %v1710, %v1822
      %1824 = vmatmul.f32.gmra.mxu0 %v1392
      %v1825 = vpop.f32.mrf.mxu0
      %v1826 = vadd.f32 %v1713, %v1825
      %1827 = vmatmul.f32.gmra.mxu0 %v1395
      %v1828 = vpop.f32.mrf.mxu0
      %v1829 = vadd.f32 %v1716, %v1828
      %1830 = vmatmul.f32.gmra.mxu0 %v1398
      %v1831 = vpop.f32.mrf.mxu0
      %v1832 = vadd.f32 %v1719, %v1831
      %1833 = vmatmul.f32.gmra.mxu0 %v1401
      %v1834 = vpop.f32.mrf.mxu0
      %v1835 = vadd.f32 %v1722, %v1834
      %1836 = vmatmul.f32.gmra.mxu0 %v1404
      %v1837 = vpop.f32.mrf.mxu0
      %v1838 = vadd.f32 %v1725, %v1837
      %1839 = vmatmul.f32.gmra.mxu0 %v1407
      %v1840 = vpop.f32.mrf.mxu0
      %v1841 = vadd.f32 %v1728, %v1840
      %1842 = vmatmul.f32.gmra.mxu0 %v1410
      %v1843 = vpop.f32.mrf.mxu0
      %v1844 = vadd.f32 %v1731, %v1843
      %1845 = vmatmul.f32.gmra.mxu0 %v1413
      %v1846 = vpop.f32.mrf.mxu0
      %v1847 = vadd.f32 %v1734, %v1846
      %1848 = vmatmul.f32.gmra.mxu0 %v1416
      %v1849 = vpop.f32.mrf.mxu0
      %v1850 = vadd.f32 %v1737, %v1849
      %1851 = vmatmul.f32.gmra.mxu0 %v1419
      %v1852 = vpop.f32.mrf.mxu0
      %v1853 = vadd.f32 %v1740, %v1852
      %1854 = vmatmul.f32.gmra.mxu0 %v1422
      %v1855 = vpop.f32.mrf.mxu0
      %v1856 = vadd.f32 %v1743, %v1855
      %1857 = vmatmul.f32.gmra.mxu0 %v1425
      %v1858 = vpop.f32.mrf.mxu0
      %v1859 = vadd.f32 %v1746, %v1858
      %1860 = vmatmul.f32.gmra.mxu0 %v1428
      %v1861 = vpop.f32.mrf.mxu0
      %v1862 = vadd.f32 %v1749, %v1861
      %1863 = vmatmul.f32.gmra.mxu0 %v1431
      %v1864 = vpop.f32.mrf.mxu0
      %v1865 = vadd.f32 %v1752, %v1864
      %1866 = vmatmul.f32.gmra.mxu0 %v1434
      %v1867 = vpop.f32.mrf.mxu0
      %v1868 = vadd.f32 %v1755, %v1867
      %1869 = vmatmul.f32.gmra.mxu0 %v1437
      %v1870 = vpop.f32.mrf.mxu0
      %v1871 = vadd.f32 %v1758, %v1870
      %1872 = vmatmul.f32.gmra.mxu0 %v1440
      %v1873 = vpop.f32.mrf.mxu0
      %v1874 = vadd.f32 %v1761, %v1873
      %1875 = vmatmul.f32.gmra.mxu0 %v1443
      %v1876 = vpop.f32.mrf.mxu0
      %v1877 = vadd.f32 %v1764, %v1876
      %1878 = vmatmul.f32.gmra.mxu0 %v1446
      %v1879 = vpop.f32.mrf.mxu0
      %v1880 = vadd.f32 %v1767, %v1879
      %1881 = vmatmul.f32.gmra.mxu0 %v1449
      %v1882 = vpop.f32.mrf.mxu0
      %v1883 = vadd.f32 %v1770, %v1882
      %1884 = vmatmul.f32.gmra.mxu0 %v1452
      %v1885 = vpop.f32.mrf.mxu0
      %v1886 = vadd.f32 %v1773, %v1885
      %1887 = vmatmul.f32.gmra.mxu0 %v1455
      %v1888 = vpop.f32.mrf.mxu0
      %v1889 = vadd.f32 %v1776, %v1888
      %1890 = vdwg.mxu0
      %1891 = vmatpush.msra.mxu0 %v1664
      %1892 = vmatpush.msra.mxu0 %v1663
      %1893 = vmatpush.msra.mxu0 %v1662
      %1894 = vmatpush.msra.mxu0 %v1661
      %1895 = vmatpush.msra.mxu0 %v1660
      %1896 = vmatpush.msra.mxu0 %v1659
      %1897 = vmatpush.msra.mxu0 %v1658
      %1898 = vmatpush.msra.mxu0 %v1657
      %1899 = vmatpush.msra.mxu0 %v1656
      %1900 = vmatpush.msra.mxu0 %v1655
      %1901 = vmatpush.msra.mxu0 %v1654
      %1902 = vmatpush.msra.mxu0 %v1653
      %1903 = vmatpush.msra.mxu0 %v1652
      %1904 = vmatpush.msra.mxu0 %v1651
      %1905 = vmatpush.msra.mxu0 %v1650
      %1906 = vmatpush.msra.mxu0 %v1649
      %1907 = vmatmul.f32.gmra.mxu0 %v1490
      %v1908 = vpop.f32.mrf.mxu0
      %v1909 = vadd.f32 %v1796, %v1908
      %1910 = vmatmul.f32.gmra.mxu0 %v1493
      %v1911 = vpop.f32.mrf.mxu0
      %v1912 = vadd.f32 %v1799, %v1911
      %1913 = vmatmul.f32.gmra.mxu0 %v1496
      %v1914 = vpop.f32.mrf.mxu0
      %v1915 = vadd.f32 %v1802, %v1914
      %1916 = vmatmul.f32.gmra.mxu0 %v1499
      %v1917 = vpop.f32.mrf.mxu0
      %v1918 = vadd.f32 %v1805, %v1917
      %1919 = vmatmul.f32.gmra.mxu0 %v1502
      %v1920 = vpop.f32.mrf.mxu0
      %v1921 = vadd.f32 %v1808, %v1920
      %1922 = vmatmul.f32.gmra.mxu0 %v1505
      %v1923 = vpop.f32.mrf.mxu0
      %v1924 = vadd.f32 %v1811, %v1923
      %1925 = vmatmul.f32.gmra.mxu0 %v1508
      %v1926 = vpop.f32.mrf.mxu0
      %v1927 = vadd.f32 %v1814, %v1926
      %1928 = vmatmul.f32.gmra.mxu0 %v1511
      %v1929 = vpop.f32.mrf.mxu0
      %v1930 = vadd.f32 %v1817, %v1929
      %1931 = vmatmul.f32.gmra.mxu0 %v1514
      %v1932 = vpop.f32.mrf.mxu0
      %v1933 = vadd.f32 %v1820, %v1932
      %1934 = vmatmul.f32.gmra.mxu0 %v1517
      %v1935 = vpop.f32.mrf.mxu0
      %v1936 = vadd.f32 %v1823, %v1935
      %1937 = vmatmul.f32.gmra.mxu0 %v1520
      %v1938 = vpop.f32.mrf.mxu0
      %v1939 = vadd.f32 %v1826, %v1938
      %1940 = vmatmul.f32.gmra.mxu0 %v1523
      %v1941 = vpop.f32.mrf.mxu0
      %v1942 = vadd.f32 %v1829, %v1941
      %1943 = vmatmul.f32.gmra.mxu0 %v1526
      %v1944 = vpop.f32.mrf.mxu0
      %v1945 = vadd.f32 %v1832, %v1944
      %1946 = vmatmul.f32.gmra.mxu0 %v1529
      %v1947 = vpop.f32.mrf.mxu0
      %v1948 = vadd.f32 %v1835, %v1947
      %1949 = vmatmul.f32.gmra.mxu0 %v1532
      %v1950 = vpop.f32.mrf.mxu0
      %v1951 = vadd.f32 %v1838, %v1950
      %1952 = vmatmul.f32.gmra.mxu0 %v1535
      %v1953 = vpop.f32.mrf.mxu0
      %v1954 = vadd.f32 %v1841, %v1953
      %1955 = vmatmul.f32.gmra.mxu0 %v1538
      %v1956 = vpop.f32.mrf.mxu0
      %v1957 = vadd.f32 %v1844, %v1956
      %1958 = vmatmul.f32.gmra.mxu0 %v1541
      %v1959 = vpop.f32.mrf.mxu0
      %v1960 = vadd.f32 %v1847, %v1959
      %1961 = vmatmul.f32.gmra.mxu0 %v1544
      %v1962 = vpop.f32.mrf.mxu0
      %v1963 = vadd.f32 %v1850, %v1962
      %1964 = vmatmul.f32.gmra.mxu0 %v1547
      %v1965 = vpop.f32.mrf.mxu0
      %v1966 = vadd.f32 %v1853, %v1965
      %1967 = vmatmul.f32.gmra.mxu0 %v1550
      %v1968 = vpop.f32.mrf.mxu0
      %v1969 = vadd.f32 %v1856, %v1968
      %1970 = vmatmul.f32.gmra.mxu0 %v1553
      %v1971 = vpop.f32.mrf.mxu0
      %v1972 = vadd.f32 %v1859, %v1971
      %1973 = vmatmul.f32.gmra.mxu0 %v1556
      %v1974 = vpop.f32.mrf.mxu0
      %v1975 = vadd.f32 %v1862, %v1974
      %1976 = vmatmul.f32.gmra.mxu0 %v1559
      %v1977 = vpop.f32.mrf.mxu0
      %v1978 = vadd.f32 %v1865, %v1977
      %1979 = vmatmul.f32.gmra.mxu0 %v1562
      %v1980 = vpop.f32.mrf.mxu0
      %v1981 = vadd.f32 %v1868, %v1980
      %1982 = vmatmul.f32.gmra.mxu0 %v1565
      %v1983 = vpop.f32.mrf.mxu0
      %v1984 = vadd.f32 %v1871, %v1983
      %1985 = vmatmul.f32.gmra.mxu0 %v1568
      %v1986 = vpop.f32.mrf.mxu0
      %v1987 = vadd.f32 %v1874, %v1986
      %1988 = vmatmul.f32.gmra.mxu0 %v1571
      %v1989 = vpop.f32.mrf.mxu0
      %v1990 = vadd.f32 %v1877, %v1989
      %1991 = vmatmul.f32.gmra.mxu0 %v1574
      %v1992 = vpop.f32.mrf.mxu0
      %v1993 = vadd.f32 %v1880, %v1992
      %1994 = vmatmul.f32.gmra.mxu0 %v1577
      %v1995 = vpop.f32.mrf.mxu0
      %v1996 = vadd.f32 %v1883, %v1995
      %1997 = vmatmul.f32.gmra.mxu0 %v1580
      %v1998 = vpop.f32.mrf.mxu0
      %v1999 = vadd.f32 %v1886, %v1998
      %2000 = vmatmul.f32.gmra.mxu0 %v1583
      %v2001 = vpop.f32.mrf.mxu0
      %v2002 = vadd.f32 %v1889, %v2001
      %2003 = vdwg.mxu0
      %v2004 = vld [vmem:[#allocation3] sm:$0xff]
      %v2005 = vld [vmem:[#allocation3 + $0x8] sm:$0xff]
      %v2006 = vld [vmem:[#allocation3 + $0x10] sm:$0xff]
      %v2007 = vld [vmem:[#allocation3 + $0x18] sm:$0xff]
      %v2008 = vld [vmem:[#allocation3 + $0x20] sm:$0xff]
      %v2009 = vld [vmem:[#allocation3 + $0x28] sm:$0xff]
      %v2010 = vld [vmem:[#allocation3 + $0x30] sm:$0xff]
      %v2011 = vld [vmem:[#allocation3 + $0x38] sm:$0xff]
      %v2012 = vld [vmem:[#allocation3 + $0x40] sm:$0xff]
      %v2013 = vld [vmem:[#allocation3 + $0x48] sm:$0xff]
      %v2014 = vld [vmem:[#allocation3 + $0x50] sm:$0xff]
      %v2015 = vld [vmem:[#allocation3 + $0x58] sm:$0xff]
      %v2016 = vld [vmem:[#allocation3 + $0x60] sm:$0xff]
      %v2017 = vld [vmem:[#allocation3 + $0x68] sm:$0xff]
      %v2018 = vld [vmem:[#allocation3 + $0x70] sm:$0xff]
      %v2019 = vld [vmem:[#allocation3 + $0x78] sm:$0xff]
      %v2020 = vld [vmem:[#allocation3 + $0x80] sm:$0xff]
      %v2021 = vld [vmem:[#allocation3 + $0x88] sm:$0xff]
      %v2022 = vld [vmem:[#allocation3 + $0x90] sm:$0xff]
      %v2023 = vld [vmem:[#allocation3 + $0x98] sm:$0xff]
      %v2024 = vld [vmem:[#allocation3 + $0xa0] sm:$0xff]
      %v2025 = vld [vmem:[#allocation3 + $0xa8] sm:$0xff]
      %v2026 = vld [vmem:[#allocation3 + $0xb0] sm:$0xff]
      %v2027 = vld [vmem:[#allocation3 + $0xb8] sm:$0xff]
      %v2028 = vld [vmem:[#allocation3 + $0xc0] sm:$0xff]
      %v2029 = vld [vmem:[#allocation3 + $0xc8] sm:$0xff]
      %v2030 = vld [vmem:[#allocation3 + $0xd0] sm:$0xff]
      %v2031 = vld [vmem:[#allocation3 + $0xd8] sm:$0xff]
      %v2032 = vld [vmem:[#allocation3 + $0xe0] sm:$0xff]
      %v2033 = vld [vmem:[#allocation3 + $0xe8] sm:$0xff]
      %v2034 = vld [vmem:[#allocation3 + $0xf0] sm:$0xff]
      %v2035 = vld [vmem:[#allocation3 + $0xf8] sm:$0xff]
      %v2036 = vadd.f32 %v2004, %v1909
      %v2037 = vadd.f32 %v2005, %v1912
      %v2038 = vadd.f32 %v2006, %v1915
      %v2039 = vadd.f32 %v2007, %v1918
      %v2040 = vadd.f32 %v2008, %v1921
      %v2041 = vadd.f32 %v2009, %v1924
      %v2042 = vadd.f32 %v2010, %v1927
      %v2043 = vadd.f32 %v2011, %v1930
      %v2044 = vadd.f32 %v2012, %v1933
      %v2045 = vadd.f32 %v2013, %v1936
      %v2046 = vadd.f32 %v2014, %v1939
      %v2047 = vadd.f32 %v2015, %v1942
      %v2048 = vadd.f32 %v2016, %v1945
      %v2049 = vadd.f32 %v2017, %v1948
      %v2050 = vadd.f32 %v2018, %v1951
      %v2051 = vadd.f32 %v2019, %v1954
      %v2052 = vadd.f32 %v2020, %v1957
      %v2053 = vadd.f32 %v2021, %v1960
      %v2054 = vadd.f32 %v2022, %v1963
      %v2055 = vadd.f32 %v2023, %v1966
      %v2056 = vadd.f32 %v2024, %v1969
      %v2057 = vadd.f32 %v2025, %v1972
      %v2058 = vadd.f32 %v2026, %v1975
      %v2059 = vadd.f32 %v2027, %v1978
      %v2060 = vadd.f32 %v2028, %v1981
      %v2061 = vadd.f32 %v2029, %v1984
      %v2062 = vadd.f32 %v2030, %v1987
      %v2063 = vadd.f32 %v2031, %v1990
      %v2064 = vadd.f32 %v2032, %v1993
      %v2065 = vadd.f32 %v2033, %v1996
      %v2066 = vadd.f32 %v2034, %v1999
      %v2067 = vadd.f32 %v2035, %v2002
      %2068 = vst [vmem:[#allocation3] sm:$0xff] %v2036
      %2069 = vst [vmem:[#allocation3 + $0x8] sm:$0xff] %v2037
      %2070 = vst [vmem:[#allocation3 + $0x10] sm:$0xff] %v2038
      %2071 = vst [vmem:[#allocation3 + $0x18] sm:$0xff] %v2039
      %2072 = vst [vmem:[#allocation3 + $0x20] sm:$0xff] %v2040
      %2073 = vst [vmem:[#allocation3 + $0x28] sm:$0xff] %v2041
      %2074 = vst [vmem:[#allocation3 + $0x30] sm:$0xff] %v2042
      %2075 = vst [vmem:[#allocation3 + $0x38] sm:$0xff] %v2043
      %2076 = vst [vmem:[#allocation3 + $0x40] sm:$0xff] %v2044
      %2077 = vst [vmem:[#allocation3 + $0x48] sm:$0xff] %v2045
      %2078 = vst [vmem:[#allocation3 + $0x50] sm:$0xff] %v2046
      %2079 = vst [vmem:[#allocation3 + $0x58] sm:$0xff] %v2047
      %2080 = vst [vmem:[#allocation3 + $0x60] sm:$0xff] %v2048
      %2081 = vst [vmem:[#allocation3 + $0x68] sm:$0xff] %v2049
      %2082 = vst [vmem:[#allocation3 + $0x70] sm:$0xff] %v2050
      %2083 = vst [vmem:[#allocation3 + $0x78] sm:$0xff] %v2051
      %2084 = vst [vmem:[#allocation3 + $0x80] sm:$0xff] %v2052
      %2085 = vst [vmem:[#allocation3 + $0x88] sm:$0xff] %v2053
      %2086 = vst [vmem:[#allocation3 + $0x90] sm:$0xff] %v2054
      %2087 = vst [vmem:[#allocation3 + $0x98] sm:$0xff] %v2055
      %2088 = vst [vmem:[#allocation3 + $0xa0] sm:$0xff] %v2056
      %2089 = vst [vmem:[#allocation3 + $0xa8] sm:$0xff] %v2057
      %2090 = vst [vmem:[#allocation3 + $0xb0] sm:$0xff] %v2058
      %2091 = vst [vmem:[#allocation3 + $0xb8] sm:$0xff] %v2059
      %2092 = vst [vmem:[#allocation3 + $0xc0] sm:$0xff] %v2060
      %2093 = vst [vmem:[#allocation3 + $0xc8] sm:$0xff] %v2061
      %2094 = vst [vmem:[#allocation3 + $0xd0] sm:$0xff] %v2062
      %2095 = vst [vmem:[#allocation3 + $0xd8] sm:$0xff] %v2063
      %2096 = vst [vmem:[#allocation3 + $0xe0] sm:$0xff] %v2064
      %2097 = vst [vmem:[#allocation3 + $0xe8] sm:$0xff] %v2065
      %2098 = vst [vmem:[#allocation3 + $0xf0] sm:$0xff] %v2066
      %2099 = vst [vmem:[#allocation3 + $0xf8] sm:$0xff] %v2067
      %s2100 = scalar_lea.vmem [#allocation2], 32
      %v2101 = vld [vmem:[%s2100] sm:$0xff]
      %v2102 = vld [vmem:[%s2100 + $0x8] sm:$0x3]
      %v2103 = vld [vmem:[%s2100 + $0x10] sm:$0xff]
      %v2104 = vld [vmem:[%s2100 + $0x18] sm:$0x3]
      %v2105 = vld [vmem:[%s2100 + $0x20] sm:$0xff]
      %v2106 = vld [vmem:[%s2100 + $0x28] sm:$0x3]
      %v2107 = vld [vmem:[%s2100 + $0x30] sm:$0xff]
      %v2108 = vld [vmem:[%s2100 + $0x38] sm:$0x3]
      %v2109 = vld [vmem:[%s2100 + $0x40] sm:$0xff]
      %v2110 = vld [vmem:[%s2100 + $0x48] sm:$0x3]
      %v2111 = vld [vmem:[%s2100 + $0x50] sm:$0xff]
      %v2112 = vld [vmem:[%s2100 + $0x58] sm:$0x3]
      %v2113 = vld [vmem:[%s2100 + $0x60] sm:$0xff]
      %v2114 = vld [vmem:[%s2100 + $0x68] sm:$0x3]
      %v2115 = vld [vmem:[%s2100 + $0x70] sm:$0xff]
      %v2116 = vld [vmem:[%s2100 + $0x78] sm:$0x3]
      %v2117 = vld [vmem:[%s2100 + $0xa0] sm:$0xff]
      %v2118 = vld [vmem:[%s2100 + $0xa8] sm:$0x3]
      %v2119 = vld [vmem:[%s2100 + $0xb0] sm:$0xff]
      %v2120 = vld [vmem:[%s2100 + $0xb8] sm:$0x3]
      %v2121 = vld [vmem:[%s2100 + $0xc0] sm:$0xff]
      %v2122 = vld [vmem:[%s2100 + $0xc8] sm:$0x3]
      %v2123 = vld [vmem:[%s2100 + $0xd0] sm:$0xff]
      %v2124 = vld [vmem:[%s2100 + $0xd8] sm:$0x3]
      %v2125 = vld [vmem:[%s2100 + $0xe0] sm:$0xff]
      %v2126 = vld [vmem:[%s2100 + $0xe8] sm:$0x3]
      %v2127 = vld [vmem:[%s2100 + $0xf0] sm:$0xff]
      %v2128 = vld [vmem:[%s2100 + $0xf8] sm:$0x3]
      %v2129 = vld [vmem:[%s2100 + $0x100] sm:$0xff]
      %v2130 = vld [vmem:[%s2100 + $0x108] sm:$0x3]
      %v2131 = vld [vmem:[%s2100 + $0x110] sm:$0xff]
      %v2132 = vld [vmem:[%s2100 + $0x118] sm:$0x3]
      %v2133 = vld [vmem:[%s2100 + $0x140] sm:$0xff]
      %v2134 = vld [vmem:[%s2100 + $0x148] sm:$0x3]
      %v2135 = vld [vmem:[%s2100 + $0x150] sm:$0xff]
      %v2136 = vld [vmem:[%s2100 + $0x158] sm:$0x3]
      %v2137 = vld [vmem:[%s2100 + $0x160] sm:$0xff]
      %v2138 = vld [vmem:[%s2100 + $0x168] sm:$0x3]
      %v2139 = vld [vmem:[%s2100 + $0x170] sm:$0xff]
      %v2140 = vld [vmem:[%s2100 + $0x178] sm:$0x3]
      %v2141 = vld [vmem:[%s2100 + $0x180] sm:$0xff]
      %v2142 = vld [vmem:[%s2100 + $0x188] sm:$0x3]
      %v2143 = vld [vmem:[%s2100 + $0x190] sm:$0xff]
      %v2144 = vld [vmem:[%s2100 + $0x198] sm:$0x3]
      %v2145 = vld [vmem:[%s2100 + $0x1a0] sm:$0xff]
      %v2146 = vld [vmem:[%s2100 + $0x1a8] sm:$0x3]
      %v2147 = vld [vmem:[%s2100 + $0x1b0] sm:$0xff]
      %v2148 = vld [vmem:[%s2100 + $0x1b8] sm:$0x3]
      %v2149 = vld [vmem:[%s2100 + $0x1e0] sm:$0xff]
      %v2150 = vld [vmem:[%s2100 + $0x1e8] sm:$0x3]
      %v2151 = vld [vmem:[%s2100 + $0x1f0] sm:$0xff]
      %v2152 = vld [vmem:[%s2100 + $0x1f8] sm:$0x3]
      %v2153 = vld [vmem:[%s2100 + $0x200] sm:$0xff]
      %v2154 = vld [vmem:[%s2100 + $0x208] sm:$0x3]
      %v2155 = vld [vmem:[%s2100 + $0x210] sm:$0xff]
      %v2156 = vld [vmem:[%s2100 + $0x218] sm:$0x3]
      %v2157 = vld [vmem:[%s2100 + $0x220] sm:$0xff]
      %v2158 = vld [vmem:[%s2100 + $0x228] sm:$0x3]
      %v2159 = vld [vmem:[%s2100 + $0x230] sm:$0xff]
      %v2160 = vld [vmem:[%s2100 + $0x238] sm:$0x3]
      %v2161 = vld [vmem:[%s2100 + $0x240] sm:$0xff]
      %v2162 = vld [vmem:[%s2100 + $0x248] sm:$0x3]
      %v2163 = vld [vmem:[%s2100 + $0x250] sm:$0xff]
      %v2164 = vld [vmem:[%s2100 + $0x258] sm:$0x3]
      %v2229 = vrot.slane %v2101, 1
      %v2230 = vrot.slane %v2102, 1
      %v2231 = vsel %vm554, %v2229, %v2230
      %v2232 = vrot.slane %v2103, 1
      %v2233 = vrot.slane %v2104, 1
      %v2234 = vsel %vm554, %v2232, %v2233
      %v2235 = vrot.slane %v2105, 1
      %v2236 = vrot.slane %v2106, 1
      %v2237 = vsel %vm554, %v2235, %v2236
      %v2238 = vrot.slane %v2107, 1
      %v2239 = vrot.slane %v2108, 1
      %v2240 = vsel %vm554, %v2238, %v2239
      %v2241 = vrot.slane %v2109, 1
      %v2242 = vrot.slane %v2110, 1
      %v2243 = vsel %vm554, %v2241, %v2242
      %v2244 = vrot.slane %v2111, 1
      %v2245 = vrot.slane %v2112, 1
      %v2246 = vsel %vm554, %v2244, %v2245
      %v2247 = vrot.slane %v2113, 1
      %v2248 = vrot.slane %v2114, 1
      %v2249 = vsel %vm554, %v2247, %v2248
      %v2250 = vrot.slane %v2115, 1
      %v2251 = vrot.slane %v2116, 1
      %v2252 = vsel %vm554, %v2250, %v2251
      %v2253 = vrot.slane %v2117, 1
      %v2254 = vrot.slane %v2118, 1
      %v2255 = vsel %vm554, %v2253, %v2254
      %v2256 = vrot.slane %v2119, 1
      %v2257 = vrot.slane %v2120, 1
      %v2258 = vsel %vm554, %v2256, %v2257
      %v2259 = vrot.slane %v2121, 1
      %v2260 = vrot.slane %v2122, 1
      %v2261 = vsel %vm554, %v2259, %v2260
      %v2262 = vrot.slane %v2123, 1
      %v2263 = vrot.slane %v2124, 1
      %v2264 = vsel %vm554, %v2262, %v2263
      %v2265 = vrot.slane %v2125, 1
      %v2266 = vrot.slane %v2126, 1
      %v2267 = vsel %vm554, %v2265, %v2266
      %v2268 = vrot.slane %v2127, 1
      %v2269 = vrot.slane %v2128, 1
      %v2270 = vsel %vm554, %v2268, %v2269
      %v2271 = vrot.slane %v2129, 1
      %v2272 = vrot.slane %v2130, 1
      %v2273 = vsel %vm554, %v2271, %v2272
      %v2274 = vrot.slane %v2131, 1
      %v2275 = vrot.slane %v2132, 1
      %v2276 = vsel %vm554, %v2274, %v2275
      %v2277 = vrot.slane %v2133, 1
      %v2278 = vrot.slane %v2134, 1
      %v2279 = vsel %vm554, %v2277, %v2278
      %v2280 = vrot.slane %v2135, 1
      %v2281 = vrot.slane %v2136, 1
      %v2282 = vsel %vm554, %v2280, %v2281
      %v2283 = vrot.slane %v2137, 1
      %v2284 = vrot.slane %v2138, 1
      %v2285 = vsel %vm554, %v2283, %v2284
      %v2286 = vrot.slane %v2139, 1
      %v2287 = vrot.slane %v2140, 1
      %v2288 = vsel %vm554, %v2286, %v2287
      %v2289 = vrot.slane %v2141, 1
      %v2290 = vrot.slane %v2142, 1
      %v2291 = vsel %vm554, %v2289, %v2290
      %v2292 = vrot.slane %v2143, 1
      %v2293 = vrot.slane %v2144, 1
      %v2294 = vsel %vm554, %v2292, %v2293
      %v2295 = vrot.slane %v2145, 1
      %v2296 = vrot.slane %v2146, 1
      %v2297 = vsel %vm554, %v2295, %v2296
      %v2298 = vrot.slane %v2147, 1
      %v2299 = vrot.slane %v2148, 1
      %v2300 = vsel %vm554, %v2298, %v2299
      %v2301 = vrot.slane %v2149, 1
      %v2302 = vrot.slane %v2150, 1
      %v2303 = vsel %vm554, %v2301, %v2302
      %v2304 = vrot.slane %v2151, 1
      %v2305 = vrot.slane %v2152, 1
      %v2306 = vsel %vm554, %v2304, %v2305
      %v2307 = vrot.slane %v2153, 1
      %v2308 = vrot.slane %v2154, 1
      %v2309 = vsel %vm554, %v2307, %v2308
      %v2310 = vrot.slane %v2155, 1
      %v2311 = vrot.slane %v2156, 1
      %v2312 = vsel %vm554, %v2310, %v2311
      %v2313 = vrot.slane %v2157, 1
      %v2314 = vrot.slane %v2158, 1
      %v2315 = vsel %vm554, %v2313, %v2314
      %v2316 = vrot.slane %v2159, 1
      %v2317 = vrot.slane %v2160, 1
      %v2318 = vsel %vm554, %v2316, %v2317
      %v2319 = vrot.slane %v2161, 1
      %v2320 = vrot.slane %v2162, 1
      %v2321 = vsel %vm554, %v2319, %v2320
      %v2322 = vrot.slane %v2163, 1
      %v2323 = vrot.slane %v2164, 1
      %v2324 = vsel %vm554, %v2322, %v2323
      %v2357 = vrot.slane %v2101, 2
      %v2358 = vrot.slane %v2102, 2
      %v2359 = vsel %vm683, %v2357, %v2358
      %v2360 = vrot.slane %v2103, 2
      %v2361 = vrot.slane %v2104, 2
      %v2362 = vsel %vm683, %v2360, %v2361
      %v2363 = vrot.slane %v2105, 2
      %v2364 = vrot.slane %v2106, 2
      %v2365 = vsel %vm683, %v2363, %v2364
      %v2366 = vrot.slane %v2107, 2
      %v2367 = vrot.slane %v2108, 2
      %v2368 = vsel %vm683, %v2366, %v2367
      %v2369 = vrot.slane %v2109, 2
      %v2370 = vrot.slane %v2110, 2
      %v2371 = vsel %vm683, %v2369, %v2370
      %v2372 = vrot.slane %v2111, 2
      %v2373 = vrot.slane %v2112, 2
      %v2374 = vsel %vm683, %v2372, %v2373
      %v2375 = vrot.slane %v2113, 2
      %v2376 = vrot.slane %v2114, 2
      %v2377 = vsel %vm683, %v2375, %v2376
      %v2378 = vrot.slane %v2115, 2
      %v2379 = vrot.slane %v2116, 2
      %v2380 = vsel %vm683, %v2378, %v2379
      %v2381 = vrot.slane %v2117, 2
      %v2382 = vrot.slane %v2118, 2
      %v2383 = vsel %vm683, %v2381, %v2382
      %v2384 = vrot.slane %v2119, 2
      %v2385 = vrot.slane %v2120, 2
      %v2386 = vsel %vm683, %v2384, %v2385
      %v2387 = vrot.slane %v2121, 2
      %v2388 = vrot.slane %v2122, 2
      %v2389 = vsel %vm683, %v2387, %v2388
      %v2390 = vrot.slane %v2123, 2
      %v2391 = vrot.slane %v2124, 2
      %v2392 = vsel %vm683, %v2390, %v2391
      %v2393 = vrot.slane %v2125, 2
      %v2394 = vrot.slane %v2126, 2
      %v2395 = vsel %vm683, %v2393, %v2394
      %v2396 = vrot.slane %v2127, 2
      %v2397 = vrot.slane %v2128, 2
      %v2398 = vsel %vm683, %v2396, %v2397
      %v2399 = vrot.slane %v2129, 2
      %v2400 = vrot.slane %v2130, 2
      %v2401 = vsel %vm683, %v2399, %v2400
      %v2402 = vrot.slane %v2131, 2
      %v2403 = vrot.slane %v2132, 2
      %v2404 = vsel %vm683, %v2402, %v2403
      %v2405 = vrot.slane %v2133, 2
      %v2406 = vrot.slane %v2134, 2
      %v2407 = vsel %vm683, %v2405, %v2406
      %v2408 = vrot.slane %v2135, 2
      %v2409 = vrot.slane %v2136, 2
      %v2410 = vsel %vm683, %v2408, %v2409
      %v2411 = vrot.slane %v2137, 2
      %v2412 = vrot.slane %v2138, 2
      %v2413 = vsel %vm683, %v2411, %v2412
      %v2414 = vrot.slane %v2139, 2
      %v2415 = vrot.slane %v2140, 2
      %v2416 = vsel %vm683, %v2414, %v2415
      %v2417 = vrot.slane %v2141, 2
      %v2418 = vrot.slane %v2142, 2
      %v2419 = vsel %vm683, %v2417, %v2418
      %v2420 = vrot.slane %v2143, 2
      %v2421 = vrot.slane %v2144, 2
      %v2422 = vsel %vm683, %v2420, %v2421
      %v2423 = vrot.slane %v2145, 2
      %v2424 = vrot.slane %v2146, 2
      %v2425 = vsel %vm683, %v2423, %v2424
      %v2426 = vrot.slane %v2147, 2
      %v2427 = vrot.slane %v2148, 2
      %v2428 = vsel %vm683, %v2426, %v2427
      %v2429 = vrot.slane %v2149, 2
      %v2430 = vrot.slane %v2150, 2
      %v2431 = vsel %vm683, %v2429, %v2430
      %v2432 = vrot.slane %v2151, 2
      %v2433 = vrot.slane %v2152, 2
      %v2434 = vsel %vm683, %v2432, %v2433
      %v2435 = vrot.slane %v2153, 2
      %v2436 = vrot.slane %v2154, 2
      %v2437 = vsel %vm683, %v2435, %v2436
      %v2438 = vrot.slane %v2155, 2
      %v2439 = vrot.slane %v2156, 2
      %v2440 = vsel %vm683, %v2438, %v2439
      %v2441 = vrot.slane %v2157, 2
      %v2442 = vrot.slane %v2158, 2
      %v2443 = vsel %vm683, %v2441, %v2442
      %v2444 = vrot.slane %v2159, 2
      %v2445 = vrot.slane %v2160, 2
      %v2446 = vsel %vm683, %v2444, %v2445
      %v2447 = vrot.slane %v2161, 2
      %v2448 = vrot.slane %v2162, 2
      %v2449 = vsel %vm683, %v2447, %v2448
      %v2450 = vrot.slane %v2163, 2
      %v2451 = vrot.slane %v2164, 2
      %v2452 = vsel %vm683, %v2450, %v2451
      %s2485 = scalar_lea.vmem %s1, 768
      %v2486 = vld [vmem:[%s2485] sm:$0xff]
      %v2487 = vld [vmem:[%s2485 + $0x8] sm:$0xff]
      %v2488 = vld [vmem:[%s2485 + $0x10] sm:$0xff]
      %v2489 = vld [vmem:[%s2485 + $0x18] sm:$0xff]
      %v2490 = vld [vmem:[%s2485 + $0x20] sm:$0xff]
      %v2491 = vld [vmem:[%s2485 + $0x28] sm:$0xff]
      %v2492 = vld [vmem:[%s2485 + $0x30] sm:$0xff]
      %v2493 = vld [vmem:[%s2485 + $0x38] sm:$0xff]
      %v2494 = vld [vmem:[%s2485 + $0x40] sm:$0xff]
      %v2495 = vld [vmem:[%s2485 + $0x48] sm:$0xff]
      %v2496 = vld [vmem:[%s2485 + $0x50] sm:$0xff]
      %v2497 = vld [vmem:[%s2485 + $0x58] sm:$0xff]
      %v2498 = vld [vmem:[%s2485 + $0x60] sm:$0xff]
      %v2499 = vld [vmem:[%s2485 + $0x68] sm:$0xff]
      %v2500 = vld [vmem:[%s2485 + $0x70] sm:$0xff]
      %v2501 = vld [vmem:[%s2485 + $0x78] sm:$0xff]
      %v2502 = vld [vmem:[%s2485 + $0x80] sm:$0xff]
      %v2503 = vld [vmem:[%s2485 + $0x88] sm:$0xff]
      %v2504 = vld [vmem:[%s2485 + $0x90] sm:$0xff]
      %v2505 = vld [vmem:[%s2485 + $0x98] sm:$0xff]
      %v2506 = vld [vmem:[%s2485 + $0xa0] sm:$0xff]
      %v2507 = vld [vmem:[%s2485 + $0xa8] sm:$0xff]
      %v2508 = vld [vmem:[%s2485 + $0xb0] sm:$0xff]
      %v2509 = vld [vmem:[%s2485 + $0xb8] sm:$0xff]
      %v2510 = vld [vmem:[%s2485 + $0xc0] sm:$0xff]
      %v2511 = vld [vmem:[%s2485 + $0xc8] sm:$0xff]
      %v2512 = vld [vmem:[%s2485 + $0xd0] sm:$0xff]
      %v2513 = vld [vmem:[%s2485 + $0xd8] sm:$0xff]
      %v2514 = vld [vmem:[%s2485 + $0xe0] sm:$0xff]
      %v2515 = vld [vmem:[%s2485 + $0xe8] sm:$0xff]
      %v2516 = vld [vmem:[%s2485 + $0xf0] sm:$0xff]
      %v2517 = vld [vmem:[%s2485 + $0xf8] sm:$0xff]
      %v2518 = vld [vmem:[%s2485 + $0x100] sm:$0xff]
      %v2519 = vld [vmem:[%s2485 + $0x108] sm:$0xff]
      %v2520 = vld [vmem:[%s2485 + $0x110] sm:$0xff]
      %v2521 = vld [vmem:[%s2485 + $0x118] sm:$0xff]
      %v2522 = vld [vmem:[%s2485 + $0x120] sm:$0xff]
      %v2523 = vld [vmem:[%s2485 + $0x128] sm:$0xff]
      %v2524 = vld [vmem:[%s2485 + $0x130] sm:$0xff]
      %v2525 = vld [vmem:[%s2485 + $0x138] sm:$0xff]
      %v2526 = vld [vmem:[%s2485 + $0x140] sm:$0xff]
      %v2527 = vld [vmem:[%s2485 + $0x148] sm:$0xff]
      %v2528 = vld [vmem:[%s2485 + $0x150] sm:$0xff]
      %v2529 = vld [vmem:[%s2485 + $0x158] sm:$0xff]
      %v2530 = vld [vmem:[%s2485 + $0x160] sm:$0xff]
      %v2531 = vld [vmem:[%s2485 + $0x168] sm:$0xff]
      %v2532 = vld [vmem:[%s2485 + $0x170] sm:$0xff]
      %v2533 = vld [vmem:[%s2485 + $0x178] sm:$0xff]
      %2534 = vmatpush.msra.mxu0 %v2501
      %2535 = vmatpush.msra.mxu0 %v2500
      %2536 = vmatpush.msra.mxu0 %v2499
      %2537 = vmatpush.msra.mxu0 %v2498
      %2538 = vmatpush.msra.mxu0 %v2497
      %2539 = vmatpush.msra.mxu0 %v2496
      %2540 = vmatpush.msra.mxu0 %v2495
      %2541 = vmatpush.msra.mxu0 %v2494
      %2542 = vmatpush.msra.mxu0 %v2493
      %2543 = vmatpush.msra.mxu0 %v2492
      %2544 = vmatpush.msra.mxu0 %v2491
      %2545 = vmatpush.msra.mxu0 %v2490
      %2546 = vmatpush.msra.mxu0 %v2489
      %2547 = vmatpush.msra.mxu0 %v2488
      %2548 = vmatpush.msra.mxu0 %v2487
      %2549 = vmatpush.msra.mxu0 %v2486
      %2550 = vmatmul.f32.gmra.mxu0 %v2101
      %v2551 = vpop.f32.mrf.mxu0
      %v2552 = vadd.f32 0.0, %v2551
      %2553 = vmatmul.f32.gmra.mxu0 %v2103
      %v2554 = vpop.f32.mrf.mxu0
      %v2555 = vadd.f32 0.0, %v2554
      %2556 = vmatmul.f32.gmra.mxu0 %v2105
      %v2557 = vpop.f32.mrf.mxu0
      %v2558 = vadd.f32 0.0, %v2557
      %2559 = vmatmul.f32.gmra.mxu0 %v2107
      %v2560 = vpop.f32.mrf.mxu0
      %v2561 = vadd.f32 0.0, %v2560
      %2562 = vmatmul.f32.gmra.mxu0 %v2109
      %v2563 = vpop.f32.mrf.mxu0
      %v2564 = vadd.f32 0.0, %v2563
      %2565 = vmatmul.f32.gmra.mxu0 %v2111
      %v2566 = vpop.f32.mrf.mxu0
      %v2567 = vadd.f32 0.0, %v2566
      %2568 = vmatmul.f32.gmra.mxu0 %v2113
      %v2569 = vpop.f32.mrf.mxu0
      %v2570 = vadd.f32 0.0, %v2569
      %2571 = vmatmul.f32.gmra.mxu0 %v2115
      %v2572 = vpop.f32.mrf.mxu0
      %v2573 = vadd.f32 0.0, %v2572
      %2574 = vmatmul.f32.gmra.mxu0 %v2117
      %v2575 = vpop.f32.mrf.mxu0
      %v2576 = vadd.f32 0.0, %v2575
      %2577 = vmatmul.f32.gmra.mxu0 %v2119
      %v2578 = vpop.f32.mrf.mxu0
      %v2579 = vadd.f32 0.0, %v2578
      %2580 = vmatmul.f32.gmra.mxu0 %v2121
      %v2581 = vpop.f32.mrf.mxu0
      %v2582 = vadd.f32 0.0, %v2581
      %2583 = vmatmul.f32.gmra.mxu0 %v2123
      %v2584 = vpop.f32.mrf.mxu0
      %v2585 = vadd.f32 0.0, %v2584
      %2586 = vmatmul.f32.gmra.mxu0 %v2125
      %v2587 = vpop.f32.mrf.mxu0
      %v2588 = vadd.f32 0.0, %v2587
      %2589 = vmatmul.f32.gmra.mxu0 %v2127
      %v2590 = vpop.f32.mrf.mxu0
      %v2591 = vadd.f32 0.0, %v2590
      %2592 = vmatmul.f32.gmra.mxu0 %v2129
      %v2593 = vpop.f32.mrf.mxu0
      %v2594 = vadd.f32 0.0, %v2593
      %2595 = vmatmul.f32.gmra.mxu0 %v2131
      %v2596 = vpop.f32.mrf.mxu0
      %v2597 = vadd.f32 0.0, %v2596
      %2598 = vmatmul.f32.gmra.mxu0 %v2133
      %v2599 = vpop.f32.mrf.mxu0
      %v2600 = vadd.f32 0.0, %v2599
      %2601 = vmatmul.f32.gmra.mxu0 %v2135
      %v2602 = vpop.f32.mrf.mxu0
      %v2603 = vadd.f32 0.0, %v2602
      %2604 = vmatmul.f32.gmra.mxu0 %v2137
      %v2605 = vpop.f32.mrf.mxu0
      %v2606 = vadd.f32 0.0, %v2605
      %2607 = vmatmul.f32.gmra.mxu0 %v2139
      %v2608 = vpop.f32.mrf.mxu0
      %v2609 = vadd.f32 0.0, %v2608
      %2610 = vmatmul.f32.gmra.mxu0 %v2141
      %v2611 = vpop.f32.mrf.mxu0
      %v2612 = vadd.f32 0.0, %v2611
      %2613 = vmatmul.f32.gmra.mxu0 %v2143
      %v2614 = vpop.f32.mrf.mxu0
      %v2615 = vadd.f32 0.0, %v2614
      %2616 = vmatmul.f32.gmra.mxu0 %v2145
      %v2617 = vpop.f32.mrf.mxu0
      %v2618 = vadd.f32 0.0, %v2617
      %2619 = vmatmul.f32.gmra.mxu0 %v2147
      %v2620 = vpop.f32.mrf.mxu0
      %v2621 = vadd.f32 0.0, %v2620
      %2622 = vmatmul.f32.gmra.mxu0 %v2149
      %v2623 = vpop.f32.mrf.mxu0
      %v2624 = vadd.f32 0.0, %v2623
      %2625 = vmatmul.f32.gmra.mxu0 %v2151
      %v2626 = vpop.f32.mrf.mxu0
      %v2627 = vadd.f32 0.0, %v2626
      %2628 = vmatmul.f32.gmra.mxu0 %v2153
      %v2629 = vpop.f32.mrf.mxu0
      %v2630 = vadd.f32 0.0, %v2629
      %2631 = vmatmul.f32.gmra.mxu0 %v2155
      %v2632 = vpop.f32.mrf.mxu0
      %v2633 = vadd.f32 0.0, %v2632
      %2634 = vmatmul.f32.gmra.mxu0 %v2157
      %v2635 = vpop.f32.mrf.mxu0
      %v2636 = vadd.f32 0.0, %v2635
      %2637 = vmatmul.f32.gmra.mxu0 %v2159
      %v2638 = vpop.f32.mrf.mxu0
      %v2639 = vadd.f32 0.0, %v2638
      %2640 = vmatmul.f32.gmra.mxu0 %v2161
      %v2641 = vpop.f32.mrf.mxu0
      %v2642 = vadd.f32 0.0, %v2641
      %2643 = vmatmul.f32.gmra.mxu0 %v2163
      %v2644 = vpop.f32.mrf.mxu0
      %v2645 = vadd.f32 0.0, %v2644
      %2646 = vdwg.mxu0
      %2647 = vmatpush.msra.mxu0 %v2517
      %2648 = vmatpush.msra.mxu0 %v2516
      %2649 = vmatpush.msra.mxu0 %v2515
      %2650 = vmatpush.msra.mxu0 %v2514
      %2651 = vmatpush.msra.mxu0 %v2513
      %2652 = vmatpush.msra.mxu0 %v2512
      %2653 = vmatpush.msra.mxu0 %v2511
      %2654 = vmatpush.msra.mxu0 %v2510
      %2655 = vmatpush.msra.mxu0 %v2509
      %2656 = vmatpush.msra.mxu0 %v2508
      %2657 = vmatpush.msra.mxu0 %v2507
      %2658 = vmatpush.msra.mxu0 %v2506
      %2659 = vmatpush.msra.mxu0 %v2505
      %2660 = vmatpush.msra.mxu0 %v2504
      %2661 = vmatpush.msra.mxu0 %v2503
      %2662 = vmatpush.msra.mxu0 %v2502
      %2663 = vmatmul.f32.gmra.mxu0 %v2231
      %v2664 = vpop.f32.mrf.mxu0
      %v2665 = vadd.f32 %v2552, %v2664
      %2666 = vmatmul.f32.gmra.mxu0 %v2234
      %v2667 = vpop.f32.mrf.mxu0
      %v2668 = vadd.f32 %v2555, %v2667
      %2669 = vmatmul.f32.gmra.mxu0 %v2237
      %v2670 = vpop.f32.mrf.mxu0
      %v2671 = vadd.f32 %v2558, %v2670
      %2672 = vmatmul.f32.gmra.mxu0 %v2240
      %v2673 = vpop.f32.mrf.mxu0
      %v2674 = vadd.f32 %v2561, %v2673
      %2675 = vmatmul.f32.gmra.mxu0 %v2243
      %v2676 = vpop.f32.mrf.mxu0
      %v2677 = vadd.f32 %v2564, %v2676
      %2678 = vmatmul.f32.gmra.mxu0 %v2246
      %v2679 = vpop.f32.mrf.mxu0
      %v2680 = vadd.f32 %v2567, %v2679
      %2681 = vmatmul.f32.gmra.mxu0 %v2249
      %v2682 = vpop.f32.mrf.mxu0
      %v2683 = vadd.f32 %v2570, %v2682
      %2684 = vmatmul.f32.gmra.mxu0 %v2252
      %v2685 = vpop.f32.mrf.mxu0
      %v2686 = vadd.f32 %v2573, %v2685
      %2687 = vmatmul.f32.gmra.mxu0 %v2255
      %v2688 = vpop.f32.mrf.mxu0
      %v2689 = vadd.f32 %v2576, %v2688
      %2690 = vmatmul.f32.gmra.mxu0 %v2258
      %v2691 = vpop.f32.mrf.mxu0
      %v2692 = vadd.f32 %v2579, %v2691
      %2693 = vmatmul.f32.gmra.mxu0 %v2261
      %v2694 = vpop.f32.mrf.mxu0
      %v2695 = vadd.f32 %v2582, %v2694
      %2696 = vmatmul.f32.gmra.mxu0 %v2264
      %v2697 = vpop.f32.mrf.mxu0
      %v2698 = vadd.f32 %v2585, %v2697
      %2699 = vmatmul.f32.gmra.mxu0 %v2267
      %v2700 = vpop.f32.mrf.mxu0
      %v2701 = vadd.f32 %v2588, %v2700
      %2702 = vmatmul.f32.gmra.mxu0 %v2270
      %v2703 = vpop.f32.mrf.mxu0
      %v2704 = vadd.f32 %v2591, %v2703
      %2705 = vmatmul.f32.gmra.mxu0 %v2273
      %v2706 = vpop.f32.mrf.mxu0
      %v2707 = vadd.f32 %v2594, %v2706
      %2708 = vmatmul.f32.gmra.mxu0 %v2276
      %v2709 = vpop.f32.mrf.mxu0
      %v2710 = vadd.f32 %v2597, %v2709
      %2711 = vmatmul.f32.gmra.mxu0 %v2279
      %v2712 = vpop.f32.mrf.mxu0
      %v2713 = vadd.f32 %v2600, %v2712
      %2714 = vmatmul.f32.gmra.mxu0 %v2282
      %v2715 = vpop.f32.mrf.mxu0
      %v2716 = vadd.f32 %v2603, %v2715
      %2717 = vmatmul.f32.gmra.mxu0 %v2285
      %v2718 = vpop.f32.mrf.mxu0
      %v2719 = vadd.f32 %v2606, %v2718
      %2720 = vmatmul.f32.gmra.mxu0 %v2288
      %v2721 = vpop.f32.mrf.mxu0
      %v2722 = vadd.f32 %v2609, %v2721
      %2723 = vmatmul.f32.gmra.mxu0 %v2291
      %v2724 = vpop.f32.mrf.mxu0
      %v2725 = vadd.f32 %v2612, %v2724
      %2726 = vmatmul.f32.gmra.mxu0 %v2294
      %v2727 = vpop.f32.mrf.mxu0
      %v2728 = vadd.f32 %v2615, %v2727
      %2729 = vmatmul.f32.gmra.mxu0 %v2297
      %v2730 = vpop.f32.mrf.mxu0
      %v2731 = vadd.f32 %v2618, %v2730
      %2732 = vmatmul.f32.gmra.mxu0 %v2300
      %v2733 = vpop.f32.mrf.mxu0
      %v2734 = vadd.f32 %v2621, %v2733
      %2735 = vmatmul.f32.gmra.mxu0 %v2303
      %v2736 = vpop.f32.mrf.mxu0
      %v2737 = vadd.f32 %v2624, %v2736
      %2738 = vmatmul.f32.gmra.mxu0 %v2306
      %v2739 = vpop.f32.mrf.mxu0
      %v2740 = vadd.f32 %v2627, %v2739
      %2741 = vmatmul.f32.gmra.mxu0 %v2309
      %v2742 = vpop.f32.mrf.mxu0
      %v2743 = vadd.f32 %v2630, %v2742
      %2744 = vmatmul.f32.gmra.mxu0 %v2312
      %v2745 = vpop.f32.mrf.mxu0
      %v2746 = vadd.f32 %v2633, %v2745
      %2747 = vmatmul.f32.gmra.mxu0 %v2315
      %v2748 = vpop.f32.mrf.mxu0
      %v2749 = vadd.f32 %v2636, %v2748
      %2750 = vmatmul.f32.gmra.mxu0 %v2318
      %v2751 = vpop.f32.mrf.mxu0
      %v2752 = vadd.f32 %v2639, %v2751
      %2753 = vmatmul.f32.gmra.mxu0 %v2321
      %v2754 = vpop.f32.mrf.mxu0
      %v2755 = vadd.f32 %v2642, %v2754
      %2756 = vmatmul.f32.gmra.mxu0 %v2324
      %v2757 = vpop.f32.mrf.mxu0
      %v2758 = vadd.f32 %v2645, %v2757
      %2759 = vdwg.mxu0
      %2760 = vmatpush.msra.mxu0 %v2533
      %2761 = vmatpush.msra.mxu0 %v2532
      %2762 = vmatpush.msra.mxu0 %v2531
      %2763 = vmatpush.msra.mxu0 %v2530
      %2764 = vmatpush.msra.mxu0 %v2529
      %2765 = vmatpush.msra.mxu0 %v2528
      %2766 = vmatpush.msra.mxu0 %v2527
      %2767 = vmatpush.msra.mxu0 %v2526
      %2768 = vmatpush.msra.mxu0 %v2525
      %2769 = vmatpush.msra.mxu0 %v2524
      %2770 = vmatpush.msra.mxu0 %v2523
      %2771 = vmatpush.msra.mxu0 %v2522
      %2772 = vmatpush.msra.mxu0 %v2521
      %2773 = vmatpush.msra.mxu0 %v2520
      %2774 = vmatpush.msra.mxu0 %v2519
      %2775 = vmatpush.msra.mxu0 %v2518
      %2776 = vmatmul.f32.gmra.mxu0 %v2359
      %v2777 = vpop.f32.mrf.mxu0
      %v2778 = vadd.f32 %v2665, %v2777
      %2779 = vmatmul.f32.gmra.mxu0 %v2362
      %v2780 = vpop.f32.mrf.mxu0
      %v2781 = vadd.f32 %v2668, %v2780
      %2782 = vmatmul.f32.gmra.mxu0 %v2365
      %v2783 = vpop.f32.mrf.mxu0
      %v2784 = vadd.f32 %v2671, %v2783
      %2785 = vmatmul.f32.gmra.mxu0 %v2368
      %v2786 = vpop.f32.mrf.mxu0
      %v2787 = vadd.f32 %v2674, %v2786
      %2788 = vmatmul.f32.gmra.mxu0 %v2371
      %v2789 = vpop.f32.mrf.mxu0
      %v2790 = vadd.f32 %v2677, %v2789
      %2791 = vmatmul.f32.gmra.mxu0 %v2374
      %v2792 = vpop.f32.mrf.mxu0
      %v2793 = vadd.f32 %v2680, %v2792
      %2794 = vmatmul.f32.gmra.mxu0 %v2377
      %v2795 = vpop.f32.mrf.mxu0
      %v2796 = vadd.f32 %v2683, %v2795
      %2797 = vmatmul.f32.gmra.mxu0 %v2380
      %v2798 = vpop.f32.mrf.mxu0
      %v2799 = vadd.f32 %v2686, %v2798
      %2800 = vmatmul.f32.gmra.mxu0 %v2383
      %v2801 = vpop.f32.mrf.mxu0
      %v2802 = vadd.f32 %v2689, %v2801
      %2803 = vmatmul.f32.gmra.mxu0 %v2386
      %v2804 = vpop.f32.mrf.mxu0
      %v2805 = vadd.f32 %v2692, %v2804
      %2806 = vmatmul.f32.gmra.mxu0 %v2389
      %v2807 = vpop.f32.mrf.mxu0
      %v2808 = vadd.f32 %v2695, %v2807
      %2809 = vmatmul.f32.gmra.mxu0 %v2392
      %v2810 = vpop.f32.mrf.mxu0
      %v2811 = vadd.f32 %v2698, %v2810
      %2812 = vmatmul.f32.gmra.mxu0 %v2395
      %v2813 = vpop.f32.mrf.mxu0
      %v2814 = vadd.f32 %v2701, %v2813
      %2815 = vmatmul.f32.gmra.mxu0 %v2398
      %v2816 = vpop.f32.mrf.mxu0
      %v2817 = vadd.f32 %v2704, %v2816
      %2818 = vmatmul.f32.gmra.mxu0 %v2401
      %v2819 = vpop.f32.mrf.mxu0
      %v2820 = vadd.f32 %v2707, %v2819
      %2821 = vmatmul.f32.gmra.mxu0 %v2404
      %v2822 = vpop.f32.mrf.mxu0
      %v2823 = vadd.f32 %v2710, %v2822
      %2824 = vmatmul.f32.gmra.mxu0 %v2407
      %v2825 = vpop.f32.mrf.mxu0
      %v2826 = vadd.f32 %v2713, %v2825
      %2827 = vmatmul.f32.gmra.mxu0 %v2410
      %v2828 = vpop.f32.mrf.mxu0
      %v2829 = vadd.f32 %v2716, %v2828
      %2830 = vmatmul.f32.gmra.mxu0 %v2413
      %v2831 = vpop.f32.mrf.mxu0
      %v2832 = vadd.f32 %v2719, %v2831
      %2833 = vmatmul.f32.gmra.mxu0 %v2416
      %v2834 = vpop.f32.mrf.mxu0
      %v2835 = vadd.f32 %v2722, %v2834
      %2836 = vmatmul.f32.gmra.mxu0 %v2419
      %v2837 = vpop.f32.mrf.mxu0
      %v2838 = vadd.f32 %v2725, %v2837
      %2839 = vmatmul.f32.gmra.mxu0 %v2422
      %v2840 = vpop.f32.mrf.mxu0
      %v2841 = vadd.f32 %v2728, %v2840
      %2842 = vmatmul.f32.gmra.mxu0 %v2425
      %v2843 = vpop.f32.mrf.mxu0
      %v2844 = vadd.f32 %v2731, %v2843
      %2845 = vmatmul.f32.gmra.mxu0 %v2428
      %v2846 = vpop.f32.mrf.mxu0
      %v2847 = vadd.f32 %v2734, %v2846
      %2848 = vmatmul.f32.gmra.mxu0 %v2431
      %v2849 = vpop.f32.mrf.mxu0
      %v2850 = vadd.f32 %v2737, %v2849
      %2851 = vmatmul.f32.gmra.mxu0 %v2434
      %v2852 = vpop.f32.mrf.mxu0
      %v2853 = vadd.f32 %v2740, %v2852
      %2854 = vmatmul.f32.gmra.mxu0 %v2437
      %v2855 = vpop.f32.mrf.mxu0
      %v2856 = vadd.f32 %v2743, %v2855
      %2857 = vmatmul.f32.gmra.mxu0 %v2440
      %v2858 = vpop.f32.mrf.mxu0
      %v2859 = vadd.f32 %v2746, %v2858
      %2860 = vmatmul.f32.gmra.mxu0 %v2443
      %v2861 = vpop.f32.mrf.mxu0
      %v2862 = vadd.f32 %v2749, %v2861
      %2863 = vmatmul.f32.gmra.mxu0 %v2446
      %v2864 = vpop.f32.mrf.mxu0
      %v2865 = vadd.f32 %v2752, %v2864
      %2866 = vmatmul.f32.gmra.mxu0 %v2449
      %v2867 = vpop.f32.mrf.mxu0
      %v2868 = vadd.f32 %v2755, %v2867
      %2869 = vmatmul.f32.gmra.mxu0 %v2452
      %v2870 = vpop.f32.mrf.mxu0
      %v2871 = vadd.f32 %v2758, %v2870
      %2872 = vdwg.mxu0
      %v2873 = vld [vmem:[#allocation3] sm:$0xff]
      %v2874 = vld [vmem:[#allocation3 + $0x8] sm:$0xff]
      %v2875 = vld [vmem:[#allocation3 + $0x10] sm:$0xff]
      %v2876 = vld [vmem:[#allocation3 + $0x18] sm:$0xff]
      %v2877 = vld [vmem:[#allocation3 + $0x20] sm:$0xff]
      %v2878 = vld [vmem:[#allocation3 + $0x28] sm:$0xff]
      %v2879 = vld [vmem:[#allocation3 + $0x30] sm:$0xff]
      %v2880 = vld [vmem:[#allocation3 + $0x38] sm:$0xff]
      %v2881 = vld [vmem:[#allocation3 + $0x40] sm:$0xff]
      %v2882 = vld [vmem:[#allocation3 + $0x48] sm:$0xff]
      %v2883 = vld [vmem:[#allocation3 + $0x50] sm:$0xff]
      %v2884 = vld [vmem:[#allocation3 + $0x58] sm:$0xff]
      %v2885 = vld [vmem:[#allocation3 + $0x60] sm:$0xff]
      %v2886 = vld [vmem:[#allocation3 + $0x68] sm:$0xff]
      %v2887 = vld [vmem:[#allocation3 + $0x70] sm:$0xff]
      %v2888 = vld [vmem:[#allocation3 + $0x78] sm:$0xff]
      %v2889 = vld [vmem:[#allocation3 + $0x80] sm:$0xff]
      %v2890 = vld [vmem:[#allocation3 + $0x88] sm:$0xff]
      %v2891 = vld [vmem:[#allocation3 + $0x90] sm:$0xff]
      %v2892 = vld [vmem:[#allocation3 + $0x98] sm:$0xff]
      %v2893 = vld [vmem:[#allocation3 + $0xa0] sm:$0xff]
      %v2894 = vld [vmem:[#allocation3 + $0xa8] sm:$0xff]
      %v2895 = vld [vmem:[#allocation3 + $0xb0] sm:$0xff]
      %v2896 = vld [vmem:[#allocation3 + $0xb8] sm:$0xff]
      %v2897 = vld [vmem:[#allocation3 + $0xc0] sm:$0xff]
      %v2898 = vld [vmem:[#allocation3 + $0xc8] sm:$0xff]
      %v2899 = vld [vmem:[#allocation3 + $0xd0] sm:$0xff]
      %v2900 = vld [vmem:[#allocation3 + $0xd8] sm:$0xff]
      %v2901 = vld [vmem:[#allocation3 + $0xe0] sm:$0xff]
      %v2902 = vld [vmem:[#allocation3 + $0xe8] sm:$0xff]
      %v2903 = vld [vmem:[#allocation3 + $0xf0] sm:$0xff]
      %v2904 = vld [vmem:[#allocation3 + $0xf8] sm:$0xff]
      %v2905 = vadd.f32 %v2873, %v2778
      %v2906 = vadd.f32 %v2874, %v2781
      %v2907 = vadd.f32 %v2875, %v2784
      %v2908 = vadd.f32 %v2876, %v2787
      %v2909 = vadd.f32 %v2877, %v2790
      %v2910 = vadd.f32 %v2878, %v2793
      %v2911 = vadd.f32 %v2879, %v2796
      %v2912 = vadd.f32 %v2880, %v2799
      %v2913 = vadd.f32 %v2881, %v2802
      %v2914 = vadd.f32 %v2882, %v2805
      %v2915 = vadd.f32 %v2883, %v2808
      %v2916 = vadd.f32 %v2884, %v2811
      %v2917 = vadd.f32 %v2885, %v2814
      %v2918 = vadd.f32 %v2886, %v2817
      %v2919 = vadd.f32 %v2887, %v2820
      %v2920 = vadd.f32 %v2888, %v2823
      %v2921 = vadd.f32 %v2889, %v2826
      %v2922 = vadd.f32 %v2890, %v2829
      %v2923 = vadd.f32 %v2891, %v2832
      %v2924 = vadd.f32 %v2892, %v2835
      %v2925 = vadd.f32 %v2893, %v2838
      %v2926 = vadd.f32 %v2894, %v2841
      %v2927 = vadd.f32 %v2895, %v2844
      %v2928 = vadd.f32 %v2896, %v2847
      %v2929 = vadd.f32 %v2897, %v2850
      %v2930 = vadd.f32 %v2898, %v2853
      %v2931 = vadd.f32 %v2899, %v2856
      %v2932 = vadd.f32 %v2900, %v2859
      %v2933 = vadd.f32 %v2901, %v2862
      %v2934 = vadd.f32 %v2902, %v2865
      %v2935 = vadd.f32 %v2903, %v2868
      %v2936 = vadd.f32 %v2904, %v2871
      %2937 = vst [vmem:[#allocation3] sm:$0xff] %v2905
      %2938 = vst [vmem:[#allocation3 + $0x8] sm:$0xff] %v2906
      %2939 = vst [vmem:[#allocation3 + $0x10] sm:$0xff] %v2907
      %2940 = vst [vmem:[#allocation3 + $0x18] sm:$0xff] %v2908
      %2941 = vst [vmem:[#allocation3 + $0x20] sm:$0xff] %v2909
      %2942 = vst [vmem:[#allocation3 + $0x28] sm:$0xff] %v2910
      %2943 = vst [vmem:[#allocation3 + $0x30] sm:$0xff] %v2911
      %2944 = vst [vmem:[#allocation3 + $0x38] sm:$0xff] %v2912
      %2945 = vst [vmem:[#allocation3 + $0x40] sm:$0xff] %v2913
      %2946 = vst [vmem:[#allocation3 + $0x48] sm:$0xff] %v2914
      %2947 = vst [vmem:[#allocation3 + $0x50] sm:$0xff] %v2915
      %2948 = vst [vmem:[#allocation3 + $0x58] sm:$0xff] %v2916
      %2949 = vst [vmem:[#allocation3 + $0x60] sm:$0xff] %v2917
      %2950 = vst [vmem:[#allocation3 + $0x68] sm:$0xff] %v2918
      %2951 = vst [vmem:[#allocation3 + $0x70] sm:$0xff] %v2919
      %2952 = vst [vmem:[#allocation3 + $0x78] sm:$0xff] %v2920
      %2953 = vst [vmem:[#allocation3 + $0x80] sm:$0xff] %v2921
      %2954 = vst [vmem:[#allocation3 + $0x88] sm:$0xff] %v2922
      %2955 = vst [vmem:[#allocation3 + $0x90] sm:$0xff] %v2923
      %2956 = vst [vmem:[#allocation3 + $0x98] sm:$0xff] %v2924
      %2957 = vst [vmem:[#allocation3 + $0xa0] sm:$0xff] %v2925
      %2958 = vst [vmem:[#allocation3 + $0xa8] sm:$0xff] %v2926
      %2959 = vst [vmem:[#allocation3 + $0xb0] sm:$0xff] %v2927
      %2960 = vst [vmem:[#allocation3 + $0xb8] sm:$0xff] %v2928
      %2961 = vst [vmem:[#allocation3 + $0xc0] sm:$0xff] %v2929
      %2962 = vst [vmem:[#allocation3 + $0xc8] sm:$0xff] %v2930
      %2963 = vst [vmem:[#allocation3 + $0xd0] sm:$0xff] %v2931
      %2964 = vst [vmem:[#allocation3 + $0xd8] sm:$0xff] %v2932
      %2965 = vst [vmem:[#allocation3 + $0xe0] sm:$0xff] %v2933
      %2966 = vst [vmem:[#allocation3 + $0xe8] sm:$0xff] %v2934
      %2967 = vst [vmem:[#allocation3 + $0xf0] sm:$0xff] %v2935
      %2968 = vst [vmem:[#allocation3 + $0xf8] sm:$0xff] %v2936
      %s2969 = scalar_lea.vmem [#allocation2], 160
      %v2970 = vld [vmem:[%s2969] sm:$0xff]
      %v2971 = vld [vmem:[%s2969 + $0x8] sm:$0x3]
      %v2972 = vld [vmem:[%s2969 + $0x10] sm:$0xff]
      %v2973 = vld [vmem:[%s2969 + $0x18] sm:$0x3]
      %v2974 = vld [vmem:[%s2969 + $0x20] sm:$0xff]
      %v2975 = vld [vmem:[%s2969 + $0x28] sm:$0x3]
      %v2976 = vld [vmem:[%s2969 + $0x30] sm:$0xff]
      %v2977 = vld [vmem:[%s2969 + $0x38] sm:$0x3]
      %v2978 = vld [vmem:[%s2969 + $0x40] sm:$0xff]
      %v2979 = vld [vmem:[%s2969 + $0x48] sm:$0x3]
      %v2980 = vld [vmem:[%s2969 + $0x50] sm:$0xff]
      %v2981 = vld [vmem:[%s2969 + $0x58] sm:$0x3]
      %v2982 = vld [vmem:[%s2969 + $0x60] sm:$0xff]
      %v2983 = vld [vmem:[%s2969 + $0x68] sm:$0x3]
      %v2984 = vld [vmem:[%s2969 + $0x70] sm:$0xff]
      %v2985 = vld [vmem:[%s2969 + $0x78] sm:$0x3]
      %v2986 = vld [vmem:[%s2969 + $0xa0] sm:$0xff]
      %v2987 = vld [vmem:[%s2969 + $0xa8] sm:$0x3]
      %v2988 = vld [vmem:[%s2969 + $0xb0] sm:$0xff]
      %v2989 = vld [vmem:[%s2969 + $0xb8] sm:$0x3]
      %v2990 = vld [vmem:[%s2969 + $0xc0] sm:$0xff]
      %v2991 = vld [vmem:[%s2969 + $0xc8] sm:$0x3]
      %v2992 = vld [vmem:[%s2969 + $0xd0] sm:$0xff]
      %v2993 = vld [vmem:[%s2969 + $0xd8] sm:$0x3]
      %v2994 = vld [vmem:[%s2969 + $0xe0] sm:$0xff]
      %v2995 = vld [vmem:[%s2969 + $0xe8] sm:$0x3]
      %v2996 = vld [vmem:[%s2969 + $0xf0] sm:$0xff]
      %v2997 = vld [vmem:[%s2969 + $0xf8] sm:$0x3]
      %v2998 = vld [vmem:[%s2969 + $0x100] sm:$0xff]
      %v2999 = vld [vmem:[%s2969 + $0x108] sm:$0x3]
      %v3000 = vld [vmem:[%s2969 + $0x110] sm:$0xff]
      %v3001 = vld [vmem:[%s2969 + $0x118] sm:$0x3]
      %v3002 = vld [vmem:[%s2969 + $0x140] sm:$0xff]
      %v3003 = vld [vmem:[%s2969 + $0x148] sm:$0x3]
      %v3004 = vld [vmem:[%s2969 + $0x150] sm:$0xff]
      %v3005 = vld [vmem:[%s2969 + $0x158] sm:$0x3]
      %v3006 = vld [vmem:[%s2969 + $0x160] sm:$0xff]
      %v3007 = vld [vmem:[%s2969 + $0x168] sm:$0x3]
      %v3008 = vld [vmem:[%s2969 + $0x170] sm:$0xff]
      %v3009 = vld [vmem:[%s2969 + $0x178] sm:$0x3]
      %v3010 = vld [vmem:[%s2969 + $0x180] sm:$0xff]
      %v3011 = vld [vmem:[%s2969 + $0x188] sm:$0x3]
      %v3012 = vld [vmem:[%s2969 + $0x190] sm:$0xff]
      %v3013 = vld [vmem:[%s2969 + $0x198] sm:$0x3]
      %v3014 = vld [vmem:[%s2969 + $0x1a0] sm:$0xff]
      %v3015 = vld [vmem:[%s2969 + $0x1a8] sm:$0x3]
      %v3016 = vld [vmem:[%s2969 + $0x1b0] sm:$0xff]
      %v3017 = vld [vmem:[%s2969 + $0x1b8] sm:$0x3]
      %v3018 = vld [vmem:[%s2969 + $0x1e0] sm:$0xff]
      %v3019 = vld [vmem:[%s2969 + $0x1e8] sm:$0x3]
      %v3020 = vld [vmem:[%s2969 + $0x1f0] sm:$0xff]
      %v3021 = vld [vmem:[%s2969 + $0x1f8] sm:$0x3]
      %v3022 = vld [vmem:[%s2969 + $0x200] sm:$0xff]
      %v3023 = vld [vmem:[%s2969 + $0x208] sm:$0x3]
      %v3024 = vld [vmem:[%s2969 + $0x210] sm:$0xff]
      %v3025 = vld [vmem:[%s2969 + $0x218] sm:$0x3]
      %v3026 = vld [vmem:[%s2969 + $0x220] sm:$0xff]
      %v3027 = vld [vmem:[%s2969 + $0x228] sm:$0x3]
      %v3028 = vld [vmem:[%s2969 + $0x230] sm:$0xff]
      %v3029 = vld [vmem:[%s2969 + $0x238] sm:$0x3]
      %v3030 = vld [vmem:[%s2969 + $0x240] sm:$0xff]
      %v3031 = vld [vmem:[%s2969 + $0x248] sm:$0x3]
      %v3032 = vld [vmem:[%s2969 + $0x250] sm:$0xff]
      %v3033 = vld [vmem:[%s2969 + $0x258] sm:$0x3]
      %v3098 = vrot.slane %v2970, 1
      %v3099 = vrot.slane %v2971, 1
      %v3100 = vsel %vm554, %v3098, %v3099
      %v3101 = vrot.slane %v2972, 1
      %v3102 = vrot.slane %v2973, 1
      %v3103 = vsel %vm554, %v3101, %v3102
      %v3104 = vrot.slane %v2974, 1
      %v3105 = vrot.slane %v2975, 1
      %v3106 = vsel %vm554, %v3104, %v3105
      %v3107 = vrot.slane %v2976, 1
      %v3108 = vrot.slane %v2977, 1
      %v3109 = vsel %vm554, %v3107, %v3108
      %v3110 = vrot.slane %v2978, 1
      %v3111 = vrot.slane %v2979, 1
      %v3112 = vsel %vm554, %v3110, %v3111
      %v3113 = vrot.slane %v2980, 1
      %v3114 = vrot.slane %v2981, 1
      %v3115 = vsel %vm554, %v3113, %v3114
      %v3116 = vrot.slane %v2982, 1
      %v3117 = vrot.slane %v2983, 1
      %v3118 = vsel %vm554, %v3116, %v3117
      %v3119 = vrot.slane %v2984, 1
      %v3120 = vrot.slane %v2985, 1
      %v3121 = vsel %vm554, %v3119, %v3120
      %v3122 = vrot.slane %v2986, 1
      %v3123 = vrot.slane %v2987, 1
      %v3124 = vsel %vm554, %v3122, %v3123
      %v3125 = vrot.slane %v2988, 1
      %v3126 = vrot.slane %v2989, 1
      %v3127 = vsel %vm554, %v3125, %v3126
      %v3128 = vrot.slane %v2990, 1
      %v3129 = vrot.slane %v2991, 1
      %v3130 = vsel %vm554, %v3128, %v3129
      %v3131 = vrot.slane %v2992, 1
      %v3132 = vrot.slane %v2993, 1
      %v3133 = vsel %vm554, %v3131, %v3132
      %v3134 = vrot.slane %v2994, 1
      %v3135 = vrot.slane %v2995, 1
      %v3136 = vsel %vm554, %v3134, %v3135
      %v3137 = vrot.slane %v2996, 1
      %v3138 = vrot.slane %v2997, 1
      %v3139 = vsel %vm554, %v3137, %v3138
      %v3140 = vrot.slane %v2998, 1
      %v3141 = vrot.slane %v2999, 1
      %v3142 = vsel %vm554, %v3140, %v3141
      %v3143 = vrot.slane %v3000, 1
      %v3144 = vrot.slane %v3001, 1
      %v3145 = vsel %vm554, %v3143, %v3144
      %v3146 = vrot.slane %v3002, 1
      %v3147 = vrot.slane %v3003, 1
      %v3148 = vsel %vm554, %v3146, %v3147
      %v3149 = vrot.slane %v3004, 1
      %v3150 = vrot.slane %v3005, 1
      %v3151 = vsel %vm554, %v3149, %v3150
      %v3152 = vrot.slane %v3006, 1
      %v3153 = vrot.slane %v3007, 1
      %v3154 = vsel %vm554, %v3152, %v3153
      %v3155 = vrot.slane %v3008, 1
      %v3156 = vrot.slane %v3009, 1
      %v3157 = vsel %vm554, %v3155, %v3156
      %v3158 = vrot.slane %v3010, 1
      %v3159 = vrot.slane %v3011, 1
      %v3160 = vsel %vm554, %v3158, %v3159
      %v3161 = vrot.slane %v3012, 1
      %v3162 = vrot.slane %v3013, 1
      %v3163 = vsel %vm554, %v3161, %v3162
      %v3164 = vrot.slane %v3014, 1
      %v3165 = vrot.slane %v3015, 1
      %v3166 = vsel %vm554, %v3164, %v3165
      %v3167 = vrot.slane %v3016, 1
      %v3168 = vrot.slane %v3017, 1
      %v3169 = vsel %vm554, %v3167, %v3168
      %v3170 = vrot.slane %v3018, 1
      %v3171 = vrot.slane %v3019, 1
      %v3172 = vsel %vm554, %v3170, %v3171
      %v3173 = vrot.slane %v3020, 1
      %v3174 = vrot.slane %v3021, 1
      %v3175 = vsel %vm554, %v3173, %v3174
      %v3176 = vrot.slane %v3022, 1
      %v3177 = vrot.slane %v3023, 1
      %v3178 = vsel %vm554, %v3176, %v3177
      %v3179 = vrot.slane %v3024, 1
      %v3180 = vrot.slane %v3025, 1
      %v3181 = vsel %vm554, %v3179, %v3180
      %v3182 = vrot.slane %v3026, 1
      %v3183 = vrot.slane %v3027, 1
      %v3184 = vsel %vm554, %v3182, %v3183
      %v3185 = vrot.slane %v3028, 1
      %v3186 = vrot.slane %v3029, 1
      %v3187 = vsel %vm554, %v3185, %v3186
      %v3188 = vrot.slane %v3030, 1
      %v3189 = vrot.slane %v3031, 1
      %v3190 = vsel %vm554, %v3188, %v3189
      %v3191 = vrot.slane %v3032, 1
      %v3192 = vrot.slane %v3033, 1
      %v3193 = vsel %vm554, %v3191, %v3192
      %v3226 = vrot.slane %v2970, 2
      %v3227 = vrot.slane %v2971, 2
      %v3228 = vsel %vm683, %v3226, %v3227
      %v3229 = vrot.slane %v2972, 2
      %v3230 = vrot.slane %v2973, 2
      %v3231 = vsel %vm683, %v3229, %v3230
      %v3232 = vrot.slane %v2974, 2
      %v3233 = vrot.slane %v2975, 2
      %v3234 = vsel %vm683, %v3232, %v3233
      %v3235 = vrot.slane %v2976, 2
      %v3236 = vrot.slane %v2977, 2
      %v3237 = vsel %vm683, %v3235, %v3236
      %v3238 = vrot.slane %v2978, 2
      %v3239 = vrot.slane %v2979, 2
      %v3240 = vsel %vm683, %v3238, %v3239
      %v3241 = vrot.slane %v2980, 2
      %v3242 = vrot.slane %v2981, 2
      %v3243 = vsel %vm683, %v3241, %v3242
      %v3244 = vrot.slane %v2982, 2
      %v3245 = vrot.slane %v2983, 2
      %v3246 = vsel %vm683, %v3244, %v3245
      %v3247 = vrot.slane %v2984, 2
      %v3248 = vrot.slane %v2985, 2
      %v3249 = vsel %vm683, %v3247, %v3248
      %v3250 = vrot.slane %v2986, 2
      %v3251 = vrot.slane %v2987, 2
      %v3252 = vsel %vm683, %v3250, %v3251
      %v3253 = vrot.slane %v2988, 2
      %v3254 = vrot.slane %v2989, 2
      %v3255 = vsel %vm683, %v3253, %v3254
      %v3256 = vrot.slane %v2990, 2
      %v3257 = vrot.slane %v2991, 2
      %v3258 = vsel %vm683, %v3256, %v3257
      %v3259 = vrot.slane %v2992, 2
      %v3260 = vrot.slane %v2993, 2
      %v3261 = vsel %vm683, %v3259, %v3260
      %v3262 = vrot.slane %v2994, 2
      %v3263 = vrot.slane %v2995, 2
      %v3264 = vsel %vm683, %v3262, %v3263
      %v3265 = vrot.slane %v2996, 2
      %v3266 = vrot.slane %v2997, 2
      %v3267 = vsel %vm683, %v3265, %v3266
      %v3268 = vrot.slane %v2998, 2
      %v3269 = vrot.slane %v2999, 2
      %v3270 = vsel %vm683, %v3268, %v3269
      %v3271 = vrot.slane %v3000, 2
      %v3272 = vrot.slane %v3001, 2
      %v3273 = vsel %vm683, %v3271, %v3272
      %v3274 = vrot.slane %v3002, 2
      %v3275 = vrot.slane %v3003, 2
      %v3276 = vsel %vm683, %v3274, %v3275
      %v3277 = vrot.slane %v3004, 2
      %v3278 = vrot.slane %v3005, 2
      %v3279 = vsel %vm683, %v3277, %v3278
      %v3280 = vrot.slane %v3006, 2
      %v3281 = vrot.slane %v3007, 2
      %v3282 = vsel %vm683, %v3280, %v3281
      %v3283 = vrot.slane %v3008, 2
      %v3284 = vrot.slane %v3009, 2
      %v3285 = vsel %vm683, %v3283, %v3284
      %v3286 = vrot.slane %v3010, 2
      %v3287 = vrot.slane %v3011, 2
      %v3288 = vsel %vm683, %v3286, %v3287
      %v3289 = vrot.slane %v3012, 2
      %v3290 = vrot.slane %v3013, 2
      %v3291 = vsel %vm683, %v3289, %v3290
      %v3292 = vrot.slane %v3014, 2
      %v3293 = vrot.slane %v3015, 2
      %v3294 = vsel %vm683, %v3292, %v3293
      %v3295 = vrot.slane %v3016, 2
      %v3296 = vrot.slane %v3017, 2
      %v3297 = vsel %vm683, %v3295, %v3296
      %v3298 = vrot.slane %v3018, 2
      %v3299 = vrot.slane %v3019, 2
      %v3300 = vsel %vm683, %v3298, %v3299
      %v3301 = vrot.slane %v3020, 2
      %v3302 = vrot.slane %v3021, 2
      %v3303 = vsel %vm683, %v3301, %v3302
      %v3304 = vrot.slane %v3022, 2
      %v3305 = vrot.slane %v3023, 2
      %v3306 = vsel %vm683, %v3304, %v3305
      %v3307 = vrot.slane %v3024, 2
      %v3308 = vrot.slane %v3025, 2
      %v3309 = vsel %vm683, %v3307, %v3308
      %v3310 = vrot.slane %v3026, 2
      %v3311 = vrot.slane %v3027, 2
      %v3312 = vsel %vm683, %v3310, %v3311
      %v3313 = vrot.slane %v3028, 2
      %v3314 = vrot.slane %v3029, 2
      %v3315 = vsel %vm683, %v3313, %v3314
      %v3316 = vrot.slane %v3030, 2
      %v3317 = vrot.slane %v3031, 2
      %v3318 = vsel %vm683, %v3316, %v3317
      %v3319 = vrot.slane %v3032, 2
      %v3320 = vrot.slane %v3033, 2
      %v3321 = vsel %vm683, %v3319, %v3320
      %s3354 = scalar_lea.vmem %s1, 1152
      %v3355 = vld [vmem:[%s3354] sm:$0xff]
      %v3356 = vld [vmem:[%s3354 + $0x8] sm:$0xff]
      %v3357 = vld [vmem:[%s3354 + $0x10] sm:$0xff]
      %v3358 = vld [vmem:[%s3354 + $0x18] sm:$0xff]
      %v3359 = vld [vmem:[%s3354 + $0x20] sm:$0xff]
      %v3360 = vld [vmem:[%s3354 + $0x28] sm:$0xff]
      %v3361 = vld [vmem:[%s3354 + $0x30] sm:$0xff]
      %v3362 = vld [vmem:[%s3354 + $0x38] sm:$0xff]
      %v3363 = vld [vmem:[%s3354 + $0x40] sm:$0xff]
      %v3364 = vld [vmem:[%s3354 + $0x48] sm:$0xff]
      %v3365 = vld [vmem:[%s3354 + $0x50] sm:$0xff]
      %v3366 = vld [vmem:[%s3354 + $0x58] sm:$0xff]
      %v3367 = vld [vmem:[%s3354 + $0x60] sm:$0xff]
      %v3368 = vld [vmem:[%s3354 + $0x68] sm:$0xff]
      %v3369 = vld [vmem:[%s3354 + $0x70] sm:$0xff]
      %v3370 = vld [vmem:[%s3354 + $0x78] sm:$0xff]
      %v3371 = vld [vmem:[%s3354 + $0x80] sm:$0xff]
      %v3372 = vld [vmem:[%s3354 + $0x88] sm:$0xff]
      %v3373 = vld [vmem:[%s3354 + $0x90] sm:$0xff]
      %v3374 = vld [vmem:[%s3354 + $0x98] sm:$0xff]
      %v3375 = vld [vmem:[%s3354 + $0xa0] sm:$0xff]
      %v3376 = vld [vmem:[%s3354 + $0xa8] sm:$0xff]
      %v3377 = vld [vmem:[%s3354 + $0xb0] sm:$0xff]
      %v3378 = vld [vmem:[%s3354 + $0xb8] sm:$0xff]
      %v3379 = vld [vmem:[%s3354 + $0xc0] sm:$0xff]
      %v3380 = vld [vmem:[%s3354 + $0xc8] sm:$0xff]
      %v3381 = vld [vmem:[%s3354 + $0xd0] sm:$0xff]
      %v3382 = vld [vmem:[%s3354 + $0xd8] sm:$0xff]
      %v3383 = vld [vmem:[%s3354 + $0xe0] sm:$0xff]
      %v3384 = vld [vmem:[%s3354 + $0xe8] sm:$0xff]
      %v3385 = vld [vmem:[%s3354 + $0xf0] sm:$0xff]
      %v3386 = vld [vmem:[%s3354 + $0xf8] sm:$0xff]
      %v3387 = vld [vmem:[%s3354 + $0x100] sm:$0xff]
      %v3388 = vld [vmem:[%s3354 + $0x108] sm:$0xff]
      %v3389 = vld [vmem:[%s3354 + $0x110] sm:$0xff]
      %v3390 = vld [vmem:[%s3354 + $0x118] sm:$0xff]
      %v3391 = vld [vmem:[%s3354 + $0x120] sm:$0xff]
      %v3392 = vld [vmem:[%s3354 + $0x128] sm:$0xff]
      %v3393 = vld [vmem:[%s3354 + $0x130] sm:$0xff]
      %v3394 = vld [vmem:[%s3354 + $0x138] sm:$0xff]
      %v3395 = vld [vmem:[%s3354 + $0x140] sm:$0xff]
      %v3396 = vld [vmem:[%s3354 + $0x148] sm:$0xff]
      %v3397 = vld [vmem:[%s3354 + $0x150] sm:$0xff]
      %v3398 = vld [vmem:[%s3354 + $0x158] sm:$0xff]
      %v3399 = vld [vmem:[%s3354 + $0x160] sm:$0xff]
      %v3400 = vld [vmem:[%s3354 + $0x168] sm:$0xff]
      %v3401 = vld [vmem:[%s3354 + $0x170] sm:$0xff]
      %v3402 = vld [vmem:[%s3354 + $0x178] sm:$0xff]
      %3403 = vmatpush.msra.mxu0 %v3370
      %3404 = vmatpush.msra.mxu0 %v3369
      %3405 = vmatpush.msra.mxu0 %v3368
      %3406 = vmatpush.msra.mxu0 %v3367
      %3407 = vmatpush.msra.mxu0 %v3366
      %3408 = vmatpush.msra.mxu0 %v3365
      %3409 = vmatpush.msra.mxu0 %v3364
      %3410 = vmatpush.msra.mxu0 %v3363
      %3411 = vmatpush.msra.mxu0 %v3362
      %3412 = vmatpush.msra.mxu0 %v3361
      %3413 = vmatpush.msra.mxu0 %v3360
      %3414 = vmatpush.msra.mxu0 %v3359
      %3415 = vmatpush.msra.mxu0 %v3358
      %3416 = vmatpush.msra.mxu0 %v3357
      %3417 = vmatpush.msra.mxu0 %v3356
      %3418 = vmatpush.msra.mxu0 %v3355
      %3419 = vmatmul.f32.gmra.mxu0 %v2970
      %v3420 = vpop.f32.mrf.mxu0
      %v3421 = vadd.f32 0.0, %v3420
      %3422 = vmatmul.f32.gmra.mxu0 %v2972
      %v3423 = vpop.f32.mrf.mxu0
      %v3424 = vadd.f32 0.0, %v3423
      %3425 = vmatmul.f32.gmra.mxu0 %v2974
      %v3426 = vpop.f32.mrf.mxu0
      %v3427 = vadd.f32 0.0, %v3426
      %3428 = vmatmul.f32.gmra.mxu0 %v2976
      %v3429 = vpop.f32.mrf.mxu0
      %v3430 = vadd.f32 0.0, %v3429
      %3431 = vmatmul.f32.gmra.mxu0 %v2978
      %v3432 = vpop.f32.mrf.mxu0
      %v3433 = vadd.f32 0.0, %v3432
      %3434 = vmatmul.f32.gmra.mxu0 %v2980
      %v3435 = vpop.f32.mrf.mxu0
      %v3436 = vadd.f32 0.0, %v3435
      %3437 = vmatmul.f32.gmra.mxu0 %v2982
      %v3438 = vpop.f32.mrf.mxu0
      %v3439 = vadd.f32 0.0, %v3438
      %3440 = vmatmul.f32.gmra.mxu0 %v2984
      %v3441 = vpop.f32.mrf.mxu0
      %v3442 = vadd.f32 0.0, %v3441
      %3443 = vmatmul.f32.gmra.mxu0 %v2986
      %v3444 = vpop.f32.mrf.mxu0
      %v3445 = vadd.f32 0.0, %v3444
      %3446 = vmatmul.f32.gmra.mxu0 %v2988
      %v3447 = vpop.f32.mrf.mxu0
      %v3448 = vadd.f32 0.0, %v3447
      %3449 = vmatmul.f32.gmra.mxu0 %v2990
      %v3450 = vpop.f32.mrf.mxu0
      %v3451 = vadd.f32 0.0, %v3450
      %3452 = vmatmul.f32.gmra.mxu0 %v2992
      %v3453 = vpop.f32.mrf.mxu0
      %v3454 = vadd.f32 0.0, %v3453
      %3455 = vmatmul.f32.gmra.mxu0 %v2994
      %v3456 = vpop.f32.mrf.mxu0
      %v3457 = vadd.f32 0.0, %v3456
      %3458 = vmatmul.f32.gmra.mxu0 %v2996
      %v3459 = vpop.f32.mrf.mxu0
      %v3460 = vadd.f32 0.0, %v3459
      %3461 = vmatmul.f32.gmra.mxu0 %v2998
      %v3462 = vpop.f32.mrf.mxu0
      %v3463 = vadd.f32 0.0, %v3462
      %3464 = vmatmul.f32.gmra.mxu0 %v3000
      %v3465 = vpop.f32.mrf.mxu0
      %v3466 = vadd.f32 0.0, %v3465
      %3467 = vmatmul.f32.gmra.mxu0 %v3002
      %v3468 = vpop.f32.mrf.mxu0
      %v3469 = vadd.f32 0.0, %v3468
      %3470 = vmatmul.f32.gmra.mxu0 %v3004
      %v3471 = vpop.f32.mrf.mxu0
      %v3472 = vadd.f32 0.0, %v3471
      %3473 = vmatmul.f32.gmra.mxu0 %v3006
      %v3474 = vpop.f32.mrf.mxu0
      %v3475 = vadd.f32 0.0, %v3474
      %3476 = vmatmul.f32.gmra.mxu0 %v3008
      %v3477 = vpop.f32.mrf.mxu0
      %v3478 = vadd.f32 0.0, %v3477
      %3479 = vmatmul.f32.gmra.mxu0 %v3010
      %v3480 = vpop.f32.mrf.mxu0
      %v3481 = vadd.f32 0.0, %v3480
      %3482 = vmatmul.f32.gmra.mxu0 %v3012
      %v3483 = vpop.f32.mrf.mxu0
      %v3484 = vadd.f32 0.0, %v3483
      %3485 = vmatmul.f32.gmra.mxu0 %v3014
      %v3486 = vpop.f32.mrf.mxu0
      %v3487 = vadd.f32 0.0, %v3486
      %3488 = vmatmul.f32.gmra.mxu0 %v3016
      %v3489 = vpop.f32.mrf.mxu0
      %v3490 = vadd.f32 0.0, %v3489
      %3491 = vmatmul.f32.gmra.mxu0 %v3018
      %v3492 = vpop.f32.mrf.mxu0
      %v3493 = vadd.f32 0.0, %v3492
      %3494 = vmatmul.f32.gmra.mxu0 %v3020
      %v3495 = vpop.f32.mrf.mxu0
      %v3496 = vadd.f32 0.0, %v3495
      %3497 = vmatmul.f32.gmra.mxu0 %v3022
      %v3498 = vpop.f32.mrf.mxu0
      %v3499 = vadd.f32 0.0, %v3498
      %3500 = vmatmul.f32.gmra.mxu0 %v3024
      %v3501 = vpop.f32.mrf.mxu0
      %v3502 = vadd.f32 0.0, %v3501
      %3503 = vmatmul.f32.gmra.mxu0 %v3026
      %v3504 = vpop.f32.mrf.mxu0
      %v3505 = vadd.f32 0.0, %v3504
      %3506 = vmatmul.f32.gmra.mxu0 %v3028
      %v3507 = vpop.f32.mrf.mxu0
      %v3508 = vadd.f32 0.0, %v3507
      %3509 = vmatmul.f32.gmra.mxu0 %v3030
      %v3510 = vpop.f32.mrf.mxu0
      %v3511 = vadd.f32 0.0, %v3510
      %3512 = vmatmul.f32.gmra.mxu0 %v3032
      %v3513 = vpop.f32.mrf.mxu0
      %v3514 = vadd.f32 0.0, %v3513
      %3515 = vdwg.mxu0
      %3516 = vmatpush.msra.mxu0 %v3386
      %3517 = vmatpush.msra.mxu0 %v3385
      %3518 = vmatpush.msra.mxu0 %v3384
      %3519 = vmatpush.msra.mxu0 %v3383
      %3520 = vmatpush.msra.mxu0 %v3382
      %3521 = vmatpush.msra.mxu0 %v3381
      %3522 = vmatpush.msra.mxu0 %v3380
      %3523 = vmatpush.msra.mxu0 %v3379
      %3524 = vmatpush.msra.mxu0 %v3378
      %3525 = vmatpush.msra.mxu0 %v3377
      %3526 = vmatpush.msra.mxu0 %v3376
      %3527 = vmatpush.msra.mxu0 %v3375
      %3528 = vmatpush.msra.mxu0 %v3374
      %3529 = vmatpush.msra.mxu0 %v3373
      %3530 = vmatpush.msra.mxu0 %v3372
      %3531 = vmatpush.msra.mxu0 %v3371
      %3532 = vmatmul.f32.gmra.mxu0 %v3100
      %v3533 = vpop.f32.mrf.mxu0
      %v3534 = vadd.f32 %v3421, %v3533
      %3535 = vmatmul.f32.gmra.mxu0 %v3103
      %v3536 = vpop.f32.mrf.mxu0
      %v3537 = vadd.f32 %v3424, %v3536
      %3538 = vmatmul.f32.gmra.mxu0 %v3106
      %v3539 = vpop.f32.mrf.mxu0
      %v3540 = vadd.f32 %v3427, %v3539
      %3541 = vmatmul.f32.gmra.mxu0 %v3109
      %v3542 = vpop.f32.mrf.mxu0
      %v3543 = vadd.f32 %v3430, %v3542
      %3544 = vmatmul.f32.gmra.mxu0 %v3112
      %v3545 = vpop.f32.mrf.mxu0
      %v3546 = vadd.f32 %v3433, %v3545
      %3547 = vmatmul.f32.gmra.mxu0 %v3115
      %v3548 = vpop.f32.mrf.mxu0
      %v3549 = vadd.f32 %v3436, %v3548
      %3550 = vmatmul.f32.gmra.mxu0 %v3118
      %v3551 = vpop.f32.mrf.mxu0
      %v3552 = vadd.f32 %v3439, %v3551
      %3553 = vmatmul.f32.gmra.mxu0 %v3121
      %v3554 = vpop.f32.mrf.mxu0
      %v3555 = vadd.f32 %v3442, %v3554
      %3556 = vmatmul.f32.gmra.mxu0 %v3124
      %v3557 = vpop.f32.mrf.mxu0
      %v3558 = vadd.f32 %v3445, %v3557
      %3559 = vmatmul.f32.gmra.mxu0 %v3127
      %v3560 = vpop.f32.mrf.mxu0
      %v3561 = vadd.f32 %v3448, %v3560
      %3562 = vmatmul.f32.gmra.mxu0 %v3130
      %v3563 = vpop.f32.mrf.mxu0
      %v3564 = vadd.f32 %v3451, %v3563
      %3565 = vmatmul.f32.gmra.mxu0 %v3133
      %v3566 = vpop.f32.mrf.mxu0
      %v3567 = vadd.f32 %v3454, %v3566
      %3568 = vmatmul.f32.gmra.mxu0 %v3136
      %v3569 = vpop.f32.mrf.mxu0
      %v3570 = vadd.f32 %v3457, %v3569
      %3571 = vmatmul.f32.gmra.mxu0 %v3139
      %v3572 = vpop.f32.mrf.mxu0
      %v3573 = vadd.f32 %v3460, %v3572
      %3574 = vmatmul.f32.gmra.mxu0 %v3142
      %v3575 = vpop.f32.mrf.mxu0
      %v3576 = vadd.f32 %v3463, %v3575
      %3577 = vmatmul.f32.gmra.mxu0 %v3145
      %v3578 = vpop.f32.mrf.mxu0
      %v3579 = vadd.f32 %v3466, %v3578
      %3580 = vmatmul.f32.gmra.mxu0 %v3148
      %v3581 = vpop.f32.mrf.mxu0
      %v3582 = vadd.f32 %v3469, %v3581
      %3583 = vmatmul.f32.gmra.mxu0 %v3151
      %v3584 = vpop.f32.mrf.mxu0
      %v3585 = vadd.f32 %v3472, %v3584
      %3586 = vmatmul.f32.gmra.mxu0 %v3154
      %v3587 = vpop.f32.mrf.mxu0
      %v3588 = vadd.f32 %v3475, %v3587
      %3589 = vmatmul.f32.gmra.mxu0 %v3157
      %v3590 = vpop.f32.mrf.mxu0
      %v3591 = vadd.f32 %v3478, %v3590
      %3592 = vmatmul.f32.gmra.mxu0 %v3160
      %v3593 = vpop.f32.mrf.mxu0
      %v3594 = vadd.f32 %v3481, %v3593
      %3595 = vmatmul.f32.gmra.mxu0 %v3163
      %v3596 = vpop.f32.mrf.mxu0
      %v3597 = vadd.f32 %v3484, %v3596
      %3598 = vmatmul.f32.gmra.mxu0 %v3166
      %v3599 = vpop.f32.mrf.mxu0
      %v3600 = vadd.f32 %v3487, %v3599
      %3601 = vmatmul.f32.gmra.mxu0 %v3169
      %v3602 = vpop.f32.mrf.mxu0
      %v3603 = vadd.f32 %v3490, %v3602
      %3604 = vmatmul.f32.gmra.mxu0 %v3172
      %v3605 = vpop.f32.mrf.mxu0
      %v3606 = vadd.f32 %v3493, %v3605
      %3607 = vmatmul.f32.gmra.mxu0 %v3175
      %v3608 = vpop.f32.mrf.mxu0
      %v3609 = vadd.f32 %v3496, %v3608
      %3610 = vmatmul.f32.gmra.mxu0 %v3178
      %v3611 = vpop.f32.mrf.mxu0
      %v3612 = vadd.f32 %v3499, %v3611
      %3613 = vmatmul.f32.gmra.mxu0 %v3181
      %v3614 = vpop.f32.mrf.mxu0
      %v3615 = vadd.f32 %v3502, %v3614
      %3616 = vmatmul.f32.gmra.mxu0 %v3184
      %v3617 = vpop.f32.mrf.mxu0
      %v3618 = vadd.f32 %v3505, %v3617
      %3619 = vmatmul.f32.gmra.mxu0 %v3187
      %v3620 = vpop.f32.mrf.mxu0
      %v3621 = vadd.f32 %v3508, %v3620
      %3622 = vmatmul.f32.gmra.mxu0 %v3190
      %v3623 = vpop.f32.mrf.mxu0
      %v3624 = vadd.f32 %v3511, %v3623
      %3625 = vmatmul.f32.gmra.mxu0 %v3193
      %v3626 = vpop.f32.mrf.mxu0
      %v3627 = vadd.f32 %v3514, %v3626
      %3628 = vdwg.mxu0
      %3629 = vmatpush.msra.mxu0 %v3402
      %3630 = vmatpush.msra.mxu0 %v3401
      %3631 = vmatpush.msra.mxu0 %v3400
      %3632 = vmatpush.msra.mxu0 %v3399
      %3633 = vmatpush.msra.mxu0 %v3398
      %3634 = vmatpush.msra.mxu0 %v3397
      %3635 = vmatpush.msra.mxu0 %v3396
      %3636 = vmatpush.msra.mxu0 %v3395
      %3637 = vmatpush.msra.mxu0 %v3394
      %3638 = vmatpush.msra.mxu0 %v3393
      %3639 = vmatpush.msra.mxu0 %v3392
      %3640 = vmatpush.msra.mxu0 %v3391
      %3641 = vmatpush.msra.mxu0 %v3390
      %3642 = vmatpush.msra.mxu0 %v3389
      %3643 = vmatpush.msra.mxu0 %v3388
      %3644 = vmatpush.msra.mxu0 %v3387
      %3645 = vmatmul.f32.gmra.mxu0 %v3228
      %v3646 = vpop.f32.mrf.mxu0
      %v3647 = vadd.f32 %v3534, %v3646
      %3648 = vmatmul.f32.gmra.mxu0 %v3231
      %v3649 = vpop.f32.mrf.mxu0
      %v3650 = vadd.f32 %v3537, %v3649
      %3651 = vmatmul.f32.gmra.mxu0 %v3234
      %v3652 = vpop.f32.mrf.mxu0
      %v3653 = vadd.f32 %v3540, %v3652
      %3654 = vmatmul.f32.gmra.mxu0 %v3237
      %v3655 = vpop.f32.mrf.mxu0
      %v3656 = vadd.f32 %v3543, %v3655
      %3657 = vmatmul.f32.gmra.mxu0 %v3240
      %v3658 = vpop.f32.mrf.mxu0
      %v3659 = vadd.f32 %v3546, %v3658
      %3660 = vmatmul.f32.gmra.mxu0 %v3243
      %v3661 = vpop.f32.mrf.mxu0
      %v3662 = vadd.f32 %v3549, %v3661
      %3663 = vmatmul.f32.gmra.mxu0 %v3246
      %v3664 = vpop.f32.mrf.mxu0
      %v3665 = vadd.f32 %v3552, %v3664
      %3666 = vmatmul.f32.gmra.mxu0 %v3249
      %v3667 = vpop.f32.mrf.mxu0
      %v3668 = vadd.f32 %v3555, %v3667
      %3669 = vmatmul.f32.gmra.mxu0 %v3252
      %v3670 = vpop.f32.mrf.mxu0
      %v3671 = vadd.f32 %v3558, %v3670
      %3672 = vmatmul.f32.gmra.mxu0 %v3255
      %v3673 = vpop.f32.mrf.mxu0
      %v3674 = vadd.f32 %v3561, %v3673
      %3675 = vmatmul.f32.gmra.mxu0 %v3258
      %v3676 = vpop.f32.mrf.mxu0
      %v3677 = vadd.f32 %v3564, %v3676
      %3678 = vmatmul.f32.gmra.mxu0 %v3261
      %v3679 = vpop.f32.mrf.mxu0
      %v3680 = vadd.f32 %v3567, %v3679
      %3681 = vmatmul.f32.gmra.mxu0 %v3264
      %v3682 = vpop.f32.mrf.mxu0
      %v3683 = vadd.f32 %v3570, %v3682
      %3684 = vmatmul.f32.gmra.mxu0 %v3267
      %v3685 = vpop.f32.mrf.mxu0
      %v3686 = vadd.f32 %v3573, %v3685
      %3687 = vmatmul.f32.gmra.mxu0 %v3270
      %v3688 = vpop.f32.mrf.mxu0
      %v3689 = vadd.f32 %v3576, %v3688
      %3690 = vmatmul.f32.gmra.mxu0 %v3273
      %v3691 = vpop.f32.mrf.mxu0
      %v3692 = vadd.f32 %v3579, %v3691
      %3693 = vmatmul.f32.gmra.mxu0 %v3276
      %v3694 = vpop.f32.mrf.mxu0
      %v3695 = vadd.f32 %v3582, %v3694
      %3696 = vmatmul.f32.gmra.mxu0 %v3279
      %v3697 = vpop.f32.mrf.mxu0
      %v3698 = vadd.f32 %v3585, %v3697
      %3699 = vmatmul.f32.gmra.mxu0 %v3282
      %v3700 = vpop.f32.mrf.mxu0
      %v3701 = vadd.f32 %v3588, %v3700
      %3702 = vmatmul.f32.gmra.mxu0 %v3285
      %v3703 = vpop.f32.mrf.mxu0
      %v3704 = vadd.f32 %v3591, %v3703
      %3705 = vmatmul.f32.gmra.mxu0 %v3288
      %v3706 = vpop.f32.mrf.mxu0
      %v3707 = vadd.f32 %v3594, %v3706
      %3708 = vmatmul.f32.gmra.mxu0 %v3291
      %v3709 = vpop.f32.mrf.mxu0
      %v3710 = vadd.f32 %v3597, %v3709
      %3711 = vmatmul.f32.gmra.mxu0 %v3294
      %v3712 = vpop.f32.mrf.mxu0
      %v3713 = vadd.f32 %v3600, %v3712
      %3714 = vmatmul.f32.gmra.mxu0 %v3297
      %v3715 = vpop.f32.mrf.mxu0
      %v3716 = vadd.f32 %v3603, %v3715
      %3717 = vmatmul.f32.gmra.mxu0 %v3300
      %v3718 = vpop.f32.mrf.mxu0
      %v3719 = vadd.f32 %v3606, %v3718
      %3720 = vmatmul.f32.gmra.mxu0 %v3303
      %v3721 = vpop.f32.mrf.mxu0
      %v3722 = vadd.f32 %v3609, %v3721
      %3723 = vmatmul.f32.gmra.mxu0 %v3306
      %v3724 = vpop.f32.mrf.mxu0
      %v3725 = vadd.f32 %v3612, %v3724
      %3726 = vmatmul.f32.gmra.mxu0 %v3309
      %v3727 = vpop.f32.mrf.mxu0
      %v3728 = vadd.f32 %v3615, %v3727
      %3729 = vmatmul.f32.gmra.mxu0 %v3312
      %v3730 = vpop.f32.mrf.mxu0
      %v3731 = vadd.f32 %v3618, %v3730
      %3732 = vmatmul.f32.gmra.mxu0 %v3315
      %v3733 = vpop.f32.mrf.mxu0
      %v3734 = vadd.f32 %v3621, %v3733
      %3735 = vmatmul.f32.gmra.mxu0 %v3318
      %v3736 = vpop.f32.mrf.mxu0
      %v3737 = vadd.f32 %v3624, %v3736
      %3738 = vmatmul.f32.gmra.mxu0 %v3321
      %v3739 = vpop.f32.mrf.mxu0
      %v3740 = vadd.f32 %v3627, %v3739
      %3741 = vdwg.mxu0
      %v3742 = vld [vmem:[#allocation3] sm:$0xff]
      %v3743 = vld [vmem:[#allocation3 + $0x8] sm:$0xff]
      %v3744 = vld [vmem:[#allocation3 + $0x10] sm:$0xff]
      %v3745 = vld [vmem:[#allocation3 + $0x18] sm:$0xff]
      %v3746 = vld [vmem:[#allocation3 + $0x20] sm:$0xff]
      %v3747 = vld [vmem:[#allocation3 + $0x28] sm:$0xff]
      %v3748 = vld [vmem:[#allocation3 + $0x30] sm:$0xff]
      %v3749 = vld [vmem:[#allocation3 + $0x38] sm:$0xff]
      %v3750 = vld [vmem:[#allocation3 + $0x40] sm:$0xff]
      %v3751 = vld [vmem:[#allocation3 + $0x48] sm:$0xff]
      %v3752 = vld [vmem:[#allocation3 + $0x50] sm:$0xff]
      %v3753 = vld [vmem:[#allocation3 + $0x58] sm:$0xff]
      %v3754 = vld [vmem:[#allocation3 + $0x60] sm:$0xff]
      %v3755 = vld [vmem:[#allocation3 + $0x68] sm:$0xff]
      %v3756 = vld [vmem:[#allocation3 + $0x70] sm:$0xff]
      %v3757 = vld [vmem:[#allocation3 + $0x78] sm:$0xff]
      %v3758 = vld [vmem:[#allocation3 + $0x80] sm:$0xff]
      %v3759 = vld [vmem:[#allocation3 + $0x88] sm:$0xff]
      %v3760 = vld [vmem:[#allocation3 + $0x90] sm:$0xff]
      %v3761 = vld [vmem:[#allocation3 + $0x98] sm:$0xff]
      %v3762 = vld [vmem:[#allocation3 + $0xa0] sm:$0xff]
      %v3763 = vld [vmem:[#allocation3 + $0xa8] sm:$0xff]
      %v3764 = vld [vmem:[#allocation3 + $0xb0] sm:$0xff]
      %v3765 = vld [vmem:[#allocation3 + $0xb8] sm:$0xff]
      %v3766 = vld [vmem:[#allocation3 + $0xc0] sm:$0xff]
      %v3767 = vld [vmem:[#allocation3 + $0xc8] sm:$0xff]
      %v3768 = vld [vmem:[#allocation3 + $0xd0] sm:$0xff]
      %v3769 = vld [vmem:[#allocation3 + $0xd8] sm:$0xff]
      %v3770 = vld [vmem:[#allocation3 + $0xe0] sm:$0xff]
      %v3771 = vld [vmem:[#allocation3 + $0xe8] sm:$0xff]
      %v3772 = vld [vmem:[#allocation3 + $0xf0] sm:$0xff]
      %v3773 = vld [vmem:[#allocation3 + $0xf8] sm:$0xff]
      %v3774 = vadd.f32 %v3742, %v3647
      %v3775 = vadd.f32 %v3743, %v3650
      %v3776 = vadd.f32 %v3744, %v3653
      %v3777 = vadd.f32 %v3745, %v3656
      %v3778 = vadd.f32 %v3746, %v3659
      %v3779 = vadd.f32 %v3747, %v3662
      %v3780 = vadd.f32 %v3748, %v3665
      %v3781 = vadd.f32 %v3749, %v3668
      %v3782 = vadd.f32 %v3750, %v3671
      %v3783 = vadd.f32 %v3751, %v3674
      %v3784 = vadd.f32 %v3752, %v3677
      %v3785 = vadd.f32 %v3753, %v3680
      %v3786 = vadd.f32 %v3754, %v3683
      %v3787 = vadd.f32 %v3755, %v3686
      %v3788 = vadd.f32 %v3756, %v3689
      %v3789 = vadd.f32 %v3757, %v3692
      %v3790 = vadd.f32 %v3758, %v3695
      %v3791 = vadd.f32 %v3759, %v3698
      %v3792 = vadd.f32 %v3760, %v3701
      %v3793 = vadd.f32 %v3761, %v3704
      %v3794 = vadd.f32 %v3762, %v3707
      %v3795 = vadd.f32 %v3763, %v3710
      %v3796 = vadd.f32 %v3764, %v3713
      %v3797 = vadd.f32 %v3765, %v3716
      %v3798 = vadd.f32 %v3766, %v3719
      %v3799 = vadd.f32 %v3767, %v3722
      %v3800 = vadd.f32 %v3768, %v3725
      %v3801 = vadd.f32 %v3769, %v3728
      %v3802 = vadd.f32 %v3770, %v3731
      %v3803 = vadd.f32 %v3771, %v3734
      %v3804 = vadd.f32 %v3772, %v3737
      %v3805 = vadd.f32 %v3773, %v3740
      %3806 = vst [vmem:[#allocation3] sm:$0xff] %v3774
      %3807 = vst [vmem:[#allocation3 + $0x8] sm:$0xff] %v3775
      %3808 = vst [vmem:[#allocation3 + $0x10] sm:$0xff] %v3776
      %3809 = vst [vmem:[#allocation3 + $0x18] sm:$0xff] %v3777
      %3810 = vst [vmem:[#allocation3 + $0x20] sm:$0xff] %v3778
      %3811 = vst [vmem:[#allocation3 + $0x28] sm:$0xff] %v3779
      %3812 = vst [vmem:[#allocation3 + $0x30] sm:$0xff] %v3780
      %3813 = vst [vmem:[#allocation3 + $0x38] sm:$0xff] %v3781
      %3814 = vst [vmem:[#allocation3 + $0x40] sm:$0xff] %v3782
      %3815 = vst [vmem:[#allocation3 + $0x48] sm:$0xff] %v3783
      %3816 = vst [vmem:[#allocation3 + $0x50] sm:$0xff] %v3784
      %3817 = vst [vmem:[#allocation3 + $0x58] sm:$0xff] %v3785
      %3818 = vst [vmem:[#allocation3 + $0x60] sm:$0xff] %v3786
      %3819 = vst [vmem:[#allocation3 + $0x68] sm:$0xff] %v3787
      %3820 = vst [vmem:[#allocation3 + $0x70] sm:$0xff] %v3788
      %3821 = vst [vmem:[#allocation3 + $0x78] sm:$0xff] %v3789
      %3822 = vst [vmem:[#allocation3 + $0x80] sm:$0xff] %v3790
      %3823 = vst [vmem:[#allocation3 + $0x88] sm:$0xff] %v3791
      %3824 = vst [vmem:[#allocation3 + $0x90] sm:$0xff] %v3792
      %3825 = vst [vmem:[#allocation3 + $0x98] sm:$0xff] %v3793
      %3826 = vst [vmem:[#allocation3 + $0xa0] sm:$0xff] %v3794
      %3827 = vst [vmem:[#allocation3 + $0xa8] sm:$0xff] %v3795
      %3828 = vst [vmem:[#allocation3 + $0xb0] sm:$0xff] %v3796
      %3829 = vst [vmem:[#allocation3 + $0xb8] sm:$0xff] %v3797
      %3830 = vst [vmem:[#allocation3 + $0xc0] sm:$0xff] %v3798
      %3831 = vst [vmem:[#allocation3 + $0xc8] sm:$0xff] %v3799
      %3832 = vst [vmem:[#allocation3 + $0xd0] sm:$0xff] %v3800
      %3833 = vst [vmem:[#allocation3 + $0xd8] sm:$0xff] %v3801
      %3834 = vst [vmem:[#allocation3 + $0xe0] sm:$0xff] %v3802
      %3835 = vst [vmem:[#allocation3 + $0xe8] sm:$0xff] %v3803
      %3836 = vst [vmem:[#allocation3 + $0xf0] sm:$0xff] %v3804
      %3837 = vst [vmem:[#allocation3 + $0xf8] sm:$0xff] %v3805
      %s3838 = scalar_lea.vmem [#allocation2], 176
      %v3839 = vld [vmem:[%s3838] sm:$0xff]
      %v3840 = vld [vmem:[%s3838 + $0x8] sm:$0x3]
      %v3841 = vld [vmem:[%s3838 + $0x10] sm:$0xff]
      %v3842 = vld [vmem:[%s3838 + $0x18] sm:$0x3]
      %v3843 = vld [vmem:[%s3838 + $0x20] sm:$0xff]
      %v3844 = vld [vmem:[%s3838 + $0x28] sm:$0x3]
      %v3845 = vld [vmem:[%s3838 + $0x30] sm:$0xff]
      %v3846 = vld [vmem:[%s3838 + $0x38] sm:$0x3]
      %v3847 = vld [vmem:[%s3838 + $0x40] sm:$0xff]
      %v3848 = vld [vmem:[%s3838 + $0x48] sm:$0x3]
      %v3849 = vld [vmem:[%s3838 + $0x50] sm:$0xff]
      %v3850 = vld [vmem:[%s3838 + $0x58] sm:$0x3]
      %v3851 = vld [vmem:[%s3838 + $0x60] sm:$0xff]
      %v3852 = vld [vmem:[%s3838 + $0x68] sm:$0x3]
      %v3853 = vld [vmem:[%s3838 + $0x70] sm:$0xff]
      %v3854 = vld [vmem:[%s3838 + $0x78] sm:$0x3]
      %v3855 = vld [vmem:[%s3838 + $0xa0] sm:$0xff]
      %v3856 = vld [vmem:[%s3838 + $0xa8] sm:$0x3]
      %v3857 = vld [vmem:[%s3838 + $0xb0] sm:$0xff]
      %v3858 = vld [vmem:[%s3838 + $0xb8] sm:$0x3]
      %v3859 = vld [vmem:[%s3838 + $0xc0] sm:$0xff]
      %v3860 = vld [vmem:[%s3838 + $0xc8] sm:$0x3]
      %v3861 = vld [vmem:[%s3838 + $0xd0] sm:$0xff]
      %v3862 = vld [vmem:[%s3838 + $0xd8] sm:$0x3]
      %v3863 = vld [vmem:[%s3838 + $0xe0] sm:$0xff]
      %v3864 = vld [vmem:[%s3838 + $0xe8] sm:$0x3]
      %v3865 = vld [vmem:[%s3838 + $0xf0] sm:$0xff]
      %v3866 = vld [vmem:[%s3838 + $0xf8] sm:$0x3]
      %v3867 = vld [vmem:[%s3838 + $0x100] sm:$0xff]
      %v3868 = vld [vmem:[%s3838 + $0x108] sm:$0x3]
      %v3869 = vld [vmem:[%s3838 + $0x110] sm:$0xff]
      %v3870 = vld [vmem:[%s3838 + $0x118] sm:$0x3]
      %v3871 = vld [vmem:[%s3838 + $0x140] sm:$0xff]
      %v3872 = vld [vmem:[%s3838 + $0x148] sm:$0x3]
      %v3873 = vld [vmem:[%s3838 + $0x150] sm:$0xff]
      %v3874 = vld [vmem:[%s3838 + $0x158] sm:$0x3]
      %v3875 = vld [vmem:[%s3838 + $0x160] sm:$0xff]
      %v3876 = vld [vmem:[%s3838 + $0x168] sm:$0x3]
      %v3877 = vld [vmem:[%s3838 + $0x170] sm:$0xff]
      %v3878 = vld [vmem:[%s3838 + $0x178] sm:$0x3]
      %v3879 = vld [vmem:[%s3838 + $0x180] sm:$0xff]
      %v3880 = vld [vmem:[%s3838 + $0x188] sm:$0x3]
      %v3881 = vld [vmem:[%s3838 + $0x190] sm:$0xff]
      %v3882 = vld [vmem:[%s3838 + $0x198] sm:$0x3]
      %v3883 = vld [vmem:[%s3838 + $0x1a0] sm:$0xff]
      %v3884 = vld [vmem:[%s3838 + $0x1a8] sm:$0x3]
      %v3885 = vld [vmem:[%s3838 + $0x1b0] sm:$0xff]
      %v3886 = vld [vmem:[%s3838 + $0x1b8] sm:$0x3]
      %v3887 = vld [vmem:[%s3838 + $0x1e0] sm:$0xff]
      %v3888 = vld [vmem:[%s3838 + $0x1e8] sm:$0x3]
      %v3889 = vld [vmem:[%s3838 + $0x1f0] sm:$0xff]
      %v3890 = vld [vmem:[%s3838 + $0x1f8] sm:$0x3]
      %v3891 = vld [vmem:[%s3838 + $0x200] sm:$0xff]
      %v3892 = vld [vmem:[%s3838 + $0x208] sm:$0x3]
      %v3893 = vld [vmem:[%s3838 + $0x210] sm:$0xff]
      %v3894 = vld [vmem:[%s3838 + $0x218] sm:$0x3]
      %v3895 = vld [vmem:[%s3838 + $0x220] sm:$0xff]
      %v3896 = vld [vmem:[%s3838 + $0x228] sm:$0x3]
      %v3897 = vld [vmem:[%s3838 + $0x230] sm:$0xff]
      %v3898 = vld [vmem:[%s3838 + $0x238] sm:$0x3]
      %v3899 = vld [vmem:[%s3838 + $0x240] sm:$0xff]
      %v3900 = vld [vmem:[%s3838 + $0x248] sm:$0x3]
      %v3901 = vld [vmem:[%s3838 + $0x250] sm:$0xff]
      %v3902 = vld [vmem:[%s3838 + $0x258] sm:$0x3]
      %v3967 = vrot.slane %v3839, 1
      %v3968 = vrot.slane %v3840, 1
      %v3969 = vsel %vm554, %v3967, %v3968
      %v3970 = vrot.slane %v3841, 1
      %v3971 = vrot.slane %v3842, 1
      %v3972 = vsel %vm554, %v3970, %v3971
      %v3973 = vrot.slane %v3843, 1
      %v3974 = vrot.slane %v3844, 1
      %v3975 = vsel %vm554, %v3973, %v3974
      %v3976 = vrot.slane %v3845, 1
      %v3977 = vrot.slane %v3846, 1
      %v3978 = vsel %vm554, %v3976, %v3977
      %v3979 = vrot.slane %v3847, 1
      %v3980 = vrot.slane %v3848, 1
      %v3981 = vsel %vm554, %v3979, %v3980
      %v3982 = vrot.slane %v3849, 1
      %v3983 = vrot.slane %v3850, 1
      %v3984 = vsel %vm554, %v3982, %v3983
      %v3985 = vrot.slane %v3851, 1
      %v3986 = vrot.slane %v3852, 1
      %v3987 = vsel %vm554, %v3985, %v3986
      %v3988 = vrot.slane %v3853, 1
      %v3989 = vrot.slane %v3854, 1
      %v3990 = vsel %vm554, %v3988, %v3989
      %v3991 = vrot.slane %v3855, 1
      %v3992 = vrot.slane %v3856, 1
      %v3993 = vsel %vm554, %v3991, %v3992
      %v3994 = vrot.slane %v3857, 1
      %v3995 = vrot.slane %v3858, 1
      %v3996 = vsel %vm554, %v3994, %v3995
      %v3997 = vrot.slane %v3859, 1
      %v3998 = vrot.slane %v3860, 1
      %v3999 = vsel %vm554, %v3997, %v3998
      %v4000 = vrot.slane %v3861, 1
      %v4001 = vrot.slane %v3862, 1
      %v4002 = vsel %vm554, %v4000, %v4001
      %v4003 = vrot.slane %v3863, 1
      %v4004 = vrot.slane %v3864, 1
      %v4005 = vsel %vm554, %v4003, %v4004
      %v4006 = vrot.slane %v3865, 1
      %v4007 = vrot.slane %v3866, 1
      %v4008 = vsel %vm554, %v4006, %v4007
      %v4009 = vrot.slane %v3867, 1
      %v4010 = vrot.slane %v3868, 1
      %v4011 = vsel %vm554, %v4009, %v4010
      %v4012 = vrot.slane %v3869, 1
      %v4013 = vrot.slane %v3870, 1
      %v4014 = vsel %vm554, %v4012, %v4013
      %v4015 = vrot.slane %v3871, 1
      %v4016 = vrot.slane %v3872, 1
      %v4017 = vsel %vm554, %v4015, %v4016
      %v4018 = vrot.slane %v3873, 1
      %v4019 = vrot.slane %v3874, 1
      %v4020 = vsel %vm554, %v4018, %v4019
      %v4021 = vrot.slane %v3875, 1
      %v4022 = vrot.slane %v3876, 1
      %v4023 = vsel %vm554, %v4021, %v4022
      %v4024 = vrot.slane %v3877, 1
      %v4025 = vrot.slane %v3878, 1
      %v4026 = vsel %vm554, %v4024, %v4025
      %v4027 = vrot.slane %v3879, 1
      %v4028 = vrot.slane %v3880, 1
      %v4029 = vsel %vm554, %v4027, %v4028
      %v4030 = vrot.slane %v3881, 1
      %v4031 = vrot.slane %v3882, 1
      %v4032 = vsel %vm554, %v4030, %v4031
      %v4033 = vrot.slane %v3883, 1
      %v4034 = vrot.slane %v3884, 1
      %v4035 = vsel %vm554, %v4033, %v4034
      %v4036 = vrot.slane %v3885, 1
      %v4037 = vrot.slane %v3886, 1
      %v4038 = vsel %vm554, %v4036, %v4037
      %v4039 = vrot.slane %v3887, 1
      %v4040 = vrot.slane %v3888, 1
      %v4041 = vsel %vm554, %v4039, %v4040
      %v4042 = vrot.slane %v3889, 1
      %v4043 = vrot.slane %v3890, 1
      %v4044 = vsel %vm554, %v4042, %v4043
      %v4045 = vrot.slane %v3891, 1
      %v4046 = vrot.slane %v3892, 1
      %v4047 = vsel %vm554, %v4045, %v4046
      %v4048 = vrot.slane %v3893, 1
      %v4049 = vrot.slane %v3894, 1
      %v4050 = vsel %vm554, %v4048, %v4049
      %v4051 = vrot.slane %v3895, 1
      %v4052 = vrot.slane %v3896, 1
      %v4053 = vsel %vm554, %v4051, %v4052
      %v4054 = vrot.slane %v3897, 1
      %v4055 = vrot.slane %v3898, 1
      %v4056 = vsel %vm554, %v4054, %v4055
      %v4057 = vrot.slane %v3899, 1
      %v4058 = vrot.slane %v3900, 1
      %v4059 = vsel %vm554, %v4057, %v4058
      %v4060 = vrot.slane %v3901, 1
      %v4061 = vrot.slane %v3902, 1
      %v4062 = vsel %vm554, %v4060, %v4061
      %v4095 = vrot.slane %v3839, 2
      %v4096 = vrot.slane %v3840, 2
      %v4097 = vsel %vm683, %v4095, %v4096
      %v4098 = vrot.slane %v3841, 2
      %v4099 = vrot.slane %v3842, 2
      %v4100 = vsel %vm683, %v4098, %v4099
      %v4101 = vrot.slane %v3843, 2
      %v4102 = vrot.slane %v3844, 2
      %v4103 = vsel %vm683, %v4101, %v4102
      %v4104 = vrot.slane %v3845, 2
      %v4105 = vrot.slane %v3846, 2
      %v4106 = vsel %vm683, %v4104, %v4105
      %v4107 = vrot.slane %v3847, 2
      %v4108 = vrot.slane %v3848, 2
      %v4109 = vsel %vm683, %v4107, %v4108
      %v4110 = vrot.slane %v3849, 2
      %v4111 = vrot.slane %v3850, 2
      %v4112 = vsel %vm683, %v4110, %v4111
      %v4113 = vrot.slane %v3851, 2
      %v4114 = vrot.slane %v3852, 2
      %v4115 = vsel %vm683, %v4113, %v4114
      %v4116 = vrot.slane %v3853, 2
      %v4117 = vrot.slane %v3854, 2
      %v4118 = vsel %vm683, %v4116, %v4117
      %v4119 = vrot.slane %v3855, 2
      %v4120 = vrot.slane %v3856, 2
      %v4121 = vsel %vm683, %v4119, %v4120
      %v4122 = vrot.slane %v3857, 2
      %v4123 = vrot.slane %v3858, 2
      %v4124 = vsel %vm683, %v4122, %v4123
      %v4125 = vrot.slane %v3859, 2
      %v4126 = vrot.slane %v3860, 2
      %v4127 = vsel %vm683, %v4125, %v4126
      %v4128 = vrot.slane %v3861, 2
      %v4129 = vrot.slane %v3862, 2
      %v4130 = vsel %vm683, %v4128, %v4129
      %v4131 = vrot.slane %v3863, 2
      %v4132 = vrot.slane %v3864, 2
      %v4133 = vsel %vm683, %v4131, %v4132
      %v4134 = vrot.slane %v3865, 2
      %v4135 = vrot.slane %v3866, 2
      %v4136 = vsel %vm683, %v4134, %v4135
      %v4137 = vrot.slane %v3867, 2
      %v4138 = vrot.slane %v3868, 2
      %v4139 = vsel %vm683, %v4137, %v4138
      %v4140 = vrot.slane %v3869, 2
      %v4141 = vrot.slane %v3870, 2
      %v4142 = vsel %vm683, %v4140, %v4141
      %v4143 = vrot.slane %v3871, 2
      %v4144 = vrot.slane %v3872, 2
      %v4145 = vsel %vm683, %v4143, %v4144
      %v4146 = vrot.slane %v3873, 2
      %v4147 = vrot.slane %v3874, 2
      %v4148 = vsel %vm683, %v4146, %v4147
      %v4149 = vrot.slane %v3875, 2
      %v4150 = vrot.slane %v3876, 2
      %v4151 = vsel %vm683, %v4149, %v4150
      %v4152 = vrot.slane %v3877, 2
      %v4153 = vrot.slane %v3878, 2
      %v4154 = vsel %vm683, %v4152, %v4153
      %v4155 = vrot.slane %v3879, 2
      %v4156 = vrot.slane %v3880, 2
      %v4157 = vsel %vm683, %v4155, %v4156
      %v4158 = vrot.slane %v3881, 2
      %v4159 = vrot.slane %v3882, 2
      %v4160 = vsel %vm683, %v4158, %v4159
      %v4161 = vrot.slane %v3883, 2
      %v4162 = vrot.slane %v3884, 2
      %v4163 = vsel %vm683, %v4161, %v4162
      %v4164 = vrot.slane %v3885, 2
      %v4165 = vrot.slane %v3886, 2
      %v4166 = vsel %vm683, %v4164, %v4165
      %v4167 = vrot.slane %v3887, 2
      %v4168 = vrot.slane %v3888, 2
      %v4169 = vsel %vm683, %v4167, %v4168
      %v4170 = vrot.slane %v3889, 2
      %v4171 = vrot.slane %v3890, 2
      %v4172 = vsel %vm683, %v4170, %v4171
      %v4173 = vrot.slane %v3891, 2
      %v4174 = vrot.slane %v3892, 2
      %v4175 = vsel %vm683, %v4173, %v4174
      %v4176 = vrot.slane %v3893, 2
      %v4177 = vrot.slane %v3894, 2
      %v4178 = vsel %vm683, %v4176, %v4177
      %v4179 = vrot.slane %v3895, 2
      %v4180 = vrot.slane %v3896, 2
      %v4181 = vsel %vm683, %v4179, %v4180
      %v4182 = vrot.slane %v3897, 2
      %v4183 = vrot.slane %v3898, 2
      %v4184 = vsel %vm683, %v4182, %v4183
      %v4185 = vrot.slane %v3899, 2
      %v4186 = vrot.slane %v3900, 2
      %v4187 = vsel %vm683, %v4185, %v4186
      %v4188 = vrot.slane %v3901, 2
      %v4189 = vrot.slane %v3902, 2
      %v4190 = vsel %vm683, %v4188, %v4189
      %s4223 = scalar_lea.vmem %s1, 1536
      %v4224 = vld [vmem:[%s4223] sm:$0xff]
      %v4225 = vld [vmem:[%s4223 + $0x8] sm:$0xff]
      %v4226 = vld [vmem:[%s4223 + $0x10] sm:$0xff]
      %v4227 = vld [vmem:[%s4223 + $0x18] sm:$0xff]
      %v4228 = vld [vmem:[%s4223 + $0x20] sm:$0xff]
      %v4229 = vld [vmem:[%s4223 + $0x28] sm:$0xff]
      %v4230 = vld [vmem:[%s4223 + $0x30] sm:$0xff]
      %v4231 = vld [vmem:[%s4223 + $0x38] sm:$0xff]
      %v4232 = vld [vmem:[%s4223 + $0x40] sm:$0xff]
      %v4233 = vld [vmem:[%s4223 + $0x48] sm:$0xff]
      %v4234 = vld [vmem:[%s4223 + $0x50] sm:$0xff]
      %v4235 = vld [vmem:[%s4223 + $0x58] sm:$0xff]
      %v4236 = vld [vmem:[%s4223 + $0x60] sm:$0xff]
      %v4237 = vld [vmem:[%s4223 + $0x68] sm:$0xff]
      %v4238 = vld [vmem:[%s4223 + $0x70] sm:$0xff]
      %v4239 = vld [vmem:[%s4223 + $0x78] sm:$0xff]
      %v4240 = vld [vmem:[%s4223 + $0x80] sm:$0xff]
      %v4241 = vld [vmem:[%s4223 + $0x88] sm:$0xff]
      %v4242 = vld [vmem:[%s4223 + $0x90] sm:$0xff]
      %v4243 = vld [vmem:[%s4223 + $0x98] sm:$0xff]
      %v4244 = vld [vmem:[%s4223 + $0xa0] sm:$0xff]
      %v4245 = vld [vmem:[%s4223 + $0xa8] sm:$0xff]
      %v4246 = vld [vmem:[%s4223 + $0xb0] sm:$0xff]
      %v4247 = vld [vmem:[%s4223 + $0xb8] sm:$0xff]
      %v4248 = vld [vmem:[%s4223 + $0xc0] sm:$0xff]
      %v4249 = vld [vmem:[%s4223 + $0xc8] sm:$0xff]
      %v4250 = vld [vmem:[%s4223 + $0xd0] sm:$0xff]
      %v4251 = vld [vmem:[%s4223 + $0xd8] sm:$0xff]
      %v4252 = vld [vmem:[%s4223 + $0xe0] sm:$0xff]
      %v4253 = vld [vmem:[%s4223 + $0xe8] sm:$0xff]
      %v4254 = vld [vmem:[%s4223 + $0xf0] sm:$0xff]
      %v4255 = vld [vmem:[%s4223 + $0xf8] sm:$0xff]
      %v4256 = vld [vmem:[%s4223 + $0x100] sm:$0xff]
      %v4257 = vld [vmem:[%s4223 + $0x108] sm:$0xff]
      %v4258 = vld [vmem:[%s4223 + $0x110] sm:$0xff]
      %v4259 = vld [vmem:[%s4223 + $0x118] sm:$0xff]
      %v4260 = vld [vmem:[%s4223 + $0x120] sm:$0xff]
      %v4261 = vld [vmem:[%s4223 + $0x128] sm:$0xff]
      %v4262 = vld [vmem:[%s4223 + $0x130] sm:$0xff]
      %v4263 = vld [vmem:[%s4223 + $0x138] sm:$0xff]
      %v4264 = vld [vmem:[%s4223 + $0x140] sm:$0xff]
      %v4265 = vld [vmem:[%s4223 + $0x148] sm:$0xff]
      %v4266 = vld [vmem:[%s4223 + $0x150] sm:$0xff]
      %v4267 = vld [vmem:[%s4223 + $0x158] sm:$0xff]
      %v4268 = vld [vmem:[%s4223 + $0x160] sm:$0xff]
      %v4269 = vld [vmem:[%s4223 + $0x168] sm:$0xff]
      %v4270 = vld [vmem:[%s4223 + $0x170] sm:$0xff]
      %v4271 = vld [vmem:[%s4223 + $0x178] sm:$0xff]
      %4272 = vmatpush.msra.mxu0 %v4239
      %4273 = vmatpush.msra.mxu0 %v4238
      %4274 = vmatpush.msra.mxu0 %v4237
      %4275 = vmatpush.msra.mxu0 %v4236
      %4276 = vmatpush.msra.mxu0 %v4235
      %4277 = vmatpush.msra.mxu0 %v4234
      %4278 = vmatpush.msra.mxu0 %v4233
      %4279 = vmatpush.msra.mxu0 %v4232
      %4280 = vmatpush.msra.mxu0 %v4231
      %4281 = vmatpush.msra.mxu0 %v4230
      %4282 = vmatpush.msra.mxu0 %v4229
      %4283 = vmatpush.msra.mxu0 %v4228
      %4284 = vmatpush.msra.mxu0 %v4227
      %4285 = vmatpush.msra.mxu0 %v4226
      %4286 = vmatpush.msra.mxu0 %v4225
      %4287 = vmatpush.msra.mxu0 %v4224
      %4288 = vmatmul.f32.gmra.mxu0 %v3839
      %v4289 = vpop.f32.mrf.mxu0
      %v4290 = vadd.f32 0.0, %v4289
      %4291 = vmatmul.f32.gmra.mxu0 %v3841
      %v4292 = vpop.f32.mrf.mxu0
      %v4293 = vadd.f32 0.0, %v4292
      %4294 = vmatmul.f32.gmra.mxu0 %v3843
      %v4295 = vpop.f32.mrf.mxu0
      %v4296 = vadd.f32 0.0, %v4295
      %4297 = vmatmul.f32.gmra.mxu0 %v3845
      %v4298 = vpop.f32.mrf.mxu0
      %v4299 = vadd.f32 0.0, %v4298
      %4300 = vmatmul.f32.gmra.mxu0 %v3847
      %v4301 = vpop.f32.mrf.mxu0
      %v4302 = vadd.f32 0.0, %v4301
      %4303 = vmatmul.f32.gmra.mxu0 %v3849
      %v4304 = vpop.f32.mrf.mxu0
      %v4305 = vadd.f32 0.0, %v4304
      %4306 = vmatmul.f32.gmra.mxu0 %v3851
      %v4307 = vpop.f32.mrf.mxu0
      %v4308 = vadd.f32 0.0, %v4307
      %4309 = vmatmul.f32.gmra.mxu0 %v3853
      %v4310 = vpop.f32.mrf.mxu0
      %v4311 = vadd.f32 0.0, %v4310
      %4312 = vmatmul.f32.gmra.mxu0 %v3855
      %v4313 = vpop.f32.mrf.mxu0
      %v4314 = vadd.f32 0.0, %v4313
      %4315 = vmatmul.f32.gmra.mxu0 %v3857
      %v4316 = vpop.f32.mrf.mxu0
      %v4317 = vadd.f32 0.0, %v4316
      %4318 = vmatmul.f32.gmra.mxu0 %v3859
      %v4319 = vpop.f32.mrf.mxu0
      %v4320 = vadd.f32 0.0, %v4319
      %4321 = vmatmul.f32.gmra.mxu0 %v3861
      %v4322 = vpop.f32.mrf.mxu0
      %v4323 = vadd.f32 0.0, %v4322
      %4324 = vmatmul.f32.gmra.mxu0 %v3863
      %v4325 = vpop.f32.mrf.mxu0
      %v4326 = vadd.f32 0.0, %v4325
      %4327 = vmatmul.f32.gmra.mxu0 %v3865
      %v4328 = vpop.f32.mrf.mxu0
      %v4329 = vadd.f32 0.0, %v4328
      %4330 = vmatmul.f32.gmra.mxu0 %v3867
      %v4331 = vpop.f32.mrf.mxu0
      %v4332 = vadd.f32 0.0, %v4331
      %4333 = vmatmul.f32.gmra.mxu0 %v3869
      %v4334 = vpop.f32.mrf.mxu0
      %v4335 = vadd.f32 0.0, %v4334
      %4336 = vmatmul.f32.gmra.mxu0 %v3871
      %v4337 = vpop.f32.mrf.mxu0
      %v4338 = vadd.f32 0.0, %v4337
      %4339 = vmatmul.f32.gmra.mxu0 %v3873
      %v4340 = vpop.f32.mrf.mxu0
      %v4341 = vadd.f32 0.0, %v4340
      %4342 = vmatmul.f32.gmra.mxu0 %v3875
      %v4343 = vpop.f32.mrf.mxu0
      %v4344 = vadd.f32 0.0, %v4343
      %4345 = vmatmul.f32.gmra.mxu0 %v3877
      %v4346 = vpop.f32.mrf.mxu0
      %v4347 = vadd.f32 0.0, %v4346
      %4348 = vmatmul.f32.gmra.mxu0 %v3879
      %v4349 = vpop.f32.mrf.mxu0
      %v4350 = vadd.f32 0.0, %v4349
      %4351 = vmatmul.f32.gmra.mxu0 %v3881
      %v4352 = vpop.f32.mrf.mxu0
      %v4353 = vadd.f32 0.0, %v4352
      %4354 = vmatmul.f32.gmra.mxu0 %v3883
      %v4355 = vpop.f32.mrf.mxu0
      %v4356 = vadd.f32 0.0, %v4355
      %4357 = vmatmul.f32.gmra.mxu0 %v3885
      %v4358 = vpop.f32.mrf.mxu0
      %v4359 = vadd.f32 0.0, %v4358
      %4360 = vmatmul.f32.gmra.mxu0 %v3887
      %v4361 = vpop.f32.mrf.mxu0
      %v4362 = vadd.f32 0.0, %v4361
      %4363 = vmatmul.f32.gmra.mxu0 %v3889
      %v4364 = vpop.f32.mrf.mxu0
      %v4365 = vadd.f32 0.0, %v4364
      %4366 = vmatmul.f32.gmra.mxu0 %v3891
      %v4367 = vpop.f32.mrf.mxu0
      %v4368 = vadd.f32 0.0, %v4367
      %4369 = vmatmul.f32.gmra.mxu0 %v3893
      %v4370 = vpop.f32.mrf.mxu0
      %v4371 = vadd.f32 0.0, %v4370
      %4372 = vmatmul.f32.gmra.mxu0 %v3895
      %v4373 = vpop.f32.mrf.mxu0
      %v4374 = vadd.f32 0.0, %v4373
      %4375 = vmatmul.f32.gmra.mxu0 %v3897
      %v4376 = vpop.f32.mrf.mxu0
      %v4377 = vadd.f32 0.0, %v4376
      %4378 = vmatmul.f32.gmra.mxu0 %v3899
      %v4379 = vpop.f32.mrf.mxu0
      %v4380 = vadd.f32 0.0, %v4379
      %4381 = vmatmul.f32.gmra.mxu0 %v3901
      %v4382 = vpop.f32.mrf.mxu0
      %v4383 = vadd.f32 0.0, %v4382
      %4384 = vdwg.mxu0
      %4385 = vmatpush.msra.mxu0 %v4255
      %4386 = vmatpush.msra.mxu0 %v4254
      %4387 = vmatpush.msra.mxu0 %v4253
      %4388 = vmatpush.msra.mxu0 %v4252
      %4389 = vmatpush.msra.mxu0 %v4251
      %4390 = vmatpush.msra.mxu0 %v4250
      %4391 = vmatpush.msra.mxu0 %v4249
      %4392 = vmatpush.msra.mxu0 %v4248
      %4393 = vmatpush.msra.mxu0 %v4247
      %4394 = vmatpush.msra.mxu0 %v4246
      %4395 = vmatpush.msra.mxu0 %v4245
      %4396 = vmatpush.msra.mxu0 %v4244
      %4397 = vmatpush.msra.mxu0 %v4243
      %4398 = vmatpush.msra.mxu0 %v4242
      %4399 = vmatpush.msra.mxu0 %v4241
      %4400 = vmatpush.msra.mxu0 %v4240
      %4401 = vmatmul.f32.gmra.mxu0 %v3969
      %v4402 = vpop.f32.mrf.mxu0
      %v4403 = vadd.f32 %v4290, %v4402
      %4404 = vmatmul.f32.gmra.mxu0 %v3972
      %v4405 = vpop.f32.mrf.mxu0
      %v4406 = vadd.f32 %v4293, %v4405
      %4407 = vmatmul.f32.gmra.mxu0 %v3975
      %v4408 = vpop.f32.mrf.mxu0
      %v4409 = vadd.f32 %v4296, %v4408
      %4410 = vmatmul.f32.gmra.mxu0 %v3978
      %v4411 = vpop.f32.mrf.mxu0
      %v4412 = vadd.f32 %v4299, %v4411
      %4413 = vmatmul.f32.gmra.mxu0 %v3981
      %v4414 = vpop.f32.mrf.mxu0
      %v4415 = vadd.f32 %v4302, %v4414
      %4416 = vmatmul.f32.gmra.mxu0 %v3984
      %v4417 = vpop.f32.mrf.mxu0
      %v4418 = vadd.f32 %v4305, %v4417
      %4419 = vmatmul.f32.gmra.mxu0 %v3987
      %v4420 = vpop.f32.mrf.mxu0
      %v4421 = vadd.f32 %v4308, %v4420
      %4422 = vmatmul.f32.gmra.mxu0 %v3990
      %v4423 = vpop.f32.mrf.mxu0
      %v4424 = vadd.f32 %v4311, %v4423
      %4425 = vmatmul.f32.gmra.mxu0 %v3993
      %v4426 = vpop.f32.mrf.mxu0
      %v4427 = vadd.f32 %v4314, %v4426
      %4428 = vmatmul.f32.gmra.mxu0 %v3996
      %v4429 = vpop.f32.mrf.mxu0
      %v4430 = vadd.f32 %v4317, %v4429
      %4431 = vmatmul.f32.gmra.mxu0 %v3999
      %v4432 = vpop.f32.mrf.mxu0
      %v4433 = vadd.f32 %v4320, %v4432
      %4434 = vmatmul.f32.gmra.mxu0 %v4002
      %v4435 = vpop.f32.mrf.mxu0
      %v4436 = vadd.f32 %v4323, %v4435
      %4437 = vmatmul.f32.gmra.mxu0 %v4005
      %v4438 = vpop.f32.mrf.mxu0
      %v4439 = vadd.f32 %v4326, %v4438
      %4440 = vmatmul.f32.gmra.mxu0 %v4008
      %v4441 = vpop.f32.mrf.mxu0
      %v4442 = vadd.f32 %v4329, %v4441
      %4443 = vmatmul.f32.gmra.mxu0 %v4011
      %v4444 = vpop.f32.mrf.mxu0
      %v4445 = vadd.f32 %v4332, %v4444
      %4446 = vmatmul.f32.gmra.mxu0 %v4014
      %v4447 = vpop.f32.mrf.mxu0
      %v4448 = vadd.f32 %v4335, %v4447
      %4449 = vmatmul.f32.gmra.mxu0 %v4017
      %v4450 = vpop.f32.mrf.mxu0
      %v4451 = vadd.f32 %v4338, %v4450
      %4452 = vmatmul.f32.gmra.mxu0 %v4020
      %v4453 = vpop.f32.mrf.mxu0
      %v4454 = vadd.f32 %v4341, %v4453
      %4455 = vmatmul.f32.gmra.mxu0 %v4023
      %v4456 = vpop.f32.mrf.mxu0
      %v4457 = vadd.f32 %v4344, %v4456
      %4458 = vmatmul.f32.gmra.mxu0 %v4026
      %v4459 = vpop.f32.mrf.mxu0
      %v4460 = vadd.f32 %v4347, %v4459
      %4461 = vmatmul.f32.gmra.mxu0 %v4029
      %v4462 = vpop.f32.mrf.mxu0
      %v4463 = vadd.f32 %v4350, %v4462
      %4464 = vmatmul.f32.gmra.mxu0 %v4032
      %v4465 = vpop.f32.mrf.mxu0
      %v4466 = vadd.f32 %v4353, %v4465
      %4467 = vmatmul.f32.gmra.mxu0 %v4035
      %v4468 = vpop.f32.mrf.mxu0
      %v4469 = vadd.f32 %v4356, %v4468
      %4470 = vmatmul.f32.gmra.mxu0 %v4038
      %v4471 = vpop.f32.mrf.mxu0
      %v4472 = vadd.f32 %v4359, %v4471
      %4473 = vmatmul.f32.gmra.mxu0 %v4041
      %v4474 = vpop.f32.mrf.mxu0
      %v4475 = vadd.f32 %v4362, %v4474
      %4476 = vmatmul.f32.gmra.mxu0 %v4044
      %v4477 = vpop.f32.mrf.mxu0
      %v4478 = vadd.f32 %v4365, %v4477
      %4479 = vmatmul.f32.gmra.mxu0 %v4047
      %v4480 = vpop.f32.mrf.mxu0
      %v4481 = vadd.f32 %v4368, %v4480
      %4482 = vmatmul.f32.gmra.mxu0 %v4050
      %v4483 = vpop.f32.mrf.mxu0
      %v4484 = vadd.f32 %v4371, %v4483
      %4485 = vmatmul.f32.gmra.mxu0 %v4053
      %v4486 = vpop.f32.mrf.mxu0
      %v4487 = vadd.f32 %v4374, %v4486
      %4488 = vmatmul.f32.gmra.mxu0 %v4056
      %v4489 = vpop.f32.mrf.mxu0
      %v4490 = vadd.f32 %v4377, %v4489
      %4491 = vmatmul.f32.gmra.mxu0 %v4059
      %v4492 = vpop.f32.mrf.mxu0
      %v4493 = vadd.f32 %v4380, %v4492
      %4494 = vmatmul.f32.gmra.mxu0 %v4062
      %v4495 = vpop.f32.mrf.mxu0
      %v4496 = vadd.f32 %v4383, %v4495
      %4497 = vdwg.mxu0
      %4498 = vmatpush.msra.mxu0 %v4271
      %4499 = vmatpush.msra.mxu0 %v4270
      %4500 = vmatpush.msra.mxu0 %v4269
      %4501 = vmatpush.msra.mxu0 %v4268
      %4502 = vmatpush.msra.mxu0 %v4267
      %4503 = vmatpush.msra.mxu0 %v4266
      %4504 = vmatpush.msra.mxu0 %v4265
      %4505 = vmatpush.msra.mxu0 %v4264
      %4506 = vmatpush.msra.mxu0 %v4263
      %4507 = vmatpush.msra.mxu0 %v4262
      %4508 = vmatpush.msra.mxu0 %v4261
      %4509 = vmatpush.msra.mxu0 %v4260
      %4510 = vmatpush.msra.mxu0 %v4259
      %4511 = vmatpush.msra.mxu0 %v4258
      %4512 = vmatpush.msra.mxu0 %v4257
      %4513 = vmatpush.msra.mxu0 %v4256
      %4514 = vmatmul.f32.gmra.mxu0 %v4097
      %v4515 = vpop.f32.mrf.mxu0
      %v4516 = vadd.f32 %v4403, %v4515
      %4517 = vmatmul.f32.gmra.mxu0 %v4100
      %v4518 = vpop.f32.mrf.mxu0
      %v4519 = vadd.f32 %v4406, %v4518
      %4520 = vmatmul.f32.gmra.mxu0 %v4103
      %v4521 = vpop.f32.mrf.mxu0
      %v4522 = vadd.f32 %v4409, %v4521
      %4523 = vmatmul.f32.gmra.mxu0 %v4106
      %v4524 = vpop.f32.mrf.mxu0
      %v4525 = vadd.f32 %v4412, %v4524
      %4526 = vmatmul.f32.gmra.mxu0 %v4109
      %v4527 = vpop.f32.mrf.mxu0
      %v4528 = vadd.f32 %v4415, %v4527
      %4529 = vmatmul.f32.gmra.mxu0 %v4112
      %v4530 = vpop.f32.mrf.mxu0
      %v4531 = vadd.f32 %v4418, %v4530
      %4532 = vmatmul.f32.gmra.mxu0 %v4115
      %v4533 = vpop.f32.mrf.mxu0
      %v4534 = vadd.f32 %v4421, %v4533
      %4535 = vmatmul.f32.gmra.mxu0 %v4118
      %v4536 = vpop.f32.mrf.mxu0
      %v4537 = vadd.f32 %v4424, %v4536
      %4538 = vmatmul.f32.gmra.mxu0 %v4121
      %v4539 = vpop.f32.mrf.mxu0
      %v4540 = vadd.f32 %v4427, %v4539
      %4541 = vmatmul.f32.gmra.mxu0 %v4124
      %v4542 = vpop.f32.mrf.mxu0
      %v4543 = vadd.f32 %v4430, %v4542
      %4544 = vmatmul.f32.gmra.mxu0 %v4127
      %v4545 = vpop.f32.mrf.mxu0
      %v4546 = vadd.f32 %v4433, %v4545
      %4547 = vmatmul.f32.gmra.mxu0 %v4130
      %v4548 = vpop.f32.mrf.mxu0
      %v4549 = vadd.f32 %v4436, %v4548
      %4550 = vmatmul.f32.gmra.mxu0 %v4133
      %v4551 = vpop.f32.mrf.mxu0
      %v4552 = vadd.f32 %v4439, %v4551
      %4553 = vmatmul.f32.gmra.mxu0 %v4136
      %v4554 = vpop.f32.mrf.mxu0
      %v4555 = vadd.f32 %v4442, %v4554
      %4556 = vmatmul.f32.gmra.mxu0 %v4139
      %v4557 = vpop.f32.mrf.mxu0
      %v4558 = vadd.f32 %v4445, %v4557
      %4559 = vmatmul.f32.gmra.mxu0 %v4142
      %v4560 = vpop.f32.mrf.mxu0
      %v4561 = vadd.f32 %v4448, %v4560
      %4562 = vmatmul.f32.gmra.mxu0 %v4145
      %v4563 = vpop.f32.mrf.mxu0
      %v4564 = vadd.f32 %v4451, %v4563
      %4565 = vmatmul.f32.gmra.mxu0 %v4148
      %v4566 = vpop.f32.mrf.mxu0
      %v4567 = vadd.f32 %v4454, %v4566
      %4568 = vmatmul.f32.gmra.mxu0 %v4151
      %v4569 = vpop.f32.mrf.mxu0
      %v4570 = vadd.f32 %v4457, %v4569
      %4571 = vmatmul.f32.gmra.mxu0 %v4154
      %v4572 = vpop.f32.mrf.mxu0
      %v4573 = vadd.f32 %v4460, %v4572
      %4574 = vmatmul.f32.gmra.mxu0 %v4157
      %v4575 = vpop.f32.mrf.mxu0
      %v4576 = vadd.f32 %v4463, %v4575
      %4577 = vmatmul.f32.gmra.mxu0 %v4160
      %v4578 = vpop.f32.mrf.mxu0
      %v4579 = vadd.f32 %v4466, %v4578
      %4580 = vmatmul.f32.gmra.mxu0 %v4163
      %v4581 = vpop.f32.mrf.mxu0
      %v4582 = vadd.f32 %v4469, %v4581
      %4583 = vmatmul.f32.gmra.mxu0 %v4166
      %v4584 = vpop.f32.mrf.mxu0
      %v4585 = vadd.f32 %v4472, %v4584
      %4586 = vmatmul.f32.gmra.mxu0 %v4169
      %v4587 = vpop.f32.mrf.mxu0
      %v4588 = vadd.f32 %v4475, %v4587
      %4589 = vmatmul.f32.gmra.mxu0 %v4172
      %v4590 = vpop.f32.mrf.mxu0
      %v4591 = vadd.f32 %v4478, %v4590
      %4592 = vmatmul.f32.gmra.mxu0 %v4175
      %v4593 = vpop.f32.mrf.mxu0
      %v4594 = vadd.f32 %v4481, %v4593
      %4595 = vmatmul.f32.gmra.mxu0 %v4178
      %v4596 = vpop.f32.mrf.mxu0
      %v4597 = vadd.f32 %v4484, %v4596
      %4598 = vmatmul.f32.gmra.mxu0 %v4181
      %v4599 = vpop.f32.mrf.mxu0
      %v4600 = vadd.f32 %v4487, %v4599
      %4601 = vmatmul.f32.gmra.mxu0 %v4184
      %v4602 = vpop.f32.mrf.mxu0
      %v4603 = vadd.f32 %v4490, %v4602
      %4604 = vmatmul.f32.gmra.mxu0 %v4187
      %v4605 = vpop.f32.mrf.mxu0
      %v4606 = vadd.f32 %v4493, %v4605
      %4607 = vmatmul.f32.gmra.mxu0 %v4190
      %v4608 = vpop.f32.mrf.mxu0
      %v4609 = vadd.f32 %v4496, %v4608
      %4610 = vdwg.mxu0
      %v4611 = vld [vmem:[#allocation3] sm:$0xff]
      %v4612 = vld [vmem:[#allocation3 + $0x8] sm:$0xff]
      %v4613 = vld [vmem:[#allocation3 + $0x10] sm:$0xff]
      %v4614 = vld [vmem:[#allocation3 + $0x18] sm:$0xff]
      %v4615 = vld [vmem:[#allocation3 + $0x20] sm:$0xff]
      %v4616 = vld [vmem:[#allocation3 + $0x28] sm:$0xff]
      %v4617 = vld [vmem:[#allocation3 + $0x30] sm:$0xff]
      %v4618 = vld [vmem:[#allocation3 + $0x38] sm:$0xff]
      %v4619 = vld [vmem:[#allocation3 + $0x40] sm:$0xff]
      %v4620 = vld [vmem:[#allocation3 + $0x48] sm:$0xff]
      %v4621 = vld [vmem:[#allocation3 + $0x50] sm:$0xff]
      %v4622 = vld [vmem:[#allocation3 + $0x58] sm:$0xff]
      %v4623 = vld [vmem:[#allocation3 + $0x60] sm:$0xff]
      %v4624 = vld [vmem:[#allocation3 + $0x68] sm:$0xff]
      %v4625 = vld [vmem:[#allocation3 + $0x70] sm:$0xff]
      %v4626 = vld [vmem:[#allocation3 + $0x78] sm:$0xff]
      %v4627 = vld [vmem:[#allocation3 + $0x80] sm:$0xff]
      %v4628 = vld [vmem:[#allocation3 + $0x88] sm:$0xff]
      %v4629 = vld [vmem:[#allocation3 + $0x90] sm:$0xff]
      %v4630 = vld [vmem:[#allocation3 + $0x98] sm:$0xff]
      %v4631 = vld [vmem:[#allocation3 + $0xa0] sm:$0xff]
      %v4632 = vld [vmem:[#allocation3 + $0xa8] sm:$0xff]
      %v4633 = vld [vmem:[#allocation3 + $0xb0] sm:$0xff]
      %v4634 = vld [vmem:[#allocation3 + $0xb8] sm:$0xff]
      %v4635 = vld [vmem:[#allocation3 + $0xc0] sm:$0xff]
      %v4636 = vld [vmem:[#allocation3 + $0xc8] sm:$0xff]
      %v4637 = vld [vmem:[#allocation3 + $0xd0] sm:$0xff]
      %v4638 = vld [vmem:[#allocation3 + $0xd8] sm:$0xff]
      %v4639 = vld [vmem:[#allocation3 + $0xe0] sm:$0xff]
      %v4640 = vld [vmem:[#allocation3 + $0xe8] sm:$0xff]
      %v4641 = vld [vmem:[#allocation3 + $0xf0] sm:$0xff]
      %v4642 = vld [vmem:[#allocation3 + $0xf8] sm:$0xff]
      %v4643 = vadd.f32 %v4611, %v4516
      %v4644 = vadd.f32 %v4612, %v4519
      %v4645 = vadd.f32 %v4613, %v4522
      %v4646 = vadd.f32 %v4614, %v4525
      %v4647 = vadd.f32 %v4615, %v4528
      %v4648 = vadd.f32 %v4616, %v4531
      %v4649 = vadd.f32 %v4617, %v4534
      %v4650 = vadd.f32 %v4618, %v4537
      %v4651 = vadd.f32 %v4619, %v4540
      %v4652 = vadd.f32 %v4620, %v4543
      %v4653 = vadd.f32 %v4621, %v4546
      %v4654 = vadd.f32 %v4622, %v4549
      %v4655 = vadd.f32 %v4623, %v4552
      %v4656 = vadd.f32 %v4624, %v4555
      %v4657 = vadd.f32 %v4625, %v4558
      %v4658 = vadd.f32 %v4626, %v4561
      %v4659 = vadd.f32 %v4627, %v4564
      %v4660 = vadd.f32 %v4628, %v4567
      %v4661 = vadd.f32 %v4629, %v4570
      %v4662 = vadd.f32 %v4630, %v4573
      %v4663 = vadd.f32 %v4631, %v4576
      %v4664 = vadd.f32 %v4632, %v4579
      %v4665 = vadd.f32 %v4633, %v4582
      %v4666 = vadd.f32 %v4634, %v4585
      %v4667 = vadd.f32 %v4635, %v4588
      %v4668 = vadd.f32 %v4636, %v4591
      %v4669 = vadd.f32 %v4637, %v4594
      %v4670 = vadd.f32 %v4638, %v4597
      %v4671 = vadd.f32 %v4639, %v4600
      %v4672 = vadd.f32 %v4640, %v4603
      %v4673 = vadd.f32 %v4641, %v4606
      %v4674 = vadd.f32 %v4642, %v4609
      %4675 = vst [vmem:[#allocation3] sm:$0xff] %v4643
      %4676 = vst [vmem:[#allocation3 + $0x8] sm:$0xff] %v4644
      %4677 = vst [vmem:[#allocation3 + $0x10] sm:$0xff] %v4645
      %4678 = vst [vmem:[#allocation3 + $0x18] sm:$0xff] %v4646
      %4679 = vst [vmem:[#allocation3 + $0x20] sm:$0xff] %v4647
      %4680 = vst [vmem:[#allocation3 + $0x28] sm:$0xff] %v4648
      %4681 = vst [vmem:[#allocation3 + $0x30] sm:$0xff] %v4649
      %4682 = vst [vmem:[#allocation3 + $0x38] sm:$0xff] %v4650
      %4683 = vst [vmem:[#allocation3 + $0x40] sm:$0xff] %v4651
      %4684 = vst [vmem:[#allocation3 + $0x48] sm:$0xff] %v4652
      %4685 = vst [vmem:[#allocation3 + $0x50] sm:$0xff] %v4653
      %4686 = vst [vmem:[#allocation3 + $0x58] sm:$0xff] %v4654
      %4687 = vst [vmem:[#allocation3 + $0x60] sm:$0xff] %v4655
      %4688 = vst [vmem:[#allocation3 + $0x68] sm:$0xff] %v4656
      %4689 = vst [vmem:[#allocation3 + $0x70] sm:$0xff] %v4657
      %4690 = vst [vmem:[#allocation3 + $0x78] sm:$0xff] %v4658
      %4691 = vst [vmem:[#allocation3 + $0x80] sm:$0xff] %v4659
      %4692 = vst [vmem:[#allocation3 + $0x88] sm:$0xff] %v4660
      %4693 = vst [vmem:[#allocation3 + $0x90] sm:$0xff] %v4661
      %4694 = vst [vmem:[#allocation3 + $0x98] sm:$0xff] %v4662
      %4695 = vst [vmem:[#allocation3 + $0xa0] sm:$0xff] %v4663
      %4696 = vst [vmem:[#allocation3 + $0xa8] sm:$0xff] %v4664
      %4697 = vst [vmem:[#allocation3 + $0xb0] sm:$0xff] %v4665
      %4698 = vst [vmem:[#allocation3 + $0xb8] sm:$0xff] %v4666
      %4699 = vst [vmem:[#allocation3 + $0xc0] sm:$0xff] %v4667
      %4700 = vst [vmem:[#allocation3 + $0xc8] sm:$0xff] %v4668
      %4701 = vst [vmem:[#allocation3 + $0xd0] sm:$0xff] %v4669
      %4702 = vst [vmem:[#allocation3 + $0xd8] sm:$0xff] %v4670
      %4703 = vst [vmem:[#allocation3 + $0xe0] sm:$0xff] %v4671
      %4704 = vst [vmem:[#allocation3 + $0xe8] sm:$0xff] %v4672
      %4705 = vst [vmem:[#allocation3 + $0xf0] sm:$0xff] %v4673
      %4706 = vst [vmem:[#allocation3 + $0xf8] sm:$0xff] %v4674
      %s4707 = scalar_lea.vmem [#allocation2], 192
      %v4708 = vld [vmem:[%s4707] sm:$0xff]
      %v4709 = vld [vmem:[%s4707 + $0x8] sm:$0x3]
      %v4710 = vld [vmem:[%s4707 + $0x10] sm:$0xff]
      %v4711 = vld [vmem:[%s4707 + $0x18] sm:$0x3]
      %v4712 = vld [vmem:[%s4707 + $0x20] sm:$0xff]
      %v4713 = vld [vmem:[%s4707 + $0x28] sm:$0x3]
      %v4714 = vld [vmem:[%s4707 + $0x30] sm:$0xff]
      %v4715 = vld [vmem:[%s4707 + $0x38] sm:$0x3]
      %v4716 = vld [vmem:[%s4707 + $0x40] sm:$0xff]
      %v4717 = vld [vmem:[%s4707 + $0x48] sm:$0x3]
      %v4718 = vld [vmem:[%s4707 + $0x50] sm:$0xff]
      %v4719 = vld [vmem:[%s4707 + $0x58] sm:$0x3]
      %v4720 = vld [vmem:[%s4707 + $0x60] sm:$0xff]
      %v4721 = vld [vmem:[%s4707 + $0x68] sm:$0x3]
      %v4722 = vld [vmem:[%s4707 + $0x70] sm:$0xff]
      %v4723 = vld [vmem:[%s4707 + $0x78] sm:$0x3]
      %v4724 = vld [vmem:[%s4707 + $0xa0] sm:$0xff]
      %v4725 = vld [vmem:[%s4707 + $0xa8] sm:$0x3]
      %v4726 = vld [vmem:[%s4707 + $0xb0] sm:$0xff]
      %v4727 = vld [vmem:[%s4707 + $0xb8] sm:$0x3]
      %v4728 = vld [vmem:[%s4707 + $0xc0] sm:$0xff]
      %v4729 = vld [vmem:[%s4707 + $0xc8] sm:$0x3]
      %v4730 = vld [vmem:[%s4707 + $0xd0] sm:$0xff]
      %v4731 = vld [vmem:[%s4707 + $0xd8] sm:$0x3]
      %v4732 = vld [vmem:[%s4707 + $0xe0] sm:$0xff]
      %v4733 = vld [vmem:[%s4707 + $0xe8] sm:$0x3]
      %v4734 = vld [vmem:[%s4707 + $0xf0] sm:$0xff]
      %v4735 = vld [vmem:[%s4707 + $0xf8] sm:$0x3]
      %v4736 = vld [vmem:[%s4707 + $0x100] sm:$0xff]
      %v4737 = vld [vmem:[%s4707 + $0x108] sm:$0x3]
      %v4738 = vld [vmem:[%s4707 + $0x110] sm:$0xff]
      %v4739 = vld [vmem:[%s4707 + $0x118] sm:$0x3]
      %v4740 = vld [vmem:[%s4707 + $0x140] sm:$0xff]
      %v4741 = vld [vmem:[%s4707 + $0x148] sm:$0x3]
      %v4742 = vld [vmem:[%s4707 + $0x150] sm:$0xff]
      %v4743 = vld [vmem:[%s4707 + $0x158] sm:$0x3]
      %v4744 = vld [vmem:[%s4707 + $0x160] sm:$0xff]
      %v4745 = vld [vmem:[%s4707 + $0x168] sm:$0x3]
      %v4746 = vld [vmem:[%s4707 + $0x170] sm:$0xff]
      %v4747 = vld [vmem:[%s4707 + $0x178] sm:$0x3]
      %v4748 = vld [vmem:[%s4707 + $0x180] sm:$0xff]
      %v4749 = vld [vmem:[%s4707 + $0x188] sm:$0x3]
      %v4750 = vld [vmem:[%s4707 + $0x190] sm:$0xff]
      %v4751 = vld [vmem:[%s4707 + $0x198] sm:$0x3]
      %v4752 = vld [vmem:[%s4707 + $0x1a0] sm:$0xff]
      %v4753 = vld [vmem:[%s4707 + $0x1a8] sm:$0x3]
      %v4754 = vld [vmem:[%s4707 + $0x1b0] sm:$0xff]
      %v4755 = vld [vmem:[%s4707 + $0x1b8] sm:$0x3]
      %v4756 = vld [vmem:[%s4707 + $0x1e0] sm:$0xff]
      %v4757 = vld [vmem:[%s4707 + $0x1e8] sm:$0x3]
      %v4758 = vld [vmem:[%s4707 + $0x1f0] sm:$0xff]
      %v4759 = vld [vmem:[%s4707 + $0x1f8] sm:$0x3]
      %v4760 = vld [vmem:[%s4707 + $0x200] sm:$0xff]
      %v4761 = vld [vmem:[%s4707 + $0x208] sm:$0x3]
      %v4762 = vld [vmem:[%s4707 + $0x210] sm:$0xff]
      %v4763 = vld [vmem:[%s4707 + $0x218] sm:$0x3]
      %v4764 = vld [vmem:[%s4707 + $0x220] sm:$0xff]
      %v4765 = vld [vmem:[%s4707 + $0x228] sm:$0x3]
      %v4766 = vld [vmem:[%s4707 + $0x230] sm:$0xff]
      %v4767 = vld [vmem:[%s4707 + $0x238] sm:$0x3]
      %v4768 = vld [vmem:[%s4707 + $0x240] sm:$0xff]
      %v4769 = vld [vmem:[%s4707 + $0x248] sm:$0x3]
      %v4770 = vld [vmem:[%s4707 + $0x250] sm:$0xff]
      %v4771 = vld [vmem:[%s4707 + $0x258] sm:$0x3]
      %v4836 = vrot.slane %v4708, 1
      %v4837 = vrot.slane %v4709, 1
      %v4838 = vsel %vm554, %v4836, %v4837
      %v4839 = vrot.slane %v4710, 1
      %v4840 = vrot.slane %v4711, 1
      %v4841 = vsel %vm554, %v4839, %v4840
      %v4842 = vrot.slane %v4712, 1
      %v4843 = vrot.slane %v4713, 1
      %v4844 = vsel %vm554, %v4842, %v4843
      %v4845 = vrot.slane %v4714, 1
      %v4846 = vrot.slane %v4715, 1
      %v4847 = vsel %vm554, %v4845, %v4846
      %v4848 = vrot.slane %v4716, 1
      %v4849 = vrot.slane %v4717, 1
      %v4850 = vsel %vm554, %v4848, %v4849
      %v4851 = vrot.slane %v4718, 1
      %v4852 = vrot.slane %v4719, 1
      %v4853 = vsel %vm554, %v4851, %v4852
      %v4854 = vrot.slane %v4720, 1
      %v4855 = vrot.slane %v4721, 1
      %v4856 = vsel %vm554, %v4854, %v4855
      %v4857 = vrot.slane %v4722, 1
      %v4858 = vrot.slane %v4723, 1
      %v4859 = vsel %vm554, %v4857, %v4858
      %v4860 = vrot.slane %v4724, 1
      %v4861 = vrot.slane %v4725, 1
      %v4862 = vsel %vm554, %v4860, %v4861
      %v4863 = vrot.slane %v4726, 1
      %v4864 = vrot.slane %v4727, 1
      %v4865 = vsel %vm554, %v4863, %v4864
      %v4866 = vrot.slane %v4728, 1
      %v4867 = vrot.slane %v4729, 1
      %v4868 = vsel %vm554, %v4866, %v4867
      %v4869 = vrot.slane %v4730, 1
      %v4870 = vrot.slane %v4731, 1
      %v4871 = vsel %vm554, %v4869, %v4870
      %v4872 = vrot.slane %v4732, 1
      %v4873 = vrot.slane %v4733, 1
      %v4874 = vsel %vm554, %v4872, %v4873
      %v4875 = vrot.slane %v4734, 1
      %v4876 = vrot.slane %v4735, 1
      %v4877 = vsel %vm554, %v4875, %v4876
      %v4878 = vrot.slane %v4736, 1
      %v4879 = vrot.slane %v4737, 1
      %v4880 = vsel %vm554, %v4878, %v4879
      %v4881 = vrot.slane %v4738, 1
      %v4882 = vrot.slane %v4739, 1
      %v4883 = vsel %vm554, %v4881, %v4882
      %v4884 = vrot.slane %v4740, 1
      %v4885 = vrot.slane %v4741, 1
      %v4886 = vsel %vm554, %v4884, %v4885
      %v4887 = vrot.slane %v4742, 1
      %v4888 = vrot.slane %v4743, 1
      %v4889 = vsel %vm554, %v4887, %v4888
      %v4890 = vrot.slane %v4744, 1
      %v4891 = vrot.slane %v4745, 1
      %v4892 = vsel %vm554, %v4890, %v4891
      %v4893 = vrot.slane %v4746, 1
      %v4894 = vrot.slane %v4747, 1
      %v4895 = vsel %vm554, %v4893, %v4894
      %v4896 = vrot.slane %v4748, 1
      %v4897 = vrot.slane %v4749, 1
      %v4898 = vsel %vm554, %v4896, %v4897
      %v4899 = vrot.slane %v4750, 1
      %v4900 = vrot.slane %v4751, 1
      %v4901 = vsel %vm554, %v4899, %v4900
      %v4902 = vrot.slane %v4752, 1
      %v4903 = vrot.slane %v4753, 1
      %v4904 = vsel %vm554, %v4902, %v4903
      %v4905 = vrot.slane %v4754, 1
      %v4906 = vrot.slane %v4755, 1
      %v4907 = vsel %vm554, %v4905, %v4906
      %v4908 = vrot.slane %v4756, 1
      %v4909 = vrot.slane %v4757, 1
      %v4910 = vsel %vm554, %v4908, %v4909
      %v4911 = vrot.slane %v4758, 1
      %v4912 = vrot.slane %v4759, 1
      %v4913 = vsel %vm554, %v4911, %v4912
      %v4914 = vrot.slane %v4760, 1
      %v4915 = vrot.slane %v4761, 1
      %v4916 = vsel %vm554, %v4914, %v4915
      %v4917 = vrot.slane %v4762, 1
      %v4918 = vrot.slane %v4763, 1
      %v4919 = vsel %vm554, %v4917, %v4918
      %v4920 = vrot.slane %v4764, 1
      %v4921 = vrot.slane %v4765, 1
      %v4922 = vsel %vm554, %v4920, %v4921
      %v4923 = vrot.slane %v4766, 1
      %v4924 = vrot.slane %v4767, 1
      %v4925 = vsel %vm554, %v4923, %v4924
      %v4926 = vrot.slane %v4768, 1
      %v4927 = vrot.slane %v4769, 1
      %v4928 = vsel %vm554, %v4926, %v4927
      %v4929 = vrot.slane %v4770, 1
      %v4930 = vrot.slane %v4771, 1
      %v4931 = vsel %vm554, %v4929, %v4930
      %v4964 = vrot.slane %v4708, 2
      %v4965 = vrot.slane %v4709, 2
      %v4966 = vsel %vm683, %v4964, %v4965
      %v4967 = vrot.slane %v4710, 2
      %v4968 = vrot.slane %v4711, 2
      %v4969 = vsel %vm683, %v4967, %v4968
      %v4970 = vrot.slane %v4712, 2
      %v4971 = vrot.slane %v4713, 2
      %v4972 = vsel %vm683, %v4970, %v4971
      %v4973 = vrot.slane %v4714, 2
      %v4974 = vrot.slane %v4715, 2
      %v4975 = vsel %vm683, %v4973, %v4974
      %v4976 = vrot.slane %v4716, 2
      %v4977 = vrot.slane %v4717, 2
      %v4978 = vsel %vm683, %v4976, %v4977
      %v4979 = vrot.slane %v4718, 2
      %v4980 = vrot.slane %v4719, 2
      %v4981 = vsel %vm683, %v4979, %v4980
      %v4982 = vrot.slane %v4720, 2
      %v4983 = vrot.slane %v4721, 2
      %v4984 = vsel %vm683, %v4982, %v4983
      %v4985 = vrot.slane %v4722, 2
      %v4986 = vrot.slane %v4723, 2
      %v4987 = vsel %vm683, %v4985, %v4986
      %v4988 = vrot.slane %v4724, 2
      %v4989 = vrot.slane %v4725, 2
      %v4990 = vsel %vm683, %v4988, %v4989
      %v4991 = vrot.slane %v4726, 2
      %v4992 = vrot.slane %v4727, 2
      %v4993 = vsel %vm683, %v4991, %v4992
      %v4994 = vrot.slane %v4728, 2
      %v4995 = vrot.slane %v4729, 2
      %v4996 = vsel %vm683, %v4994, %v4995
      %v4997 = vrot.slane %v4730, 2
      %v4998 = vrot.slane %v4731, 2
      %v4999 = vsel %vm683, %v4997, %v4998
      %v5000 = vrot.slane %v4732, 2
      %v5001 = vrot.slane %v4733, 2
      %v5002 = vsel %vm683, %v5000, %v5001
      %v5003 = vrot.slane %v4734, 2
      %v5004 = vrot.slane %v4735, 2
      %v5005 = vsel %vm683, %v5003, %v5004
      %v5006 = vrot.slane %v4736, 2
      %v5007 = vrot.slane %v4737, 2
      %v5008 = vsel %vm683, %v5006, %v5007
      %v5009 = vrot.slane %v4738, 2
      %v5010 = vrot.slane %v4739, 2
      %v5011 = vsel %vm683, %v5009, %v5010
      %v5012 = vrot.slane %v4740, 2
      %v5013 = vrot.slane %v4741, 2
      %v5014 = vsel %vm683, %v5012, %v5013
      %v5015 = vrot.slane %v4742, 2
      %v5016 = vrot.slane %v4743, 2
      %v5017 = vsel %vm683, %v5015, %v5016
      %v5018 = vrot.slane %v4744, 2
      %v5019 = vrot.slane %v4745, 2
      %v5020 = vsel %vm683, %v5018, %v5019
      %v5021 = vrot.slane %v4746, 2
      %v5022 = vrot.slane %v4747, 2
      %v5023 = vsel %vm683, %v5021, %v5022
      %v5024 = vrot.slane %v4748, 2
      %v5025 = vrot.slane %v4749, 2
      %v5026 = vsel %vm683, %v5024, %v5025
      %v5027 = vrot.slane %v4750, 2
      %v5028 = vrot.slane %v4751, 2
      %v5029 = vsel %vm683, %v5027, %v5028
      %v5030 = vrot.slane %v4752, 2
      %v5031 = vrot.slane %v4753, 2
      %v5032 = vsel %vm683, %v5030, %v5031
      %v5033 = vrot.slane %v4754, 2
      %v5034 = vrot.slane %v4755, 2
      %v5035 = vsel %vm683, %v5033, %v5034
      %v5036 = vrot.slane %v4756, 2
      %v5037 = vrot.slane %v4757, 2
      %v5038 = vsel %vm683, %v5036, %v5037
      %v5039 = vrot.slane %v4758, 2
      %v5040 = vrot.slane %v4759, 2
      %v5041 = vsel %vm683, %v5039, %v5040
      %v5042 = vrot.slane %v4760, 2
      %v5043 = vrot.slane %v4761, 2
      %v5044 = vsel %vm683, %v5042, %v5043
      %v5045 = vrot.slane %v4762, 2
      %v5046 = vrot.slane %v4763, 2
      %v5047 = vsel %vm683, %v5045, %v5046
      %v5048 = vrot.slane %v4764, 2
      %v5049 = vrot.slane %v4765, 2
      %v5050 = vsel %vm683, %v5048, %v5049
      %v5051 = vrot.slane %v4766, 2
      %v5052 = vrot.slane %v4767, 2
      %v5053 = vsel %vm683, %v5051, %v5052
      %v5054 = vrot.slane %v4768, 2
      %v5055 = vrot.slane %v4769, 2
      %v5056 = vsel %vm683, %v5054, %v5055
      %v5057 = vrot.slane %v4770, 2
      %v5058 = vrot.slane %v4771, 2
      %v5059 = vsel %vm683, %v5057, %v5058
      %s5092 = scalar_lea.vmem %s1, 1920
      %v5093 = vld [vmem:[%s5092] sm:$0xff]
      %v5094 = vld [vmem:[%s5092 + $0x8] sm:$0xff]
      %v5095 = vld [vmem:[%s5092 + $0x10] sm:$0xff]
      %v5096 = vld [vmem:[%s5092 + $0x18] sm:$0xff]
      %v5097 = vld [vmem:[%s5092 + $0x20] sm:$0xff]
      %v5098 = vld [vmem:[%s5092 + $0x28] sm:$0xff]
      %v5099 = vld [vmem:[%s5092 + $0x30] sm:$0xff]
      %v5100 = vld [vmem:[%s5092 + $0x38] sm:$0xff]
      %v5101 = vld [vmem:[%s5092 + $0x40] sm:$0xff]
      %v5102 = vld [vmem:[%s5092 + $0x48] sm:$0xff]
      %v5103 = vld [vmem:[%s5092 + $0x50] sm:$0xff]
      %v5104 = vld [vmem:[%s5092 + $0x58] sm:$0xff]
      %v5105 = vld [vmem:[%s5092 + $0x60] sm:$0xff]
      %v5106 = vld [vmem:[%s5092 + $0x68] sm:$0xff]
      %v5107 = vld [vmem:[%s5092 + $0x70] sm:$0xff]
      %v5108 = vld [vmem:[%s5092 + $0x78] sm:$0xff]
      %v5109 = vld [vmem:[%s5092 + $0x80] sm:$0xff]
      %v5110 = vld [vmem:[%s5092 + $0x88] sm:$0xff]
      %v5111 = vld [vmem:[%s5092 + $0x90] sm:$0xff]
      %v5112 = vld [vmem:[%s5092 + $0x98] sm:$0xff]
      %v5113 = vld [vmem:[%s5092 + $0xa0] sm:$0xff]
      %v5114 = vld [vmem:[%s5092 + $0xa8] sm:$0xff]
      %v5115 = vld [vmem:[%s5092 + $0xb0] sm:$0xff]
      %v5116 = vld [vmem:[%s5092 + $0xb8] sm:$0xff]
      %v5117 = vld [vmem:[%s5092 + $0xc0] sm:$0xff]
      %v5118 = vld [vmem:[%s5092 + $0xc8] sm:$0xff]
      %v5119 = vld [vmem:[%s5092 + $0xd0] sm:$0xff]
      %v5120 = vld [vmem:[%s5092 + $0xd8] sm:$0xff]
      %v5121 = vld [vmem:[%s5092 + $0xe0] sm:$0xff]
      %v5122 = vld [vmem:[%s5092 + $0xe8] sm:$0xff]
      %v5123 = vld [vmem:[%s5092 + $0xf0] sm:$0xff]
      %v5124 = vld [vmem:[%s5092 + $0xf8] sm:$0xff]
      %v5125 = vld [vmem:[%s5092 + $0x100] sm:$0xff]
      %v5126 = vld [vmem:[%s5092 + $0x108] sm:$0xff]
      %v5127 = vld [vmem:[%s5092 + $0x110] sm:$0xff]
      %v5128 = vld [vmem:[%s5092 + $0x118] sm:$0xff]
      %v5129 = vld [vmem:[%s5092 + $0x120] sm:$0xff]
      %v5130 = vld [vmem:[%s5092 + $0x128] sm:$0xff]
      %v5131 = vld [vmem:[%s5092 + $0x130] sm:$0xff]
      %v5132 = vld [vmem:[%s5092 + $0x138] sm:$0xff]
      %v5133 = vld [vmem:[%s5092 + $0x140] sm:$0xff]
      %v5134 = vld [vmem:[%s5092 + $0x148] sm:$0xff]
      %v5135 = vld [vmem:[%s5092 + $0x150] sm:$0xff]
      %v5136 = vld [vmem:[%s5092 + $0x158] sm:$0xff]
      %v5137 = vld [vmem:[%s5092 + $0x160] sm:$0xff]
      %v5138 = vld [vmem:[%s5092 + $0x168] sm:$0xff]
      %v5139 = vld [vmem:[%s5092 + $0x170] sm:$0xff]
      %v5140 = vld [vmem:[%s5092 + $0x178] sm:$0xff]
      %5141 = vmatpush.msra.mxu0 %v5108
      %5142 = vmatpush.msra.mxu0 %v5107
      %5143 = vmatpush.msra.mxu0 %v5106
      %5144 = vmatpush.msra.mxu0 %v5105
      %5145 = vmatpush.msra.mxu0 %v5104
      %5146 = vmatpush.msra.mxu0 %v5103
      %5147 = vmatpush.msra.mxu0 %v5102
      %5148 = vmatpush.msra.mxu0 %v5101
      %5149 = vmatpush.msra.mxu0 %v5100
      %5150 = vmatpush.msra.mxu0 %v5099
      %5151 = vmatpush.msra.mxu0 %v5098
      %5152 = vmatpush.msra.mxu0 %v5097
      %5153 = vmatpush.msra.mxu0 %v5096
      %5154 = vmatpush.msra.mxu0 %v5095
      %5155 = vmatpush.msra.mxu0 %v5094
      %5156 = vmatpush.msra.mxu0 %v5093
      %5157 = vmatmul.f32.gmra.mxu0 %v4708
      %v5158 = vpop.f32.mrf.mxu0
      %v5159 = vadd.f32 0.0, %v5158
      %5160 = vmatmul.f32.gmra.mxu0 %v4710
      %v5161 = vpop.f32.mrf.mxu0
      %v5162 = vadd.f32 0.0, %v5161
      %5163 = vmatmul.f32.gmra.mxu0 %v4712
      %v5164 = vpop.f32.mrf.mxu0
      %v5165 = vadd.f32 0.0, %v5164
      %5166 = vmatmul.f32.gmra.mxu0 %v4714
      %v5167 = vpop.f32.mrf.mxu0
      %v5168 = vadd.f32 0.0, %v5167
      %5169 = vmatmul.f32.gmra.mxu0 %v4716
      %v5170 = vpop.f32.mrf.mxu0
      %v5171 = vadd.f32 0.0, %v5170
      %5172 = vmatmul.f32.gmra.mxu0 %v4718
      %v5173 = vpop.f32.mrf.mxu0
      %v5174 = vadd.f32 0.0, %v5173
      %5175 = vmatmul.f32.gmra.mxu0 %v4720
      %v5176 = vpop.f32.mrf.mxu0
      %v5177 = vadd.f32 0.0, %v5176
      %5178 = vmatmul.f32.gmra.mxu0 %v4722
      %v5179 = vpop.f32.mrf.mxu0
      %v5180 = vadd.f32 0.0, %v5179
      %5181 = vmatmul.f32.gmra.mxu0 %v4724
      %v5182 = vpop.f32.mrf.mxu0
      %v5183 = vadd.f32 0.0, %v5182
      %5184 = vmatmul.f32.gmra.mxu0 %v4726
      %v5185 = vpop.f32.mrf.mxu0
      %v5186 = vadd.f32 0.0, %v5185
      %5187 = vmatmul.f32.gmra.mxu0 %v4728
      %v5188 = vpop.f32.mrf.mxu0
      %v5189 = vadd.f32 0.0, %v5188
      %5190 = vmatmul.f32.gmra.mxu0 %v4730
      %v5191 = vpop.f32.mrf.mxu0
      %v5192 = vadd.f32 0.0, %v5191
      %5193 = vmatmul.f32.gmra.mxu0 %v4732
      %v5194 = vpop.f32.mrf.mxu0
      %v5195 = vadd.f32 0.0, %v5194
      %5196 = vmatmul.f32.gmra.mxu0 %v4734
      %v5197 = vpop.f32.mrf.mxu0
      %v5198 = vadd.f32 0.0, %v5197
      %5199 = vmatmul.f32.gmra.mxu0 %v4736
      %v5200 = vpop.f32.mrf.mxu0
      %v5201 = vadd.f32 0.0, %v5200
      %5202 = vmatmul.f32.gmra.mxu0 %v4738
      %v5203 = vpop.f32.mrf.mxu0
      %v5204 = vadd.f32 0.0, %v5203
      %5205 = vmatmul.f32.gmra.mxu0 %v4740
      %v5206 = vpop.f32.mrf.mxu0
      %v5207 = vadd.f32 0.0, %v5206
      %5208 = vmatmul.f32.gmra.mxu0 %v4742
      %v5209 = vpop.f32.mrf.mxu0
      %v5210 = vadd.f32 0.0, %v5209
      %5211 = vmatmul.f32.gmra.mxu0 %v4744
      %v5212 = vpop.f32.mrf.mxu0
      %v5213 = vadd.f32 0.0, %v5212
      %5214 = vmatmul.f32.gmra.mxu0 %v4746
      %v5215 = vpop.f32.mrf.mxu0
      %v5216 = vadd.f32 0.0, %v5215
      %5217 = vmatmul.f32.gmra.mxu0 %v4748
      %v5218 = vpop.f32.mrf.mxu0
      %v5219 = vadd.f32 0.0, %v5218
      %5220 = vmatmul.f32.gmra.mxu0 %v4750
      %v5221 = vpop.f32.mrf.mxu0
      %v5222 = vadd.f32 0.0, %v5221
      %5223 = vmatmul.f32.gmra.mxu0 %v4752
      %v5224 = vpop.f32.mrf.mxu0
      %v5225 = vadd.f32 0.0, %v5224
      %5226 = vmatmul.f32.gmra.mxu0 %v4754
      %v5227 = vpop.f32.mrf.mxu0
      %v5228 = vadd.f32 0.0, %v5227
      %5229 = vmatmul.f32.gmra.mxu0 %v4756
      %v5230 = vpop.f32.mrf.mxu0
      %v5231 = vadd.f32 0.0, %v5230
      %5232 = vmatmul.f32.gmra.mxu0 %v4758
      %v5233 = vpop.f32.mrf.mxu0
      %v5234 = vadd.f32 0.0, %v5233
      %5235 = vmatmul.f32.gmra.mxu0 %v4760
      %v5236 = vpop.f32.mrf.mxu0
      %v5237 = vadd.f32 0.0, %v5236
      %5238 = vmatmul.f32.gmra.mxu0 %v4762
      %v5239 = vpop.f32.mrf.mxu0
      %v5240 = vadd.f32 0.0, %v5239
      %5241 = vmatmul.f32.gmra.mxu0 %v4764
      %v5242 = vpop.f32.mrf.mxu0
      %v5243 = vadd.f32 0.0, %v5242
      %5244 = vmatmul.f32.gmra.mxu0 %v4766
      %v5245 = vpop.f32.mrf.mxu0
      %v5246 = vadd.f32 0.0, %v5245
      %5247 = vmatmul.f32.gmra.mxu0 %v4768
      %v5248 = vpop.f32.mrf.mxu0
      %v5249 = vadd.f32 0.0, %v5248
      %5250 = vmatmul.f32.gmra.mxu0 %v4770
      %v5251 = vpop.f32.mrf.mxu0
      %v5252 = vadd.f32 0.0, %v5251
      %5253 = vdwg.mxu0
      %5254 = vmatpush.msra.mxu0 %v5124
      %5255 = vmatpush.msra.mxu0 %v5123
      %5256 = vmatpush.msra.mxu0 %v5122
      %5257 = vmatpush.msra.mxu0 %v5121
      %5258 = vmatpush.msra.mxu0 %v5120
      %5259 = vmatpush.msra.mxu0 %v5119
      %5260 = vmatpush.msra.mxu0 %v5118
      %5261 = vmatpush.msra.mxu0 %v5117
      %5262 = vmatpush.msra.mxu0 %v5116
      %5263 = vmatpush.msra.mxu0 %v5115
      %5264 = vmatpush.msra.mxu0 %v5114
      %5265 = vmatpush.msra.mxu0 %v5113
      %5266 = vmatpush.msra.mxu0 %v5112
      %5267 = vmatpush.msra.mxu0 %v5111
      %5268 = vmatpush.msra.mxu0 %v5110
      %5269 = vmatpush.msra.mxu0 %v5109
      %5270 = vmatmul.f32.gmra.mxu0 %v4838
      %v5271 = vpop.f32.mrf.mxu0
      %v5272 = vadd.f32 %v5159, %v5271
      %5273 = vmatmul.f32.gmra.mxu0 %v4841
      %v5274 = vpop.f32.mrf.mxu0
      %v5275 = vadd.f32 %v5162, %v5274
      %5276 = vmatmul.f32.gmra.mxu0 %v4844
      %v5277 = vpop.f32.mrf.mxu0
      %v5278 = vadd.f32 %v5165, %v5277
      %5279 = vmatmul.f32.gmra.mxu0 %v4847
      %v5280 = vpop.f32.mrf.mxu0
      %v5281 = vadd.f32 %v5168, %v5280
      %5282 = vmatmul.f32.gmra.mxu0 %v4850
      %v5283 = vpop.f32.mrf.mxu0
      %v5284 = vadd.f32 %v5171, %v5283
      %5285 = vmatmul.f32.gmra.mxu0 %v4853
      %v5286 = vpop.f32.mrf.mxu0
      %v5287 = vadd.f32 %v5174, %v5286
      %5288 = vmatmul.f32.gmra.mxu0 %v4856
      %v5289 = vpop.f32.mrf.mxu0
      %v5290 = vadd.f32 %v5177, %v5289
      %5291 = vmatmul.f32.gmra.mxu0 %v4859
      %v5292 = vpop.f32.mrf.mxu0
      %v5293 = vadd.f32 %v5180, %v5292
      %5294 = vmatmul.f32.gmra.mxu0 %v4862
      %v5295 = vpop.f32.mrf.mxu0
      %v5296 = vadd.f32 %v5183, %v5295
      %5297 = vmatmul.f32.gmra.mxu0 %v4865
      %v5298 = vpop.f32.mrf.mxu0
      %v5299 = vadd.f32 %v5186, %v5298
      %5300 = vmatmul.f32.gmra.mxu0 %v4868
      %v5301 = vpop.f32.mrf.mxu0
      %v5302 = vadd.f32 %v5189, %v5301
      %5303 = vmatmul.f32.gmra.mxu0 %v4871
      %v5304 = vpop.f32.mrf.mxu0
      %v5305 = vadd.f32 %v5192, %v5304
      %5306 = vmatmul.f32.gmra.mxu0 %v4874
      %v5307 = vpop.f32.mrf.mxu0
      %v5308 = vadd.f32 %v5195, %v5307
      %5309 = vmatmul.f32.gmra.mxu0 %v4877
      %v5310 = vpop.f32.mrf.mxu0
      %v5311 = vadd.f32 %v5198, %v5310
      %5312 = vmatmul.f32.gmra.mxu0 %v4880
      %v5313 = vpop.f32.mrf.mxu0
      %v5314 = vadd.f32 %v5201, %v5313
      %5315 = vmatmul.f32.gmra.mxu0 %v4883
      %v5316 = vpop.f32.mrf.mxu0
      %v5317 = vadd.f32 %v5204, %v5316
      %5318 = vmatmul.f32.gmra.mxu0 %v4886
      %v5319 = vpop.f32.mrf.mxu0
      %v5320 = vadd.f32 %v5207, %v5319
      %5321 = vmatmul.f32.gmra.mxu0 %v4889
      %v5322 = vpop.f32.mrf.mxu0
      %v5323 = vadd.f32 %v5210, %v5322
      %5324 = vmatmul.f32.gmra.mxu0 %v4892
      %v5325 = vpop.f32.mrf.mxu0
      %v5326 = vadd.f32 %v5213, %v5325
      %5327 = vmatmul.f32.gmra.mxu0 %v4895
      %v5328 = vpop.f32.mrf.mxu0
      %v5329 = vadd.f32 %v5216, %v5328
      %5330 = vmatmul.f32.gmra.mxu0 %v4898
      %v5331 = vpop.f32.mrf.mxu0
      %v5332 = vadd.f32 %v5219, %v5331
      %5333 = vmatmul.f32.gmra.mxu0 %v4901
      %v5334 = vpop.f32.mrf.mxu0
      %v5335 = vadd.f32 %v5222, %v5334
      %5336 = vmatmul.f32.gmra.mxu0 %v4904
      %v5337 = vpop.f32.mrf.mxu0
      %v5338 = vadd.f32 %v5225, %v5337
      %5339 = vmatmul.f32.gmra.mxu0 %v4907
      %v5340 = vpop.f32.mrf.mxu0
      %v5341 = vadd.f32 %v5228, %v5340
      %5342 = vmatmul.f32.gmra.mxu0 %v4910
      %v5343 = vpop.f32.mrf.mxu0
      %v5344 = vadd.f32 %v5231, %v5343
      %5345 = vmatmul.f32.gmra.mxu0 %v4913
      %v5346 = vpop.f32.mrf.mxu0
      %v5347 = vadd.f32 %v5234, %v5346
      %5348 = vmatmul.f32.gmra.mxu0 %v4916
      %v5349 = vpop.f32.mrf.mxu0
      %v5350 = vadd.f32 %v5237, %v5349
      %5351 = vmatmul.f32.gmra.mxu0 %v4919
      %v5352 = vpop.f32.mrf.mxu0
      %v5353 = vadd.f32 %v5240, %v5352
      %5354 = vmatmul.f32.gmra.mxu0 %v4922
      %v5355 = vpop.f32.mrf.mxu0
      %v5356 = vadd.f32 %v5243, %v5355
      %5357 = vmatmul.f32.gmra.mxu0 %v4925
      %v5358 = vpop.f32.mrf.mxu0
      %v5359 = vadd.f32 %v5246, %v5358
      %5360 = vmatmul.f32.gmra.mxu0 %v4928
      %v5361 = vpop.f32.mrf.mxu0
      %v5362 = vadd.f32 %v5249, %v5361
      %5363 = vmatmul.f32.gmra.mxu0 %v4931
      %v5364 = vpop.f32.mrf.mxu0
      %v5365 = vadd.f32 %v5252, %v5364
      %5366 = vdwg.mxu0
      %5367 = vmatpush.msra.mxu0 %v5140
      %5368 = vmatpush.msra.mxu0 %v5139
      %5369 = vmatpush.msra.mxu0 %v5138
      %5370 = vmatpush.msra.mxu0 %v5137
      %5371 = vmatpush.msra.mxu0 %v5136
      %5372 = vmatpush.msra.mxu0 %v5135
      %5373 = vmatpush.msra.mxu0 %v5134
      %5374 = vmatpush.msra.mxu0 %v5133
      %5375 = vmatpush.msra.mxu0 %v5132
      %5376 = vmatpush.msra.mxu0 %v5131
      %5377 = vmatpush.msra.mxu0 %v5130
      %5378 = vmatpush.msra.mxu0 %v5129
      %5379 = vmatpush.msra.mxu0 %v5128
      %5380 = vmatpush.msra.mxu0 %v5127
      %5381 = vmatpush.msra.mxu0 %v5126
      %5382 = vmatpush.msra.mxu0 %v5125
      %5383 = vmatmul.f32.gmra.mxu0 %v4966
      %v5384 = vpop.f32.mrf.mxu0
      %v5385 = vadd.f32 %v5272, %v5384
      %5386 = vmatmul.f32.gmra.mxu0 %v4969
      %v5387 = vpop.f32.mrf.mxu0
      %v5388 = vadd.f32 %v5275, %v5387
      %5389 = vmatmul.f32.gmra.mxu0 %v4972
      %v5390 = vpop.f32.mrf.mxu0
      %v5391 = vadd.f32 %v5278, %v5390
      %5392 = vmatmul.f32.gmra.mxu0 %v4975
      %v5393 = vpop.f32.mrf.mxu0
      %v5394 = vadd.f32 %v5281, %v5393
      %5395 = vmatmul.f32.gmra.mxu0 %v4978
      %v5396 = vpop.f32.mrf.mxu0
      %v5397 = vadd.f32 %v5284, %v5396
      %5398 = vmatmul.f32.gmra.mxu0 %v4981
      %v5399 = vpop.f32.mrf.mxu0
      %v5400 = vadd.f32 %v5287, %v5399
      %5401 = vmatmul.f32.gmra.mxu0 %v4984
      %v5402 = vpop.f32.mrf.mxu0
      %v5403 = vadd.f32 %v5290, %v5402
      %5404 = vmatmul.f32.gmra.mxu0 %v4987
      %v5405 = vpop.f32.mrf.mxu0
      %v5406 = vadd.f32 %v5293, %v5405
      %5407 = vmatmul.f32.gmra.mxu0 %v4990
      %v5408 = vpop.f32.mrf.mxu0
      %v5409 = vadd.f32 %v5296, %v5408
      %5410 = vmatmul.f32.gmra.mxu0 %v4993
      %v5411 = vpop.f32.mrf.mxu0
      %v5412 = vadd.f32 %v5299, %v5411
      %5413 = vmatmul.f32.gmra.mxu0 %v4996
      %v5414 = vpop.f32.mrf.mxu0
      %v5415 = vadd.f32 %v5302, %v5414
      %5416 = vmatmul.f32.gmra.mxu0 %v4999
      %v5417 = vpop.f32.mrf.mxu0
      %v5418 = vadd.f32 %v5305, %v5417
      %5419 = vmatmul.f32.gmra.mxu0 %v5002
      %v5420 = vpop.f32.mrf.mxu0
      %v5421 = vadd.f32 %v5308, %v5420
      %5422 = vmatmul.f32.gmra.mxu0 %v5005
      %v5423 = vpop.f32.mrf.mxu0
      %v5424 = vadd.f32 %v5311, %v5423
      %5425 = vmatmul.f32.gmra.mxu0 %v5008
      %v5426 = vpop.f32.mrf.mxu0
      %v5427 = vadd.f32 %v5314, %v5426
      %5428 = vmatmul.f32.gmra.mxu0 %v5011
      %v5429 = vpop.f32.mrf.mxu0
      %v5430 = vadd.f32 %v5317, %v5429
      %5431 = vmatmul.f32.gmra.mxu0 %v5014
      %v5432 = vpop.f32.mrf.mxu0
      %v5433 = vadd.f32 %v5320, %v5432
      %5434 = vmatmul.f32.gmra.mxu0 %v5017
      %v5435 = vpop.f32.mrf.mxu0
      %v5436 = vadd.f32 %v5323, %v5435
      %5437 = vmatmul.f32.gmra.mxu0 %v5020
      %v5438 = vpop.f32.mrf.mxu0
      %v5439 = vadd.f32 %v5326, %v5438
      %5440 = vmatmul.f32.gmra.mxu0 %v5023
      %v5441 = vpop.f32.mrf.mxu0
      %v5442 = vadd.f32 %v5329, %v5441
      %5443 = vmatmul.f32.gmra.mxu0 %v5026
      %v5444 = vpop.f32.mrf.mxu0
      %v5445 = vadd.f32 %v5332, %v5444
      %5446 = vmatmul.f32.gmra.mxu0 %v5029
      %v5447 = vpop.f32.mrf.mxu0
      %v5448 = vadd.f32 %v5335, %v5447
      %5449 = vmatmul.f32.gmra.mxu0 %v5032
      %v5450 = vpop.f32.mrf.mxu0
      %v5451 = vadd.f32 %v5338, %v5450
      %5452 = vmatmul.f32.gmra.mxu0 %v5035
      %v5453 = vpop.f32.mrf.mxu0
      %v5454 = vadd.f32 %v5341, %v5453
      %5455 = vmatmul.f32.gmra.mxu0 %v5038
      %v5456 = vpop.f32.mrf.mxu0
      %v5457 = vadd.f32 %v5344, %v5456
      %5458 = vmatmul.f32.gmra.mxu0 %v5041
      %v5459 = vpop.f32.mrf.mxu0
      %v5460 = vadd.f32 %v5347, %v5459
      %5461 = vmatmul.f32.gmra.mxu0 %v5044
      %v5462 = vpop.f32.mrf.mxu0
      %v5463 = vadd.f32 %v5350, %v5462
      %5464 = vmatmul.f32.gmra.mxu0 %v5047
      %v5465 = vpop.f32.mrf.mxu0
      %v5466 = vadd.f32 %v5353, %v5465
      %5467 = vmatmul.f32.gmra.mxu0 %v5050
      %v5468 = vpop.f32.mrf.mxu0
      %v5469 = vadd.f32 %v5356, %v5468
      %5470 = vmatmul.f32.gmra.mxu0 %v5053
      %v5471 = vpop.f32.mrf.mxu0
      %v5472 = vadd.f32 %v5359, %v5471
      %5473 = vmatmul.f32.gmra.mxu0 %v5056
      %v5474 = vpop.f32.mrf.mxu0
      %v5475 = vadd.f32 %v5362, %v5474
      %5476 = vmatmul.f32.gmra.mxu0 %v5059
      %v5477 = vpop.f32.mrf.mxu0
      %v5478 = vadd.f32 %v5365, %v5477
      %5479 = vdwg.mxu0
      %v5480 = vld [vmem:[#allocation3] sm:$0xff]
      %v5481 = vld [vmem:[#allocation3 + $0x8] sm:$0xff]
      %v5482 = vld [vmem:[#allocation3 + $0x10] sm:$0xff]
      %v5483 = vld [vmem:[#allocation3 + $0x18] sm:$0xff]
      %v5484 = vld [vmem:[#allocation3 + $0x20] sm:$0xff]
      %v5485 = vld [vmem:[#allocation3 + $0x28] sm:$0xff]
      %v5486 = vld [vmem:[#allocation3 + $0x30] sm:$0xff]
      %v5487 = vld [vmem:[#allocation3 + $0x38] sm:$0xff]
      %v5488 = vld [vmem:[#allocation3 + $0x40] sm:$0xff]
      %v5489 = vld [vmem:[#allocation3 + $0x48] sm:$0xff]
      %v5490 = vld [vmem:[#allocation3 + $0x50] sm:$0xff]
      %v5491 = vld [vmem:[#allocation3 + $0x58] sm:$0xff]
      %v5492 = vld [vmem:[#allocation3 + $0x60] sm:$0xff]
      %v5493 = vld [vmem:[#allocation3 + $0x68] sm:$0xff]
      %v5494 = vld [vmem:[#allocation3 + $0x70] sm:$0xff]
      %v5495 = vld [vmem:[#allocation3 + $0x78] sm:$0xff]
      %v5496 = vld [vmem:[#allocation3 + $0x80] sm:$0xff]
      %v5497 = vld [vmem:[#allocation3 + $0x88] sm:$0xff]
      %v5498 = vld [vmem:[#allocation3 + $0x90] sm:$0xff]
      %v5499 = vld [vmem:[#allocation3 + $0x98] sm:$0xff]
      %v5500 = vld [vmem:[#allocation3 + $0xa0] sm:$0xff]
      %v5501 = vld [vmem:[#allocation3 + $0xa8] sm:$0xff]
      %v5502 = vld [vmem:[#allocation3 + $0xb0] sm:$0xff]
      %v5503 = vld [vmem:[#allocation3 + $0xb8] sm:$0xff]
      %v5504 = vld [vmem:[#allocation3 + $0xc0] sm:$0xff]
      %v5505 = vld [vmem:[#allocation3 + $0xc8] sm:$0xff]
      %v5506 = vld [vmem:[#allocation3 + $0xd0] sm:$0xff]
      %v5507 = vld [vmem:[#allocation3 + $0xd8] sm:$0xff]
      %v5508 = vld [vmem:[#allocation3 + $0xe0] sm:$0xff]
      %v5509 = vld [vmem:[#allocation3 + $0xe8] sm:$0xff]
      %v5510 = vld [vmem:[#allocation3 + $0xf0] sm:$0xff]
      %v5511 = vld [vmem:[#allocation3 + $0xf8] sm:$0xff]
      %v5512 = vadd.f32 %v5480, %v5385
      %v5513 = vadd.f32 %v5481, %v5388
      %v5514 = vadd.f32 %v5482, %v5391
      %v5515 = vadd.f32 %v5483, %v5394
      %v5516 = vadd.f32 %v5484, %v5397
      %v5517 = vadd.f32 %v5485, %v5400
      %v5518 = vadd.f32 %v5486, %v5403
      %v5519 = vadd.f32 %v5487, %v5406
      %v5520 = vadd.f32 %v5488, %v5409
      %v5521 = vadd.f32 %v5489, %v5412
      %v5522 = vadd.f32 %v5490, %v5415
      %v5523 = vadd.f32 %v5491, %v5418
      %v5524 = vadd.f32 %v5492, %v5421
      %v5525 = vadd.f32 %v5493, %v5424
      %v5526 = vadd.f32 %v5494, %v5427
      %v5527 = vadd.f32 %v5495, %v5430
      %v5528 = vadd.f32 %v5496, %v5433
      %v5529 = vadd.f32 %v5497, %v5436
      %v5530 = vadd.f32 %v5498, %v5439
      %v5531 = vadd.f32 %v5499, %v5442
      %v5532 = vadd.f32 %v5500, %v5445
      %v5533 = vadd.f32 %v5501, %v5448
      %v5534 = vadd.f32 %v5502, %v5451
      %v5535 = vadd.f32 %v5503, %v5454
      %v5536 = vadd.f32 %v5504, %v5457
      %v5537 = vadd.f32 %v5505, %v5460
      %v5538 = vadd.f32 %v5506, %v5463
      %v5539 = vadd.f32 %v5507, %v5466
      %v5540 = vadd.f32 %v5508, %v5469
      %v5541 = vadd.f32 %v5509, %v5472
      %v5542 = vadd.f32 %v5510, %v5475
      %v5543 = vadd.f32 %v5511, %v5478
      %5544 = vst [vmem:[#allocation3] sm:$0xff] %v5512
      %5545 = vst [vmem:[#allocation3 + $0x8] sm:$0xff] %v5513
      %5546 = vst [vmem:[#allocation3 + $0x10] sm:$0xff] %v5514
      %5547 = vst [vmem:[#allocation3 + $0x18] sm:$0xff] %v5515
      %5548 = vst [vmem:[#allocation3 + $0x20] sm:$0xff] %v5516
      %5549 = vst [vmem:[#allocation3 + $0x28] sm:$0xff] %v5517
      %5550 = vst [vmem:[#allocation3 + $0x30] sm:$0xff] %v5518
      %5551 = vst [vmem:[#allocation3 + $0x38] sm:$0xff] %v5519
      %5552 = vst [vmem:[#allocation3 + $0x40] sm:$0xff] %v5520
      %5553 = vst [vmem:[#allocation3 + $0x48] sm:$0xff] %v5521
      %5554 = vst [vmem:[#allocation3 + $0x50] sm:$0xff] %v5522
      %5555 = vst [vmem:[#allocation3 + $0x58] sm:$0xff] %v5523
      %5556 = vst [vmem:[#allocation3 + $0x60] sm:$0xff] %v5524
      %5557 = vst [vmem:[#allocation3 + $0x68] sm:$0xff] %v5525
      %5558 = vst [vmem:[#allocation3 + $0x70] sm:$0xff] %v5526
      %5559 = vst [vmem:[#allocation3 + $0x78] sm:$0xff] %v5527
      %5560 = vst [vmem:[#allocation3 + $0x80] sm:$0xff] %v5528
      %5561 = vst [vmem:[#allocation3 + $0x88] sm:$0xff] %v5529
      %5562 = vst [vmem:[#allocation3 + $0x90] sm:$0xff] %v5530
      %5563 = vst [vmem:[#allocation3 + $0x98] sm:$0xff] %v5531
      %5564 = vst [vmem:[#allocation3 + $0xa0] sm:$0xff] %v5532
      %5565 = vst [vmem:[#allocation3 + $0xa8] sm:$0xff] %v5533
      %5566 = vst [vmem:[#allocation3 + $0xb0] sm:$0xff] %v5534
      %5567 = vst [vmem:[#allocation3 + $0xb8] sm:$0xff] %v5535
      %5568 = vst [vmem:[#allocation3 + $0xc0] sm:$0xff] %v5536
      %5569 = vst [vmem:[#allocation3 + $0xc8] sm:$0xff] %v5537
      %5570 = vst [vmem:[#allocation3 + $0xd0] sm:$0xff] %v5538
      %5571 = vst [vmem:[#allocation3 + $0xd8] sm:$0xff] %v5539
      %5572 = vst [vmem:[#allocation3 + $0xe0] sm:$0xff] %v5540
      %5573 = vst [vmem:[#allocation3 + $0xe8] sm:$0xff] %v5541
      %5574 = vst [vmem:[#allocation3 + $0xf0] sm:$0xff] %v5542
      %5575 = vst [vmem:[#allocation3 + $0xf8] sm:$0xff] %v5543
      %s5576 = scalar_lea.vmem [#allocation2], 320
      %v5577 = vld [vmem:[%s5576] sm:$0xff]
      %v5578 = vld [vmem:[%s5576 + $0x8] sm:$0x3]
      %v5579 = vld [vmem:[%s5576 + $0x10] sm:$0xff]
      %v5580 = vld [vmem:[%s5576 + $0x18] sm:$0x3]
      %v5581 = vld [vmem:[%s5576 + $0x20] sm:$0xff]
      %v5582 = vld [vmem:[%s5576 + $0x28] sm:$0x3]
      %v5583 = vld [vmem:[%s5576 + $0x30] sm:$0xff]
      %v5584 = vld [vmem:[%s5576 + $0x38] sm:$0x3]
      %v5585 = vld [vmem:[%s5576 + $0x40] sm:$0xff]
      %v5586 = vld [vmem:[%s5576 + $0x48] sm:$0x3]
      %v5587 = vld [vmem:[%s5576 + $0x50] sm:$0xff]
      %v5588 = vld [vmem:[%s5576 + $0x58] sm:$0x3]
      %v5589 = vld [vmem:[%s5576 + $0x60] sm:$0xff]
      %v5590 = vld [vmem:[%s5576 + $0x68] sm:$0x3]
      %v5591 = vld [vmem:[%s5576 + $0x70] sm:$0xff]
      %v5592 = vld [vmem:[%s5576 + $0x78] sm:$0x3]
      %v5593 = vld [vmem:[%s5576 + $0xa0] sm:$0xff]
      %v5594 = vld [vmem:[%s5576 + $0xa8] sm:$0x3]
      %v5595 = vld [vmem:[%s5576 + $0xb0] sm:$0xff]
      %v5596 = vld [vmem:[%s5576 + $0xb8] sm:$0x3]
      %v5597 = vld [vmem:[%s5576 + $0xc0] sm:$0xff]
      %v5598 = vld [vmem:[%s5576 + $0xc8] sm:$0x3]
      %v5599 = vld [vmem:[%s5576 + $0xd0] sm:$0xff]
      %v5600 = vld [vmem:[%s5576 + $0xd8] sm:$0x3]
      %v5601 = vld [vmem:[%s5576 + $0xe0] sm:$0xff]
      %v5602 = vld [vmem:[%s5576 + $0xe8] sm:$0x3]
      %v5603 = vld [vmem:[%s5576 + $0xf0] sm:$0xff]
      %v5604 = vld [vmem:[%s5576 + $0xf8] sm:$0x3]
      %v5605 = vld [vmem:[%s5576 + $0x100] sm:$0xff]
      %v5606 = vld [vmem:[%s5576 + $0x108] sm:$0x3]
      %v5607 = vld [vmem:[%s5576 + $0x110] sm:$0xff]
      %v5608 = vld [vmem:[%s5576 + $0x118] sm:$0x3]
      %v5609 = vld [vmem:[%s5576 + $0x140] sm:$0xff]
      %v5610 = vld [vmem:[%s5576 + $0x148] sm:$0x3]
      %v5611 = vld [vmem:[%s5576 + $0x150] sm:$0xff]
      %v5612 = vld [vmem:[%s5576 + $0x158] sm:$0x3]
      %v5613 = vld [vmem:[%s5576 + $0x160] sm:$0xff]
      %v5614 = vld [vmem:[%s5576 + $0x168] sm:$0x3]
      %v5615 = vld [vmem:[%s5576 + $0x170] sm:$0xff]
      %v5616 = vld [vmem:[%s5576 + $0x178] sm:$0x3]
      %v5617 = vld [vmem:[%s5576 + $0x180] sm:$0xff]
      %v5618 = vld [vmem:[%s5576 + $0x188] sm:$0x3]
      %v5619 = vld [vmem:[%s5576 + $0x190] sm:$0xff]
      %v5620 = vld [vmem:[%s5576 + $0x198] sm:$0x3]
      %v5621 = vld [vmem:[%s5576 + $0x1a0] sm:$0xff]
      %v5622 = vld [vmem:[%s5576 + $0x1a8] sm:$0x3]
      %v5623 = vld [vmem:[%s5576 + $0x1b0] sm:$0xff]
      %v5624 = vld [vmem:[%s5576 + $0x1b8] sm:$0x3]
      %v5625 = vld [vmem:[%s5576 + $0x1e0] sm:$0xff]
      %v5626 = vld [vmem:[%s5576 + $0x1e8] sm:$0x3]
      %v5627 = vld [vmem:[%s5576 + $0x1f0] sm:$0xff]
      %v5628 = vld [vmem:[%s5576 + $0x1f8] sm:$0x3]
      %v5629 = vld [vmem:[%s5576 + $0x200] sm:$0xff]
      %v5630 = vld [vmem:[%s5576 + $0x208] sm:$0x3]
      %v5631 = vld [vmem:[%s5576 + $0x210] sm:$0xff]
      %v5632 = vld [vmem:[%s5576 + $0x218] sm:$0x3]
      %v5633 = vld [vmem:[%s5576 + $0x220] sm:$0xff]
      %v5634 = vld [vmem:[%s5576 + $0x228] sm:$0x3]
      %v5635 = vld [vmem:[%s5576 + $0x230] sm:$0xff]
      %v5636 = vld [vmem:[%s5576 + $0x238] sm:$0x3]
      %v5637 = vld [vmem:[%s5576 + $0x240] sm:$0xff]
      %v5638 = vld [vmem:[%s5576 + $0x248] sm:$0x3]
      %v5639 = vld [vmem:[%s5576 + $0x250] sm:$0xff]
      %v5640 = vld [vmem:[%s5576 + $0x258] sm:$0x3]
      %v5705 = vrot.slane %v5577, 1
      %v5706 = vrot.slane %v5578, 1
      %v5707 = vsel %vm554, %v5705, %v5706
      %v5708 = vrot.slane %v5579, 1
      %v5709 = vrot.slane %v5580, 1
      %v5710 = vsel %vm554, %v5708, %v5709
      %v5711 = vrot.slane %v5581, 1
      %v5712 = vrot.slane %v5582, 1
      %v5713 = vsel %vm554, %v5711, %v5712
      %v5714 = vrot.slane %v5583, 1
      %v5715 = vrot.slane %v5584, 1
      %v5716 = vsel %vm554, %v5714, %v5715
      %v5717 = vrot.slane %v5585, 1
      %v5718 = vrot.slane %v5586, 1
      %v5719 = vsel %vm554, %v5717, %v5718
      %v5720 = vrot.slane %v5587, 1
      %v5721 = vrot.slane %v5588, 1
      %v5722 = vsel %vm554, %v5720, %v5721
      %v5723 = vrot.slane %v5589, 1
      %v5724 = vrot.slane %v5590, 1
      %v5725 = vsel %vm554, %v5723, %v5724
      %v5726 = vrot.slane %v5591, 1
      %v5727 = vrot.slane %v5592, 1
      %v5728 = vsel %vm554, %v5726, %v5727
      %v5729 = vrot.slane %v5593, 1
      %v5730 = vrot.slane %v5594, 1
      %v5731 = vsel %vm554, %v5729, %v5730
      %v5732 = vrot.slane %v5595, 1
      %v5733 = vrot.slane %v5596, 1
      %v5734 = vsel %vm554, %v5732, %v5733
      %v5735 = vrot.slane %v5597, 1
      %v5736 = vrot.slane %v5598, 1
      %v5737 = vsel %vm554, %v5735, %v5736
      %v5738 = vrot.slane %v5599, 1
      %v5739 = vrot.slane %v5600, 1
      %v5740 = vsel %vm554, %v5738, %v5739
      %v5741 = vrot.slane %v5601, 1
      %v5742 = vrot.slane %v5602, 1
      %v5743 = vsel %vm554, %v5741, %v5742
      %v5744 = vrot.slane %v5603, 1
      %v5745 = vrot.slane %v5604, 1
      %v5746 = vsel %vm554, %v5744, %v5745
      %v5747 = vrot.slane %v5605, 1
      %v5748 = vrot.slane %v5606, 1
      %v5749 = vsel %vm554, %v5747, %v5748
      %v5750 = vrot.slane %v5607, 1
      %v5751 = vrot.slane %v5608, 1
      %v5752 = vsel %vm554, %v5750, %v5751
      %v5753 = vrot.slane %v5609, 1
      %v5754 = vrot.slane %v5610, 1
      %v5755 = vsel %vm554, %v5753, %v5754
      %v5756 = vrot.slane %v5611, 1
      %v5757 = vrot.slane %v5612, 1
      %v5758 = vsel %vm554, %v5756, %v5757
      %v5759 = vrot.slane %v5613, 1
      %v5760 = vrot.slane %v5614, 1
      %v5761 = vsel %vm554, %v5759, %v5760
      %v5762 = vrot.slane %v5615, 1
      %v5763 = vrot.slane %v5616, 1
      %v5764 = vsel %vm554, %v5762, %v5763
      %v5765 = vrot.slane %v5617, 1
      %v5766 = vrot.slane %v5618, 1
      %v5767 = vsel %vm554, %v5765, %v5766
      %v5768 = vrot.slane %v5619, 1
      %v5769 = vrot.slane %v5620, 1
      %v5770 = vsel %vm554, %v5768, %v5769
      %v5771 = vrot.slane %v5621, 1
      %v5772 = vrot.slane %v5622, 1
      %v5773 = vsel %vm554, %v5771, %v5772
      %v5774 = vrot.slane %v5623, 1
      %v5775 = vrot.slane %v5624, 1
      %v5776 = vsel %vm554, %v5774, %v5775
      %v5777 = vrot.slane %v5625, 1
      %v5778 = vrot.slane %v5626, 1
      %v5779 = vsel %vm554, %v5777, %v5778
      %v5780 = vrot.slane %v5627, 1
      %v5781 = vrot.slane %v5628, 1
      %v5782 = vsel %vm554, %v5780, %v5781
      %v5783 = vrot.slane %v5629, 1
      %v5784 = vrot.slane %v5630, 1
      %v5785 = vsel %vm554, %v5783, %v5784
      %v5786 = vrot.slane %v5631, 1
      %v5787 = vrot.slane %v5632, 1
      %v5788 = vsel %vm554, %v5786, %v5787
      %v5789 = vrot.slane %v5633, 1
      %v5790 = vrot.slane %v5634, 1
      %v5791 = vsel %vm554, %v5789, %v5790
      %v5792 = vrot.slane %v5635, 1
      %v5793 = vrot.slane %v5636, 1
      %v5794 = vsel %vm554, %v5792, %v5793
      %v5795 = vrot.slane %v5637, 1
      %v5796 = vrot.slane %v5638, 1
      %v5797 = vsel %vm554, %v5795, %v5796
      %v5798 = vrot.slane %v5639, 1
      %v5799 = vrot.slane %v5640, 1
      %v5800 = vsel %vm554, %v5798, %v5799
      %v5833 = vrot.slane %v5577, 2
      %v5834 = vrot.slane %v5578, 2
      %v5835 = vsel %vm683, %v5833, %v5834
      %v5836 = vrot.slane %v5579, 2
      %v5837 = vrot.slane %v5580, 2
      %v5838 = vsel %vm683, %v5836, %v5837
      %v5839 = vrot.slane %v5581, 2
      %v5840 = vrot.slane %v5582, 2
      %v5841 = vsel %vm683, %v5839, %v5840
      %v5842 = vrot.slane %v5583, 2
      %v5843 = vrot.slane %v5584, 2
      %v5844 = vsel %vm683, %v5842, %v5843
      %v5845 = vrot.slane %v5585, 2
      %v5846 = vrot.slane %v5586, 2
      %v5847 = vsel %vm683, %v5845, %v5846
      %v5848 = vrot.slane %v5587, 2
      %v5849 = vrot.slane %v5588, 2
      %v5850 = vsel %vm683, %v5848, %v5849
      %v5851 = vrot.slane %v5589, 2
      %v5852 = vrot.slane %v5590, 2
      %v5853 = vsel %vm683, %v5851, %v5852
      %v5854 = vrot.slane %v5591, 2
      %v5855 = vrot.slane %v5592, 2
      %v5856 = vsel %vm683, %v5854, %v5855
      %v5857 = vrot.slane %v5593, 2
      %v5858 = vrot.slane %v5594, 2
      %v5859 = vsel %vm683, %v5857, %v5858
      %v5860 = vrot.slane %v5595, 2
      %v5861 = vrot.slane %v5596, 2
      %v5862 = vsel %vm683, %v5860, %v5861
      %v5863 = vrot.slane %v5597, 2
      %v5864 = vrot.slane %v5598, 2
      %v5865 = vsel %vm683, %v5863, %v5864
      %v5866 = vrot.slane %v5599, 2
      %v5867 = vrot.slane %v5600, 2
      %v5868 = vsel %vm683, %v5866, %v5867
      %v5869 = vrot.slane %v5601, 2
      %v5870 = vrot.slane %v5602, 2
      %v5871 = vsel %vm683, %v5869, %v5870
      %v5872 = vrot.slane %v5603, 2
      %v5873 = vrot.slane %v5604, 2
      %v5874 = vsel %vm683, %v5872, %v5873
      %v5875 = vrot.slane %v5605, 2
      %v5876 = vrot.slane %v5606, 2
      %v5877 = vsel %vm683, %v5875, %v5876
      %v5878 = vrot.slane %v5607, 2
      %v5879 = vrot.slane %v5608, 2
      %v5880 = vsel %vm683, %v5878, %v5879
      %v5881 = vrot.slane %v5609, 2
      %v5882 = vrot.slane %v5610, 2
      %v5883 = vsel %vm683, %v5881, %v5882
      %v5884 = vrot.slane %v5611, 2
      %v5885 = vrot.slane %v5612, 2
      %v5886 = vsel %vm683, %v5884, %v5885
      %v5887 = vrot.slane %v5613, 2
      %v5888 = vrot.slane %v5614, 2
      %v5889 = vsel %vm683, %v5887, %v5888
      %v5890 = vrot.slane %v5615, 2
      %v5891 = vrot.slane %v5616, 2
      %v5892 = vsel %vm683, %v5890, %v5891
      %v5893 = vrot.slane %v5617, 2
      %v5894 = vrot.slane %v5618, 2
      %v5895 = vsel %vm683, %v5893, %v5894
      %v5896 = vrot.slane %v5619, 2
      %v5897 = vrot.slane %v5620, 2
      %v5898 = vsel %vm683, %v5896, %v5897
      %v5899 = vrot.slane %v5621, 2
      %v5900 = vrot.slane %v5622, 2
      %v5901 = vsel %vm683, %v5899, %v5900
      %v5902 = vrot.slane %v5623, 2
      %v5903 = vrot.slane %v5624, 2
      %v5904 = vsel %vm683, %v5902, %v5903
      %v5905 = vrot.slane %v5625, 2
      %v5906 = vrot.slane %v5626, 2
      %v5907 = vsel %vm683, %v5905, %v5906
      %v5908 = vrot.slane %v5627, 2
      %v5909 = vrot.slane %v5628, 2
      %v5910 = vsel %vm683, %v5908, %v5909
      %v5911 = vrot.slane %v5629, 2
      %v5912 = vrot.slane %v5630, 2
      %v5913 = vsel %vm683, %v5911, %v5912
      %v5914 = vrot.slane %v5631, 2
      %v5915 = vrot.slane %v5632, 2
      %v5916 = vsel %vm683, %v5914, %v5915
      %v5917 = vrot.slane %v5633, 2
      %v5918 = vrot.slane %v5634, 2
      %v5919 = vsel %vm683, %v5917, %v5918
      %v5920 = vrot.slane %v5635, 2
      %v5921 = vrot.slane %v5636, 2
      %v5922 = vsel %vm683, %v5920, %v5921
      %v5923 = vrot.slane %v5637, 2
      %v5924 = vrot.slane %v5638, 2
      %v5925 = vsel %vm683, %v5923, %v5924
      %v5926 = vrot.slane %v5639, 2
      %v5927 = vrot.slane %v5640, 2
      %v5928 = vsel %vm683, %v5926, %v5927
      %s5961 = scalar_lea.vmem %s1, 2304
      %v5962 = vld [vmem:[%s5961] sm:$0xff]
      %v5963 = vld [vmem:[%s5961 + $0x8] sm:$0xff]
      %v5964 = vld [vmem:[%s5961 + $0x10] sm:$0xff]
      %v5965 = vld [vmem:[%s5961 + $0x18] sm:$0xff]
      %v5966 = vld [vmem:[%s5961 + $0x20] sm:$0xff]
      %v5967 = vld [vmem:[%s5961 + $0x28] sm:$0xff]
      %v5968 = vld [vmem:[%s5961 + $0x30] sm:$0xff]
      %v5969 = vld [vmem:[%s5961 + $0x38] sm:$0xff]
      %v5970 = vld [vmem:[%s5961 + $0x40] sm:$0xff]
      %v5971 = vld [vmem:[%s5961 + $0x48] sm:$0xff]
      %v5972 = vld [vmem:[%s5961 + $0x50] sm:$0xff]
      %v5973 = vld [vmem:[%s5961 + $0x58] sm:$0xff]
      %v5974 = vld [vmem:[%s5961 + $0x60] sm:$0xff]
      %v5975 = vld [vmem:[%s5961 + $0x68] sm:$0xff]
      %v5976 = vld [vmem:[%s5961 + $0x70] sm:$0xff]
      %v5977 = vld [vmem:[%s5961 + $0x78] sm:$0xff]
      %v5978 = vld [vmem:[%s5961 + $0x80] sm:$0xff]
      %v5979 = vld [vmem:[%s5961 + $0x88] sm:$0xff]
      %v5980 = vld [vmem:[%s5961 + $0x90] sm:$0xff]
      %v5981 = vld [vmem:[%s5961 + $0x98] sm:$0xff]
      %v5982 = vld [vmem:[%s5961 + $0xa0] sm:$0xff]
      %v5983 = vld [vmem:[%s5961 + $0xa8] sm:$0xff]
      %v5984 = vld [vmem:[%s5961 + $0xb0] sm:$0xff]
      %v5985 = vld [vmem:[%s5961 + $0xb8] sm:$0xff]
      %v5986 = vld [vmem:[%s5961 + $0xc0] sm:$0xff]
      %v5987 = vld [vmem:[%s5961 + $0xc8] sm:$0xff]
      %v5988 = vld [vmem:[%s5961 + $0xd0] sm:$0xff]
      %v5989 = vld [vmem:[%s5961 + $0xd8] sm:$0xff]
      %v5990 = vld [vmem:[%s5961 + $0xe0] sm:$0xff]
      %v5991 = vld [vmem:[%s5961 + $0xe8] sm:$0xff]
      %v5992 = vld [vmem:[%s5961 + $0xf0] sm:$0xff]
      %v5993 = vld [vmem:[%s5961 + $0xf8] sm:$0xff]
      %v5994 = vld [vmem:[%s5961 + $0x100] sm:$0xff]
      %v5995 = vld [vmem:[%s5961 + $0x108] sm:$0xff]
      %v5996 = vld [vmem:[%s5961 + $0x110] sm:$0xff]
      %v5997 = vld [vmem:[%s5961 + $0x118] sm:$0xff]
      %v5998 = vld [vmem:[%s5961 + $0x120] sm:$0xff]
      %v5999 = vld [vmem:[%s5961 + $0x128] sm:$0xff]
      %v6000 = vld [vmem:[%s5961 + $0x130] sm:$0xff]
      %v6001 = vld [vmem:[%s5961 + $0x138] sm:$0xff]
      %v6002 = vld [vmem:[%s5961 + $0x140] sm:$0xff]
      %v6003 = vld [vmem:[%s5961 + $0x148] sm:$0xff]
      %v6004 = vld [vmem:[%s5961 + $0x150] sm:$0xff]
      %v6005 = vld [vmem:[%s5961 + $0x158] sm:$0xff]
      %v6006 = vld [vmem:[%s5961 + $0x160] sm:$0xff]
      %v6007 = vld [vmem:[%s5961 + $0x168] sm:$0xff]
      %v6008 = vld [vmem:[%s5961 + $0x170] sm:$0xff]
      %v6009 = vld [vmem:[%s5961 + $0x178] sm:$0xff]
      %6010 = vmatpush.msra.mxu0 %v5977
      %6011 = vmatpush.msra.mxu0 %v5976
      %6012 = vmatpush.msra.mxu0 %v5975
      %6013 = vmatpush.msra.mxu0 %v5974
      %6014 = vmatpush.msra.mxu0 %v5973
      %6015 = vmatpush.msra.mxu0 %v5972
      %6016 = vmatpush.msra.mxu0 %v5971
      %6017 = vmatpush.msra.mxu0 %v5970
      %6018 = vmatpush.msra.mxu0 %v5969
      %6019 = vmatpush.msra.mxu0 %v5968
      %6020 = vmatpush.msra.mxu0 %v5967
      %6021 = vmatpush.msra.mxu0 %v5966
      %6022 = vmatpush.msra.mxu0 %v5965
      %6023 = vmatpush.msra.mxu0 %v5964
      %6024 = vmatpush.msra.mxu0 %v5963
      %6025 = vmatpush.msra.mxu0 %v5962
      %6026 = vmatmul.f32.gmra.mxu0 %v5577
      %v6027 = vpop.f32.mrf.mxu0
      %v6028 = vadd.f32 0.0, %v6027
      %6029 = vmatmul.f32.gmra.mxu0 %v5579
      %v6030 = vpop.f32.mrf.mxu0
      %v6031 = vadd.f32 0.0, %v6030
      %6032 = vmatmul.f32.gmra.mxu0 %v5581
      %v6033 = vpop.f32.mrf.mxu0
      %v6034 = vadd.f32 0.0, %v6033
      %6035 = vmatmul.f32.gmra.mxu0 %v5583
      %v6036 = vpop.f32.mrf.mxu0
      %v6037 = vadd.f32 0.0, %v6036
      %6038 = vmatmul.f32.gmra.mxu0 %v5585
      %v6039 = vpop.f32.mrf.mxu0
      %v6040 = vadd.f32 0.0, %v6039
      %6041 = vmatmul.f32.gmra.mxu0 %v5587
      %v6042 = vpop.f32.mrf.mxu0
      %v6043 = vadd.f32 0.0, %v6042
      %6044 = vmatmul.f32.gmra.mxu0 %v5589
      %v6045 = vpop.f32.mrf.mxu0
      %v6046 = vadd.f32 0.0, %v6045
      %6047 = vmatmul.f32.gmra.mxu0 %v5591
      %v6048 = vpop.f32.mrf.mxu0
      %v6049 = vadd.f32 0.0, %v6048
      %6050 = vmatmul.f32.gmra.mxu0 %v5593
      %v6051 = vpop.f32.mrf.mxu0
      %v6052 = vadd.f32 0.0, %v6051
      %6053 = vmatmul.f32.gmra.mxu0 %v5595
      %v6054 = vpop.f32.mrf.mxu0
      %v6055 = vadd.f32 0.0, %v6054
      %6056 = vmatmul.f32.gmra.mxu0 %v5597
      %v6057 = vpop.f32.mrf.mxu0
      %v6058 = vadd.f32 0.0, %v6057
      %6059 = vmatmul.f32.gmra.mxu0 %v5599
      %v6060 = vpop.f32.mrf.mxu0
      %v6061 = vadd.f32 0.0, %v6060
      %6062 = vmatmul.f32.gmra.mxu0 %v5601
      %v6063 = vpop.f32.mrf.mxu0
      %v6064 = vadd.f32 0.0, %v6063
      %6065 = vmatmul.f32.gmra.mxu0 %v5603
      %v6066 = vpop.f32.mrf.mxu0
      %v6067 = vadd.f32 0.0, %v6066
      %6068 = vmatmul.f32.gmra.mxu0 %v5605
      %v6069 = vpop.f32.mrf.mxu0
      %v6070 = vadd.f32 0.0, %v6069
      %6071 = vmatmul.f32.gmra.mxu0 %v5607
      %v6072 = vpop.f32.mrf.mxu0
      %v6073 = vadd.f32 0.0, %v6072
      %6074 = vmatmul.f32.gmra.mxu0 %v5609
      %v6075 = vpop.f32.mrf.mxu0
      %v6076 = vadd.f32 0.0, %v6075
      %6077 = vmatmul.f32.gmra.mxu0 %v5611
      %v6078 = vpop.f32.mrf.mxu0
      %v6079 = vadd.f32 0.0, %v6078
      %6080 = vmatmul.f32.gmra.mxu0 %v5613
      %v6081 = vpop.f32.mrf.mxu0
      %v6082 = vadd.f32 0.0, %v6081
      %6083 = vmatmul.f32.gmra.mxu0 %v5615
      %v6084 = vpop.f32.mrf.mxu0
      %v6085 = vadd.f32 0.0, %v6084
      %6086 = vmatmul.f32.gmra.mxu0 %v5617
      %v6087 = vpop.f32.mrf.mxu0
      %v6088 = vadd.f32 0.0, %v6087
      %6089 = vmatmul.f32.gmra.mxu0 %v5619
      %v6090 = vpop.f32.mrf.mxu0
      %v6091 = vadd.f32 0.0, %v6090
      %6092 = vmatmul.f32.gmra.mxu0 %v5621
      %v6093 = vpop.f32.mrf.mxu0
      %v6094 = vadd.f32 0.0, %v6093
      %6095 = vmatmul.f32.gmra.mxu0 %v5623
      %v6096 = vpop.f32.mrf.mxu0
      %v6097 = vadd.f32 0.0, %v6096
      %6098 = vmatmul.f32.gmra.mxu0 %v5625
      %v6099 = vpop.f32.mrf.mxu0
      %v6100 = vadd.f32 0.0, %v6099
      %6101 = vmatmul.f32.gmra.mxu0 %v5627
      %v6102 = vpop.f32.mrf.mxu0
      %v6103 = vadd.f32 0.0, %v6102
      %6104 = vmatmul.f32.gmra.mxu0 %v5629
      %v6105 = vpop.f32.mrf.mxu0
      %v6106 = vadd.f32 0.0, %v6105
      %6107 = vmatmul.f32.gmra.mxu0 %v5631
      %v6108 = vpop.f32.mrf.mxu0
      %v6109 = vadd.f32 0.0, %v6108
      %6110 = vmatmul.f32.gmra.mxu0 %v5633
      %v6111 = vpop.f32.mrf.mxu0
      %v6112 = vadd.f32 0.0, %v6111
      %6113 = vmatmul.f32.gmra.mxu0 %v5635
      %v6114 = vpop.f32.mrf.mxu0
      %v6115 = vadd.f32 0.0, %v6114
      %6116 = vmatmul.f32.gmra.mxu0 %v5637
      %v6117 = vpop.f32.mrf.mxu0
      %v6118 = vadd.f32 0.0, %v6117
      %6119 = vmatmul.f32.gmra.mxu0 %v5639
      %v6120 = vpop.f32.mrf.mxu0
      %v6121 = vadd.f32 0.0, %v6120
      %6122 = vdwg.mxu0
      %6123 = vmatpush.msra.mxu0 %v5993
      %6124 = vmatpush.msra.mxu0 %v5992
      %6125 = vmatpush.msra.mxu0 %v5991
      %6126 = vmatpush.msra.mxu0 %v5990
      %6127 = vmatpush.msra.mxu0 %v5989
      %6128 = vmatpush.msra.mxu0 %v5988
      %6129 = vmatpush.msra.mxu0 %v5987
      %6130 = vmatpush.msra.mxu0 %v5986
      %6131 = vmatpush.msra.mxu0 %v5985
      %6132 = vmatpush.msra.mxu0 %v5984
      %6133 = vmatpush.msra.mxu0 %v5983
      %6134 = vmatpush.msra.mxu0 %v5982
      %6135 = vmatpush.msra.mxu0 %v5981
      %6136 = vmatpush.msra.mxu0 %v5980
      %6137 = vmatpush.msra.mxu0 %v5979
      %6138 = vmatpush.msra.mxu0 %v5978
      %6139 = vmatmul.f32.gmra.mxu0 %v5707
      %v6140 = vpop.f32.mrf.mxu0
      %v6141 = vadd.f32 %v6028, %v6140
      %6142 = vmatmul.f32.gmra.mxu0 %v5710
      %v6143 = vpop.f32.mrf.mxu0
      %v6144 = vadd.f32 %v6031, %v6143
      %6145 = vmatmul.f32.gmra.mxu0 %v5713
      %v6146 = vpop.f32.mrf.mxu0
      %v6147 = vadd.f32 %v6034, %v6146
      %6148 = vmatmul.f32.gmra.mxu0 %v5716
      %v6149 = vpop.f32.mrf.mxu0
      %v6150 = vadd.f32 %v6037, %v6149
      %6151 = vmatmul.f32.gmra.mxu0 %v5719
      %v6152 = vpop.f32.mrf.mxu0
      %v6153 = vadd.f32 %v6040, %v6152
      %6154 = vmatmul.f32.gmra.mxu0 %v5722
      %v6155 = vpop.f32.mrf.mxu0
      %v6156 = vadd.f32 %v6043, %v6155
      %6157 = vmatmul.f32.gmra.mxu0 %v5725
      %v6158 = vpop.f32.mrf.mxu0
      %v6159 = vadd.f32 %v6046, %v6158
      %6160 = vmatmul.f32.gmra.mxu0 %v5728
      %v6161 = vpop.f32.mrf.mxu0
      %v6162 = vadd.f32 %v6049, %v6161
      %6163 = vmatmul.f32.gmra.mxu0 %v5731
      %v6164 = vpop.f32.mrf.mxu0
      %v6165 = vadd.f32 %v6052, %v6164
      %6166 = vmatmul.f32.gmra.mxu0 %v5734
      %v6167 = vpop.f32.mrf.mxu0
      %v6168 = vadd.f32 %v6055, %v6167
      %6169 = vmatmul.f32.gmra.mxu0 %v5737
      %v6170 = vpop.f32.mrf.mxu0
      %v6171 = vadd.f32 %v6058, %v6170
      %6172 = vmatmul.f32.gmra.mxu0 %v5740
      %v6173 = vpop.f32.mrf.mxu0
      %v6174 = vadd.f32 %v6061, %v6173
      %6175 = vmatmul.f32.gmra.mxu0 %v5743
      %v6176 = vpop.f32.mrf.mxu0
      %v6177 = vadd.f32 %v6064, %v6176
      %6178 = vmatmul.f32.gmra.mxu0 %v5746
      %v6179 = vpop.f32.mrf.mxu0
      %v6180 = vadd.f32 %v6067, %v6179
      %6181 = vmatmul.f32.gmra.mxu0 %v5749
      %v6182 = vpop.f32.mrf.mxu0
      %v6183 = vadd.f32 %v6070, %v6182
      %6184 = vmatmul.f32.gmra.mxu0 %v5752
      %v6185 = vpop.f32.mrf.mxu0
      %v6186 = vadd.f32 %v6073, %v6185
      %6187 = vmatmul.f32.gmra.mxu0 %v5755
      %v6188 = vpop.f32.mrf.mxu0
      %v6189 = vadd.f32 %v6076, %v6188
      %6190 = vmatmul.f32.gmra.mxu0 %v5758
      %v6191 = vpop.f32.mrf.mxu0
      %v6192 = vadd.f32 %v6079, %v6191
      %6193 = vmatmul.f32.gmra.mxu0 %v5761
      %v6194 = vpop.f32.mrf.mxu0
      %v6195 = vadd.f32 %v6082, %v6194
      %6196 = vmatmul.f32.gmra.mxu0 %v5764
      %v6197 = vpop.f32.mrf.mxu0
      %v6198 = vadd.f32 %v6085, %v6197
      %6199 = vmatmul.f32.gmra.mxu0 %v5767
      %v6200 = vpop.f32.mrf.mxu0
      %v6201 = vadd.f32 %v6088, %v6200
      %6202 = vmatmul.f32.gmra.mxu0 %v5770
      %v6203 = vpop.f32.mrf.mxu0
      %v6204 = vadd.f32 %v6091, %v6203
      %6205 = vmatmul.f32.gmra.mxu0 %v5773
      %v6206 = vpop.f32.mrf.mxu0
      %v6207 = vadd.f32 %v6094, %v6206
      %6208 = vmatmul.f32.gmra.mxu0 %v5776
      %v6209 = vpop.f32.mrf.mxu0
      %v6210 = vadd.f32 %v6097, %v6209
      %6211 = vmatmul.f32.gmra.mxu0 %v5779
      %v6212 = vpop.f32.mrf.mxu0
      %v6213 = vadd.f32 %v6100, %v6212
      %6214 = vmatmul.f32.gmra.mxu0 %v5782
      %v6215 = vpop.f32.mrf.mxu0
      %v6216 = vadd.f32 %v6103, %v6215
      %6217 = vmatmul.f32.gmra.mxu0 %v5785
      %v6218 = vpop.f32.mrf.mxu0
      %v6219 = vadd.f32 %v6106, %v6218
      %6220 = vmatmul.f32.gmra.mxu0 %v5788
      %v6221 = vpop.f32.mrf.mxu0
      %v6222 = vadd.f32 %v6109, %v6221
      %6223 = vmatmul.f32.gmra.mxu0 %v5791
      %v6224 = vpop.f32.mrf.mxu0
      %v6225 = vadd.f32 %v6112, %v6224
      %6226 = vmatmul.f32.gmra.mxu0 %v5794
      %v6227 = vpop.f32.mrf.mxu0
      %v6228 = vadd.f32 %v6115, %v6227
      %6229 = vmatmul.f32.gmra.mxu0 %v5797
      %v6230 = vpop.f32.mrf.mxu0
      %v6231 = vadd.f32 %v6118, %v6230
      %6232 = vmatmul.f32.gmra.mxu0 %v5800
      %v6233 = vpop.f32.mrf.mxu0
      %v6234 = vadd.f32 %v6121, %v6233
      %6235 = vdwg.mxu0
      %6236 = vmatpush.msra.mxu0 %v6009
      %6237 = vmatpush.msra.mxu0 %v6008
      %6238 = vmatpush.msra.mxu0 %v6007
      %6239 = vmatpush.msra.mxu0 %v6006
      %6240 = vmatpush.msra.mxu0 %v6005
      %6241 = vmatpush.msra.mxu0 %v6004
      %6242 = vmatpush.msra.mxu0 %v6003
      %6243 = vmatpush.msra.mxu0 %v6002
      %6244 = vmatpush.msra.mxu0 %v6001
      %6245 = vmatpush.msra.mxu0 %v6000
      %6246 = vmatpush.msra.mxu0 %v5999
      %6247 = vmatpush.msra.mxu0 %v5998
      %6248 = vmatpush.msra.mxu0 %v5997
      %6249 = vmatpush.msra.mxu0 %v5996
      %6250 = vmatpush.msra.mxu0 %v5995
      %6251 = vmatpush.msra.mxu0 %v5994
      %6252 = vmatmul.f32.gmra.mxu0 %v5835
      %v6253 = vpop.f32.mrf.mxu0
      %v6254 = vadd.f32 %v6141, %v6253
      %6255 = vmatmul.f32.gmra.mxu0 %v5838
      %v6256 = vpop.f32.mrf.mxu0
      %v6257 = vadd.f32 %v6144, %v6256
      %6258 = vmatmul.f32.gmra.mxu0 %v5841
      %v6259 = vpop.f32.mrf.mxu0
      %v6260 = vadd.f32 %v6147, %v6259
      %6261 = vmatmul.f32.gmra.mxu0 %v5844
      %v6262 = vpop.f32.mrf.mxu0
      %v6263 = vadd.f32 %v6150, %v6262
      %6264 = vmatmul.f32.gmra.mxu0 %v5847
      %v6265 = vpop.f32.mrf.mxu0
      %v6266 = vadd.f32 %v6153, %v6265
      %6267 = vmatmul.f32.gmra.mxu0 %v5850
      %v6268 = vpop.f32.mrf.mxu0
      %v6269 = vadd.f32 %v6156, %v6268
      %6270 = vmatmul.f32.gmra.mxu0 %v5853
      %v6271 = vpop.f32.mrf.mxu0
      %v6272 = vadd.f32 %v6159, %v6271
      %6273 = vmatmul.f32.gmra.mxu0 %v5856
      %v6274 = vpop.f32.mrf.mxu0
      %v6275 = vadd.f32 %v6162, %v6274
      %6276 = vmatmul.f32.gmra.mxu0 %v5859
      %v6277 = vpop.f32.mrf.mxu0
      %v6278 = vadd.f32 %v6165, %v6277
      %6279 = vmatmul.f32.gmra.mxu0 %v5862
      %v6280 = vpop.f32.mrf.mxu0
      %v6281 = vadd.f32 %v6168, %v6280
      %6282 = vmatmul.f32.gmra.mxu0 %v5865
      %v6283 = vpop.f32.mrf.mxu0
      %v6284 = vadd.f32 %v6171, %v6283
      %6285 = vmatmul.f32.gmra.mxu0 %v5868
      %v6286 = vpop.f32.mrf.mxu0
      %v6287 = vadd.f32 %v6174, %v6286
      %6288 = vmatmul.f32.gmra.mxu0 %v5871
      %v6289 = vpop.f32.mrf.mxu0
      %v6290 = vadd.f32 %v6177, %v6289
      %6291 = vmatmul.f32.gmra.mxu0 %v5874
      %v6292 = vpop.f32.mrf.mxu0
      %v6293 = vadd.f32 %v6180, %v6292
      %6294 = vmatmul.f32.gmra.mxu0 %v5877
      %v6295 = vpop.f32.mrf.mxu0
      %v6296 = vadd.f32 %v6183, %v6295
      %6297 = vmatmul.f32.gmra.mxu0 %v5880
      %v6298 = vpop.f32.mrf.mxu0
      %v6299 = vadd.f32 %v6186, %v6298
      %6300 = vmatmul.f32.gmra.mxu0 %v5883
      %v6301 = vpop.f32.mrf.mxu0
      %v6302 = vadd.f32 %v6189, %v6301
      %6303 = vmatmul.f32.gmra.mxu0 %v5886
      %v6304 = vpop.f32.mrf.mxu0
      %v6305 = vadd.f32 %v6192, %v6304
      %6306 = vmatmul.f32.gmra.mxu0 %v5889
      %v6307 = vpop.f32.mrf.mxu0
      %v6308 = vadd.f32 %v6195, %v6307
      %6309 = vmatmul.f32.gmra.mxu0 %v5892
      %v6310 = vpop.f32.mrf.mxu0
      %v6311 = vadd.f32 %v6198, %v6310
      %6312 = vmatmul.f32.gmra.mxu0 %v5895
      %v6313 = vpop.f32.mrf.mxu0
      %v6314 = vadd.f32 %v6201, %v6313
      %6315 = vmatmul.f32.gmra.mxu0 %v5898
      %v6316 = vpop.f32.mrf.mxu0
      %v6317 = vadd.f32 %v6204, %v6316
      %6318 = vmatmul.f32.gmra.mxu0 %v5901
      %v6319 = vpop.f32.mrf.mxu0
      %v6320 = vadd.f32 %v6207, %v6319
      %6321 = vmatmul.f32.gmra.mxu0 %v5904
      %v6322 = vpop.f32.mrf.mxu0
      %v6323 = vadd.f32 %v6210, %v6322
      %6324 = vmatmul.f32.gmra.mxu0 %v5907
      %v6325 = vpop.f32.mrf.mxu0
      %v6326 = vadd.f32 %v6213, %v6325
      %6327 = vmatmul.f32.gmra.mxu0 %v5910
      %v6328 = vpop.f32.mrf.mxu0
      %v6329 = vadd.f32 %v6216, %v6328
      %6330 = vmatmul.f32.gmra.mxu0 %v5913
      %v6331 = vpop.f32.mrf.mxu0
      %v6332 = vadd.f32 %v6219, %v6331
      %6333 = vmatmul.f32.gmra.mxu0 %v5916
      %v6334 = vpop.f32.mrf.mxu0
      %v6335 = vadd.f32 %v6222, %v6334
      %6336 = vmatmul.f32.gmra.mxu0 %v5919
      %v6337 = vpop.f32.mrf.mxu0
      %v6338 = vadd.f32 %v6225, %v6337
      %6339 = vmatmul.f32.gmra.mxu0 %v5922
      %v6340 = vpop.f32.mrf.mxu0
      %v6341 = vadd.f32 %v6228, %v6340
      %6342 = vmatmul.f32.gmra.mxu0 %v5925
      %v6343 = vpop.f32.mrf.mxu0
      %v6344 = vadd.f32 %v6231, %v6343
      %6345 = vmatmul.f32.gmra.mxu0 %v5928
      %v6346 = vpop.f32.mrf.mxu0
      %v6347 = vadd.f32 %v6234, %v6346
      %6348 = vdwg.mxu0
      %v6349 = vld [vmem:[#allocation3] sm:$0xff]
      %v6350 = vld [vmem:[#allocation3 + $0x8] sm:$0xff]
      %v6351 = vld [vmem:[#allocation3 + $0x10] sm:$0xff]
      %v6352 = vld [vmem:[#allocation3 + $0x18] sm:$0xff]
      %v6353 = vld [vmem:[#allocation3 + $0x20] sm:$0xff]
      %v6354 = vld [vmem:[#allocation3 + $0x28] sm:$0xff]
      %v6355 = vld [vmem:[#allocation3 + $0x30] sm:$0xff]
      %v6356 = vld [vmem:[#allocation3 + $0x38] sm:$0xff]
      %v6357 = vld [vmem:[#allocation3 + $0x40] sm:$0xff]
      %v6358 = vld [vmem:[#allocation3 + $0x48] sm:$0xff]
      %v6359 = vld [vmem:[#allocation3 + $0x50] sm:$0xff]
      %v6360 = vld [vmem:[#allocation3 + $0x58] sm:$0xff]
      %v6361 = vld [vmem:[#allocation3 + $0x60] sm:$0xff]
      %v6362 = vld [vmem:[#allocation3 + $0x68] sm:$0xff]
      %v6363 = vld [vmem:[#allocation3 + $0x70] sm:$0xff]
      %v6364 = vld [vmem:[#allocation3 + $0x78] sm:$0xff]
      %v6365 = vld [vmem:[#allocation3 + $0x80] sm:$0xff]
      %v6366 = vld [vmem:[#allocation3 + $0x88] sm:$0xff]
      %v6367 = vld [vmem:[#allocation3 + $0x90] sm:$0xff]
      %v6368 = vld [vmem:[#allocation3 + $0x98] sm:$0xff]
      %v6369 = vld [vmem:[#allocation3 + $0xa0] sm:$0xff]
      %v6370 = vld [vmem:[#allocation3 + $0xa8] sm:$0xff]
      %v6371 = vld [vmem:[#allocation3 + $0xb0] sm:$0xff]
      %v6372 = vld [vmem:[#allocation3 + $0xb8] sm:$0xff]
      %v6373 = vld [vmem:[#allocation3 + $0xc0] sm:$0xff]
      %v6374 = vld [vmem:[#allocation3 + $0xc8] sm:$0xff]
      %v6375 = vld [vmem:[#allocation3 + $0xd0] sm:$0xff]
      %v6376 = vld [vmem:[#allocation3 + $0xd8] sm:$0xff]
      %v6377 = vld [vmem:[#allocation3 + $0xe0] sm:$0xff]
      %v6378 = vld [vmem:[#allocation3 + $0xe8] sm:$0xff]
      %v6379 = vld [vmem:[#allocation3 + $0xf0] sm:$0xff]
      %v6380 = vld [vmem:[#allocation3 + $0xf8] sm:$0xff]
      %v6381 = vadd.f32 %v6349, %v6254
      %v6382 = vadd.f32 %v6350, %v6257
      %v6383 = vadd.f32 %v6351, %v6260
      %v6384 = vadd.f32 %v6352, %v6263
      %v6385 = vadd.f32 %v6353, %v6266
      %v6386 = vadd.f32 %v6354, %v6269
      %v6387 = vadd.f32 %v6355, %v6272
      %v6388 = vadd.f32 %v6356, %v6275
      %v6389 = vadd.f32 %v6357, %v6278
      %v6390 = vadd.f32 %v6358, %v6281
      %v6391 = vadd.f32 %v6359, %v6284
      %v6392 = vadd.f32 %v6360, %v6287
      %v6393 = vadd.f32 %v6361, %v6290
      %v6394 = vadd.f32 %v6362, %v6293
      %v6395 = vadd.f32 %v6363, %v6296
      %v6396 = vadd.f32 %v6364, %v6299
      %v6397 = vadd.f32 %v6365, %v6302
      %v6398 = vadd.f32 %v6366, %v6305
      %v6399 = vadd.f32 %v6367, %v6308
      %v6400 = vadd.f32 %v6368, %v6311
      %v6401 = vadd.f32 %v6369, %v6314
      %v6402 = vadd.f32 %v6370, %v6317
      %v6403 = vadd.f32 %v6371, %v6320
      %v6404 = vadd.f32 %v6372, %v6323
      %v6405 = vadd.f32 %v6373, %v6326
      %v6406 = vadd.f32 %v6374, %v6329
      %v6407 = vadd.f32 %v6375, %v6332
      %v6408 = vadd.f32 %v6376, %v6335
      %v6409 = vadd.f32 %v6377, %v6338
      %v6410 = vadd.f32 %v6378, %v6341
      %v6411 = vadd.f32 %v6379, %v6344
      %v6412 = vadd.f32 %v6380, %v6347
      %6413 = vst [vmem:[#allocation3] sm:$0xff] %v6381
      %6414 = vst [vmem:[#allocation3 + $0x8] sm:$0xff] %v6382
      %6415 = vst [vmem:[#allocation3 + $0x10] sm:$0xff] %v6383
      %6416 = vst [vmem:[#allocation3 + $0x18] sm:$0xff] %v6384
      %6417 = vst [vmem:[#allocation3 + $0x20] sm:$0xff] %v6385
      %6418 = vst [vmem:[#allocation3 + $0x28] sm:$0xff] %v6386
      %6419 = vst [vmem:[#allocation3 + $0x30] sm:$0xff] %v6387
      %6420 = vst [vmem:[#allocation3 + $0x38] sm:$0xff] %v6388
      %6421 = vst [vmem:[#allocation3 + $0x40] sm:$0xff] %v6389
      %6422 = vst [vmem:[#allocation3 + $0x48] sm:$0xff] %v6390
      %6423 = vst [vmem:[#allocation3 + $0x50] sm:$0xff] %v6391
      %6424 = vst [vmem:[#allocation3 + $0x58] sm:$0xff] %v6392
      %6425 = vst [vmem:[#allocation3 + $0x60] sm:$0xff] %v6393
      %6426 = vst [vmem:[#allocation3 + $0x68] sm:$0xff] %v6394
      %6427 = vst [vmem:[#allocation3 + $0x70] sm:$0xff] %v6395
      %6428 = vst [vmem:[#allocation3 + $0x78] sm:$0xff] %v6396
      %6429 = vst [vmem:[#allocation3 + $0x80] sm:$0xff] %v6397
      %6430 = vst [vmem:[#allocation3 + $0x88] sm:$0xff] %v6398
      %6431 = vst [vmem:[#allocation3 + $0x90] sm:$0xff] %v6399
      %6432 = vst [vmem:[#allocation3 + $0x98] sm:$0xff] %v6400
      %6433 = vst [vmem:[#allocation3 + $0xa0] sm:$0xff] %v6401
      %6434 = vst [vmem:[#allocation3 + $0xa8] sm:$0xff] %v6402
      %6435 = vst [vmem:[#allocation3 + $0xb0] sm:$0xff] %v6403
      %6436 = vst [vmem:[#allocation3 + $0xb8] sm:$0xff] %v6404
      %6437 = vst [vmem:[#allocation3 + $0xc0] sm:$0xff] %v6405
      %6438 = vst [vmem:[#allocation3 + $0xc8] sm:$0xff] %v6406
      %6439 = vst [vmem:[#allocation3 + $0xd0] sm:$0xff] %v6407
      %6440 = vst [vmem:[#allocation3 + $0xd8] sm:$0xff] %v6408
      %6441 = vst [vmem:[#allocation3 + $0xe0] sm:$0xff] %v6409
      %6442 = vst [vmem:[#allocation3 + $0xe8] sm:$0xff] %v6410
      %6443 = vst [vmem:[#allocation3 + $0xf0] sm:$0xff] %v6411
      %6444 = vst [vmem:[#allocation3 + $0xf8] sm:$0xff] %v6412
      %s6445 = scalar_lea.vmem [#allocation2], 336
      %v6446 = vld [vmem:[%s6445] sm:$0xff]
      %v6447 = vld [vmem:[%s6445 + $0x8] sm:$0x3]
      %v6448 = vld [vmem:[%s6445 + $0x10] sm:$0xff]
      %v6449 = vld [vmem:[%s6445 + $0x18] sm:$0x3]
      %v6450 = vld [vmem:[%s6445 + $0x20] sm:$0xff]
      %v6451 = vld [vmem:[%s6445 + $0x28] sm:$0x3]
      %v6452 = vld [vmem:[%s6445 + $0x30] sm:$0xff]
      %v6453 = vld [vmem:[%s6445 + $0x38] sm:$0x3]
      %v6454 = vld [vmem:[%s6445 + $0x40] sm:$0xff]
      %v6455 = vld [vmem:[%s6445 + $0x48] sm:$0x3]
      %v6456 = vld [vmem:[%s6445 + $0x50] sm:$0xff]
      %v6457 = vld [vmem:[%s6445 + $0x58] sm:$0x3]
      %v6458 = vld [vmem:[%s6445 + $0x60] sm:$0xff]
      %v6459 = vld [vmem:[%s6445 + $0x68] sm:$0x3]
      %v6460 = vld [vmem:[%s6445 + $0x70] sm:$0xff]
      %v6461 = vld [vmem:[%s6445 + $0x78] sm:$0x3]
      %v6462 = vld [vmem:[%s6445 + $0xa0] sm:$0xff]
      %v6463 = vld [vmem:[%s6445 + $0xa8] sm:$0x3]
      %v6464 = vld [vmem:[%s6445 + $0xb0] sm:$0xff]
      %v6465 = vld [vmem:[%s6445 + $0xb8] sm:$0x3]
      %v6466 = vld [vmem:[%s6445 + $0xc0] sm:$0xff]
      %v6467 = vld [vmem:[%s6445 + $0xc8] sm:$0x3]
      %v6468 = vld [vmem:[%s6445 + $0xd0] sm:$0xff]
      %v6469 = vld [vmem:[%s6445 + $0xd8] sm:$0x3]
      %v6470 = vld [vmem:[%s6445 + $0xe0] sm:$0xff]
      %v6471 = vld [vmem:[%s6445 + $0xe8] sm:$0x3]
      %v6472 = vld [vmem:[%s6445 + $0xf0] sm:$0xff]
      %v6473 = vld [vmem:[%s6445 + $0xf8] sm:$0x3]
      %v6474 = vld [vmem:[%s6445 + $0x100] sm:$0xff]
      %v6475 = vld [vmem:[%s6445 + $0x108] sm:$0x3]
      %v6476 = vld [vmem:[%s6445 + $0x110] sm:$0xff]
      %v6477 = vld [vmem:[%s6445 + $0x118] sm:$0x3]
      %v6478 = vld [vmem:[%s6445 + $0x140] sm:$0xff]
      %v6479 = vld [vmem:[%s6445 + $0x148] sm:$0x3]
      %v6480 = vld [vmem:[%s6445 + $0x150] sm:$0xff]
      %v6481 = vld [vmem:[%s6445 + $0x158] sm:$0x3]
      %v6482 = vld [vmem:[%s6445 + $0x160] sm:$0xff]
      %v6483 = vld [vmem:[%s6445 + $0x168] sm:$0x3]
      %v6484 = vld [vmem:[%s6445 + $0x170] sm:$0xff]
      %v6485 = vld [vmem:[%s6445 + $0x178] sm:$0x3]
      %v6486 = vld [vmem:[%s6445 + $0x180] sm:$0xff]
      %v6487 = vld [vmem:[%s6445 + $0x188] sm:$0x3]
      %v6488 = vld [vmem:[%s6445 + $0x190] sm:$0xff]
      %v6489 = vld [vmem:[%s6445 + $0x198] sm:$0x3]
      %v6490 = vld [vmem:[%s6445 + $0x1a0] sm:$0xff]
      %v6491 = vld [vmem:[%s6445 + $0x1a8] sm:$0x3]
      %v6492 = vld [vmem:[%s6445 + $0x1b0] sm:$0xff]
      %v6493 = vld [vmem:[%s6445 + $0x1b8] sm:$0x3]
      %v6494 = vld [vmem:[%s6445 + $0x1e0] sm:$0xff]
      %v6495 = vld [vmem:[%s6445 + $0x1e8] sm:$0x3]
      %v6496 = vld [vmem:[%s6445 + $0x1f0] sm:$0xff]
      %v6497 = vld [vmem:[%s6445 + $0x1f8] sm:$0x3]
      %v6498 = vld [vmem:[%s6445 + $0x200] sm:$0xff]
      %v6499 = vld [vmem:[%s6445 + $0x208] sm:$0x3]
      %v6500 = vld [vmem:[%s6445 + $0x210] sm:$0xff]
      %v6501 = vld [vmem:[%s6445 + $0x218] sm:$0x3]
      %v6502 = vld [vmem:[%s6445 + $0x220] sm:$0xff]
      %v6503 = vld [vmem:[%s6445 + $0x228] sm:$0x3]
      %v6504 = vld [vmem:[%s6445 + $0x230] sm:$0xff]
      %v6505 = vld [vmem:[%s6445 + $0x238] sm:$0x3]
      %v6506 = vld [vmem:[%s6445 + $0x240] sm:$0xff]
      %v6507 = vld [vmem:[%s6445 + $0x248] sm:$0x3]
      %v6508 = vld [vmem:[%s6445 + $0x250] sm:$0xff]
      %v6509 = vld [vmem:[%s6445 + $0x258] sm:$0x3]
      %v6574 = vrot.slane %v6446, 1
      %v6575 = vrot.slane %v6447, 1
      %v6576 = vsel %vm554, %v6574, %v6575
      %v6577 = vrot.slane %v6448, 1
      %v6578 = vrot.slane %v6449, 1
      %v6579 = vsel %vm554, %v6577, %v6578
      %v6580 = vrot.slane %v6450, 1
      %v6581 = vrot.slane %v6451, 1
      %v6582 = vsel %vm554, %v6580, %v6581
      %v6583 = vrot.slane %v6452, 1
      %v6584 = vrot.slane %v6453, 1
      %v6585 = vsel %vm554, %v6583, %v6584
      %v6586 = vrot.slane %v6454, 1
      %v6587 = vrot.slane %v6455, 1
      %v6588 = vsel %vm554, %v6586, %v6587
      %v6589 = vrot.slane %v6456, 1
      %v6590 = vrot.slane %v6457, 1
      %v6591 = vsel %vm554, %v6589, %v6590
      %v6592 = vrot.slane %v6458, 1
      %v6593 = vrot.slane %v6459, 1
      %v6594 = vsel %vm554, %v6592, %v6593
      %v6595 = vrot.slane %v6460, 1
      %v6596 = vrot.slane %v6461, 1
      %v6597 = vsel %vm554, %v6595, %v6596
      %v6598 = vrot.slane %v6462, 1
      %v6599 = vrot.slane %v6463, 1
      %v6600 = vsel %vm554, %v6598, %v6599
      %v6601 = vrot.slane %v6464, 1
      %v6602 = vrot.slane %v6465, 1
      %v6603 = vsel %vm554, %v6601, %v6602
      %v6604 = vrot.slane %v6466, 1
      %v6605 = vrot.slane %v6467, 1
      %v6606 = vsel %vm554, %v6604, %v6605
      %v6607 = vrot.slane %v6468, 1
      %v6608 = vrot.slane %v6469, 1
      %v6609 = vsel %vm554, %v6607, %v6608
      %v6610 = vrot.slane %v6470, 1
      %v6611 = vrot.slane %v6471, 1
      %v6612 = vsel %vm554, %v6610, %v6611
      %v6613 = vrot.slane %v6472, 1
      %v6614 = vrot.slane %v6473, 1
      %v6615 = vsel %vm554, %v6613, %v6614
      %v6616 = vrot.slane %v6474, 1
      %v6617 = vrot.slane %v6475, 1
      %v6618 = vsel %vm554, %v6616, %v6617
      %v6619 = vrot.slane %v6476, 1
      %v6620 = vrot.slane %v6477, 1
      %v6621 = vsel %vm554, %v6619, %v6620
      %v6622 = vrot.slane %v6478, 1
      %v6623 = vrot.slane %v6479, 1
      %v6624 = vsel %vm554, %v6622, %v6623
      %v6625 = vrot.slane %v6480, 1
      %v6626 = vrot.slane %v6481, 1
      %v6627 = vsel %vm554, %v6625, %v6626
      %v6628 = vrot.slane %v6482, 1
      %v6629 = vrot.slane %v6483, 1
      %v6630 = vsel %vm554, %v6628, %v6629
      %v6631 = vrot.slane %v6484, 1
      %v6632 = vrot.slane %v6485, 1
      %v6633 = vsel %vm554, %v6631, %v6632
      %v6634 = vrot.slane %v6486, 1
      %v6635 = vrot.slane %v6487, 1
      %v6636 = vsel %vm554, %v6634, %v6635
      %v6637 = vrot.slane %v6488, 1
      %v6638 = vrot.slane %v6489, 1
      %v6639 = vsel %vm554, %v6637, %v6638
      %v6640 = vrot.slane %v6490, 1
      %v6641 = vrot.slane %v6491, 1
      %v6642 = vsel %vm554, %v6640, %v6641
      %v6643 = vrot.slane %v6492, 1
      %v6644 = vrot.slane %v6493, 1
      %v6645 = vsel %vm554, %v6643, %v6644
      %v6646 = vrot.slane %v6494, 1
      %v6647 = vrot.slane %v6495, 1
      %v6648 = vsel %vm554, %v6646, %v6647
      %v6649 = vrot.slane %v6496, 1
      %v6650 = vrot.slane %v6497, 1
      %v6651 = vsel %vm554, %v6649, %v6650
      %v6652 = vrot.slane %v6498, 1
      %v6653 = vrot.slane %v6499, 1
      %v6654 = vsel %vm554, %v6652, %v6653
      %v6655 = vrot.slane %v6500, 1
      %v6656 = vrot.slane %v6501, 1
      %v6657 = vsel %vm554, %v6655, %v6656
      %v6658 = vrot.slane %v6502, 1
      %v6659 = vrot.slane %v6503, 1
      %v6660 = vsel %vm554, %v6658, %v6659
      %v6661 = vrot.slane %v6504, 1
      %v6662 = vrot.slane %v6505, 1
      %v6663 = vsel %vm554, %v6661, %v6662
      %v6664 = vrot.slane %v6506, 1
      %v6665 = vrot.slane %v6507, 1
      %v6666 = vsel %vm554, %v6664, %v6665
      %v6667 = vrot.slane %v6508, 1
      %v6668 = vrot.slane %v6509, 1
      %v6669 = vsel %vm554, %v6667, %v6668
      %v6702 = vrot.slane %v6446, 2
      %v6703 = vrot.slane %v6447, 2
      %v6704 = vsel %vm683, %v6702, %v6703
      %v6705 = vrot.slane %v6448, 2
      %v6706 = vrot.slane %v6449, 2
      %v6707 = vsel %vm683, %v6705, %v6706
      %v6708 = vrot.slane %v6450, 2
      %v6709 = vrot.slane %v6451, 2
      %v6710 = vsel %vm683, %v6708, %v6709
      %v6711 = vrot.slane %v6452, 2
      %v6712 = vrot.slane %v6453, 2
      %v6713 = vsel %vm683, %v6711, %v6712
      %v6714 = vrot.slane %v6454, 2
      %v6715 = vrot.slane %v6455, 2
      %v6716 = vsel %vm683, %v6714, %v6715
      %v6717 = vrot.slane %v6456, 2
      %v6718 = vrot.slane %v6457, 2
      %v6719 = vsel %vm683, %v6717, %v6718
      %v6720 = vrot.slane %v6458, 2
      %v6721 = vrot.slane %v6459, 2
      %v6722 = vsel %vm683, %v6720, %v6721
      %v6723 = vrot.slane %v6460, 2
      %v6724 = vrot.slane %v6461, 2
      %v6725 = vsel %vm683, %v6723, %v6724
      %v6726 = vrot.slane %v6462, 2
      %v6727 = vrot.slane %v6463, 2
      %v6728 = vsel %vm683, %v6726, %v6727
      %v6729 = vrot.slane %v6464, 2
      %v6730 = vrot.slane %v6465, 2
      %v6731 = vsel %vm683, %v6729, %v6730
      %v6732 = vrot.slane %v6466, 2
      %v6733 = vrot.slane %v6467, 2
      %v6734 = vsel %vm683, %v6732, %v6733
      %v6735 = vrot.slane %v6468, 2
      %v6736 = vrot.slane %v6469, 2
      %v6737 = vsel %vm683, %v6735, %v6736
      %v6738 = vrot.slane %v6470, 2
      %v6739 = vrot.slane %v6471, 2
      %v6740 = vsel %vm683, %v6738, %v6739
      %v6741 = vrot.slane %v6472, 2
      %v6742 = vrot.slane %v6473, 2
      %v6743 = vsel %vm683, %v6741, %v6742
      %v6744 = vrot.slane %v6474, 2
      %v6745 = vrot.slane %v6475, 2
      %v6746 = vsel %vm683, %v6744, %v6745
      %v6747 = vrot.slane %v6476, 2
      %v6748 = vrot.slane %v6477, 2
      %v6749 = vsel %vm683, %v6747, %v6748
      %v6750 = vrot.slane %v6478, 2
      %v6751 = vrot.slane %v6479, 2
      %v6752 = vsel %vm683, %v6750, %v6751
      %v6753 = vrot.slane %v6480, 2
      %v6754 = vrot.slane %v6481, 2
      %v6755 = vsel %vm683, %v6753, %v6754
      %v6756 = vrot.slane %v6482, 2
      %v6757 = vrot.slane %v6483, 2
      %v6758 = vsel %vm683, %v6756, %v6757
      %v6759 = vrot.slane %v6484, 2
      %v6760 = vrot.slane %v6485, 2
      %v6761 = vsel %vm683, %v6759, %v6760
      %v6762 = vrot.slane %v6486, 2
      %v6763 = vrot.slane %v6487, 2
      %v6764 = vsel %vm683, %v6762, %v6763
      %v6765 = vrot.slane %v6488, 2
      %v6766 = vrot.slane %v6489, 2
      %v6767 = vsel %vm683, %v6765, %v6766
      %v6768 = vrot.slane %v6490, 2
      %v6769 = vrot.slane %v6491, 2
      %v6770 = vsel %vm683, %v6768, %v6769
      %v6771 = vrot.slane %v6492, 2
      %v6772 = vrot.slane %v6493, 2
      %v6773 = vsel %vm683, %v6771, %v6772
      %v6774 = vrot.slane %v6494, 2
      %v6775 = vrot.slane %v6495, 2
      %v6776 = vsel %vm683, %v6774, %v6775
      %v6777 = vrot.slane %v6496, 2
      %v6778 = vrot.slane %v6497, 2
      %v6779 = vsel %vm683, %v6777, %v6778
      %v6780 = vrot.slane %v6498, 2
      %v6781 = vrot.slane %v6499, 2
      %v6782 = vsel %vm683, %v6780, %v6781
      %v6783 = vrot.slane %v6500, 2
      %v6784 = vrot.slane %v6501, 2
      %v6785 = vsel %vm683, %v6783, %v6784
      %v6786 = vrot.slane %v6502, 2
      %v6787 = vrot.slane %v6503, 2
      %v6788 = vsel %vm683, %v6786, %v6787
      %v6789 = vrot.slane %v6504, 2
      %v6790 = vrot.slane %v6505, 2
      %v6791 = vsel %vm683, %v6789, %v6790
      %v6792 = vrot.slane %v6506, 2
      %v6793 = vrot.slane %v6507, 2
      %v6794 = vsel %vm683, %v6792, %v6793
      %v6795 = vrot.slane %v6508, 2
      %v6796 = vrot.slane %v6509, 2
      %v6797 = vsel %vm683, %v6795, %v6796
      %s6830 = scalar_lea.vmem %s1, 2688
      %v6831 = vld [vmem:[%s6830] sm:$0xff]
      %v6832 = vld [vmem:[%s6830 + $0x8] sm:$0xff]
      %v6833 = vld [vmem:[%s6830 + $0x10] sm:$0xff]
      %v6834 = vld [vmem:[%s6830 + $0x18] sm:$0xff]
      %v6835 = vld [vmem:[%s6830 + $0x20] sm:$0xff]
      %v6836 = vld [vmem:[%s6830 + $0x28] sm:$0xff]
      %v6837 = vld [vmem:[%s6830 + $0x30] sm:$0xff]
      %v6838 = vld [vmem:[%s6830 + $0x38] sm:$0xff]
      %v6839 = vld [vmem:[%s6830 + $0x40] sm:$0xff]
      %v6840 = vld [vmem:[%s6830 + $0x48] sm:$0xff]
      %v6841 = vld [vmem:[%s6830 + $0x50] sm:$0xff]
      %v6842 = vld [vmem:[%s6830 + $0x58] sm:$0xff]
      %v6843 = vld [vmem:[%s6830 + $0x60] sm:$0xff]
      %v6844 = vld [vmem:[%s6830 + $0x68] sm:$0xff]
      %v6845 = vld [vmem:[%s6830 + $0x70] sm:$0xff]
      %v6846 = vld [vmem:[%s6830 + $0x78] sm:$0xff]
      %v6847 = vld [vmem:[%s6830 + $0x80] sm:$0xff]
      %v6848 = vld [vmem:[%s6830 + $0x88] sm:$0xff]
      %v6849 = vld [vmem:[%s6830 + $0x90] sm:$0xff]
      %v6850 = vld [vmem:[%s6830 + $0x98] sm:$0xff]
      %v6851 = vld [vmem:[%s6830 + $0xa0] sm:$0xff]
      %v6852 = vld [vmem:[%s6830 + $0xa8] sm:$0xff]
      %v6853 = vld [vmem:[%s6830 + $0xb0] sm:$0xff]
      %v6854 = vld [vmem:[%s6830 + $0xb8] sm:$0xff]
      %v6855 = vld [vmem:[%s6830 + $0xc0] sm:$0xff]
      %v6856 = vld [vmem:[%s6830 + $0xc8] sm:$0xff]
      %v6857 = vld [vmem:[%s6830 + $0xd0] sm:$0xff]
      %v6858 = vld [vmem:[%s6830 + $0xd8] sm:$0xff]
      %v6859 = vld [vmem:[%s6830 + $0xe0] sm:$0xff]
      %v6860 = vld [vmem:[%s6830 + $0xe8] sm:$0xff]
      %v6861 = vld [vmem:[%s6830 + $0xf0] sm:$0xff]
      %v6862 = vld [vmem:[%s6830 + $0xf8] sm:$0xff]
      %v6863 = vld [vmem:[%s6830 + $0x100] sm:$0xff]
      %v6864 = vld [vmem:[%s6830 + $0x108] sm:$0xff]
      %v6865 = vld [vmem:[%s6830 + $0x110] sm:$0xff]
      %v6866 = vld [vmem:[%s6830 + $0x118] sm:$0xff]
      %v6867 = vld [vmem:[%s6830 + $0x120] sm:$0xff]
      %v6868 = vld [vmem:[%s6830 + $0x128] sm:$0xff]
      %v6869 = vld [vmem:[%s6830 + $0x130] sm:$0xff]
      %v6870 = vld [vmem:[%s6830 + $0x138] sm:$0xff]
      %v6871 = vld [vmem:[%s6830 + $0x140] sm:$0xff]
      %v6872 = vld [vmem:[%s6830 + $0x148] sm:$0xff]
      %v6873 = vld [vmem:[%s6830 + $0x150] sm:$0xff]
      %v6874 = vld [vmem:[%s6830 + $0x158] sm:$0xff]
      %v6875 = vld [vmem:[%s6830 + $0x160] sm:$0xff]
      %v6876 = vld [vmem:[%s6830 + $0x168] sm:$0xff]
      %v6877 = vld [vmem:[%s6830 + $0x170] sm:$0xff]
      %v6878 = vld [vmem:[%s6830 + $0x178] sm:$0xff]
      %6879 = vmatpush.msra.mxu0 %v6846
      %6880 = vmatpush.msra.mxu0 %v6845
      %6881 = vmatpush.msra.mxu0 %v6844
      %6882 = vmatpush.msra.mxu0 %v6843
      %6883 = vmatpush.msra.mxu0 %v6842
      %6884 = vmatpush.msra.mxu0 %v6841
      %6885 = vmatpush.msra.mxu0 %v6840
      %6886 = vmatpush.msra.mxu0 %v6839
      %6887 = vmatpush.msra.mxu0 %v6838
      %6888 = vmatpush.msra.mxu0 %v6837
      %6889 = vmatpush.msra.mxu0 %v6836
      %6890 = vmatpush.msra.mxu0 %v6835
      %6891 = vmatpush.msra.mxu0 %v6834
      %6892 = vmatpush.msra.mxu0 %v6833
      %6893 = vmatpush.msra.mxu0 %v6832
      %6894 = vmatpush.msra.mxu0 %v6831
      %6895 = vmatmul.f32.gmra.mxu0 %v6446
      %v6896 = vpop.f32.mrf.mxu0
      %v6897 = vadd.f32 0.0, %v6896
      %6898 = vmatmul.f32.gmra.mxu0 %v6448
      %v6899 = vpop.f32.mrf.mxu0
      %v6900 = vadd.f32 0.0, %v6899
      %6901 = vmatmul.f32.gmra.mxu0 %v6450
      %v6902 = vpop.f32.mrf.mxu0
      %v6903 = vadd.f32 0.0, %v6902
      %6904 = vmatmul.f32.gmra.mxu0 %v6452
      %v6905 = vpop.f32.mrf.mxu0
      %v6906 = vadd.f32 0.0, %v6905
      %6907 = vmatmul.f32.gmra.mxu0 %v6454
      %v6908 = vpop.f32.mrf.mxu0
      %v6909 = vadd.f32 0.0, %v6908
      %6910 = vmatmul.f32.gmra.mxu0 %v6456
      %v6911 = vpop.f32.mrf.mxu0
      %v6912 = vadd.f32 0.0, %v6911
      %6913 = vmatmul.f32.gmra.mxu0 %v6458
      %v6914 = vpop.f32.mrf.mxu0
      %v6915 = vadd.f32 0.0, %v6914
      %6916 = vmatmul.f32.gmra.mxu0 %v6460
      %v6917 = vpop.f32.mrf.mxu0
      %v6918 = vadd.f32 0.0, %v6917
      %6919 = vmatmul.f32.gmra.mxu0 %v6462
      %v6920 = vpop.f32.mrf.mxu0
      %v6921 = vadd.f32 0.0, %v6920
      %6922 = vmatmul.f32.gmra.mxu0 %v6464
      %v6923 = vpop.f32.mrf.mxu0
      %v6924 = vadd.f32 0.0, %v6923
      %6925 = vmatmul.f32.gmra.mxu0 %v6466
      %v6926 = vpop.f32.mrf.mxu0
      %v6927 = vadd.f32 0.0, %v6926
      %6928 = vmatmul.f32.gmra.mxu0 %v6468
      %v6929 = vpop.f32.mrf.mxu0
      %v6930 = vadd.f32 0.0, %v6929
      %6931 = vmatmul.f32.gmra.mxu0 %v6470
      %v6932 = vpop.f32.mrf.mxu0
      %v6933 = vadd.f32 0.0, %v6932
      %6934 = vmatmul.f32.gmra.mxu0 %v6472
      %v6935 = vpop.f32.mrf.mxu0
      %v6936 = vadd.f32 0.0, %v6935
      %6937 = vmatmul.f32.gmra.mxu0 %v6474
      %v6938 = vpop.f32.mrf.mxu0
      %v6939 = vadd.f32 0.0, %v6938
      %6940 = vmatmul.f32.gmra.mxu0 %v6476
      %v6941 = vpop.f32.mrf.mxu0
      %v6942 = vadd.f32 0.0, %v6941
      %6943 = vmatmul.f32.gmra.mxu0 %v6478
      %v6944 = vpop.f32.mrf.mxu0
      %v6945 = vadd.f32 0.0, %v6944
      %6946 = vmatmul.f32.gmra.mxu0 %v6480
      %v6947 = vpop.f32.mrf.mxu0
      %v6948 = vadd.f32 0.0, %v6947
      %6949 = vmatmul.f32.gmra.mxu0 %v6482
      %v6950 = vpop.f32.mrf.mxu0
      %v6951 = vadd.f32 0.0, %v6950
      %6952 = vmatmul.f32.gmra.mxu0 %v6484
      %v6953 = vpop.f32.mrf.mxu0
      %v6954 = vadd.f32 0.0, %v6953
      %6955 = vmatmul.f32.gmra.mxu0 %v6486
      %v6956 = vpop.f32.mrf.mxu0
      %v6957 = vadd.f32 0.0, %v6956
      %6958 = vmatmul.f32.gmra.mxu0 %v6488
      %v6959 = vpop.f32.mrf.mxu0
      %v6960 = vadd.f32 0.0, %v6959
      %6961 = vmatmul.f32.gmra.mxu0 %v6490
      %v6962 = vpop.f32.mrf.mxu0
      %v6963 = vadd.f32 0.0, %v6962
      %6964 = vmatmul.f32.gmra.mxu0 %v6492
      %v6965 = vpop.f32.mrf.mxu0
      %v6966 = vadd.f32 0.0, %v6965
      %6967 = vmatmul.f32.gmra.mxu0 %v6494
      %v6968 = vpop.f32.mrf.mxu0
      %v6969 = vadd.f32 0.0, %v6968
      %6970 = vmatmul.f32.gmra.mxu0 %v6496
      %v6971 = vpop.f32.mrf.mxu0
      %v6972 = vadd.f32 0.0, %v6971
      %6973 = vmatmul.f32.gmra.mxu0 %v6498
      %v6974 = vpop.f32.mrf.mxu0
      %v6975 = vadd.f32 0.0, %v6974
      %6976 = vmatmul.f32.gmra.mxu0 %v6500
      %v6977 = vpop.f32.mrf.mxu0
      %v6978 = vadd.f32 0.0, %v6977
      %6979 = vmatmul.f32.gmra.mxu0 %v6502
      %v6980 = vpop.f32.mrf.mxu0
      %v6981 = vadd.f32 0.0, %v6980
      %6982 = vmatmul.f32.gmra.mxu0 %v6504
      %v6983 = vpop.f32.mrf.mxu0
      %v6984 = vadd.f32 0.0, %v6983
      %6985 = vmatmul.f32.gmra.mxu0 %v6506
      %v6986 = vpop.f32.mrf.mxu0
      %v6987 = vadd.f32 0.0, %v6986
      %6988 = vmatmul.f32.gmra.mxu0 %v6508
      %v6989 = vpop.f32.mrf.mxu0
      %v6990 = vadd.f32 0.0, %v6989
      %6991 = vdwg.mxu0
      %6992 = vmatpush.msra.mxu0 %v6862
      %6993 = vmatpush.msra.mxu0 %v6861
      %6994 = vmatpush.msra.mxu0 %v6860
      %6995 = vmatpush.msra.mxu0 %v6859
      %6996 = vmatpush.msra.mxu0 %v6858
      %6997 = vmatpush.msra.mxu0 %v6857
      %6998 = vmatpush.msra.mxu0 %v6856
      %6999 = vmatpush.msra.mxu0 %v6855
      %7000 = vmatpush.msra.mxu0 %v6854
      %7001 = vmatpush.msra.mxu0 %v6853
      %7002 = vmatpush.msra.mxu0 %v6852
      %7003 = vmatpush.msra.mxu0 %v6851
      %7004 = vmatpush.msra.mxu0 %v6850
      %7005 = vmatpush.msra.mxu0 %v6849
      %7006 = vmatpush.msra.mxu0 %v6848
      %7007 = vmatpush.msra.mxu0 %v6847
      %7008 = vmatmul.f32.gmra.mxu0 %v6576
      %v7009 = vpop.f32.mrf.mxu0
      %v7010 = vadd.f32 %v6897, %v7009
      %7011 = vmatmul.f32.gmra.mxu0 %v6579
      %v7012 = vpop.f32.mrf.mxu0
      %v7013 = vadd.f32 %v6900, %v7012
      %7014 = vmatmul.f32.gmra.mxu0 %v6582
      %v7015 = vpop.f32.mrf.mxu0
      %v7016 = vadd.f32 %v6903, %v7015
      %7017 = vmatmul.f32.gmra.mxu0 %v6585
      %v7018 = vpop.f32.mrf.mxu0
      %v7019 = vadd.f32 %v6906, %v7018
      %7020 = vmatmul.f32.gmra.mxu0 %v6588
      %v7021 = vpop.f32.mrf.mxu0
      %v7022 = vadd.f32 %v6909, %v7021
      %7023 = vmatmul.f32.gmra.mxu0 %v6591
      %v7024 = vpop.f32.mrf.mxu0
      %v7025 = vadd.f32 %v6912, %v7024
      %7026 = vmatmul.f32.gmra.mxu0 %v6594
      %v7027 = vpop.f32.mrf.mxu0
      %v7028 = vadd.f32 %v6915, %v7027
      %7029 = vmatmul.f32.gmra.mxu0 %v6597
      %v7030 = vpop.f32.mrf.mxu0
      %v7031 = vadd.f32 %v6918, %v7030
      %7032 = vmatmul.f32.gmra.mxu0 %v6600
      %v7033 = vpop.f32.mrf.mxu0
      %v7034 = vadd.f32 %v6921, %v7033
      %7035 = vmatmul.f32.gmra.mxu0 %v6603
      %v7036 = vpop.f32.mrf.mxu0
      %v7037 = vadd.f32 %v6924, %v7036
      %7038 = vmatmul.f32.gmra.mxu0 %v6606
      %v7039 = vpop.f32.mrf.mxu0
      %v7040 = vadd.f32 %v6927, %v7039
      %7041 = vmatmul.f32.gmra.mxu0 %v6609
      %v7042 = vpop.f32.mrf.mxu0
      %v7043 = vadd.f32 %v6930, %v7042
      %7044 = vmatmul.f32.gmra.mxu0 %v6612
      %v7045 = vpop.f32.mrf.mxu0
      %v7046 = vadd.f32 %v6933, %v7045
      %7047 = vmatmul.f32.gmra.mxu0 %v6615
      %v7048 = vpop.f32.mrf.mxu0
      %v7049 = vadd.f32 %v6936, %v7048
      %7050 = vmatmul.f32.gmra.mxu0 %v6618
      %v7051 = vpop.f32.mrf.mxu0
      %v7052 = vadd.f32 %v6939, %v7051
      %7053 = vmatmul.f32.gmra.mxu0 %v6621
      %v7054 = vpop.f32.mrf.mxu0
      %v7055 = vadd.f32 %v6942, %v7054
      %7056 = vmatmul.f32.gmra.mxu0 %v6624
      %v7057 = vpop.f32.mrf.mxu0
      %v7058 = vadd.f32 %v6945, %v7057
      %7059 = vmatmul.f32.gmra.mxu0 %v6627
      %v7060 = vpop.f32.mrf.mxu0
      %v7061 = vadd.f32 %v6948, %v7060
      %7062 = vmatmul.f32.gmra.mxu0 %v6630
      %v7063 = vpop.f32.mrf.mxu0
      %v7064 = vadd.f32 %v6951, %v7063
      %7065 = vmatmul.f32.gmra.mxu0 %v6633
      %v7066 = vpop.f32.mrf.mxu0
      %v7067 = vadd.f32 %v6954, %v7066
      %7068 = vmatmul.f32.gmra.mxu0 %v6636
      %v7069 = vpop.f32.mrf.mxu0
      %v7070 = vadd.f32 %v6957, %v7069
      %7071 = vmatmul.f32.gmra.mxu0 %v6639
      %v7072 = vpop.f32.mrf.mxu0
      %v7073 = vadd.f32 %v6960, %v7072
      %7074 = vmatmul.f32.gmra.mxu0 %v6642
      %v7075 = vpop.f32.mrf.mxu0
      %v7076 = vadd.f32 %v6963, %v7075
      %7077 = vmatmul.f32.gmra.mxu0 %v6645
      %v7078 = vpop.f32.mrf.mxu0
      %v7079 = vadd.f32 %v6966, %v7078
      %7080 = vmatmul.f32.gmra.mxu0 %v6648
      %v7081 = vpop.f32.mrf.mxu0
      %v7082 = vadd.f32 %v6969, %v7081
      %7083 = vmatmul.f32.gmra.mxu0 %v6651
      %v7084 = vpop.f32.mrf.mxu0
      %v7085 = vadd.f32 %v6972, %v7084
      %7086 = vmatmul.f32.gmra.mxu0 %v6654
      %v7087 = vpop.f32.mrf.mxu0
      %v7088 = vadd.f32 %v6975, %v7087
      %7089 = vmatmul.f32.gmra.mxu0 %v6657
      %v7090 = vpop.f32.mrf.mxu0
      %v7091 = vadd.f32 %v6978, %v7090
      %7092 = vmatmul.f32.gmra.mxu0 %v6660
      %v7093 = vpop.f32.mrf.mxu0
      %v7094 = vadd.f32 %v6981, %v7093
      %7095 = vmatmul.f32.gmra.mxu0 %v6663
      %v7096 = vpop.f32.mrf.mxu0
      %v7097 = vadd.f32 %v6984, %v7096
      %7098 = vmatmul.f32.gmra.mxu0 %v6666
      %v7099 = vpop.f32.mrf.mxu0
      %v7100 = vadd.f32 %v6987, %v7099
      %7101 = vmatmul.f32.gmra.mxu0 %v6669
      %v7102 = vpop.f32.mrf.mxu0
      %v7103 = vadd.f32 %v6990, %v7102
      %7104 = vdwg.mxu0
      %7105 = vmatpush.msra.mxu0 %v6878
      %7106 = vmatpush.msra.mxu0 %v6877
      %7107 = vmatpush.msra.mxu0 %v6876
      %7108 = vmatpush.msra.mxu0 %v6875
      %7109 = vmatpush.msra.mxu0 %v6874
      %7110 = vmatpush.msra.mxu0 %v6873
      %7111 = vmatpush.msra.mxu0 %v6872
      %7112 = vmatpush.msra.mxu0 %v6871
      %7113 = vmatpush.msra.mxu0 %v6870
      %7114 = vmatpush.msra.mxu0 %v6869
      %7115 = vmatpush.msra.mxu0 %v6868
      %7116 = vmatpush.msra.mxu0 %v6867
      %7117 = vmatpush.msra.mxu0 %v6866
      %7118 = vmatpush.msra.mxu0 %v6865
      %7119 = vmatpush.msra.mxu0 %v6864
      %7120 = vmatpush.msra.mxu0 %v6863
      %7121 = vmatmul.f32.gmra.mxu0 %v6704
      %v7122 = vpop.f32.mrf.mxu0
      %v7123 = vadd.f32 %v7010, %v7122
      %7124 = vmatmul.f32.gmra.mxu0 %v6707
      %v7125 = vpop.f32.mrf.mxu0
      %v7126 = vadd.f32 %v7013, %v7125
      %7127 = vmatmul.f32.gmra.mxu0 %v6710
      %v7128 = vpop.f32.mrf.mxu0
      %v7129 = vadd.f32 %v7016, %v7128
      %7130 = vmatmul.f32.gmra.mxu0 %v6713
      %v7131 = vpop.f32.mrf.mxu0
      %v7132 = vadd.f32 %v7019, %v7131
      %7133 = vmatmul.f32.gmra.mxu0 %v6716
      %v7134 = vpop.f32.mrf.mxu0
      %v7135 = vadd.f32 %v7022, %v7134
      %7136 = vmatmul.f32.gmra.mxu0 %v6719
      %v7137 = vpop.f32.mrf.mxu0
      %v7138 = vadd.f32 %v7025, %v7137
      %7139 = vmatmul.f32.gmra.mxu0 %v6722
      %v7140 = vpop.f32.mrf.mxu0
      %v7141 = vadd.f32 %v7028, %v7140
      %7142 = vmatmul.f32.gmra.mxu0 %v6725
      %v7143 = vpop.f32.mrf.mxu0
      %v7144 = vadd.f32 %v7031, %v7143
      %7145 = vmatmul.f32.gmra.mxu0 %v6728
      %v7146 = vpop.f32.mrf.mxu0
      %v7147 = vadd.f32 %v7034, %v7146
      %7148 = vmatmul.f32.gmra.mxu0 %v6731
      %v7149 = vpop.f32.mrf.mxu0
      %v7150 = vadd.f32 %v7037, %v7149
      %7151 = vmatmul.f32.gmra.mxu0 %v6734
      %v7152 = vpop.f32.mrf.mxu0
      %v7153 = vadd.f32 %v7040, %v7152
      %7154 = vmatmul.f32.gmra.mxu0 %v6737
      %v7155 = vpop.f32.mrf.mxu0
      %v7156 = vadd.f32 %v7043, %v7155
      %7157 = vmatmul.f32.gmra.mxu0 %v6740
      %v7158 = vpop.f32.mrf.mxu0
      %v7159 = vadd.f32 %v7046, %v7158
      %7160 = vmatmul.f32.gmra.mxu0 %v6743
      %v7161 = vpop.f32.mrf.mxu0
      %v7162 = vadd.f32 %v7049, %v7161
      %7163 = vmatmul.f32.gmra.mxu0 %v6746
      %v7164 = vpop.f32.mrf.mxu0
      %v7165 = vadd.f32 %v7052, %v7164
      %7166 = vmatmul.f32.gmra.mxu0 %v6749
      %v7167 = vpop.f32.mrf.mxu0
      %v7168 = vadd.f32 %v7055, %v7167
      %7169 = vmatmul.f32.gmra.mxu0 %v6752
      %v7170 = vpop.f32.mrf.mxu0
      %v7171 = vadd.f32 %v7058, %v7170
      %7172 = vmatmul.f32.gmra.mxu0 %v6755
      %v7173 = vpop.f32.mrf.mxu0
      %v7174 = vadd.f32 %v7061, %v7173
      %7175 = vmatmul.f32.gmra.mxu0 %v6758
      %v7176 = vpop.f32.mrf.mxu0
      %v7177 = vadd.f32 %v7064, %v7176
      %7178 = vmatmul.f32.gmra.mxu0 %v6761
      %v7179 = vpop.f32.mrf.mxu0
      %v7180 = vadd.f32 %v7067, %v7179
      %7181 = vmatmul.f32.gmra.mxu0 %v6764
      %v7182 = vpop.f32.mrf.mxu0
      %v7183 = vadd.f32 %v7070, %v7182
      %7184 = vmatmul.f32.gmra.mxu0 %v6767
      %v7185 = vpop.f32.mrf.mxu0
      %v7186 = vadd.f32 %v7073, %v7185
      %7187 = vmatmul.f32.gmra.mxu0 %v6770
      %v7188 = vpop.f32.mrf.mxu0
      %v7189 = vadd.f32 %v7076, %v7188
      %7190 = vmatmul.f32.gmra.mxu0 %v6773
      %v7191 = vpop.f32.mrf.mxu0
      %v7192 = vadd.f32 %v7079, %v7191
      %7193 = vmatmul.f32.gmra.mxu0 %v6776
      %v7194 = vpop.f32.mrf.mxu0
      %v7195 = vadd.f32 %v7082, %v7194
      %7196 = vmatmul.f32.gmra.mxu0 %v6779
      %v7197 = vpop.f32.mrf.mxu0
      %v7198 = vadd.f32 %v7085, %v7197
      %7199 = vmatmul.f32.gmra.mxu0 %v6782
      %v7200 = vpop.f32.mrf.mxu0
      %v7201 = vadd.f32 %v7088, %v7200
      %7202 = vmatmul.f32.gmra.mxu0 %v6785
      %v7203 = vpop.f32.mrf.mxu0
      %v7204 = vadd.f32 %v7091, %v7203
      %7205 = vmatmul.f32.gmra.mxu0 %v6788
      %v7206 = vpop.f32.mrf.mxu0
      %v7207 = vadd.f32 %v7094, %v7206
      %7208 = vmatmul.f32.gmra.mxu0 %v6791
      %v7209 = vpop.f32.mrf.mxu0
      %v7210 = vadd.f32 %v7097, %v7209
      %7211 = vmatmul.f32.gmra.mxu0 %v6794
      %v7212 = vpop.f32.mrf.mxu0
      %v7213 = vadd.f32 %v7100, %v7212
      %7214 = vmatmul.f32.gmra.mxu0 %v6797
      %v7215 = vpop.f32.mrf.mxu0
      %v7216 = vadd.f32 %v7103, %v7215
      %7217 = vdwg.mxu0
      %v7218 = vld [vmem:[#allocation3] sm:$0xff]
      %v7219 = vld [vmem:[#allocation3 + $0x8] sm:$0xff]
      %v7220 = vld [vmem:[#allocation3 + $0x10] sm:$0xff]
      %v7221 = vld [vmem:[#allocation3 + $0x18] sm:$0xff]
      %v7222 = vld [vmem:[#allocation3 + $0x20] sm:$0xff]
      %v7223 = vld [vmem:[#allocation3 + $0x28] sm:$0xff]
      %v7224 = vld [vmem:[#allocation3 + $0x30] sm:$0xff]
      %v7225 = vld [vmem:[#allocation3 + $0x38] sm:$0xff]
      %v7226 = vld [vmem:[#allocation3 + $0x40] sm:$0xff]
      %v7227 = vld [vmem:[#allocation3 + $0x48] sm:$0xff]
      %v7228 = vld [vmem:[#allocation3 + $0x50] sm:$0xff]
      %v7229 = vld [vmem:[#allocation3 + $0x58] sm:$0xff]
      %v7230 = vld [vmem:[#allocation3 + $0x60] sm:$0xff]
      %v7231 = vld [vmem:[#allocation3 + $0x68] sm:$0xff]
      %v7232 = vld [vmem:[#allocation3 + $0x70] sm:$0xff]
      %v7233 = vld [vmem:[#allocation3 + $0x78] sm:$0xff]
      %v7234 = vld [vmem:[#allocation3 + $0x80] sm:$0xff]
      %v7235 = vld [vmem:[#allocation3 + $0x88] sm:$0xff]
      %v7236 = vld [vmem:[#allocation3 + $0x90] sm:$0xff]
      %v7237 = vld [vmem:[#allocation3 + $0x98] sm:$0xff]
      %v7238 = vld [vmem:[#allocation3 + $0xa0] sm:$0xff]
      %v7239 = vld [vmem:[#allocation3 + $0xa8] sm:$0xff]
      %v7240 = vld [vmem:[#allocation3 + $0xb0] sm:$0xff]
      %v7241 = vld [vmem:[#allocation3 + $0xb8] sm:$0xff]
      %v7242 = vld [vmem:[#allocation3 + $0xc0] sm:$0xff]
      %v7243 = vld [vmem:[#allocation3 + $0xc8] sm:$0xff]
      %v7244 = vld [vmem:[#allocation3 + $0xd0] sm:$0xff]
      %v7245 = vld [vmem:[#allocation3 + $0xd8] sm:$0xff]
      %v7246 = vld [vmem:[#allocation3 + $0xe0] sm:$0xff]
      %v7247 = vld [vmem:[#allocation3 + $0xe8] sm:$0xff]
      %v7248 = vld [vmem:[#allocation3 + $0xf0] sm:$0xff]
      %v7249 = vld [vmem:[#allocation3 + $0xf8] sm:$0xff]
      %v7250 = vadd.f32 %v7218, %v7123
      %v7251 = vadd.f32 %v7219, %v7126
      %v7252 = vadd.f32 %v7220, %v7129
      %v7253 = vadd.f32 %v7221, %v7132
      %v7254 = vadd.f32 %v7222, %v7135
      %v7255 = vadd.f32 %v7223, %v7138
      %v7256 = vadd.f32 %v7224, %v7141
      %v7257 = vadd.f32 %v7225, %v7144
      %v7258 = vadd.f32 %v7226, %v7147
      %v7259 = vadd.f32 %v7227, %v7150
      %v7260 = vadd.f32 %v7228, %v7153
      %v7261 = vadd.f32 %v7229, %v7156
      %v7262 = vadd.f32 %v7230, %v7159
      %v7263 = vadd.f32 %v7231, %v7162
      %v7264 = vadd.f32 %v7232, %v7165
      %v7265 = vadd.f32 %v7233, %v7168
      %v7266 = vadd.f32 %v7234, %v7171
      %v7267 = vadd.f32 %v7235, %v7174
      %v7268 = vadd.f32 %v7236, %v7177
      %v7269 = vadd.f32 %v7237, %v7180
      %v7270 = vadd.f32 %v7238, %v7183
      %v7271 = vadd.f32 %v7239, %v7186
      %v7272 = vadd.f32 %v7240, %v7189
      %v7273 = vadd.f32 %v7241, %v7192
      %v7274 = vadd.f32 %v7242, %v7195
      %v7275 = vadd.f32 %v7243, %v7198
      %v7276 = vadd.f32 %v7244, %v7201
      %v7277 = vadd.f32 %v7245, %v7204
      %v7278 = vadd.f32 %v7246, %v7207
      %v7279 = vadd.f32 %v7247, %v7210
      %v7280 = vadd.f32 %v7248, %v7213
      %v7281 = vadd.f32 %v7249, %v7216
      %7282 = vst [vmem:[#allocation3] sm:$0xff] %v7250
      %7283 = vst [vmem:[#allocation3 + $0x8] sm:$0xff] %v7251
      %7284 = vst [vmem:[#allocation3 + $0x10] sm:$0xff] %v7252
      %7285 = vst [vmem:[#allocation3 + $0x18] sm:$0xff] %v7253
      %7286 = vst [vmem:[#allocation3 + $0x20] sm:$0xff] %v7254
      %7287 = vst [vmem:[#allocation3 + $0x28] sm:$0xff] %v7255
      %7288 = vst [vmem:[#allocation3 + $0x30] sm:$0xff] %v7256
      %7289 = vst [vmem:[#allocation3 + $0x38] sm:$0xff] %v7257
      %7290 = vst [vmem:[#allocation3 + $0x40] sm:$0xff] %v7258
      %7291 = vst [vmem:[#allocation3 + $0x48] sm:$0xff] %v7259
      %7292 = vst [vmem:[#allocation3 + $0x50] sm:$0xff] %v7260
      %7293 = vst [vmem:[#allocation3 + $0x58] sm:$0xff] %v7261
      %7294 = vst [vmem:[#allocation3 + $0x60] sm:$0xff] %v7262
      %7295 = vst [vmem:[#allocation3 + $0x68] sm:$0xff] %v7263
      %7296 = vst [vmem:[#allocation3 + $0x70] sm:$0xff] %v7264
      %7297 = vst [vmem:[#allocation3 + $0x78] sm:$0xff] %v7265
      %7298 = vst [vmem:[#allocation3 + $0x80] sm:$0xff] %v7266
      %7299 = vst [vmem:[#allocation3 + $0x88] sm:$0xff] %v7267
      %7300 = vst [vmem:[#allocation3 + $0x90] sm:$0xff] %v7268
      %7301 = vst [vmem:[#allocation3 + $0x98] sm:$0xff] %v7269
      %7302 = vst [vmem:[#allocation3 + $0xa0] sm:$0xff] %v7270
      %7303 = vst [vmem:[#allocation3 + $0xa8] sm:$0xff] %v7271
      %7304 = vst [vmem:[#allocation3 + $0xb0] sm:$0xff] %v7272
      %7305 = vst [vmem:[#allocation3 + $0xb8] sm:$0xff] %v7273
      %7306 = vst [vmem:[#allocation3 + $0xc0] sm:$0xff] %v7274
      %7307 = vst [vmem:[#allocation3 + $0xc8] sm:$0xff] %v7275
      %7308 = vst [vmem:[#allocation3 + $0xd0] sm:$0xff] %v7276
      %7309 = vst [vmem:[#allocation3 + $0xd8] sm:$0xff] %v7277
      %7310 = vst [vmem:[#allocation3 + $0xe0] sm:$0xff] %v7278
      %7311 = vst [vmem:[#allocation3 + $0xe8] sm:$0xff] %v7279
      %7312 = vst [vmem:[#allocation3 + $0xf0] sm:$0xff] %v7280
      %7313 = vst [vmem:[#allocation3 + $0xf8] sm:$0xff] %v7281
      %s7314 = scalar_lea.vmem [#allocation2], 352
      %v7315 = vld [vmem:[%s7314] sm:$0xff]
      %v7316 = vld [vmem:[%s7314 + $0x8] sm:$0x3]
      %v7317 = vld [vmem:[%s7314 + $0x10] sm:$0xff]
      %v7318 = vld [vmem:[%s7314 + $0x18] sm:$0x3]
      %v7319 = vld [vmem:[%s7314 + $0x20] sm:$0xff]
      %v7320 = vld [vmem:[%s7314 + $0x28] sm:$0x3]
      %v7321 = vld [vmem:[%s7314 + $0x30] sm:$0xff]
      %v7322 = vld [vmem:[%s7314 + $0x38] sm:$0x3]
      %v7323 = vld [vmem:[%s7314 + $0x40] sm:$0xff]
      %v7324 = vld [vmem:[%s7314 + $0x48] sm:$0x3]
      %v7325 = vld [vmem:[%s7314 + $0x50] sm:$0xff]
      %v7326 = vld [vmem:[%s7314 + $0x58] sm:$0x3]
      %v7327 = vld [vmem:[%s7314 + $0x60] sm:$0xff]
      %v7328 = vld [vmem:[%s7314 + $0x68] sm:$0x3]
      %v7329 = vld [vmem:[%s7314 + $0x70] sm:$0xff]
      %v7330 = vld [vmem:[%s7314 + $0x78] sm:$0x3]
      %v7331 = vld [vmem:[%s7314 + $0xa0] sm:$0xff]
      %v7332 = vld [vmem:[%s7314 + $0xa8] sm:$0x3]
      %v7333 = vld [vmem:[%s7314 + $0xb0] sm:$0xff]
      %v7334 = vld [vmem:[%s7314 + $0xb8] sm:$0x3]
      %v7335 = vld [vmem:[%s7314 + $0xc0] sm:$0xff]
      %v7336 = vld [vmem:[%s7314 + $0xc8] sm:$0x3]
      %v7337 = vld [vmem:[%s7314 + $0xd0] sm:$0xff]
      %v7338 = vld [vmem:[%s7314 + $0xd8] sm:$0x3]
      %v7339 = vld [vmem:[%s7314 + $0xe0] sm:$0xff]
      %v7340 = vld [vmem:[%s7314 + $0xe8] sm:$0x3]
      %v7341 = vld [vmem:[%s7314 + $0xf0] sm:$0xff]
      %v7342 = vld [vmem:[%s7314 + $0xf8] sm:$0x3]
      %v7343 = vld [vmem:[%s7314 + $0x100] sm:$0xff]
      %v7344 = vld [vmem:[%s7314 + $0x108] sm:$0x3]
      %v7345 = vld [vmem:[%s7314 + $0x110] sm:$0xff]
      %v7346 = vld [vmem:[%s7314 + $0x118] sm:$0x3]
      %v7347 = vld [vmem:[%s7314 + $0x140] sm:$0xff]
      %v7348 = vld [vmem:[%s7314 + $0x148] sm:$0x3]
      %v7349 = vld [vmem:[%s7314 + $0x150] sm:$0xff]
      %v7350 = vld [vmem:[%s7314 + $0x158] sm:$0x3]
      %v7351 = vld [vmem:[%s7314 + $0x160] sm:$0xff]
      %v7352 = vld [vmem:[%s7314 + $0x168] sm:$0x3]
      %v7353 = vld [vmem:[%s7314 + $0x170] sm:$0xff]
      %v7354 = vld [vmem:[%s7314 + $0x178] sm:$0x3]
      %v7355 = vld [vmem:[%s7314 + $0x180] sm:$0xff]
      %v7356 = vld [vmem:[%s7314 + $0x188] sm:$0x3]
      %v7357 = vld [vmem:[%s7314 + $0x190] sm:$0xff]
      %v7358 = vld [vmem:[%s7314 + $0x198] sm:$0x3]
      %v7359 = vld [vmem:[%s7314 + $0x1a0] sm:$0xff]
      %v7360 = vld [vmem:[%s7314 + $0x1a8] sm:$0x3]
      %v7361 = vld [vmem:[%s7314 + $0x1b0] sm:$0xff]
      %v7362 = vld [vmem:[%s7314 + $0x1b8] sm:$0x3]
      %v7363 = vld [vmem:[%s7314 + $0x1e0] sm:$0xff]
      %v7364 = vld [vmem:[%s7314 + $0x1e8] sm:$0x3]
      %v7365 = vld [vmem:[%s7314 + $0x1f0] sm:$0xff]
      %v7366 = vld [vmem:[%s7314 + $0x1f8] sm:$0x3]
      %v7367 = vld [vmem:[%s7314 + $0x200] sm:$0xff]
      %v7368 = vld [vmem:[%s7314 + $0x208] sm:$0x3]
      %v7369 = vld [vmem:[%s7314 + $0x210] sm:$0xff]
      %v7370 = vld [vmem:[%s7314 + $0x218] sm:$0x3]
      %v7371 = vld [vmem:[%s7314 + $0x220] sm:$0xff]
      %v7372 = vld [vmem:[%s7314 + $0x228] sm:$0x3]
      %v7373 = vld [vmem:[%s7314 + $0x230] sm:$0xff]
      %v7374 = vld [vmem:[%s7314 + $0x238] sm:$0x3]
      %v7375 = vld [vmem:[%s7314 + $0x240] sm:$0xff]
      %v7376 = vld [vmem:[%s7314 + $0x248] sm:$0x3]
      %v7377 = vld [vmem:[%s7314 + $0x250] sm:$0xff]
      %v7378 = vld [vmem:[%s7314 + $0x258] sm:$0x3]
      %v7443 = vrot.slane %v7315, 1
      %v7444 = vrot.slane %v7316, 1
      %v7445 = vsel %vm554, %v7443, %v7444
      %v7446 = vrot.slane %v7317, 1
      %v7447 = vrot.slane %v7318, 1
      %v7448 = vsel %vm554, %v7446, %v7447
      %v7449 = vrot.slane %v7319, 1
      %v7450 = vrot.slane %v7320, 1
      %v7451 = vsel %vm554, %v7449, %v7450
      %v7452 = vrot.slane %v7321, 1
      %v7453 = vrot.slane %v7322, 1
      %v7454 = vsel %vm554, %v7452, %v7453
      %v7455 = vrot.slane %v7323, 1
      %v7456 = vrot.slane %v7324, 1
      %v7457 = vsel %vm554, %v7455, %v7456
      %v7458 = vrot.slane %v7325, 1
      %v7459 = vrot.slane %v7326, 1
      %v7460 = vsel %vm554, %v7458, %v7459
      %v7461 = vrot.slane %v7327, 1
      %v7462 = vrot.slane %v7328, 1
      %v7463 = vsel %vm554, %v7461, %v7462
      %v7464 = vrot.slane %v7329, 1
      %v7465 = vrot.slane %v7330, 1
      %v7466 = vsel %vm554, %v7464, %v7465
      %v7467 = vrot.slane %v7331, 1
      %v7468 = vrot.slane %v7332, 1
      %v7469 = vsel %vm554, %v7467, %v7468
      %v7470 = vrot.slane %v7333, 1
      %v7471 = vrot.slane %v7334, 1
      %v7472 = vsel %vm554, %v7470, %v7471
      %v7473 = vrot.slane %v7335, 1
      %v7474 = vrot.slane %v7336, 1
      %v7475 = vsel %vm554, %v7473, %v7474
      %v7476 = vrot.slane %v7337, 1
      %v7477 = vrot.slane %v7338, 1
      %v7478 = vsel %vm554, %v7476, %v7477
      %v7479 = vrot.slane %v7339, 1
      %v7480 = vrot.slane %v7340, 1
      %v7481 = vsel %vm554, %v7479, %v7480
      %v7482 = vrot.slane %v7341, 1
      %v7483 = vrot.slane %v7342, 1
      %v7484 = vsel %vm554, %v7482, %v7483
      %v7485 = vrot.slane %v7343, 1
      %v7486 = vrot.slane %v7344, 1
      %v7487 = vsel %vm554, %v7485, %v7486
      %v7488 = vrot.slane %v7345, 1
      %v7489 = vrot.slane %v7346, 1
      %v7490 = vsel %vm554, %v7488, %v7489
      %v7491 = vrot.slane %v7347, 1
      %v7492 = vrot.slane %v7348, 1
      %v7493 = vsel %vm554, %v7491, %v7492
      %v7494 = vrot.slane %v7349, 1
      %v7495 = vrot.slane %v7350, 1
      %v7496 = vsel %vm554, %v7494, %v7495
      %v7497 = vrot.slane %v7351, 1
      %v7498 = vrot.slane %v7352, 1
      %v7499 = vsel %vm554, %v7497, %v7498
      %v7500 = vrot.slane %v7353, 1
      %v7501 = vrot.slane %v7354, 1
      %v7502 = vsel %vm554, %v7500, %v7501
      %v7503 = vrot.slane %v7355, 1
      %v7504 = vrot.slane %v7356, 1
      %v7505 = vsel %vm554, %v7503, %v7504
      %v7506 = vrot.slane %v7357, 1
      %v7507 = vrot.slane %v7358, 1
      %v7508 = vsel %vm554, %v7506, %v7507
      %v7509 = vrot.slane %v7359, 1
      %v7510 = vrot.slane %v7360, 1
      %v7511 = vsel %vm554, %v7509, %v7510
      %v7512 = vrot.slane %v7361, 1
      %v7513 = vrot.slane %v7362, 1
      %v7514 = vsel %vm554, %v7512, %v7513
      %v7515 = vrot.slane %v7363, 1
      %v7516 = vrot.slane %v7364, 1
      %v7517 = vsel %vm554, %v7515, %v7516
      %v7518 = vrot.slane %v7365, 1
      %v7519 = vrot.slane %v7366, 1
      %v7520 = vsel %vm554, %v7518, %v7519
      %v7521 = vrot.slane %v7367, 1
      %v7522 = vrot.slane %v7368, 1
      %v7523 = vsel %vm554, %v7521, %v7522
      %v7524 = vrot.slane %v7369, 1
      %v7525 = vrot.slane %v7370, 1
      %v7526 = vsel %vm554, %v7524, %v7525
      %v7527 = vrot.slane %v7371, 1
      %v7528 = vrot.slane %v7372, 1
      %v7529 = vsel %vm554, %v7527, %v7528
      %v7530 = vrot.slane %v7373, 1
      %v7531 = vrot.slane %v7374, 1
      %v7532 = vsel %vm554, %v7530, %v7531
      %v7533 = vrot.slane %v7375, 1
      %v7534 = vrot.slane %v7376, 1
      %v7535 = vsel %vm554, %v7533, %v7534
      %v7536 = vrot.slane %v7377, 1
      %v7537 = vrot.slane %v7378, 1
      %v7538 = vsel %vm554, %v7536, %v7537
      %v7571 = vrot.slane %v7315, 2
      %v7572 = vrot.slane %v7316, 2
      %v7573 = vsel %vm683, %v7571, %v7572
      %v7574 = vrot.slane %v7317, 2
      %v7575 = vrot.slane %v7318, 2
      %v7576 = vsel %vm683, %v7574, %v7575
      %v7577 = vrot.slane %v7319, 2
      %v7578 = vrot.slane %v7320, 2
      %v7579 = vsel %vm683, %v7577, %v7578
      %v7580 = vrot.slane %v7321, 2
      %v7581 = vrot.slane %v7322, 2
      %v7582 = vsel %vm683, %v7580, %v7581
      %v7583 = vrot.slane %v7323, 2
      %v7584 = vrot.slane %v7324, 2
      %v7585 = vsel %vm683, %v7583, %v7584
      %v7586 = vrot.slane %v7325, 2
      %v7587 = vrot.slane %v7326, 2
      %v7588 = vsel %vm683, %v7586, %v7587
      %v7589 = vrot.slane %v7327, 2
      %v7590 = vrot.slane %v7328, 2
      %v7591 = vsel %vm683, %v7589, %v7590
      %v7592 = vrot.slane %v7329, 2
      %v7593 = vrot.slane %v7330, 2
      %v7594 = vsel %vm683, %v7592, %v7593
      %v7595 = vrot.slane %v7331, 2
      %v7596 = vrot.slane %v7332, 2
      %v7597 = vsel %vm683, %v7595, %v7596
      %v7598 = vrot.slane %v7333, 2
      %v7599 = vrot.slane %v7334, 2
      %v7600 = vsel %vm683, %v7598, %v7599
      %v7601 = vrot.slane %v7335, 2
      %v7602 = vrot.slane %v7336, 2
      %v7603 = vsel %vm683, %v7601, %v7602
      %v7604 = vrot.slane %v7337, 2
      %v7605 = vrot.slane %v7338, 2
      %v7606 = vsel %vm683, %v7604, %v7605
      %v7607 = vrot.slane %v7339, 2
      %v7608 = vrot.slane %v7340, 2
      %v7609 = vsel %vm683, %v7607, %v7608
      %v7610 = vrot.slane %v7341, 2
      %v7611 = vrot.slane %v7342, 2
      %v7612 = vsel %vm683, %v7610, %v7611
      %v7613 = vrot.slane %v7343, 2
      %v7614 = vrot.slane %v7344, 2
      %v7615 = vsel %vm683, %v7613, %v7614
      %v7616 = vrot.slane %v7345, 2
      %v7617 = vrot.slane %v7346, 2
      %v7618 = vsel %vm683, %v7616, %v7617
      %v7619 = vrot.slane %v7347, 2
      %v7620 = vrot.slane %v7348, 2
      %v7621 = vsel %vm683, %v7619, %v7620
      %v7622 = vrot.slane %v7349, 2
      %v7623 = vrot.slane %v7350, 2
      %v7624 = vsel %vm683, %v7622, %v7623
      %v7625 = vrot.slane %v7351, 2
      %v7626 = vrot.slane %v7352, 2
      %v7627 = vsel %vm683, %v7625, %v7626
      %v7628 = vrot.slane %v7353, 2
      %v7629 = vrot.slane %v7354, 2
      %v7630 = vsel %vm683, %v7628, %v7629
      %v7631 = vrot.slane %v7355, 2
      %v7632 = vrot.slane %v7356, 2
      %v7633 = vsel %vm683, %v7631, %v7632
      %v7634 = vrot.slane %v7357, 2
      %v7635 = vrot.slane %v7358, 2
      %v7636 = vsel %vm683, %v7634, %v7635
      %v7637 = vrot.slane %v7359, 2
      %v7638 = vrot.slane %v7360, 2
      %v7639 = vsel %vm683, %v7637, %v7638
      %v7640 = vrot.slane %v7361, 2
      %v7641 = vrot.slane %v7362, 2
      %v7642 = vsel %vm683, %v7640, %v7641
      %v7643 = vrot.slane %v7363, 2
      %v7644 = vrot.slane %v7364, 2
      %v7645 = vsel %vm683, %v7643, %v7644
      %v7646 = vrot.slane %v7365, 2
      %v7647 = vrot.slane %v7366, 2
      %v7648 = vsel %vm683, %v7646, %v7647
      %v7649 = vrot.slane %v7367, 2
      %v7650 = vrot.slane %v7368, 2
      %v7651 = vsel %vm683, %v7649, %v7650
      %v7652 = vrot.slane %v7369, 2
      %v7653 = vrot.slane %v7370, 2
      %v7654 = vsel %vm683, %v7652, %v7653
      %v7655 = vrot.slane %v7371, 2
      %v7656 = vrot.slane %v7372, 2
      %v7657 = vsel %vm683, %v7655, %v7656
      %v7658 = vrot.slane %v7373, 2
      %v7659 = vrot.slane %v7374, 2
      %v7660 = vsel %vm683, %v7658, %v7659
      %v7661 = vrot.slane %v7375, 2
      %v7662 = vrot.slane %v7376, 2
      %v7663 = vsel %vm683, %v7661, %v7662
      %v7664 = vrot.slane %v7377, 2
      %v7665 = vrot.slane %v7378, 2
      %v7666 = vsel %vm683, %v7664, %v7665
      %s7699 = scalar_lea.vmem %s1, 3072
      %v7700 = vld [vmem:[%s7699] sm:$0xff]
      %v7701 = vld [vmem:[%s7699 + $0x8] sm:$0xff]
      %v7702 = vld [vmem:[%s7699 + $0x10] sm:$0xff]
      %v7703 = vld [vmem:[%s7699 + $0x18] sm:$0xff]
      %v7704 = vld [vmem:[%s7699 + $0x20] sm:$0xff]
      %v7705 = vld [vmem:[%s7699 + $0x28] sm:$0xff]
      %v7706 = vld [vmem:[%s7699 + $0x30] sm:$0xff]
      %v7707 = vld [vmem:[%s7699 + $0x38] sm:$0xff]
      %v7708 = vld [vmem:[%s7699 + $0x40] sm:$0xff]
      %v7709 = vld [vmem:[%s7699 + $0x48] sm:$0xff]
      %v7710 = vld [vmem:[%s7699 + $0x50] sm:$0xff]
      %v7711 = vld [vmem:[%s7699 + $0x58] sm:$0xff]
      %v7712 = vld [vmem:[%s7699 + $0x60] sm:$0xff]
      %v7713 = vld [vmem:[%s7699 + $0x68] sm:$0xff]
      %v7714 = vld [vmem:[%s7699 + $0x70] sm:$0xff]
      %v7715 = vld [vmem:[%s7699 + $0x78] sm:$0xff]
      %v7716 = vld [vmem:[%s7699 + $0x80] sm:$0xff]
      %v7717 = vld [vmem:[%s7699 + $0x88] sm:$0xff]
      %v7718 = vld [vmem:[%s7699 + $0x90] sm:$0xff]
      %v7719 = vld [vmem:[%s7699 + $0x98] sm:$0xff]
      %v7720 = vld [vmem:[%s7699 + $0xa0] sm:$0xff]
      %v7721 = vld [vmem:[%s7699 + $0xa8] sm:$0xff]
      %v7722 = vld [vmem:[%s7699 + $0xb0] sm:$0xff]
      %v7723 = vld [vmem:[%s7699 + $0xb8] sm:$0xff]
      %v7724 = vld [vmem:[%s7699 + $0xc0] sm:$0xff]
      %v7725 = vld [vmem:[%s7699 + $0xc8] sm:$0xff]
      %v7726 = vld [vmem:[%s7699 + $0xd0] sm:$0xff]
      %v7727 = vld [vmem:[%s7699 + $0xd8] sm:$0xff]
      %v7728 = vld [vmem:[%s7699 + $0xe0] sm:$0xff]
      %v7729 = vld [vmem:[%s7699 + $0xe8] sm:$0xff]
      %v7730 = vld [vmem:[%s7699 + $0xf0] sm:$0xff]
      %v7731 = vld [vmem:[%s7699 + $0xf8] sm:$0xff]
      %v7732 = vld [vmem:[%s7699 + $0x100] sm:$0xff]
      %v7733 = vld [vmem:[%s7699 + $0x108] sm:$0xff]
      %v7734 = vld [vmem:[%s7699 + $0x110] sm:$0xff]
      %v7735 = vld [vmem:[%s7699 + $0x118] sm:$0xff]
      %v7736 = vld [vmem:[%s7699 + $0x120] sm:$0xff]
      %v7737 = vld [vmem:[%s7699 + $0x128] sm:$0xff]
      %v7738 = vld [vmem:[%s7699 + $0x130] sm:$0xff]
      %v7739 = vld [vmem:[%s7699 + $0x138] sm:$0xff]
      %v7740 = vld [vmem:[%s7699 + $0x140] sm:$0xff]
      %v7741 = vld [vmem:[%s7699 + $0x148] sm:$0xff]
      %v7742 = vld [vmem:[%s7699 + $0x150] sm:$0xff]
      %v7743 = vld [vmem:[%s7699 + $0x158] sm:$0xff]
      %v7744 = vld [vmem:[%s7699 + $0x160] sm:$0xff]
      %v7745 = vld [vmem:[%s7699 + $0x168] sm:$0xff]
      %v7746 = vld [vmem:[%s7699 + $0x170] sm:$0xff]
      %v7747 = vld [vmem:[%s7699 + $0x178] sm:$0xff]
      %7748 = vmatpush.msra.mxu0 %v7715
      %7749 = vmatpush.msra.mxu0 %v7714
      %7750 = vmatpush.msra.mxu0 %v7713
      %7751 = vmatpush.msra.mxu0 %v7712
      %7752 = vmatpush.msra.mxu0 %v7711
      %7753 = vmatpush.msra.mxu0 %v7710
      %7754 = vmatpush.msra.mxu0 %v7709
      %7755 = vmatpush.msra.mxu0 %v7708
      %7756 = vmatpush.msra.mxu0 %v7707
      %7757 = vmatpush.msra.mxu0 %v7706
      %7758 = vmatpush.msra.mxu0 %v7705
      %7759 = vmatpush.msra.mxu0 %v7704
      %7760 = vmatpush.msra.mxu0 %v7703
      %7761 = vmatpush.msra.mxu0 %v7702
      %7762 = vmatpush.msra.mxu0 %v7701
      %7763 = vmatpush.msra.mxu0 %v7700
      %7764 = vmatmul.f32.gmra.mxu0 %v7315
      %v7765 = vpop.f32.mrf.mxu0
      %v7766 = vadd.f32 0.0, %v7765
      %7767 = vmatmul.f32.gmra.mxu0 %v7317
      %v7768 = vpop.f32.mrf.mxu0
      %v7769 = vadd.f32 0.0, %v7768
      %7770 = vmatmul.f32.gmra.mxu0 %v7319
      %v7771 = vpop.f32.mrf.mxu0
      %v7772 = vadd.f32 0.0, %v7771
      %7773 = vmatmul.f32.gmra.mxu0 %v7321
      %v7774 = vpop.f32.mrf.mxu0
      %v7775 = vadd.f32 0.0, %v7774
      %7776 = vmatmul.f32.gmra.mxu0 %v7323
      %v7777 = vpop.f32.mrf.mxu0
      %v7778 = vadd.f32 0.0, %v7777
      %7779 = vmatmul.f32.gmra.mxu0 %v7325
      %v7780 = vpop.f32.mrf.mxu0
      %v7781 = vadd.f32 0.0, %v7780
      %7782 = vmatmul.f32.gmra.mxu0 %v7327
      %v7783 = vpop.f32.mrf.mxu0
      %v7784 = vadd.f32 0.0, %v7783
      %7785 = vmatmul.f32.gmra.mxu0 %v7329
      %v7786 = vpop.f32.mrf.mxu0
      %v7787 = vadd.f32 0.0, %v7786
      %7788 = vmatmul.f32.gmra.mxu0 %v7331
      %v7789 = vpop.f32.mrf.mxu0
      %v7790 = vadd.f32 0.0, %v7789
      %7791 = vmatmul.f32.gmra.mxu0 %v7333
      %v7792 = vpop.f32.mrf.mxu0
      %v7793 = vadd.f32 0.0, %v7792
      %7794 = vmatmul.f32.gmra.mxu0 %v7335
      %v7795 = vpop.f32.mrf.mxu0
      %v7796 = vadd.f32 0.0, %v7795
      %7797 = vmatmul.f32.gmra.mxu0 %v7337
      %v7798 = vpop.f32.mrf.mxu0
      %v7799 = vadd.f32 0.0, %v7798
      %7800 = vmatmul.f32.gmra.mxu0 %v7339
      %v7801 = vpop.f32.mrf.mxu0
      %v7802 = vadd.f32 0.0, %v7801
      %7803 = vmatmul.f32.gmra.mxu0 %v7341
      %v7804 = vpop.f32.mrf.mxu0
      %v7805 = vadd.f32 0.0, %v7804
      %7806 = vmatmul.f32.gmra.mxu0 %v7343
      %v7807 = vpop.f32.mrf.mxu0
      %v7808 = vadd.f32 0.0, %v7807
      %7809 = vmatmul.f32.gmra.mxu0 %v7345
      %v7810 = vpop.f32.mrf.mxu0
      %v7811 = vadd.f32 0.0, %v7810
      %7812 = vmatmul.f32.gmra.mxu0 %v7347
      %v7813 = vpop.f32.mrf.mxu0
      %v7814 = vadd.f32 0.0, %v7813
      %7815 = vmatmul.f32.gmra.mxu0 %v7349
      %v7816 = vpop.f32.mrf.mxu0
      %v7817 = vadd.f32 0.0, %v7816
      %7818 = vmatmul.f32.gmra.mxu0 %v7351
      %v7819 = vpop.f32.mrf.mxu0
      %v7820 = vadd.f32 0.0, %v7819
      %7821 = vmatmul.f32.gmra.mxu0 %v7353
      %v7822 = vpop.f32.mrf.mxu0
      %v7823 = vadd.f32 0.0, %v7822
      %7824 = vmatmul.f32.gmra.mxu0 %v7355
      %v7825 = vpop.f32.mrf.mxu0
      %v7826 = vadd.f32 0.0, %v7825
      %7827 = vmatmul.f32.gmra.mxu0 %v7357
      %v7828 = vpop.f32.mrf.mxu0
      %v7829 = vadd.f32 0.0, %v7828
      %7830 = vmatmul.f32.gmra.mxu0 %v7359
      %v7831 = vpop.f32.mrf.mxu0
      %v7832 = vadd.f32 0.0, %v7831
      %7833 = vmatmul.f32.gmra.mxu0 %v7361
      %v7834 = vpop.f32.mrf.mxu0
      %v7835 = vadd.f32 0.0, %v7834
      %7836 = vmatmul.f32.gmra.mxu0 %v7363
      %v7837 = vpop.f32.mrf.mxu0
      %v7838 = vadd.f32 0.0, %v7837
      %7839 = vmatmul.f32.gmra.mxu0 %v7365
      %v7840 = vpop.f32.mrf.mxu0
      %v7841 = vadd.f32 0.0, %v7840
      %7842 = vmatmul.f32.gmra.mxu0 %v7367
      %v7843 = vpop.f32.mrf.mxu0
      %v7844 = vadd.f32 0.0, %v7843
      %7845 = vmatmul.f32.gmra.mxu0 %v7369
      %v7846 = vpop.f32.mrf.mxu0
      %v7847 = vadd.f32 0.0, %v7846
      %7848 = vmatmul.f32.gmra.mxu0 %v7371
      %v7849 = vpop.f32.mrf.mxu0
      %v7850 = vadd.f32 0.0, %v7849
      %7851 = vmatmul.f32.gmra.mxu0 %v7373
      %v7852 = vpop.f32.mrf.mxu0
      %v7853 = vadd.f32 0.0, %v7852
      %7854 = vmatmul.f32.gmra.mxu0 %v7375
      %v7855 = vpop.f32.mrf.mxu0
      %v7856 = vadd.f32 0.0, %v7855
      %7857 = vmatmul.f32.gmra.mxu0 %v7377
      %v7858 = vpop.f32.mrf.mxu0
      %v7859 = vadd.f32 0.0, %v7858
      %7860 = vdwg.mxu0
      %7861 = vmatpush.msra.mxu0 %v7731
      %7862 = vmatpush.msra.mxu0 %v7730
      %7863 = vmatpush.msra.mxu0 %v7729
      %7864 = vmatpush.msra.mxu0 %v7728
      %7865 = vmatpush.msra.mxu0 %v7727
      %7866 = vmatpush.msra.mxu0 %v7726
      %7867 = vmatpush.msra.mxu0 %v7725
      %7868 = vmatpush.msra.mxu0 %v7724
      %7869 = vmatpush.msra.mxu0 %v7723
      %7870 = vmatpush.msra.mxu0 %v7722
      %7871 = vmatpush.msra.mxu0 %v7721
      %7872 = vmatpush.msra.mxu0 %v7720
      %7873 = vmatpush.msra.mxu0 %v7719
      %7874 = vmatpush.msra.mxu0 %v7718
      %7875 = vmatpush.msra.mxu0 %v7717
      %7876 = vmatpush.msra.mxu0 %v7716
      %7877 = vmatmul.f32.gmra.mxu0 %v7445
      %v7878 = vpop.f32.mrf.mxu0
      %v7879 = vadd.f32 %v7766, %v7878
      %7880 = vmatmul.f32.gmra.mxu0 %v7448
      %v7881 = vpop.f32.mrf.mxu0
      %v7882 = vadd.f32 %v7769, %v7881
      %7883 = vmatmul.f32.gmra.mxu0 %v7451
      %v7884 = vpop.f32.mrf.mxu0
      %v7885 = vadd.f32 %v7772, %v7884
      %7886 = vmatmul.f32.gmra.mxu0 %v7454
      %v7887 = vpop.f32.mrf.mxu0
      %v7888 = vadd.f32 %v7775, %v7887
      %7889 = vmatmul.f32.gmra.mxu0 %v7457
      %v7890 = vpop.f32.mrf.mxu0
      %v7891 = vadd.f32 %v7778, %v7890
      %7892 = vmatmul.f32.gmra.mxu0 %v7460
      %v7893 = vpop.f32.mrf.mxu0
      %v7894 = vadd.f32 %v7781, %v7893
      %7895 = vmatmul.f32.gmra.mxu0 %v7463
      %v7896 = vpop.f32.mrf.mxu0
      %v7897 = vadd.f32 %v7784, %v7896
      %7898 = vmatmul.f32.gmra.mxu0 %v7466
      %v7899 = vpop.f32.mrf.mxu0
      %v7900 = vadd.f32 %v7787, %v7899
      %7901 = vmatmul.f32.gmra.mxu0 %v7469
      %v7902 = vpop.f32.mrf.mxu0
      %v7903 = vadd.f32 %v7790, %v7902
      %7904 = vmatmul.f32.gmra.mxu0 %v7472
      %v7905 = vpop.f32.mrf.mxu0
      %v7906 = vadd.f32 %v7793, %v7905
      %7907 = vmatmul.f32.gmra.mxu0 %v7475
      %v7908 = vpop.f32.mrf.mxu0
      %v7909 = vadd.f32 %v7796, %v7908
      %7910 = vmatmul.f32.gmra.mxu0 %v7478
      %v7911 = vpop.f32.mrf.mxu0
      %v7912 = vadd.f32 %v7799, %v7911
      %7913 = vmatmul.f32.gmra.mxu0 %v7481
      %v7914 = vpop.f32.mrf.mxu0
      %v7915 = vadd.f32 %v7802, %v7914
      %7916 = vmatmul.f32.gmra.mxu0 %v7484
      %v7917 = vpop.f32.mrf.mxu0
      %v7918 = vadd.f32 %v7805, %v7917
      %7919 = vmatmul.f32.gmra.mxu0 %v7487
      %v7920 = vpop.f32.mrf.mxu0
      %v7921 = vadd.f32 %v7808, %v7920
      %7922 = vmatmul.f32.gmra.mxu0 %v7490
      %v7923 = vpop.f32.mrf.mxu0
      %v7924 = vadd.f32 %v7811, %v7923
      %7925 = vmatmul.f32.gmra.mxu0 %v7493
      %v7926 = vpop.f32.mrf.mxu0
      %v7927 = vadd.f32 %v7814, %v7926
      %7928 = vmatmul.f32.gmra.mxu0 %v7496
      %v7929 = vpop.f32.mrf.mxu0
      %v7930 = vadd.f32 %v7817, %v7929
      %7931 = vmatmul.f32.gmra.mxu0 %v7499
      %v7932 = vpop.f32.mrf.mxu0
      %v7933 = vadd.f32 %v7820, %v7932
      %7934 = vmatmul.f32.gmra.mxu0 %v7502
      %v7935 = vpop.f32.mrf.mxu0
      %v7936 = vadd.f32 %v7823, %v7935
      %7937 = vmatmul.f32.gmra.mxu0 %v7505
      %v7938 = vpop.f32.mrf.mxu0
      %v7939 = vadd.f32 %v7826, %v7938
      %7940 = vmatmul.f32.gmra.mxu0 %v7508
      %v7941 = vpop.f32.mrf.mxu0
      %v7942 = vadd.f32 %v7829, %v7941
      %7943 = vmatmul.f32.gmra.mxu0 %v7511
      %v7944 = vpop.f32.mrf.mxu0
      %v7945 = vadd.f32 %v7832, %v7944
      %7946 = vmatmul.f32.gmra.mxu0 %v7514
      %v7947 = vpop.f32.mrf.mxu0
      %v7948 = vadd.f32 %v7835, %v7947
      %7949 = vmatmul.f32.gmra.mxu0 %v7517
      %v7950 = vpop.f32.mrf.mxu0
      %v7951 = vadd.f32 %v7838, %v7950
      %7952 = vmatmul.f32.gmra.mxu0 %v7520
      %v7953 = vpop.f32.mrf.mxu0
      %v7954 = vadd.f32 %v7841, %v7953
      %7955 = vmatmul.f32.gmra.mxu0 %v7523
      %v7956 = vpop.f32.mrf.mxu0
      %v7957 = vadd.f32 %v7844, %v7956
      %7958 = vmatmul.f32.gmra.mxu0 %v7526
      %v7959 = vpop.f32.mrf.mxu0
      %v7960 = vadd.f32 %v7847, %v7959
      %7961 = vmatmul.f32.gmra.mxu0 %v7529
      %v7962 = vpop.f32.mrf.mxu0
      %v7963 = vadd.f32 %v7850, %v7962
      %7964 = vmatmul.f32.gmra.mxu0 %v7532
      %v7965 = vpop.f32.mrf.mxu0
      %v7966 = vadd.f32 %v7853, %v7965
      %7967 = vmatmul.f32.gmra.mxu0 %v7535
      %v7968 = vpop.f32.mrf.mxu0
      %v7969 = vadd.f32 %v7856, %v7968
      %7970 = vmatmul.f32.gmra.mxu0 %v7538
      %v7971 = vpop.f32.mrf.mxu0
      %v7972 = vadd.f32 %v7859, %v7971
      %7973 = vdwg.mxu0
      %7974 = vmatpush.msra.mxu0 %v7747
      %7975 = vmatpush.msra.mxu0 %v7746
      %7976 = vmatpush.msra.mxu0 %v7745
      %7977 = vmatpush.msra.mxu0 %v7744
      %7978 = vmatpush.msra.mxu0 %v7743
      %7979 = vmatpush.msra.mxu0 %v7742
      %7980 = vmatpush.msra.mxu0 %v7741
      %7981 = vmatpush.msra.mxu0 %v7740
      %7982 = vmatpush.msra.mxu0 %v7739
      %7983 = vmatpush.msra.mxu0 %v7738
      %7984 = vmatpush.msra.mxu0 %v7737
      %7985 = vmatpush.msra.mxu0 %v7736
      %7986 = vmatpush.msra.mxu0 %v7735
      %7987 = vmatpush.msra.mxu0 %v7734
      %7988 = vmatpush.msra.mxu0 %v7733
      %7989 = vmatpush.msra.mxu0 %v7732
      %7990 = vmatmul.f32.gmra.mxu0 %v7573
      %v7991 = vpop.f32.mrf.mxu0
      %v7992 = vadd.f32 %v7879, %v7991
      %7993 = vmatmul.f32.gmra.mxu0 %v7576
      %v7994 = vpop.f32.mrf.mxu0
      %v7995 = vadd.f32 %v7882, %v7994
      %7996 = vmatmul.f32.gmra.mxu0 %v7579
      %v7997 = vpop.f32.mrf.mxu0
      %v7998 = vadd.f32 %v7885, %v7997
      %7999 = vmatmul.f32.gmra.mxu0 %v7582
      %v8000 = vpop.f32.mrf.mxu0
      %v8001 = vadd.f32 %v7888, %v8000
      %8002 = vmatmul.f32.gmra.mxu0 %v7585
      %v8003 = vpop.f32.mrf.mxu0
      %v8004 = vadd.f32 %v7891, %v8003
      %8005 = vmatmul.f32.gmra.mxu0 %v7588
      %v8006 = vpop.f32.mrf.mxu0
      %v8007 = vadd.f32 %v7894, %v8006
      %8008 = vmatmul.f32.gmra.mxu0 %v7591
      %v8009 = vpop.f32.mrf.mxu0
      %v8010 = vadd.f32 %v7897, %v8009
      %8011 = vmatmul.f32.gmra.mxu0 %v7594
      %v8012 = vpop.f32.mrf.mxu0
      %v8013 = vadd.f32 %v7900, %v8012
      %8014 = vmatmul.f32.gmra.mxu0 %v7597
      %v8015 = vpop.f32.mrf.mxu0
      %v8016 = vadd.f32 %v7903, %v8015
      %8017 = vmatmul.f32.gmra.mxu0 %v7600
      %v8018 = vpop.f32.mrf.mxu0
      %v8019 = vadd.f32 %v7906, %v8018
      %8020 = vmatmul.f32.gmra.mxu0 %v7603
      %v8021 = vpop.f32.mrf.mxu0
      %v8022 = vadd.f32 %v7909, %v8021
      %8023 = vmatmul.f32.gmra.mxu0 %v7606
      %v8024 = vpop.f32.mrf.mxu0
      %v8025 = vadd.f32 %v7912, %v8024
      %8026 = vmatmul.f32.gmra.mxu0 %v7609
      %v8027 = vpop.f32.mrf.mxu0
      %v8028 = vadd.f32 %v7915, %v8027
      %8029 = vmatmul.f32.gmra.mxu0 %v7612
      %v8030 = vpop.f32.mrf.mxu0
      %v8031 = vadd.f32 %v7918, %v8030
      %8032 = vmatmul.f32.gmra.mxu0 %v7615
      %v8033 = vpop.f32.mrf.mxu0
      %v8034 = vadd.f32 %v7921, %v8033
      %8035 = vmatmul.f32.gmra.mxu0 %v7618
      %v8036 = vpop.f32.mrf.mxu0
      %v8037 = vadd.f32 %v7924, %v8036
      %8038 = vmatmul.f32.gmra.mxu0 %v7621
      %v8039 = vpop.f32.mrf.mxu0
      %v8040 = vadd.f32 %v7927, %v8039
      %8041 = vmatmul.f32.gmra.mxu0 %v7624
      %v8042 = vpop.f32.mrf.mxu0
      %v8043 = vadd.f32 %v7930, %v8042
      %8044 = vmatmul.f32.gmra.mxu0 %v7627
      %v8045 = vpop.f32.mrf.mxu0
      %v8046 = vadd.f32 %v7933, %v8045
      %8047 = vmatmul.f32.gmra.mxu0 %v7630
      %v8048 = vpop.f32.mrf.mxu0
      %v8049 = vadd.f32 %v7936, %v8048
      %8050 = vmatmul.f32.gmra.mxu0 %v7633
      %v8051 = vpop.f32.mrf.mxu0
      %v8052 = vadd.f32 %v7939, %v8051
      %8053 = vmatmul.f32.gmra.mxu0 %v7636
      %v8054 = vpop.f32.mrf.mxu0
      %v8055 = vadd.f32 %v7942, %v8054
      %8056 = vmatmul.f32.gmra.mxu0 %v7639
      %v8057 = vpop.f32.mrf.mxu0
      %v8058 = vadd.f32 %v7945, %v8057
      %8059 = vmatmul.f32.gmra.mxu0 %v7642
      %v8060 = vpop.f32.mrf.mxu0
      %v8061 = vadd.f32 %v7948, %v8060
      %8062 = vmatmul.f32.gmra.mxu0 %v7645
      %v8063 = vpop.f32.mrf.mxu0
      %v8064 = vadd.f32 %v7951, %v8063
      %8065 = vmatmul.f32.gmra.mxu0 %v7648
      %v8066 = vpop.f32.mrf.mxu0
      %v8067 = vadd.f32 %v7954, %v8066
      %8068 = vmatmul.f32.gmra.mxu0 %v7651
      %v8069 = vpop.f32.mrf.mxu0
      %v8070 = vadd.f32 %v7957, %v8069
      %8071 = vmatmul.f32.gmra.mxu0 %v7654
      %v8072 = vpop.f32.mrf.mxu0
      %v8073 = vadd.f32 %v7960, %v8072
      %8074 = vmatmul.f32.gmra.mxu0 %v7657
      %v8075 = vpop.f32.mrf.mxu0
      %v8076 = vadd.f32 %v7963, %v8075
      %8077 = vmatmul.f32.gmra.mxu0 %v7660
      %v8078 = vpop.f32.mrf.mxu0
      %v8079 = vadd.f32 %v7966, %v8078
      %8080 = vmatmul.f32.gmra.mxu0 %v7663
      %v8081 = vpop.f32.mrf.mxu0
      %v8082 = vadd.f32 %v7969, %v8081
      %8083 = vmatmul.f32.gmra.mxu0 %v7666
      %v8084 = vpop.f32.mrf.mxu0
      %v8085 = vadd.f32 %v7972, %v8084
      %8086 = vdwg.mxu0
      %v8087 = vld [vmem:[#allocation3] sm:$0xff]
      %v8088 = vld [vmem:[#allocation3 + $0x8] sm:$0xff]
      %v8089 = vld [vmem:[#allocation3 + $0x10] sm:$0xff]
      %v8090 = vld [vmem:[#allocation3 + $0x18] sm:$0xff]
      %v8091 = vld [vmem:[#allocation3 + $0x20] sm:$0xff]
      %v8092 = vld [vmem:[#allocation3 + $0x28] sm:$0xff]
      %v8093 = vld [vmem:[#allocation3 + $0x30] sm:$0xff]
      %v8094 = vld [vmem:[#allocation3 + $0x38] sm:$0xff]
      %v8095 = vld [vmem:[#allocation3 + $0x40] sm:$0xff]
      %v8096 = vld [vmem:[#allocation3 + $0x48] sm:$0xff]
      %v8097 = vld [vmem:[#allocation3 + $0x50] sm:$0xff]
      %v8098 = vld [vmem:[#allocation3 + $0x58] sm:$0xff]
      %v8099 = vld [vmem:[#allocation3 + $0x60] sm:$0xff]
      %v8100 = vld [vmem:[#allocation3 + $0x68] sm:$0xff]
      %v8101 = vld [vmem:[#allocation3 + $0x70] sm:$0xff]
      %v8102 = vld [vmem:[#allocation3 + $0x78] sm:$0xff]
      %v8103 = vld [vmem:[#allocation3 + $0x80] sm:$0xff]
      %v8104 = vld [vmem:[#allocation3 + $0x88] sm:$0xff]
      %v8105 = vld [vmem:[#allocation3 + $0x90] sm:$0xff]
      %v8106 = vld [vmem:[#allocation3 + $0x98] sm:$0xff]
      %v8107 = vld [vmem:[#allocation3 + $0xa0] sm:$0xff]
      %v8108 = vld [vmem:[#allocation3 + $0xa8] sm:$0xff]
      %v8109 = vld [vmem:[#allocation3 + $0xb0] sm:$0xff]
      %v8110 = vld [vmem:[#allocation3 + $0xb8] sm:$0xff]
      %v8111 = vld [vmem:[#allocation3 + $0xc0] sm:$0xff]
      %v8112 = vld [vmem:[#allocation3 + $0xc8] sm:$0xff]
      %v8113 = vld [vmem:[#allocation3 + $0xd0] sm:$0xff]
      %v8114 = vld [vmem:[#allocation3 + $0xd8] sm:$0xff]
      %v8115 = vld [vmem:[#allocation3 + $0xe0] sm:$0xff]
      %v8116 = vld [vmem:[#allocation3 + $0xe8] sm:$0xff]
      %v8117 = vld [vmem:[#allocation3 + $0xf0] sm:$0xff]
      %v8118 = vld [vmem:[#allocation3 + $0xf8] sm:$0xff]
      %v8119 = vadd.f32 %v8087, %v7992
      %v8120 = vadd.f32 %v8088, %v7995
      %v8121 = vadd.f32 %v8089, %v7998
      %v8122 = vadd.f32 %v8090, %v8001
      %v8123 = vadd.f32 %v8091, %v8004
      %v8124 = vadd.f32 %v8092, %v8007
      %v8125 = vadd.f32 %v8093, %v8010
      %v8126 = vadd.f32 %v8094, %v8013
      %v8127 = vadd.f32 %v8095, %v8016
      %v8128 = vadd.f32 %v8096, %v8019
      %v8129 = vadd.f32 %v8097, %v8022
      %v8130 = vadd.f32 %v8098, %v8025
      %v8131 = vadd.f32 %v8099, %v8028
      %v8132 = vadd.f32 %v8100, %v8031
      %v8133 = vadd.f32 %v8101, %v8034
      %v8134 = vadd.f32 %v8102, %v8037
      %v8135 = vadd.f32 %v8103, %v8040
      %v8136 = vadd.f32 %v8104, %v8043
      %v8137 = vadd.f32 %v8105, %v8046
      %v8138 = vadd.f32 %v8106, %v8049
      %v8139 = vadd.f32 %v8107, %v8052
      %v8140 = vadd.f32 %v8108, %v8055
      %v8141 = vadd.f32 %v8109, %v8058
      %v8142 = vadd.f32 %v8110, %v8061
      %v8143 = vadd.f32 %v8111, %v8064
      %v8144 = vadd.f32 %v8112, %v8067
      %v8145 = vadd.f32 %v8113, %v8070
      %v8146 = vadd.f32 %v8114, %v8073
      %v8147 = vadd.f32 %v8115, %v8076
      %v8148 = vadd.f32 %v8116, %v8079
      %v8149 = vadd.f32 %v8117, %v8082
      %v8150 = vadd.f32 %v8118, %v8085
      %8151 = vst [vmem:[#allocation3] sm:$0xff] %v8119
      %8152 = vst [vmem:[#allocation3 + $0x8] sm:$0xff] %v8120
      %8153 = vst [vmem:[#allocation3 + $0x10] sm:$0xff] %v8121
      %8154 = vst [vmem:[#allocation3 + $0x18] sm:$0xff] %v8122
      %8155 = vst [vmem:[#allocation3 + $0x20] sm:$0xff] %v8123
      %8156 = vst [vmem:[#allocation3 + $0x28] sm:$0xff] %v8124
      %8157 = vst [vmem:[#allocation3 + $0x30] sm:$0xff] %v8125
      %8158 = vst [vmem:[#allocation3 + $0x38] sm:$0xff] %v8126
      %8159 = vst [vmem:[#allocation3 + $0x40] sm:$0xff] %v8127
      %8160 = vst [vmem:[#allocation3 + $0x48] sm:$0xff] %v8128
      %8161 = vst [vmem:[#allocation3 + $0x50] sm:$0xff] %v8129
      %8162 = vst [vmem:[#allocation3 + $0x58] sm:$0xff] %v8130
      %8163 = vst [vmem:[#allocation3 + $0x60] sm:$0xff] %v8131
      %8164 = vst [vmem:[#allocation3 + $0x68] sm:$0xff] %v8132
      %8165 = vst [vmem:[#allocation3 + $0x70] sm:$0xff] %v8133
      %8166 = vst [vmem:[#allocation3 + $0x78] sm:$0xff] %v8134
      %8167 = vst [vmem:[#allocation3 + $0x80] sm:$0xff] %v8135
      %8168 = vst [vmem:[#allocation3 + $0x88] sm:$0xff] %v8136
      %8169 = vst [vmem:[#allocation3 + $0x90] sm:$0xff] %v8137
      %8170 = vst [vmem:[#allocation3 + $0x98] sm:$0xff] %v8138
      %8171 = vst [vmem:[#allocation3 + $0xa0] sm:$0xff] %v8139
      %8172 = vst [vmem:[#allocation3 + $0xa8] sm:$0xff] %v8140
      %8173 = vst [vmem:[#allocation3 + $0xb0] sm:$0xff] %v8141
      %8174 = vst [vmem:[#allocation3 + $0xb8] sm:$0xff] %v8142
      %8175 = vst [vmem:[#allocation3 + $0xc0] sm:$0xff] %v8143
      %8176 = vst [vmem:[#allocation3 + $0xc8] sm:$0xff] %v8144
      %8177 = vst [vmem:[#allocation3 + $0xd0] sm:$0xff] %v8145
      %8178 = vst [vmem:[#allocation3 + $0xd8] sm:$0xff] %v8146
      %8179 = vst [vmem:[#allocation3 + $0xe0] sm:$0xff] %v8147
      %8180 = vst [vmem:[#allocation3 + $0xe8] sm:$0xff] %v8148
      %8181 = vst [vmem:[#allocation3 + $0xf0] sm:$0xff] %v8149
      %8182 = vst [vmem:[#allocation3 + $0xf8] sm:$0xff] %v8150
      %v8183 = vld [vmem:[#allocation3] sm:$0xff]
      %v8184 = vld [vmem:[#allocation3 + $0x8] sm:$0xff]
      %v8185 = vld [vmem:[#allocation3 + $0x10] sm:$0xff]
      %v8186 = vld [vmem:[#allocation3 + $0x18] sm:$0xff]
      %v8187 = vld [vmem:[#allocation3 + $0x20] sm:$0xff]
      %v8188 = vld [vmem:[#allocation3 + $0x28] sm:$0xff]
      %v8189 = vld [vmem:[#allocation3 + $0x30] sm:$0xff]
      %v8190 = vld [vmem:[#allocation3 + $0x38] sm:$0xff]
      %v8191 = vld [vmem:[#allocation3 + $0x40] sm:$0xff]
      %v8192 = vld [vmem:[#allocation3 + $0x48] sm:$0xff]
      %v8193 = vld [vmem:[#allocation3 + $0x50] sm:$0xff]
      %v8194 = vld [vmem:[#allocation3 + $0x58] sm:$0xff]
      %v8195 = vld [vmem:[#allocation3 + $0x60] sm:$0xff]
      %v8196 = vld [vmem:[#allocation3 + $0x68] sm:$0xff]
      %v8197 = vld [vmem:[#allocation3 + $0x70] sm:$0xff]
      %v8198 = vld [vmem:[#allocation3 + $0x78] sm:$0xff]
      %v8199 = vld [vmem:[#allocation3 + $0x80] sm:$0xff]
      %v8200 = vld [vmem:[#allocation3 + $0x88] sm:$0xff]
      %v8201 = vld [vmem:[#allocation3 + $0x90] sm:$0xff]
      %v8202 = vld [vmem:[#allocation3 + $0x98] sm:$0xff]
      %v8203 = vld [vmem:[#allocation3 + $0xa0] sm:$0xff]
      %v8204 = vld [vmem:[#allocation3 + $0xa8] sm:$0xff]
      %v8205 = vld [vmem:[#allocation3 + $0xb0] sm:$0xff]
      %v8206 = vld [vmem:[#allocation3 + $0xb8] sm:$0xff]
      %v8207 = vld [vmem:[#allocation3 + $0xc0] sm:$0xff]
      %v8208 = vld [vmem:[#allocation3 + $0xc8] sm:$0xff]
      %v8209 = vld [vmem:[#allocation3 + $0xd0] sm:$0xff]
      %v8210 = vld [vmem:[#allocation3 + $0xd8] sm:$0xff]
      %v8211 = vld [vmem:[#allocation3 + $0xe0] sm:$0xff]
      %v8212 = vld [vmem:[#allocation3 + $0xe8] sm:$0xff]
      %v8213 = vld [vmem:[#allocation3 + $0xf0] sm:$0xff]
      %v8214 = vld [vmem:[#allocation3 + $0xf8] sm:$0xff]
      %v8215 = vld [vmem:[%s2] sm:$0x1]
      %v8217 = vperm.slane %v8215, 0
      %v8219 = vadd.f32 %v8183, %v8217
      %v8220 = vadd.f32 %v8184, %v8217
      %v8221 = vadd.f32 %v8185, %v8217
      %v8222 = vadd.f32 %v8186, %v8217
      %v8223 = vadd.f32 %v8187, %v8217
      %v8224 = vadd.f32 %v8188, %v8217
      %v8225 = vadd.f32 %v8189, %v8217
      %v8226 = vadd.f32 %v8190, %v8217
      %v8227 = vadd.f32 %v8191, %v8217
      %v8228 = vadd.f32 %v8192, %v8217
      %v8229 = vadd.f32 %v8193, %v8217
      %v8230 = vadd.f32 %v8194, %v8217
      %v8231 = vadd.f32 %v8195, %v8217
      %v8232 = vadd.f32 %v8196, %v8217
      %v8233 = vadd.f32 %v8197, %v8217
      %v8234 = vadd.f32 %v8198, %v8217
      %v8235 = vadd.f32 %v8199, %v8217
      %v8236 = vadd.f32 %v8200, %v8217
      %v8237 = vadd.f32 %v8201, %v8217
      %v8238 = vadd.f32 %v8202, %v8217
      %v8239 = vadd.f32 %v8203, %v8217
      %v8240 = vadd.f32 %v8204, %v8217
      %v8241 = vadd.f32 %v8205, %v8217
      %v8242 = vadd.f32 %v8206, %v8217
      %v8243 = vadd.f32 %v8207, %v8217
      %v8244 = vadd.f32 %v8208, %v8217
      %v8245 = vadd.f32 %v8209, %v8217
      %v8246 = vadd.f32 %v8210, %v8217
      %v8247 = vadd.f32 %v8211, %v8217
      %v8248 = vadd.f32 %v8212, %v8217
      %v8249 = vadd.f32 %v8213, %v8217
      %v8250 = vadd.f32 %v8214, %v8217
      %v8251 = vmax.f32 %v8219, 0.0
      %v8252 = vmax.f32 %v8220, 0.0
      %v8253 = vmax.f32 %v8221, 0.0
      %v8254 = vmax.f32 %v8222, 0.0
      %v8255 = vmax.f32 %v8223, 0.0
      %v8256 = vmax.f32 %v8224, 0.0
      %v8257 = vmax.f32 %v8225, 0.0
      %v8258 = vmax.f32 %v8226, 0.0
      %v8259 = vmax.f32 %v8227, 0.0
      %v8260 = vmax.f32 %v8228, 0.0
      %v8261 = vmax.f32 %v8229, 0.0
      %v8262 = vmax.f32 %v8230, 0.0
      %v8263 = vmax.f32 %v8231, 0.0
      %v8264 = vmax.f32 %v8232, 0.0
      %v8265 = vmax.f32 %v8233, 0.0
      %v8266 = vmax.f32 %v8234, 0.0
      %v8267 = vmax.f32 %v8235, 0.0
      %v8268 = vmax.f32 %v8236, 0.0
      %v8269 = vmax.f32 %v8237, 0.0
      %v8270 = vmax.f32 %v8238, 0.0
      %v8271 = vmax.f32 %v8239, 0.0
      %v8272 = vmax.f32 %v8240, 0.0
      %v8273 = vmax.f32 %v8241, 0.0
      %v8274 = vmax.f32 %v8242, 0.0
      %v8275 = vmax.f32 %v8243, 0.0
      %v8276 = vmax.f32 %v8244, 0.0
      %v8277 = vmax.f32 %v8245, 0.0
      %v8278 = vmax.f32 %v8246, 0.0
      %v8279 = vmax.f32 %v8247, 0.0
      %v8280 = vmax.f32 %v8248, 0.0
      %v8281 = vmax.f32 %v8249, 0.0
      %v8282 = vmax.f32 %v8250, 0.0
      %8283 = vst [vmem:[%s148] sm:$0xff] %v8251
      %8284 = vst [vmem:[%s148 + $0x8] sm:$0xff] %v8252
      %8285 = vst [vmem:[%s148 + $0x10] sm:$0xff] %v8253
      %8286 = vst [vmem:[%s148 + $0x18] sm:$0xff] %v8254
      %8287 = vst [vmem:[%s148 + $0x20] sm:$0xff] %v8255
      %8288 = vst [vmem:[%s148 + $0x28] sm:$0xff] %v8256
      %8289 = vst [vmem:[%s148 + $0x30] sm:$0xff] %v8257
      %8290 = vst [vmem:[%s148 + $0x38] sm:$0xff] %v8258
      %8291 = vst [vmem:[%s148 + $0x40] sm:$0xff] %v8259
      %8292 = vst [vmem:[%s148 + $0x48] sm:$0xff] %v8260
      %8293 = vst [vmem:[%s148 + $0x50] sm:$0xff] %v8261
      %8294 = vst [vmem:[%s148 + $0x58] sm:$0xff] %v8262
      %8295 = vst [vmem:[%s148 + $0x60] sm:$0xff] %v8263
      %8296 = vst [vmem:[%s148 + $0x68] sm:$0xff] %v8264
      %8297 = vst [vmem:[%s148 + $0x70] sm:$0xff] %v8265
      %8298 = vst [vmem:[%s148 + $0x78] sm:$0xff] %v8266
      %8299 = vst [vmem:[%s148 + $0x80] sm:$0xff] %v8267
      %8300 = vst [vmem:[%s148 + $0x88] sm:$0xff] %v8268
      %8301 = vst [vmem:[%s148 + $0x90] sm:$0xff] %v8269
      %8302 = vst [vmem:[%s148 + $0x98] sm:$0xff] %v8270
      %8303 = vst [vmem:[%s148 + $0xa0] sm:$0xff] %v8271
      %8304 = vst [vmem:[%s148 + $0xa8] sm:$0xff] %v8272
      %8305 = vst [vmem:[%s148 + $0xb0] sm:$0xff] %v8273
      %8306 = vst [vmem:[%s148 + $0xb8] sm:$0xff] %v8274
      %8307 = vst [vmem:[%s148 + $0xc0] sm:$0xff] %v8275
      %8308 = vst [vmem:[%s148 + $0xc8] sm:$0xff] %v8276
      %8309 = vst [vmem:[%s148 + $0xd0] sm:$0xff] %v8277
      %8310 = vst [vmem:[%s148 + $0xd8] sm:$0xff] %v8278
      %8311 = vst [vmem:[%s148 + $0xe0] sm:$0xff] %v8279
      %8312 = vst [vmem:[%s148 + $0xe8] sm:$0xff] %v8280
      %8313 = vst [vmem:[%s148 + $0xf0] sm:$0xff] %v8281
      %8314 = vst [vmem:[%s148 + $0xf8] sm:$0xff] %v8282
      %s8315 = smul.u32 4, %s19
      %p8316 = scmp.lt.s32.totalorder %s18, 1
      %s8317 = scalar_select %p8316, %s18, 1
      %p8318 = scmp.lt.s32.totalorder %s8315, 7
      %s8319 = scalar_select %p8318, %s8315, 7
      %s8320 = smul.addr %s8319, 8
      %s8321 = smul.addr %s8317, 64
      %s8322 = sadd.s32 %s8320, %s8321
      %s8323 = smul.addr %s8322, 8
      %s8324 = scalar_lea.vmem %s3, %s8323
      // Predicated region
      $region51: #{a_call__.2} parent=27 // pred_check
        %p8325 = pneg %p88
      $region52: #{a_call__.2} parent=27 // pred_check_branch
        %8327 = sbr.rel (%p8325) target = $region54
      $region53: #{a_call__.2} parent=27 // pred_region
        %s8328 = smul.u32 4, %s19
      $region54: #{a_call__.2} parent=27 // pred_fallthru
        _
    $region28: #{a_call__.2} parent=5 // pred_fallthru
      _
    %p8329 = scmp.le.s32.totalorder 2, %s9
    // Predicated region
    $region55: #{a_call__.2} parent=5 // pred_check
      %p8330 = pneg %p8329
    $region56: #{a_call__.2} parent=5 // pred_check_branch
      %8332 = sbr.rel (%p8330) target = $region58
    $region57: #{a_call__.2} parent=5 // pred_region
      %s8333 = ssub.s32 %s9, 2
      // Predicated region
      $region59: #{a_call__.2} parent=57 // pred_check
        %p8334 = pneg %p94
      $region60: #{a_call__.2} parent=57 // pred_check_branch
        %8336 = sbr.rel (%p8334) target = $region62
      $region61: #{a_call__.2} parent=57 // pred_region
        %s8337 = smul.u32 4, %s21
        %p8338 = scmp.lt.s32.totalorder %s20, 1
        %s8339 = scalar_select %p8338, %s20, 1
        %p8340 = scmp.lt.s32.totalorder %s8337, 7
        %s8341 = scalar_select %p8340, %s8337, 7
        %s8342 = smul.addr %s8341, 8
        %s8343 = smul.addr %s8339, 64
        %s8344 = sadd.s32 %s8342, %s8343
        %s8345 = smul.addr %s8344, 8
        %s8346 = scalar_lea.vmem %s3, %s8345
      $region62: #{a_call__.2} parent=57 // pred_fallthru
        _
    $region58: #{a_call__.2} parent=5 // pred_fallthru
      _
  $region6: #{a_call__.2} parent=0 // loop_footer
    %s13 = sadd.s32 1, %s9
  $region7: #{a_call__.2} parent=0 // loop_footer_branch
    %8 = sbr.rel target = $region3
  $region8: #{a_call__.2} parent=0 // loop_exit
    _
  %8347 = vsyncmov [#allocation4]
  %s8348 = vpop.sfrf %8347
  %p8349 = scmp.eq.s32.totalorder %s8348, 0
  %p8350 = pneg %p8349
  %8352 = shalt.err (%p8350)

</llo_original>
